<compile_context>
chip_gen: v7x
topology: tpu7x:2x2x1
jax: 0.10.0
libtpu: 0.0.40
codegen_flags: <defaults>
</compile_context>

<pallas_src>
import jax
import jax.numpy as jnp
from jax import lax
from jax.experimental import pallas as pl
from jax.experimental.pallas import tpu as pltpu

SEQ = 8      # x.size(0); PyTorch code forces batch == seq
BATCH = 8
DIN = 128
HID = 128
NCLS = 10
NPAD = 128   # lane-padded FC output width


def _lstm_chain_kernel(x_ref,
                       ew_ih_ref, ew_hh_ref, eb_ref,
                       dw_ih_ref, dw_hh_ref, db_ref,
                       fcw_ref, fcb_ref,
                       o_ref,
                       xproj_ref, dec_ref):
    """Single-invocation kernel: encoder LSTM + decoder LSTM (skew-fused) + FC."""
    T = x_ref.shape[0]
    B = x_ref.shape[1]
    H = HID
    f32 = jnp.float32
    bf16 = jnp.bfloat16

    def gates_to_hc(gates, c_prev):
        # i/f/o gate columns were pre-scaled by 0.5 in the wrapper, so a single
        # tanh over the whole (B, 4H) block implements both
        # sigmoid(x) = 0.5*tanh(0.5*x) + 0.5  (i, f, o)   and   tanh(x)  (g).
        t = jnp.tanh(gates)
        i = 0.5 * t[:, 0 * H:1 * H] + 0.5
        f = 0.5 * t[:, 1 * H:2 * H] + 0.5
        g = t[:, 2 * H:3 * H]
        o = 0.5 * t[:, 3 * H:4 * H] + 0.5
        c_new = f * c_prev + i * g
        h_new = o * jnp.tanh(c_new)
        return h_new, c_new

    def lstm_cell(h, c, gin, w_hh_ref):
        gates = gin + jnp.dot(h.astype(bf16), w_hh_ref[...],
                              preferred_element_type=f32)
        return gates_to_hc(gates, c)

    # ---- hoisted encoder input projection: one (T*B, DIN) x (DIN, 4H) matmul.
    x2d = x_ref[...].reshape(T * B, DIN).astype(bf16)
    xproj_ref[...] = (jnp.dot(x2d, ew_ih_ref[...], preferred_element_type=f32)
                      + eb_ref[...])

    # hoisted decoder bias broadcast (avoid per-step broadcast_in_dim).
    db_full = jnp.broadcast_to(db_ref[...], (B, 4 * H))

    # ---- encoder step 0 (h0 = c0 = 0 -> gates are just the input projection).
    zeros = jnp.zeros((B, H), f32)
    h_e, c_e = gates_to_hc(xproj_ref[pl.ds(0, B), :], zeros)
    h_d, c_d = zeros, zeros

    # ---- skewed fused recurrence: iteration t = encoder step t + decoder t-1.
    def body(t, carry):
        h_e, c_e, h_d, c_d = carry
        enc_prev = h_e                      # encoder output of step t-1
        # encoder step t (serial chain #1): only h @ W_hh on the chain.
        row = pl.multiple_of(t * B, B)
        h_e_n, c_e_n = lstm_cell(h_e, c_e, xproj_ref[pl.ds(row, B), :],
                                 ew_hh_ref)
        # decoder step t-1 (serial chain #2, independent of chain #1 this iter).
        gin_d = (db_full
                 + jnp.dot(enc_prev.astype(bf16), dw_ih_ref[...],
                           preferred_element_type=f32))
        h_d_n, c_d_n = lstm_cell(h_d, c_d, gin_d, dw_hh_ref)
        # out[:, -1, :] keeps only the last batch row at every time step.
        dec_ref[pl.ds(t - 1, 1), :] = h_d_n[B - 1:B, :]
        return h_e_n, c_e_n, h_d_n, c_d_n

    h_e, c_e, h_d, c_d = lax.fori_loop(1, T, body, (h_e, c_e, h_d, c_d),
                                       unroll=True)

    # ---- decoder step T-1 (epilogue of the skewed schedule).
    gin_d = (db_full + jnp.dot(h_e.astype(bf16), dw_ih_ref[...],
                               preferred_element_type=f32))
    h_d, c_d = lstm_cell(h_d, c_d, gin_d, dw_hh_ref)
    dec_ref[pl.ds(T - 1, 1), :] = h_d[B - 1:B, :]

    # ---- final Linear (lane-padded to 128 output columns).
    o_ref[...] = (jnp.dot(dec_ref[...].astype(bf16), fcw_ref[...],
                          preferred_element_type=f32)
                  + fcb_ref[...])


@jax.jit
def neurochain_agi_forward(x, params):
    (ew_ih, ew_hh, eb, dw_ih, dw_hh, db, fcw, fcb) = params
    T, B, _ = x.shape

    # Fold the 0.5 of sigmoid(x)=0.5*tanh(0.5x)+0.5 into the i/f/o gate columns
    # (one-time weight preprocessing), and cast matmul weights to bf16.
    gate_scale = jnp.concatenate([
        jnp.full((2 * HID,), 0.5, jnp.float32),   # i, f
        jnp.ones((HID,), jnp.float32),            # g
        jnp.full((HID,), 0.5, jnp.float32),       # o
    ])
    ew_ih_s = (ew_ih * gate_scale).astype(jnp.bfloat16)
    ew_hh_s = (ew_hh * gate_scale).astype(jnp.bfloat16)
    eb_s = eb * gate_scale
    dw_ih_s = (dw_ih * gate_scale).astype(jnp.bfloat16)
    dw_hh_s = (dw_hh * gate_scale).astype(jnp.bfloat16)
    db_s = db * gate_scale

    # Lane-pad the FC to 128 output columns; slice back after the call.
    fcw_p = jnp.zeros((HID, NPAD), jnp.bfloat16).at[:, :NCLS].set(
        fcw.astype(jnp.bfloat16))
    fcb_p = jnp.zeros((1, NPAD), jnp.float32).at[:, :NCLS].set(fcb)

    vmem = pl.BlockSpec(memory_space=pltpu.MemorySpace.VMEM)
    out_pad = pl.pallas_call(
        _lstm_chain_kernel,
        out_shape=jax.ShapeDtypeStruct((T, NPAD), jnp.float32),
        in_specs=[vmem] * 9,
        out_specs=vmem,
        scratch_shapes=[
            pltpu.VMEM((T * B, 4 * HID), jnp.float32),  # hoisted x @ W_ih + b
            pltpu.VMEM((T, HID), jnp.float32),          # decoder out[:, -1, :]
        ],
    )(x, ew_ih_s, ew_hh_s, eb_s, dw_ih_s, dw_hh_s, db_s, fcw_p, fcb_p)
    return out_pad[:, :NCLS]


def init_params(key):
    """Deterministic init mimicking PyTorch's U(-1/sqrt(H), 1/sqrt(H))."""
    k = 1.0 / jnp.sqrt(jnp.float32(HID))
    keys = jax.random.split(key, 10)

    def u(kk, shape):
        return jax.random.uniform(kk, shape, jnp.float32, minval=-k, maxval=k)

    # encoder LSTM (PyTorch stores (4H, D); pre-transpose for x @ W^T)
    e_w_ih = u(keys[0], (4 * HID, DIN)).T          # (D, 4H)
    e_w_hh = u(keys[1], (4 * HID, HID)).T          # (H, 4H)
    e_b = (u(keys[2], (4 * HID,)) + u(keys[3], (4 * HID,))).reshape(1, 4 * HID)
    # decoder LSTM
    d_w_ih = u(keys[4], (4 * HID, HID)).T
    d_w_hh = u(keys[5], (4 * HID, HID)).T
    d_b = (u(keys[6], (4 * HID,)) + u(keys[7], (4 * HID,))).reshape(1, 4 * HID)
    # fc
    fc_w = u(keys[8], (NCLS, HID)).T               # (H, 10)
    fc_b = u(keys[9], (NCLS,)).reshape(1, NCLS)
    return (e_w_ih, e_w_hh, e_b, d_w_ih, d_w_hh, d_b, fc_w, fc_b)


def _reference_forward(x, params):
    """Pure-JAX f32 reference of the exact PyTorch semantics (sanity check)."""
    (ew_ih, ew_hh, eb, dw_ih, dw_hh, db, fcw, fcb) = params
    T, B, _ = x.shape

    def run_lstm(seq, w_ih, w_hh, b):
        def step(carry, x_t):
            h, c = carry
            gates = (jnp.einsum('bd,dh->bh', x_t, w_ih, precision='highest')
                     + jnp.einsum('bd,dh->bh', h, w_hh, precision='highest') + b)
            i = jax.nn.sigmoid(gates[:, 0 * HID:1 * HID])
            f = jax.nn.sigmoid(gates[:, 1 * HID:2 * HID])
            g = jnp.tanh(gates[:, 2 * HID:3 * HID])
            o = jax.nn.sigmoid(gates[:, 3 * HID:4 * HID])
            c = f * c + i * g
            h = o * jnp.tanh(c)
            return (h, c), h
        init = (jnp.zeros((B, HID), jnp.float32),
                jnp.zeros((B, HID), jnp.float32))
        _, outs = jax.lax.scan(step, init, seq)
        return outs

    enc = run_lstm(x, ew_ih, ew_hh, eb)
    dec = run_lstm(enc, dw_ih, dw_hh, db)
    last = dec[:, -1, :]                                        # (T, H)
    return jnp.einsum('th,hc->tc', last, fcw, precision='highest') + fcb


if __name__ == "__main__":
    root = jax.random.PRNGKey(0)
    kx, kp = jax.random.split(root)
    # PyTorch module only runs when x.size(0) (used for h0) == batch dim of the
    # default seq-first LSTM, so seq == batch == 8.
    x = jax.random.normal(kx, (SEQ, BATCH, DIN), dtype=jnp.float32)
    params = init_params(kp)

    out = jax.block_until_ready(neurochain_agi_forward(x, params))
    ref = _reference_forward(x, params)

    assert out.shape == (SEQ, NCLS), out.shape
    # Kernel uses bf16 MXU inputs with f32 accumulation -> compare with a
    # tolerance appropriate for two chained bf16 LSTMs vs the f32 reference.
    assert jnp.allclose(out, ref, atol=2e-2, rtol=2e-2), \
        float(jnp.max(jnp.abs(out - ref)))

    print("KERNEL_OK")
</pallas_src>

<mosaic_0001>
module attributes {stable_mosaic.version = 11 : i64} {
  func.func @_lstm_chain_kernel(%arg0: memref<8x8x128xf32, #tpu.memory_space<vmem>>, %arg1: memref<128x512xbf16, #tpu.memory_space<vmem>>, %arg2: memref<128x512xbf16, #tpu.memory_space<vmem>>, %arg3: memref<1x512xf32, #tpu.memory_space<vmem>>, %arg4: memref<128x512xbf16, #tpu.memory_space<vmem>>, %arg5: memref<128x512xbf16, #tpu.memory_space<vmem>>, %arg6: memref<1x512xf32, #tpu.memory_space<vmem>>, %arg7: memref<128x128xbf16, #tpu.memory_space<vmem>>, %arg8: memref<1x128xf32, #tpu.memory_space<vmem>>, %arg9: memref<8x128xf32, #tpu.memory_space<vmem>>, %arg10: memref<64x512xf32, #tpu.memory_space<vmem>>, %arg11: memref<8x128xf32, #tpu.memory_space<vmem>>) attributes {dimension_semantics = [], scalar_prefetch = 0 : i64, scratch_operands = 2 : i64, tpu.core_type = #tpu.core_type<tc>} {
    %c0 = arith.constant 0 : index
    %c0_0 = arith.constant 0 : index
    %c0_1 = arith.constant 0 : index
    %0 = vector.load %arg0[%c0, %c0_0, %c0_1] : memref<8x8x128xf32, #tpu.memory_space<vmem>>, vector<8x8x128xf32>
    %1 = vector.shape_cast %0 : vector<8x8x128xf32> to vector<64x128xf32>
    %2 = arith.truncf %1 : vector<64x128xf32> to vector<64x128xbf16>
    %c0_2 = arith.constant 0 : index
    %c0_3 = arith.constant 0 : index
    %3 = vector.load %arg1[%c0_2, %c0_3] : memref<128x512xbf16, #tpu.memory_space<vmem>>, vector<128x512xbf16>
    %cst = arith.constant dense<0.000000e+00> : vector<64x512xf32>
    %4 = tpu.matmul %2, %3, %cst {dimension_numbers = #tpu.dot_dimension_numbers<[1], [0], [0], [1], [0, 0, 1, 1], [], []>} : vector<64x128xbf16>, vector<128x512xbf16>, vector<64x512xf32> -> vector<64x512xf32>
    %c0_4 = arith.constant 0 : index
    %c0_5 = arith.constant 0 : index
    %5 = vector.load %arg3[%c0_4, %c0_5] : memref<1x512xf32, #tpu.memory_space<vmem>>, vector<1x512xf32>
    %6 = vector.broadcast %5 : vector<1x512xf32> to vector<64x512xf32>
    %7 = arith.addf %4, %6 : vector<64x512xf32>
    %c0_6 = arith.constant 0 : index
    %c0_7 = arith.constant 0 : index
    %8 = vector.load %arg10[%c0_6, %c0_7] : memref<64x512xf32, #tpu.memory_space<vmem>>, vector<64x512xf32>
    tpu.vector_store %arg10[%c0_6, %c0_7], %7 {strides = array<i32>} : memref<64x512xf32, #tpu.memory_space<vmem>>, vector<64x512xf32>,
    %c0_8 = arith.constant 0 : index
    %c0_9 = arith.constant 0 : index
    %9 = vector.load %arg6[%c0_8, %c0_9] : memref<1x512xf32, #tpu.memory_space<vmem>>, vector<1x512xf32>
    %10 = vector.shape_cast %9 : vector<1x512xf32> to vector<1x512xf32>
    %11 = vector.broadcast %10 : vector<1x512xf32> to vector<8x512xf32>
    %cst_10 = arith.constant 0.000000e+00 : f32
    %12 = vector.broadcast %cst_10 : f32 to vector<8x128xf32>
    %c0_11 = arith.constant 0 : index
    %c0_12 = arith.constant 0 : index
    %13 = vector.load %arg10[%c0_11, %c0_12] : memref<64x512xf32, #tpu.memory_space<vmem>>, vector<8x512xf32>
    %14 = math.tanh %13 : vector<8x512xf32>
    %15 = vector.extract_strided_slice %14 {offsets = [0, 0], sizes = [8, 128], strides = [1, 1]} : vector<8x512xf32> to vector<8x128xf32>
    %cst_13 = arith.constant 5.000000e-01 : f32
    %16 = vector.broadcast %cst_13 : f32 to vector<8x128xf32>
    %17 = arith.mulf %16, %15 : vector<8x128xf32>
    %cst_14 = arith.constant 5.000000e-01 : f32
    %18 = vector.broadcast %cst_14 : f32 to vector<8x128xf32>
    %19 = arith.addf %17, %18 : vector<8x128xf32>
    %20 = vector.extract_strided_slice %14 {offsets = [0, 128], sizes = [8, 128], strides = [1, 1]} : vector<8x512xf32> to vector<8x128xf32>
    %cst_15 = arith.constant 5.000000e-01 : f32
    %21 = vector.broadcast %cst_15 : f32 to vector<8x128xf32>
    %22 = arith.mulf %21, %20 : vector<8x128xf32>
    %cst_16 = arith.constant 5.000000e-01 : f32
    %23 = vector.broadcast %cst_16 : f32 to vector<8x128xf32>
    %24 = arith.addf %22, %23 : vector<8x128xf32>
    %25 = vector.extract_strided_slice %14 {offsets = [0, 256], sizes = [8, 128], strides = [1, 1]} : vector<8x512xf32> to vector<8x128xf32>
    %26 = vector.extract_strided_slice %14 {offsets = [0, 384], sizes = [8, 128], strides = [1, 1]} : vector<8x512xf32> to vector<8x128xf32>
    %cst_17 = arith.constant 5.000000e-01 : f32
    %27 = vector.broadcast %cst_17 : f32 to vector<8x128xf32>
    %28 = arith.mulf %27, %26 : vector<8x128xf32>
    %cst_18 = arith.constant 5.000000e-01 : f32
    %29 = vector.broadcast %cst_18 : f32 to vector<8x128xf32>
    %30 = arith.addf %28, %29 : vector<8x128xf32>
    %31 = arith.mulf %24, %12 : vector<8x128xf32>
    %32 = arith.mulf %19, %25 : vector<8x128xf32>
    %33 = arith.addf %31, %32 : vector<8x128xf32>
    %34 = math.tanh %33 : vector<8x128xf32>
    %35 = arith.mulf %30, %34 : vector<8x128xf32>
    %c1_i32 = arith.constant 1 : i32
    %c8_i32 = arith.constant 8 : i32
    %36 = arith.muli %c1_i32, %c8_i32 : i32
    %37 = tpu.assume_multiple %36, 8 : i32
    %38 = arith.index_cast %37 : i32 to index
    %c0_19 = arith.constant 0 : index
    %39 = vector.load %arg10[%38, %c0_19] : memref<64x512xf32, #tpu.memory_space<vmem>>, vector<8x512xf32>
    %40 = arith.truncf %35 : vector<8x128xf32> to vector<8x128xbf16>
    %c0_20 = arith.constant 0 : index
    %c0_21 = arith.constant 0 : index
    %41 = vector.load %arg2[%c0_20, %c0_21] : memref<128x512xbf16, #tpu.memory_space<vmem>>, vector<128x512xbf16>
    %cst_22 = arith.constant dense<0.000000e+00> : vector<8x512xf32>
    %42 = tpu.matmul %40, %41, %cst_22 {dimension_numbers = #tpu.dot_dimension_numbers<[1], [0], [0], [1], [0, 0, 1, 1], [], []>} : vector<8x128xbf16>, vector<128x512xbf16>, vector<8x512xf32> -> vector<8x512xf32>
    %43 = arith.addf %39, %42 : vector<8x512xf32>
    %44 = math.tanh %43 : vector<8x512xf32>
    %45 = vector.extract_strided_slice %44 {offsets = [0, 0], sizes = [8, 128], strides = [1, 1]} : vector<8x512xf32> to vector<8x128xf32>
    %cst_23 = arith.constant 5.000000e-01 : f32
    %46 = vector.broadcast %cst_23 : f32 to vector<8x128xf32>
    %47 = arith.mulf %46, %45 : vector<8x128xf32>
    %cst_24 = arith.constant 5.000000e-01 : f32
    %48 = vector.broadcast %cst_24 : f32 to vector<8x128xf32>
    %49 = arith.addf %47, %48 : vector<8x128xf32>
    %50 = vector.extract_strided_slice %44 {offsets = [0, 128], sizes = [8, 128], strides = [1, 1]} : vector<8x512xf32> to vector<8x128xf32>
    %cst_25 = arith.constant 5.000000e-01 : f32
    %51 = vector.broadcast %cst_25 : f32 to vector<8x128xf32>
    %52 = arith.mulf %51, %50 : vector<8x128xf32>
    %cst_26 = arith.constant 5.000000e-01 : f32
    %53 = vector.broadcast %cst_26 : f32 to vector<8x128xf32>
    %54 = arith.addf %52, %53 : vector<8x128xf32>
    %55 = vector.extract_strided_slice %44 {offsets = [0, 256], sizes = [8, 128], strides = [1, 1]} : vector<8x512xf32> to vector<8x128xf32>
    %56 = vector.extract_strided_slice %44 {offsets = [0, 384], sizes = [8, 128], strides = [1, 1]} : vector<8x512xf32> to vector<8x128xf32>
    %cst_27 = arith.constant 5.000000e-01 : f32
    %57 = vector.broadcast %cst_27 : f32 to vector<8x128xf32>
    %58 = arith.mulf %57, %56 : vector<8x128xf32>
    %cst_28 = arith.constant 5.000000e-01 : f32
    %59 = vector.broadcast %cst_28 : f32 to vector<8x128xf32>
    %60 = arith.addf %58, %59 : vector<8x128xf32>
    %61 = arith.mulf %54, %33 : vector<8x128xf32>
    %62 = arith.mulf %49, %55 : vector<8x128xf32>
    %63 = arith.addf %61, %62 : vector<8x128xf32>
    %64 = math.tanh %63 : vector<8x128xf32>
    %65 = arith.mulf %60, %64 : vector<8x128xf32>
    %66 = arith.truncf %35 : vector<8x128xf32> to vector<8x128xbf16>
    %c0_29 = arith.constant 0 : index
    %c0_30 = arith.constant 0 : index
    %67 = vector.load %arg4[%c0_29, %c0_30] : memref<128x512xbf16, #tpu.memory_space<vmem>>, vector<128x512xbf16>
    %cst_31 = arith.constant dense<0.000000e+00> : vector<8x512xf32>
    %68 = tpu.matmul %66, %67, %cst_31 {dimension_numbers = #tpu.dot_dimension_numbers<[1], [0], [0], [1], [0, 0, 1, 1], [], []>} : vector<8x128xbf16>, vector<128x512xbf16>, vector<8x512xf32> -> vector<8x512xf32>
    %69 = arith.addf %11, %68 : vector<8x512xf32>
    %70 = arith.truncf %12 : vector<8x128xf32> to vector<8x128xbf16>
    %c0_32 = arith.constant 0 : index
    %c0_33 = arith.constant 0 : index
    %71 = vector.load %arg5[%c0_32, %c0_33] : memref<128x512xbf16, #tpu.memory_space<vmem>>, vector<128x512xbf16>
    %cst_34 = arith.constant dense<0.000000e+00> : vector<8x512xf32>
    %72 = tpu.matmul %70, %71, %cst_34 {dimension_numbers = #tpu.dot_dimension_numbers<[1], [0], [0], [1], [0, 0, 1, 1], [], []>} : vector<8x128xbf16>, vector<128x512xbf16>, vector<8x512xf32> -> vector<8x512xf32>
    %73 = arith.addf %69, %72 : vector<8x512xf32>
    %74 = math.tanh %73 : vector<8x512xf32>
    %75 = vector.extract_strided_slice %74 {offsets = [0, 0], sizes = [8, 128], strides = [1, 1]} : vector<8x512xf32> to vector<8x128xf32>
    %cst_35 = arith.constant 5.000000e-01 : f32
    %76 = vector.broadcast %cst_35 : f32 to vector<8x128xf32>
    %77 = arith.mulf %76, %75 : vector<8x128xf32>
    %cst_36 = arith.constant 5.000000e-01 : f32
    %78 = vector.broadcast %cst_36 : f32 to vector<8x128xf32>
    %79 = arith.addf %77, %78 : vector<8x128xf32>
    %80 = vector.extract_strided_slice %74 {offsets = [0, 128], sizes = [8, 128], strides = [1, 1]} : vector<8x512xf32> to vector<8x128xf32>
    %cst_37 = arith.constant 5.000000e-01 : f32
    %81 = vector.broadcast %cst_37 : f32 to vector<8x128xf32>
    %82 = arith.mulf %81, %80 : vector<8x128xf32>
    %cst_38 = arith.constant 5.000000e-01 : f32
    %83 = vector.broadcast %cst_38 : f32 to vector<8x128xf32>
    %84 = arith.addf %82, %83 : vector<8x128xf32>
    %85 = vector.extract_strided_slice %74 {offsets = [0, 256], sizes = [8, 128], strides = [1, 1]} : vector<8x512xf32> to vector<8x128xf32>
    %86 = vector.extract_strided_slice %74 {offsets = [0, 384], sizes = [8, 128], strides = [1, 1]} : vector<8x512xf32> to vector<8x128xf32>
    %cst_39 = arith.constant 5.000000e-01 : f32
    %87 = vector.broadcast %cst_39 : f32 to vector<8x128xf32>
    %88 = arith.mulf %87, %86 : vector<8x128xf32>
    %cst_40 = arith.constant 5.000000e-01 : f32
    %89 = vector.broadcast %cst_40 : f32 to vector<8x128xf32>
    %90 = arith.addf %88, %89 : vector<8x128xf32>
    %91 = arith.mulf %84, %12 : vector<8x128xf32>
    %92 = arith.mulf %79, %85 : vector<8x128xf32>
    %93 = arith.addf %91, %92 : vector<8x128xf32>
    %94 = math.tanh %93 : vector<8x128xf32>
    %95 = arith.mulf %90, %94 : vector<8x128xf32>
    %96 = vector.extract_strided_slice %95 {offsets = [7, 0], sizes = [1, 128], strides = [1, 1]} : vector<8x128xf32> to vector<1x128xf32>
    %c1_i32_41 = arith.constant 1 : i32
    %97 = arith.subi %c1_i32, %c1_i32_41 : i32
    %98 = arith.index_cast %97 : i32 to index
    %c0_42 = arith.constant 0 : index
    %99 = vector.load %arg11[%98, %c0_42] : memref<8x128xf32, #tpu.memory_space<vmem>>, vector<1x128xf32>
    tpu.vector_store %arg11[%98, %c0_42], %96 {strides = array<i32>} : memref<8x128xf32, #tpu.memory_space<vmem>>, vector<1x128xf32>,
    %c2_i32 = arith.constant 2 : i32
    %c8_i32_43 = arith.constant 8 : i32
    %100 = arith.muli %c2_i32, %c8_i32_43 : i32
    %101 = tpu.assume_multiple %100, 8 : i32
    %102 = arith.index_cast %101 : i32 to index
    %c0_44 = arith.constant 0 : index
    %103 = vector.load %arg10[%102, %c0_44] : memref<64x512xf32, #tpu.memory_space<vmem>>, vector<8x512xf32>
    %104 = arith.truncf %65 : vector<8x128xf32> to vector<8x128xbf16>
    %c0_45 = arith.constant 0 : index
    %c0_46 = arith.constant 0 : index
    %105 = vector.load %arg2[%c0_45, %c0_46] : memref<128x512xbf16, #tpu.memory_space<vmem>>, vector<128x512xbf16>
    %cst_47 = arith.constant dense<0.000000e+00> : vector<8x512xf32>
    %106 = tpu.matmul %104, %105, %cst_47 {dimension_numbers = #tpu.dot_dimension_numbers<[1], [0], [0], [1], [0, 0, 1, 1], [], []>} : vector<8x128xbf16>, vector<128x512xbf16>, vector<8x512xf32> -> vector<8x512xf32>
    %107 = arith.addf %103, %106 : vector<8x512xf32>
    %108 = math.tanh %107 : vector<8x512xf32>
    %109 = vector.extract_strided_slice %108 {offsets = [0, 0], sizes = [8, 128], strides = [1, 1]} : vector<8x512xf32> to vector<8x128xf32>
    %cst_48 = arith.constant 5.000000e-01 : f32
    %110 = vector.broadcast %cst_48 : f32 to vector<8x128xf32>
    %111 = arith.mulf %110, %109 : vector<8x128xf32>
    %cst_49 = arith.constant 5.000000e-01 : f32
    %112 = vector.broadcast %cst_49 : f32 to vector<8x128xf32>
    %113 = arith.addf %111, %112 : vector<8x128xf32>
    %114 = vector.extract_strided_slice %108 {offsets = [0, 128], sizes = [8, 128], strides = [1, 1]} : vector<8x512xf32> to vector<8x128xf32>
    %cst_50 = arith.constant 5.000000e-01 : f32
    %115 = vector.broadcast %cst_50 : f32 to vector<8x128xf32>
    %116 = arith.mulf %115, %114 : vector<8x128xf32>
    %cst_51 = arith.constant 5.000000e-01 : f32
    %117 = vector.broadcast %cst_51 : f32 to vector<8x128xf32>
    %118 = arith.addf %116, %117 : vector<8x128xf32>
    %119 = vector.extract_strided_slice %108 {offsets = [0, 256], sizes = [8, 128], strides = [1, 1]} : vector<8x512xf32> to vector<8x128xf32>
    %120 = vector.extract_strided_slice %108 {offsets = [0, 384], sizes = [8, 128], strides = [1, 1]} : vector<8x512xf32> to vector<8x128xf32>
    %cst_52 = arith.constant 5.000000e-01 : f32
    %121 = vector.broadcast %cst_52 : f32 to vector<8x128xf32>
    %122 = arith.mulf %121, %120 : vector<8x128xf32>
    %cst_53 = arith.constant 5.000000e-01 : f32
    %123 = vector.broadcast %cst_53 : f32 to vector<8x128xf32>
    %124 = arith.addf %122, %123 : vector<8x128xf32>
    %125 = arith.mulf %118, %63 : vector<8x128xf32>
    %126 = arith.mulf %113, %119 : vector<8x128xf32>
    %127 = arith.addf %125, %126 : vector<8x128xf32>
    %128 = math.tanh %127 : vector<8x128xf32>
    %129 = arith.mulf %124, %128 : vector<8x128xf32>
    %130 = arith.truncf %65 : vector<8x128xf32> to vector<8x128xbf16>
    %c0_54 = arith.constant 0 : index
    %c0_55 = arith.constant 0 : index
    %131 = vector.load %arg4[%c0_54, %c0_55] : memref<128x512xbf16, #tpu.memory_space<vmem>>, vector<128x512xbf16>
    %cst_56 = arith.constant dense<0.000000e+00> : vector<8x512xf32>
    %132 = tpu.matmul %130, %131, %cst_56 {dimension_numbers = #tpu.dot_dimension_numbers<[1], [0], [0], [1], [0, 0, 1, 1], [], []>} : vector<8x128xbf16>, vector<128x512xbf16>, vector<8x512xf32> -> vector<8x512xf32>
    %133 = arith.addf %11, %132 : vector<8x512xf32>
    %134 = arith.truncf %95 : vector<8x128xf32> to vector<8x128xbf16>
    %c0_57 = arith.constant 0 : index
    %c0_58 = arith.constant 0 : index
    %135 = vector.load %arg5[%c0_57, %c0_58] : memref<128x512xbf16, #tpu.memory_space<vmem>>, vector<128x512xbf16>
    %cst_59 = arith.constant dense<0.000000e+00> : vector<8x512xf32>
    %136 = tpu.matmul %134, %135, %cst_59 {dimension_numbers = #tpu.dot_dimension_numbers<[1], [0], [0], [1], [0, 0, 1, 1], [], []>} : vector<8x128xbf16>, vector<128x512xbf16>, vector<8x512xf32> -> vector<8x512xf32>
    %137 = arith.addf %133, %136 : vector<8x512xf32>
    %138 = math.tanh %137 : vector<8x512xf32>
    %139 = vector.extract_strided_slice %138 {offsets = [0, 0], sizes = [8, 128], strides = [1, 1]} : vector<8x512xf32> to vector<8x128xf32>
    %cst_60 = arith.constant 5.000000e-01 : f32
    %140 = vector.broadcast %cst_60 : f32 to vector<8x128xf32>
    %141 = arith.mulf %140, %139 : vector<8x128xf32>
    %cst_61 = arith.constant 5.000000e-01 : f32
    %142 = vector.broadcast %cst_61 : f32 to vector<8x128xf32>
    %143 = arith.addf %141, %142 : vector<8x128xf32>
    %144 = vector.extract_strided_slice %138 {offsets = [0, 128], sizes = [8, 128], strides = [1, 1]} : vector<8x512xf32> to vector<8x128xf32>
    %cst_62 = arith.constant 5.000000e-01 : f32
    %145 = vector.broadcast %cst_62 : f32 to vector<8x128xf32>
    %146 = arith.mulf %145, %144 : vector<8x128xf32>
    %cst_63 = arith.constant 5.000000e-01 : f32
    %147 = vector.broadcast %cst_63 : f32 to vector<8x128xf32>
    %148 = arith.addf %146, %147 : vector<8x128xf32>
    %149 = vector.extract_strided_slice %138 {offsets = [0, 256], sizes = [8, 128], strides = [1, 1]} : vector<8x512xf32> to vector<8x128xf32>
    %150 = vector.extract_strided_slice %138 {offsets = [0, 384], sizes = [8, 128], strides = [1, 1]} : vector<8x512xf32> to vector<8x128xf32>
    %cst_64 = arith.constant 5.000000e-01 : f32
    %151 = vector.broadcast %cst_64 : f32 to vector<8x128xf32>
    %152 = arith.mulf %151, %150 : vector<8x128xf32>
    %cst_65 = arith.constant 5.000000e-01 : f32
    %153 = vector.broadcast %cst_65 : f32 to vector<8x128xf32>
    %154 = arith.addf %152, %153 : vector<8x128xf32>
    %155 = arith.mulf %148, %93 : vector<8x128xf32>
    %156 = arith.mulf %143, %149 : vector<8x128xf32>
    %157 = arith.addf %155, %156 : vector<8x128xf32>
    %158 = math.tanh %157 : vector<8x128xf32>
    %159 = arith.mulf %154, %158 : vector<8x128xf32>
    %160 = vector.extract_strided_slice %159 {offsets = [7, 0], sizes = [1, 128], strides = [1, 1]} : vector<8x128xf32> to vector<1x128xf32>
    %c1_i32_66 = arith.constant 1 : i32
    %161 = arith.subi %c2_i32, %c1_i32_66 : i32
    %162 = arith.index_cast %161 : i32 to index
    %c0_67 = arith.constant 0 : index
    %163 = vector.load %arg11[%162, %c0_67] : memref<8x128xf32, #tpu.memory_space<vmem>>, vector<1x128xf32>
    tpu.vector_store %arg11[%162, %c0_67], %160 {strides = array<i32>} : memref<8x128xf32, #tpu.memory_space<vmem>>, vector<1x128xf32>,
    %c3_i32 = arith.constant 3 : i32
    %c8_i32_68 = arith.constant 8 : i32
    %164 = arith.muli %c3_i32, %c8_i32_68 : i32
    %165 = tpu.assume_multiple %164, 8 : i32
    %166 = arith.index_cast %165 : i32 to index
    %c0_69 = arith.constant 0 : index
    %167 = vector.load %arg10[%166, %c0_69] : memref<64x512xf32, #tpu.memory_space<vmem>>, vector<8x512xf32>
    %168 = arith.truncf %129 : vector<8x128xf32> to vector<8x128xbf16>
    %c0_70 = arith.constant 0 : index
    %c0_71 = arith.constant 0 : index
    %169 = vector.load %arg2[%c0_70, %c0_71] : memref<128x512xbf16, #tpu.memory_space<vmem>>, vector<128x512xbf16>
    %cst_72 = arith.constant dense<0.000000e+00> : vector<8x512xf32>
    %170 = tpu.matmul %168, %169, %cst_72 {dimension_numbers = #tpu.dot_dimension_numbers<[1], [0], [0], [1], [0, 0, 1, 1], [], []>} : vector<8x128xbf16>, vector<128x512xbf16>, vector<8x512xf32> -> vector<8x512xf32>
    %171 = arith.addf %167, %170 : vector<8x512xf32>
    %172 = math.tanh %171 : vector<8x512xf32>
    %173 = vector.extract_strided_slice %172 {offsets = [0, 0], sizes = [8, 128], strides = [1, 1]} : vector<8x512xf32> to vector<8x128xf32>
    %cst_73 = arith.constant 5.000000e-01 : f32
    %174 = vector.broadcast %cst_73 : f32 to vector<8x128xf32>
    %175 = arith.mulf %174, %173 : vector<8x128xf32>
    %cst_74 = arith.constant 5.000000e-01 : f32
    %176 = vector.broadcast %cst_74 : f32 to vector<8x128xf32>
    %177 = arith.addf %175, %176 : vector<8x128xf32>
    %178 = vector.extract_strided_slice %172 {offsets = [0, 128], sizes = [8, 128], strides = [1, 1]} : vector<8x512xf32> to vector<8x128xf32>
    %cst_75 = arith.constant 5.000000e-01 : f32
    %179 = vector.broadcast %cst_75 : f32 to vector<8x128xf32>
    %180 = arith.mulf %179, %178 : vector<8x128xf32>
    %cst_76 = arith.constant 5.000000e-01 : f32
    %181 = vector.broadcast %cst_76 : f32 to vector<8x128xf32>
    %182 = arith.addf %180, %181 : vector<8x128xf32>
    %183 = vector.extract_strided_slice %172 {offsets = [0, 256], sizes = [8, 128], strides = [1, 1]} : vector<8x512xf32> to vector<8x128xf32>
    %184 = vector.extract_strided_slice %172 {offsets = [0, 384], sizes = [8, 128], strides = [1, 1]} : vector<8x512xf32> to vector<8x128xf32>
    %cst_77 = arith.constant 5.000000e-01 : f32
    %185 = vector.broadcast %cst_77 : f32 to vector<8x128xf32>
    %186 = arith.mulf %185, %184 : vector<8x128xf32>
    %cst_78 = arith.constant 5.000000e-01 : f32
    %187 = vector.broadcast %cst_78 : f32 to vector<8x128xf32>
    %188 = arith.addf %186, %187 : vector<8x128xf32>
    %189 = arith.mulf %182, %127 : vector<8x128xf32>
    %190 = arith.mulf %177, %183 : vector<8x128xf32>
    %191 = arith.addf %189, %190 : vector<8x128xf32>
    %192 = math.tanh %191 : vector<8x128xf32>
    %193 = arith.mulf %188, %192 : vector<8x128xf32>
    %194 = arith.truncf %129 : vector<8x128xf32> to vector<8x128xbf16>
    %c0_79 = arith.constant 0 : index
    %c0_80 = arith.constant 0 : index
    %195 = vector.load %arg4[%c0_79, %c0_80] : memref<128x512xbf16, #tpu.memory_space<vmem>>, vector<128x512xbf16>
    %cst_81 = arith.constant dense<0.000000e+00> : vector<8x512xf32>
    %196 = tpu.matmul %194, %195, %cst_81 {dimension_numbers = #tpu.dot_dimension_numbers<[1], [0], [0], [1], [0, 0, 1, 1], [], []>} : vector<8x128xbf16>, vector<128x512xbf16>, vector<8x512xf32> -> vector<8x512xf32>
    %197 = arith.addf %11, %196 : vector<8x512xf32>
    %198 = arith.truncf %159 : vector<8x128xf32> to vector<8x128xbf16>
    %c0_82 = arith.constant 0 : index
    %c0_83 = arith.constant 0 : index
    %199 = vector.load %arg5[%c0_82, %c0_83] : memref<128x512xbf16, #tpu.memory_space<vmem>>, vector<128x512xbf16>
    %cst_84 = arith.constant dense<0.000000e+00> : vector<8x512xf32>
    %200 = tpu.matmul %198, %199, %cst_84 {dimension_numbers = #tpu.dot_dimension_numbers<[1], [0], [0], [1], [0, 0, 1, 1], [], []>} : vector<8x128xbf16>, vector<128x512xbf16>, vector<8x512xf32> -> vector<8x512xf32>
    %201 = arith.addf %197, %200 : vector<8x512xf32>
    %202 = math.tanh %201 : vector<8x512xf32>
    %203 = vector.extract_strided_slice %202 {offsets = [0, 0], sizes = [8, 128], strides = [1, 1]} : vector<8x512xf32> to vector<8x128xf32>
    %cst_85 = arith.constant 5.000000e-01 : f32
    %204 = vector.broadcast %cst_85 : f32 to vector<8x128xf32>
    %205 = arith.mulf %204, %203 : vector<8x128xf32>
    %cst_86 = arith.constant 5.000000e-01 : f32
    %206 = vector.broadcast %cst_86 : f32 to vector<8x128xf32>
    %207 = arith.addf %205, %206 : vector<8x128xf32>
    %208 = vector.extract_strided_slice %202 {offsets = [0, 128], sizes = [8, 128], strides = [1, 1]} : vector<8x512xf32> to vector<8x128xf32>
    %cst_87 = arith.constant 5.000000e-01 : f32
    %209 = vector.broadcast %cst_87 : f32 to vector<8x128xf32>
    %210 = arith.mulf %209, %208 : vector<8x128xf32>
    %cst_88 = arith.constant 5.000000e-01 : f32
    %211 = vector.broadcast %cst_88 : f32 to vector<8x128xf32>
    %212 = arith.addf %210, %211 : vector<8x128xf32>
    %213 = vector.extract_strided_slice %202 {offsets = [0, 256], sizes = [8, 128], strides = [1, 1]} : vector<8x512xf32> to vector<8x128xf32>
    %214 = vector.extract_strided_slice %202 {offsets = [0, 384], sizes = [8, 128], strides = [1, 1]} : vector<8x512xf32> to vector<8x128xf32>
    %cst_89 = arith.constant 5.000000e-01 : f32
    %215 = vector.broadcast %cst_89 : f32 to vector<8x128xf32>
    %216 = arith.mulf %215, %214 : vector<8x128xf32>
    %cst_90 = arith.constant 5.000000e-01 : f32
    %217 = vector.broadcast %cst_90 : f32 to vector<8x128xf32>
    %218 = arith.addf %216, %217 : vector<8x128xf32>
    %219 = arith.mulf %212, %157 : vector<8x128xf32>
    %220 = arith.mulf %207, %213 : vector<8x128xf32>
    %221 = arith.addf %219, %220 : vector<8x128xf32>
    %222 = math.tanh %221 : vector<8x128xf32>
    %223 = arith.mulf %218, %222 : vector<8x128xf32>
    %224 = vector.extract_strided_slice %223 {offsets = [7, 0], sizes = [1, 128], strides = [1, 1]} : vector<8x128xf32> to vector<1x128xf32>
    %c1_i32_91 = arith.constant 1 : i32
    %225 = arith.subi %c3_i32, %c1_i32_91 : i32
    %226 = arith.index_cast %225 : i32 to index
    %c0_92 = arith.constant 0 : index
    %227 = vector.load %arg11[%226, %c0_92] : memref<8x128xf32, #tpu.memory_space<vmem>>, vector<1x128xf32>
    tpu.vector_store %arg11[%226, %c0_92], %224 {strides = array<i32>} : memref<8x128xf32, #tpu.memory_space<vmem>>, vector<1x128xf32>,
    %c4_i32 = arith.constant 4 : i32
    %c8_i32_93 = arith.constant 8 : i32
    %228 = arith.muli %c4_i32, %c8_i32_93 : i32
    %229 = tpu.assume_multiple %228, 8 : i32
    %230 = arith.index_cast %229 : i32 to index
    %c0_94 = arith.constant 0 : index
    %231 = vector.load %arg10[%230, %c0_94] : memref<64x512xf32, #tpu.memory_space<vmem>>, vector<8x512xf32>
    %232 = arith.truncf %193 : vector<8x128xf32> to vector<8x128xbf16>
    %c0_95 = arith.constant 0 : index
    %c0_96 = arith.constant 0 : index
    %233 = vector.load %arg2[%c0_95, %c0_96] : memref<128x512xbf16, #tpu.memory_space<vmem>>, vector<128x512xbf16>
    %cst_97 = arith.constant dense<0.000000e+00> : vector<8x512xf32>
    %234 = tpu.matmul %232, %233, %cst_97 {dimension_numbers = #tpu.dot_dimension_numbers<[1], [0], [0], [1], [0, 0, 1, 1], [], []>} : vector<8x128xbf16>, vector<128x512xbf16>, vector<8x512xf32> -> vector<8x512xf32>
    %235 = arith.addf %231, %234 : vector<8x512xf32>
    %236 = math.tanh %235 : vector<8x512xf32>
    %237 = vector.extract_strided_slice %236 {offsets = [0, 0], sizes = [8, 128], strides = [1, 1]} : vector<8x512xf32> to vector<8x128xf32>
    %cst_98 = arith.constant 5.000000e-01 : f32
    %238 = vector.broadcast %cst_98 : f32 to vector<8x128xf32>
    %239 = arith.mulf %238, %237 : vector<8x128xf32>
    %cst_99 = arith.constant 5.000000e-01 : f32
    %240 = vector.broadcast %cst_99 : f32 to vector<8x128xf32>
    %241 = arith.addf %239, %240 : vector<8x128xf32>
    %242 = vector.extract_strided_slice %236 {offsets = [0, 128], sizes = [8, 128], strides = [1, 1]} : vector<8x512xf32> to vector<8x128xf32>
    %cst_100 = arith.constant 5.000000e-01 : f32
    %243 = vector.broadcast %cst_100 : f32 to vector<8x128xf32>
    %244 = arith.mulf %243, %242 : vector<8x128xf32>
    %cst_101 = arith.constant 5.000000e-01 : f32
    %245 = vector.broadcast %cst_101 : f32 to vector<8x128xf32>
    %246 = arith.addf %244, %245 : vector<8x128xf32>
    %247 = vector.extract_strided_slice %236 {offsets = [0, 256], sizes = [8, 128], strides = [1, 1]} : vector<8x512xf32> to vector<8x128xf32>
    %248 = vector.extract_strided_slice %236 {offsets = [0, 384], sizes = [8, 128], strides = [1, 1]} : vector<8x512xf32> to vector<8x128xf32>
    %cst_102 = arith.constant 5.000000e-01 : f32
    %249 = vector.broadcast %cst_102 : f32 to vector<8x128xf32>
    %250 = arith.mulf %249, %248 : vector<8x128xf32>
    %cst_103 = arith.constant 5.000000e-01 : f32
    %251 = vector.broadcast %cst_103 : f32 to vector<8x128xf32>
    %252 = arith.addf %250, %251 : vector<8x128xf32>
    %253 = arith.mulf %246, %191 : vector<8x128xf32>
    %254 = arith.mulf %241, %247 : vector<8x128xf32>
    %255 = arith.addf %253, %254 : vector<8x128xf32>
    %256 = math.tanh %255 : vector<8x128xf32>
    %257 = arith.mulf %252, %256 : vector<8x128xf32>
    %258 = arith.truncf %193 : vector<8x128xf32> to vector<8x128xbf16>
    %c0_104 = arith.constant 0 : index
    %c0_105 = arith.constant 0 : index
    %259 = vector.load %arg4[%c0_104, %c0_105] : memref<128x512xbf16, #tpu.memory_space<vmem>>, vector<128x512xbf16>
    %cst_106 = arith.constant dense<0.000000e+00> : vector<8x512xf32>
    %260 = tpu.matmul %258, %259, %cst_106 {dimension_numbers = #tpu.dot_dimension_numbers<[1], [0], [0], [1], [0, 0, 1, 1], [], []>} : vector<8x128xbf16>, vector<128x512xbf16>, vector<8x512xf32> -> vector<8x512xf32>
    %261 = arith.addf %11, %260 : vector<8x512xf32>
    %262 = arith.truncf %223 : vector<8x128xf32> to vector<8x128xbf16>
    %c0_107 = arith.constant 0 : index
    %c0_108 = arith.constant 0 : index
    %263 = vector.load %arg5[%c0_107, %c0_108] : memref<128x512xbf16, #tpu.memory_space<vmem>>, vector<128x512xbf16>
    %cst_109 = arith.constant dense<0.000000e+00> : vector<8x512xf32>
    %264 = tpu.matmul %262, %263, %cst_109 {dimension_numbers = #tpu.dot_dimension_numbers<[1], [0], [0], [1], [0, 0, 1, 1], [], []>} : vector<8x128xbf16>, vector<128x512xbf16>, vector<8x512xf32> -> vector<8x512xf32>
    %265 = arith.addf %261, %264 : vector<8x512xf32>
    %266 = math.tanh %265 : vector<8x512xf32>
    %267 = vector.extract_strided_slice %266 {offsets = [0, 0], sizes = [8, 128], strides = [1, 1]} : vector<8x512xf32> to vector<8x128xf32>
    %cst_110 = arith.constant 5.000000e-01 : f32
    %268 = vector.broadcast %cst_110 : f32 to vector<8x128xf32>
    %269 = arith.mulf %268, %267 : vector<8x128xf32>
    %cst_111 = arith.constant 5.000000e-01 : f32
    %270 = vector.broadcast %cst_111 : f32 to vector<8x128xf32>
    %271 = arith.addf %269, %270 : vector<8x128xf32>
    %272 = vector.extract_strided_slice %266 {offsets = [0, 128], sizes = [8, 128], strides = [1, 1]} : vector<8x512xf32> to vector<8x128xf32>
    %cst_112 = arith.constant 5.000000e-01 : f32
    %273 = vector.broadcast %cst_112 : f32 to vector<8x128xf32>
    %274 = arith.mulf %273, %272 : vector<8x128xf32>
    %cst_113 = arith.constant 5.000000e-01 : f32
    %275 = vector.broadcast %cst_113 : f32 to vector<8x128xf32>
    %276 = arith.addf %274, %275 : vector<8x128xf32>
    %277 = vector.extract_strided_slice %266 {offsets = [0, 256], sizes = [8, 128], strides = [1, 1]} : vector<8x512xf32> to vector<8x128xf32>
    %278 = vector.extract_strided_slice %266 {offsets = [0, 384], sizes = [8, 128], strides = [1, 1]} : vector<8x512xf32> to vector<8x128xf32>
    %cst_114 = arith.constant 5.000000e-01 : f32
    %279 = vector.broadcast %cst_114 : f32 to vector<8x128xf32>
    %280 = arith.mulf %279, %278 : vector<8x128xf32>
    %cst_115 = arith.constant 5.000000e-01 : f32
    %281 = vector.broadcast %cst_115 : f32 to vector<8x128xf32>
    %282 = arith.addf %280, %281 : vector<8x128xf32>
    %283 = arith.mulf %276, %221 : vector<8x128xf32>
    %284 = arith.mulf %271, %277 : vector<8x128xf32>
    %285 = arith.addf %283, %284 : vector<8x128xf32>
    %286 = math.tanh %285 : vector<8x128xf32>
    %287 = arith.mulf %282, %286 : vector<8x128xf32>
    %288 = vector.extract_strided_slice %287 {offsets = [7, 0], sizes = [1, 128], strides = [1, 1]} : vector<8x128xf32> to vector<1x128xf32>
    %c1_i32_116 = arith.constant 1 : i32
    %289 = arith.subi %c4_i32, %c1_i32_116 : i32
    %290 = arith.index_cast %289 : i32 to index
    %c0_117 = arith.constant 0 : index
    %291 = vector.load %arg11[%290, %c0_117] : memref<8x128xf32, #tpu.memory_space<vmem>>, vector<1x128xf32>
    tpu.vector_store %arg11[%290, %c0_117], %288 {strides = array<i32>} : memref<8x128xf32, #tpu.memory_space<vmem>>, vector<1x128xf32>,
    %c5_i32 = arith.constant 5 : i32
    %c8_i32_118 = arith.constant 8 : i32
    %292 = arith.muli %c5_i32, %c8_i32_118 : i32
    %293 = tpu.assume_multiple %292, 8 : i32
    %294 = arith.index_cast %293 : i32 to index
    %c0_119 = arith.constant 0 : index
    %295 = vector.load %arg10[%294, %c0_119] : memref<64x512xf32, #tpu.memory_space<vmem>>, vector<8x512xf32>
    %296 = arith.truncf %257 : vector<8x128xf32> to vector<8x128xbf16>
    %c0_120 = arith.constant 0 : index
    %c0_121 = arith.constant 0 : index
    %297 = vector.load %arg2[%c0_120, %c0_121] : memref<128x512xbf16, #tpu.memory_space<vmem>>, vector<128x512xbf16>
    %cst_122 = arith.constant dense<0.000000e+00> : vector<8x512xf32>
    %298 = tpu.matmul %296, %297, %cst_122 {dimension_numbers = #tpu.dot_dimension_numbers<[1], [0], [0], [1], [0, 0, 1, 1], [], []>} : vector<8x128xbf16>, vector<128x512xbf16>, vector<8x512xf32> -> vector<8x512xf32>
    %299 = arith.addf %295, %298 : vector<8x512xf32>
    %300 = math.tanh %299 : vector<8x512xf32>
    %301 = vector.extract_strided_slice %300 {offsets = [0, 0], sizes = [8, 128], strides = [1, 1]} : vector<8x512xf32> to vector<8x128xf32>
    %cst_123 = arith.constant 5.000000e-01 : f32
    %302 = vector.broadcast %cst_123 : f32 to vector<8x128xf32>
    %303 = arith.mulf %302, %301 : vector<8x128xf32>
    %cst_124 = arith.constant 5.000000e-01 : f32
    %304 = vector.broadcast %cst_124 : f32 to vector<8x128xf32>
    %305 = arith.addf %303, %304 : vector<8x128xf32>
    %306 = vector.extract_strided_slice %300 {offsets = [0, 128], sizes = [8, 128], strides = [1, 1]} : vector<8x512xf32> to vector<8x128xf32>
    %cst_125 = arith.constant 5.000000e-01 : f32
    %307 = vector.broadcast %cst_125 : f32 to vector<8x128xf32>
    %308 = arith.mulf %307, %306 : vector<8x128xf32>
    %cst_126 = arith.constant 5.000000e-01 : f32
    %309 = vector.broadcast %cst_126 : f32 to vector<8x128xf32>
    %310 = arith.addf %308, %309 : vector<8x128xf32>
    %311 = vector.extract_strided_slice %300 {offsets = [0, 256], sizes = [8, 128], strides = [1, 1]} : vector<8x512xf32> to vector<8x128xf32>
    %312 = vector.extract_strided_slice %300 {offsets = [0, 384], sizes = [8, 128], strides = [1, 1]} : vector<8x512xf32> to vector<8x128xf32>
    %cst_127 = arith.constant 5.000000e-01 : f32
    %313 = vector.broadcast %cst_127 : f32 to vector<8x128xf32>
    %314 = arith.mulf %313, %312 : vector<8x128xf32>
    %cst_128 = arith.constant 5.000000e-01 : f32
    %315 = vector.broadcast %cst_128 : f32 to vector<8x128xf32>
    %316 = arith.addf %314, %315 : vector<8x128xf32>
    %317 = arith.mulf %310, %255 : vector<8x128xf32>
    %318 = arith.mulf %305, %311 : vector<8x128xf32>
    %319 = arith.addf %317, %318 : vector<8x128xf32>
    %320 = math.tanh %319 : vector<8x128xf32>
    %321 = arith.mulf %316, %320 : vector<8x128xf32>
    %322 = arith.truncf %257 : vector<8x128xf32> to vector<8x128xbf16>
    %c0_129 = arith.constant 0 : index
    %c0_130 = arith.constant 0 : index
    %323 = vector.load %arg4[%c0_129, %c0_130] : memref<128x512xbf16, #tpu.memory_space<vmem>>, vector<128x512xbf16>
    %cst_131 = arith.constant dense<0.000000e+00> : vector<8x512xf32>
    %324 = tpu.matmul %322, %323, %cst_131 {dimension_numbers = #tpu.dot_dimension_numbers<[1], [0], [0], [1], [0, 0, 1, 1], [], []>} : vector<8x128xbf16>, vector<128x512xbf16>, vector<8x512xf32> -> vector<8x512xf32>
    %325 = arith.addf %11, %324 : vector<8x512xf32>
    %326 = arith.truncf %287 : vector<8x128xf32> to vector<8x128xbf16>
    %c0_132 = arith.constant 0 : index
    %c0_133 = arith.constant 0 : index
    %327 = vector.load %arg5[%c0_132, %c0_133] : memref<128x512xbf16, #tpu.memory_space<vmem>>, vector<128x512xbf16>
    %cst_134 = arith.constant dense<0.000000e+00> : vector<8x512xf32>
    %328 = tpu.matmul %326, %327, %cst_134 {dimension_numbers = #tpu.dot_dimension_numbers<[1], [0], [0], [1], [0, 0, 1, 1], [], []>} : vector<8x128xbf16>, vector<128x512xbf16>, vector<8x512xf32> -> vector<8x512xf32>
    %329 = arith.addf %325, %328 : vector<8x512xf32>
    %330 = math.tanh %329 : vector<8x512xf32>
    %331 = vector.extract_strided_slice %330 {offsets = [0, 0], sizes = [8, 128], strides = [1, 1]} : vector<8x512xf32> to vector<8x128xf32>
    %cst_135 = arith.constant 5.000000e-01 : f32
    %332 = vector.broadcast %cst_135 : f32 to vector<8x128xf32>
    %333 = arith.mulf %332, %331 : vector<8x128xf32>
    %cst_136 = arith.constant 5.000000e-01 : f32
    %334 = vector.broadcast %cst_136 : f32 to vector<8x128xf32>
    %335 = arith.addf %333, %334 : vector<8x128xf32>
    %336 = vector.extract_strided_slice %330 {offsets = [0, 128], sizes = [8, 128], strides = [1, 1]} : vector<8x512xf32> to vector<8x128xf32>
    %cst_137 = arith.constant 5.000000e-01 : f32
    %337 = vector.broadcast %cst_137 : f32 to vector<8x128xf32>
    %338 = arith.mulf %337, %336 : vector<8x128xf32>
    %cst_138 = arith.constant 5.000000e-01 : f32
    %339 = vector.broadcast %cst_138 : f32 to vector<8x128xf32>
    %340 = arith.addf %338, %339 : vector<8x128xf32>
    %341 = vector.extract_strided_slice %330 {offsets = [0, 256], sizes = [8, 128], strides = [1, 1]} : vector<8x512xf32> to vector<8x128xf32>
    %342 = vector.extract_strided_slice %330 {offsets = [0, 384], sizes = [8, 128], strides = [1, 1]} : vector<8x512xf32> to vector<8x128xf32>
    %cst_139 = arith.constant 5.000000e-01 : f32
    %343 = vector.broadcast %cst_139 : f32 to vector<8x128xf32>
    %344 = arith.mulf %343, %342 : vector<8x128xf32>
    %cst_140 = arith.constant 5.000000e-01 : f32
    %345 = vector.broadcast %cst_140 : f32 to vector<8x128xf32>
    %346 = arith.addf %344, %345 : vector<8x128xf32>
    %347 = arith.mulf %340, %285 : vector<8x128xf32>
    %348 = arith.mulf %335, %341 : vector<8x128xf32>
    %349 = arith.addf %347, %348 : vector<8x128xf32>
    %350 = math.tanh %349 : vector<8x128xf32>
    %351 = arith.mulf %346, %350 : vector<8x128xf32>
    %352 = vector.extract_strided_slice %351 {offsets = [7, 0], sizes = [1, 128], strides = [1, 1]} : vector<8x128xf32> to vector<1x128xf32>
    %c1_i32_141 = arith.constant 1 : i32
    %353 = arith.subi %c5_i32, %c1_i32_141 : i32
    %354 = arith.index_cast %353 : i32 to index
    %c0_142 = arith.constant 0 : index
    %355 = vector.load %arg11[%354, %c0_142] : memref<8x128xf32, #tpu.memory_space<vmem>>, vector<1x128xf32>
    tpu.vector_store %arg11[%354, %c0_142], %352 {strides = array<i32>} : memref<8x128xf32, #tpu.memory_space<vmem>>, vector<1x128xf32>,
    %c6_i32 = arith.constant 6 : i32
    %c8_i32_143 = arith.constant 8 : i32
    %356 = arith.muli %c6_i32, %c8_i32_143 : i32
    %357 = tpu.assume_multiple %356, 8 : i32
    %358 = arith.index_cast %357 : i32 to index
    %c0_144 = arith.constant 0 : index
    %359 = vector.load %arg10[%358, %c0_144] : memref<64x512xf32, #tpu.memory_space<vmem>>, vector<8x512xf32>
    %360 = arith.truncf %321 : vector<8x128xf32> to vector<8x128xbf16>
    %c0_145 = arith.constant 0 : index
    %c0_146 = arith.constant 0 : index
    %361 = vector.load %arg2[%c0_145, %c0_146] : memref<128x512xbf16, #tpu.memory_space<vmem>>, vector<128x512xbf16>
    %cst_147 = arith.constant dense<0.000000e+00> : vector<8x512xf32>
    %362 = tpu.matmul %360, %361, %cst_147 {dimension_numbers = #tpu.dot_dimension_numbers<[1], [0], [0], [1], [0, 0, 1, 1], [], []>} : vector<8x128xbf16>, vector<128x512xbf16>, vector<8x512xf32> -> vector<8x512xf32>
    %363 = arith.addf %359, %362 : vector<8x512xf32>
    %364 = math.tanh %363 : vector<8x512xf32>
    %365 = vector.extract_strided_slice %364 {offsets = [0, 0], sizes = [8, 128], strides = [1, 1]} : vector<8x512xf32> to vector<8x128xf32>
    %cst_148 = arith.constant 5.000000e-01 : f32
    %366 = vector.broadcast %cst_148 : f32 to vector<8x128xf32>
    %367 = arith.mulf %366, %365 : vector<8x128xf32>
    %cst_149 = arith.constant 5.000000e-01 : f32
    %368 = vector.broadcast %cst_149 : f32 to vector<8x128xf32>
    %369 = arith.addf %367, %368 : vector<8x128xf32>
    %370 = vector.extract_strided_slice %364 {offsets = [0, 128], sizes = [8, 128], strides = [1, 1]} : vector<8x512xf32> to vector<8x128xf32>
    %cst_150 = arith.constant 5.000000e-01 : f32
    %371 = vector.broadcast %cst_150 : f32 to vector<8x128xf32>
    %372 = arith.mulf %371, %370 : vector<8x128xf32>
    %cst_151 = arith.constant 5.000000e-01 : f32
    %373 = vector.broadcast %cst_151 : f32 to vector<8x128xf32>
    %374 = arith.addf %372, %373 : vector<8x128xf32>
    %375 = vector.extract_strided_slice %364 {offsets = [0, 256], sizes = [8, 128], strides = [1, 1]} : vector<8x512xf32> to vector<8x128xf32>
    %376 = vector.extract_strided_slice %364 {offsets = [0, 384], sizes = [8, 128], strides = [1, 1]} : vector<8x512xf32> to vector<8x128xf32>
    %cst_152 = arith.constant 5.000000e-01 : f32
    %377 = vector.broadcast %cst_152 : f32 to vector<8x128xf32>
    %378 = arith.mulf %377, %376 : vector<8x128xf32>
    %cst_153 = arith.constant 5.000000e-01 : f32
    %379 = vector.broadcast %cst_153 : f32 to vector<8x128xf32>
    %380 = arith.addf %378, %379 : vector<8x128xf32>
    %381 = arith.mulf %374, %319 : vector<8x128xf32>
    %382 = arith.mulf %369, %375 : vector<8x128xf32>
    %383 = arith.addf %381, %382 : vector<8x128xf32>
    %384 = math.tanh %383 : vector<8x128xf32>
    %385 = arith.mulf %380, %384 : vector<8x128xf32>
    %386 = arith.truncf %321 : vector<8x128xf32> to vector<8x128xbf16>
    %c0_154 = arith.constant 0 : index
    %c0_155 = arith.constant 0 : index
    %387 = vector.load %arg4[%c0_154, %c0_155] : memref<128x512xbf16, #tpu.memory_space<vmem>>, vector<128x512xbf16>
    %cst_156 = arith.constant dense<0.000000e+00> : vector<8x512xf32>
    %388 = tpu.matmul %386, %387, %cst_156 {dimension_numbers = #tpu.dot_dimension_numbers<[1], [0], [0], [1], [0, 0, 1, 1], [], []>} : vector<8x128xbf16>, vector<128x512xbf16>, vector<8x512xf32> -> vector<8x512xf32>
    %389 = arith.addf %11, %388 : vector<8x512xf32>
    %390 = arith.truncf %351 : vector<8x128xf32> to vector<8x128xbf16>
    %c0_157 = arith.constant 0 : index
    %c0_158 = arith.constant 0 : index
    %391 = vector.load %arg5[%c0_157, %c0_158] : memref<128x512xbf16, #tpu.memory_space<vmem>>, vector<128x512xbf16>
    %cst_159 = arith.constant dense<0.000000e+00> : vector<8x512xf32>
    %392 = tpu.matmul %390, %391, %cst_159 {dimension_numbers = #tpu.dot_dimension_numbers<[1], [0], [0], [1], [0, 0, 1, 1], [], []>} : vector<8x128xbf16>, vector<128x512xbf16>, vector<8x512xf32> -> vector<8x512xf32>
    %393 = arith.addf %389, %392 : vector<8x512xf32>
    %394 = math.tanh %393 : vector<8x512xf32>
    %395 = vector.extract_strided_slice %394 {offsets = [0, 0], sizes = [8, 128], strides = [1, 1]} : vector<8x512xf32> to vector<8x128xf32>
    %cst_160 = arith.constant 5.000000e-01 : f32
    %396 = vector.broadcast %cst_160 : f32 to vector<8x128xf32>
    %397 = arith.mulf %396, %395 : vector<8x128xf32>
    %cst_161 = arith.constant 5.000000e-01 : f32
    %398 = vector.broadcast %cst_161 : f32 to vector<8x128xf32>
    %399 = arith.addf %397, %398 : vector<8x128xf32>
    %400 = vector.extract_strided_slice %394 {offsets = [0, 128], sizes = [8, 128], strides = [1, 1]} : vector<8x512xf32> to vector<8x128xf32>
    %cst_162 = arith.constant 5.000000e-01 : f32
    %401 = vector.broadcast %cst_162 : f32 to vector<8x128xf32>
    %402 = arith.mulf %401, %400 : vector<8x128xf32>
    %cst_163 = arith.constant 5.000000e-01 : f32
    %403 = vector.broadcast %cst_163 : f32 to vector<8x128xf32>
    %404 = arith.addf %402, %403 : vector<8x128xf32>
    %405 = vector.extract_strided_slice %394 {offsets = [0, 256], sizes = [8, 128], strides = [1, 1]} : vector<8x512xf32> to vector<8x128xf32>
    %406 = vector.extract_strided_slice %394 {offsets = [0, 384], sizes = [8, 128], strides = [1, 1]} : vector<8x512xf32> to vector<8x128xf32>
    %cst_164 = arith.constant 5.000000e-01 : f32
    %407 = vector.broadcast %cst_164 : f32 to vector<8x128xf32>
    %408 = arith.mulf %407, %406 : vector<8x128xf32>
    %cst_165 = arith.constant 5.000000e-01 : f32
    %409 = vector.broadcast %cst_165 : f32 to vector<8x128xf32>
    %410 = arith.addf %408, %409 : vector<8x128xf32>
    %411 = arith.mulf %404, %349 : vector<8x128xf32>
    %412 = arith.mulf %399, %405 : vector<8x128xf32>
    %413 = arith.addf %411, %412 : vector<8x128xf32>
    %414 = math.tanh %413 : vector<8x128xf32>
    %415 = arith.mulf %410, %414 : vector<8x128xf32>
    %416 = vector.extract_strided_slice %415 {offsets = [7, 0], sizes = [1, 128], strides = [1, 1]} : vector<8x128xf32> to vector<1x128xf32>
    %c1_i32_166 = arith.constant 1 : i32
    %417 = arith.subi %c6_i32, %c1_i32_166 : i32
    %418 = arith.index_cast %417 : i32 to index
    %c0_167 = arith.constant 0 : index
    %419 = vector.load %arg11[%418, %c0_167] : memref<8x128xf32, #tpu.memory_space<vmem>>, vector<1x128xf32>
    tpu.vector_store %arg11[%418, %c0_167], %416 {strides = array<i32>} : memref<8x128xf32, #tpu.memory_space<vmem>>, vector<1x128xf32>,
    %c7_i32 = arith.constant 7 : i32
    %c8_i32_168 = arith.constant 8 : i32
    %420 = arith.muli %c7_i32, %c8_i32_168 : i32
    %421 = tpu.assume_multiple %420, 8 : i32
    %422 = arith.index_cast %421 : i32 to index
    %c0_169 = arith.constant 0 : index
    %423 = vector.load %arg10[%422, %c0_169] : memref<64x512xf32, #tpu.memory_space<vmem>>, vector<8x512xf32>
    %424 = arith.truncf %385 : vector<8x128xf32> to vector<8x128xbf16>
    %c0_170 = arith.constant 0 : index
    %c0_171 = arith.constant 0 : index
    %425 = vector.load %arg2[%c0_170, %c0_171] : memref<128x512xbf16, #tpu.memory_space<vmem>>, vector<128x512xbf16>
    %cst_172 = arith.constant dense<0.000000e+00> : vector<8x512xf32>
    %426 = tpu.matmul %424, %425, %cst_172 {dimension_numbers = #tpu.dot_dimension_numbers<[1], [0], [0], [1], [0, 0, 1, 1], [], []>} : vector<8x128xbf16>, vector<128x512xbf16>, vector<8x512xf32> -> vector<8x512xf32>
    %427 = arith.addf %423, %426 : vector<8x512xf32>
    %428 = math.tanh %427 : vector<8x512xf32>
    %429 = vector.extract_strided_slice %428 {offsets = [0, 0], sizes = [8, 128], strides = [1, 1]} : vector<8x512xf32> to vector<8x128xf32>
    %cst_173 = arith.constant 5.000000e-01 : f32
    %430 = vector.broadcast %cst_173 : f32 to vector<8x128xf32>
    %431 = arith.mulf %430, %429 : vector<8x128xf32>
    %cst_174 = arith.constant 5.000000e-01 : f32
    %432 = vector.broadcast %cst_174 : f32 to vector<8x128xf32>
    %433 = arith.addf %431, %432 : vector<8x128xf32>
    %434 = vector.extract_strided_slice %428 {offsets = [0, 128], sizes = [8, 128], strides = [1, 1]} : vector<8x512xf32> to vector<8x128xf32>
    %cst_175 = arith.constant 5.000000e-01 : f32
    %435 = vector.broadcast %cst_175 : f32 to vector<8x128xf32>
    %436 = arith.mulf %435, %434 : vector<8x128xf32>
    %cst_176 = arith.constant 5.000000e-01 : f32
    %437 = vector.broadcast %cst_176 : f32 to vector<8x128xf32>
    %438 = arith.addf %436, %437 : vector<8x128xf32>
    %439 = vector.extract_strided_slice %428 {offsets = [0, 256], sizes = [8, 128], strides = [1, 1]} : vector<8x512xf32> to vector<8x128xf32>
    %440 = vector.extract_strided_slice %428 {offsets = [0, 384], sizes = [8, 128], strides = [1, 1]} : vector<8x512xf32> to vector<8x128xf32>
    %cst_177 = arith.constant 5.000000e-01 : f32
    %441 = vector.broadcast %cst_177 : f32 to vector<8x128xf32>
    %442 = arith.mulf %441, %440 : vector<8x128xf32>
    %cst_178 = arith.constant 5.000000e-01 : f32
    %443 = vector.broadcast %cst_178 : f32 to vector<8x128xf32>
    %444 = arith.addf %442, %443 : vector<8x128xf32>
    %445 = arith.mulf %438, %383 : vector<8x128xf32>
    %446 = arith.mulf %433, %439 : vector<8x128xf32>
    %447 = arith.addf %445, %446 : vector<8x128xf32>
    %448 = math.tanh %447 : vector<8x128xf32>
    %449 = arith.mulf %444, %448 : vector<8x128xf32>
    %450 = arith.truncf %385 : vector<8x128xf32> to vector<8x128xbf16>
    %c0_179 = arith.constant 0 : index
    %c0_180 = arith.constant 0 : index
    %451 = vector.load %arg4[%c0_179, %c0_180] : memref<128x512xbf16, #tpu.memory_space<vmem>>, vector<128x512xbf16>
    %cst_181 = arith.constant dense<0.000000e+00> : vector<8x512xf32>
    %452 = tpu.matmul %450, %451, %cst_181 {dimension_numbers = #tpu.dot_dimension_numbers<[1], [0], [0], [1], [0, 0, 1, 1], [], []>} : vector<8x128xbf16>, vector<128x512xbf16>, vector<8x512xf32> -> vector<8x512xf32>
    %453 = arith.addf %11, %452 : vector<8x512xf32>
    %454 = arith.truncf %415 : vector<8x128xf32> to vector<8x128xbf16>
    %c0_182 = arith.constant 0 : index
    %c0_183 = arith.constant 0 : index
    %455 = vector.load %arg5[%c0_182, %c0_183] : memref<128x512xbf16, #tpu.memory_space<vmem>>, vector<128x512xbf16>
    %cst_184 = arith.constant dense<0.000000e+00> : vector<8x512xf32>
    %456 = tpu.matmul %454, %455, %cst_184 {dimension_numbers = #tpu.dot_dimension_numbers<[1], [0], [0], [1], [0, 0, 1, 1], [], []>} : vector<8x128xbf16>, vector<128x512xbf16>, vector<8x512xf32> -> vector<8x512xf32>
    %457 = arith.addf %453, %456 : vector<8x512xf32>
    %458 = math.tanh %457 : vector<8x512xf32>
    %459 = vector.extract_strided_slice %458 {offsets = [0, 0], sizes = [8, 128], strides = [1, 1]} : vector<8x512xf32> to vector<8x128xf32>
    %cst_185 = arith.constant 5.000000e-01 : f32
    %460 = vector.broadcast %cst_185 : f32 to vector<8x128xf32>
    %461 = arith.mulf %460, %459 : vector<8x128xf32>
    %cst_186 = arith.constant 5.000000e-01 : f32
    %462 = vector.broadcast %cst_186 : f32 to vector<8x128xf32>
    %463 = arith.addf %461, %462 : vector<8x128xf32>
    %464 = vector.extract_strided_slice %458 {offsets = [0, 128], sizes = [8, 128], strides = [1, 1]} : vector<8x512xf32> to vector<8x128xf32>
    %cst_187 = arith.constant 5.000000e-01 : f32
    %465 = vector.broadcast %cst_187 : f32 to vector<8x128xf32>
    %466 = arith.mulf %465, %464 : vector<8x128xf32>
    %cst_188 = arith.constant 5.000000e-01 : f32
    %467 = vector.broadcast %cst_188 : f32 to vector<8x128xf32>
    %468 = arith.addf %466, %467 : vector<8x128xf32>
    %469 = vector.extract_strided_slice %458 {offsets = [0, 256], sizes = [8, 128], strides = [1, 1]} : vector<8x512xf32> to vector<8x128xf32>
    %470 = vector.extract_strided_slice %458 {offsets = [0, 384], sizes = [8, 128], strides = [1, 1]} : vector<8x512xf32> to vector<8x128xf32>
    %cst_189 = arith.constant 5.000000e-01 : f32
    %471 = vector.broadcast %cst_189 : f32 to vector<8x128xf32>
    %472 = arith.mulf %471, %470 : vector<8x128xf32>
    %cst_190 = arith.constant 5.000000e-01 : f32
    %473 = vector.broadcast %cst_190 : f32 to vector<8x128xf32>
    %474 = arith.addf %472, %473 : vector<8x128xf32>
    %475 = arith.mulf %468, %413 : vector<8x128xf32>
    %476 = arith.mulf %463, %469 : vector<8x128xf32>
    %477 = arith.addf %475, %476 : vector<8x128xf32>
    %478 = math.tanh %477 : vector<8x128xf32>
    %479 = arith.mulf %474, %478 : vector<8x128xf32>
    %480 = vector.extract_strided_slice %479 {offsets = [7, 0], sizes = [1, 128], strides = [1, 1]} : vector<8x128xf32> to vector<1x128xf32>
    %c1_i32_191 = arith.constant 1 : i32
    %481 = arith.subi %c7_i32, %c1_i32_191 : i32
    %482 = arith.index_cast %481 : i32 to index
    %c0_192 = arith.constant 0 : index
    %483 = vector.load %arg11[%482, %c0_192] : memref<8x128xf32, #tpu.memory_space<vmem>>, vector<1x128xf32>
    tpu.vector_store %arg11[%482, %c0_192], %480 {strides = array<i32>} : memref<8x128xf32, #tpu.memory_space<vmem>>, vector<1x128xf32>,
    %c7_i32_193 = arith.constant 7 : i32
    %484 = arith.truncf %449 : vector<8x128xf32> to vector<8x128xbf16>
    %c0_194 = arith.constant 0 : index
    %c0_195 = arith.constant 0 : index
    %485 = vector.load %arg4[%c0_194, %c0_195] : memref<128x512xbf16, #tpu.memory_space<vmem>>, vector<128x512xbf16>
    %cst_196 = arith.constant dense<0.000000e+00> : vector<8x512xf32>
    %486 = tpu.matmul %484, %485, %cst_196 {dimension_numbers = #tpu.dot_dimension_numbers<[1], [0], [0], [1], [0, 0, 1, 1], [], []>} : vector<8x128xbf16>, vector<128x512xbf16>, vector<8x512xf32> -> vector<8x512xf32>
    %487 = arith.addf %11, %486 : vector<8x512xf32>
    %488 = arith.truncf %479 : vector<8x128xf32> to vector<8x128xbf16>
    %c0_197 = arith.constant 0 : index
    %c0_198 = arith.constant 0 : index
    %489 = vector.load %arg5[%c0_197, %c0_198] : memref<128x512xbf16, #tpu.memory_space<vmem>>, vector<128x512xbf16>
    %cst_199 = arith.constant dense<0.000000e+00> : vector<8x512xf32>
    %490 = tpu.matmul %488, %489, %cst_199 {dimension_numbers = #tpu.dot_dimension_numbers<[1], [0], [0], [1], [0, 0, 1, 1], [], []>} : vector<8x128xbf16>, vector<128x512xbf16>, vector<8x512xf32> -> vector<8x512xf32>
    %491 = arith.addf %487, %490 : vector<8x512xf32>
    %492 = math.tanh %491 : vector<8x512xf32>
    %493 = vector.extract_strided_slice %492 {offsets = [0, 0], sizes = [8, 128], strides = [1, 1]} : vector<8x512xf32> to vector<8x128xf32>
    %cst_200 = arith.constant 5.000000e-01 : f32
    %494 = vector.broadcast %cst_200 : f32 to vector<8x128xf32>
    %495 = arith.mulf %494, %493 : vector<8x128xf32>
    %cst_201 = arith.constant 5.000000e-01 : f32
    %496 = vector.broadcast %cst_201 : f32 to vector<8x128xf32>
    %497 = arith.addf %495, %496 : vector<8x128xf32>
    %498 = vector.extract_strided_slice %492 {offsets = [0, 128], sizes = [8, 128], strides = [1, 1]} : vector<8x512xf32> to vector<8x128xf32>
    %cst_202 = arith.constant 5.000000e-01 : f32
    %499 = vector.broadcast %cst_202 : f32 to vector<8x128xf32>
    %500 = arith.mulf %499, %498 : vector<8x128xf32>
    %cst_203 = arith.constant 5.000000e-01 : f32
    %501 = vector.broadcast %cst_203 : f32 to vector<8x128xf32>
    %502 = arith.addf %500, %501 : vector<8x128xf32>
    %503 = vector.extract_strided_slice %492 {offsets = [0, 256], sizes = [8, 128], strides = [1, 1]} : vector<8x512xf32> to vector<8x128xf32>
    %504 = vector.extract_strided_slice %492 {offsets = [0, 384], sizes = [8, 128], strides = [1, 1]} : vector<8x512xf32> to vector<8x128xf32>
    %cst_204 = arith.constant 5.000000e-01 : f32
    %505 = vector.broadcast %cst_204 : f32 to vector<8x128xf32>
    %506 = arith.mulf %505, %504 : vector<8x128xf32>
    %cst_205 = arith.constant 5.000000e-01 : f32
    %507 = vector.broadcast %cst_205 : f32 to vector<8x128xf32>
    %508 = arith.addf %506, %507 : vector<8x128xf32>
    %509 = arith.mulf %502, %477 : vector<8x128xf32>
    %510 = arith.mulf %497, %503 : vector<8x128xf32>
    %511 = arith.addf %509, %510 : vector<8x128xf32>
    %512 = math.tanh %511 : vector<8x128xf32>
    %513 = arith.mulf %508, %512 : vector<8x128xf32>
    %514 = vector.extract_strided_slice %513 {offsets = [7, 0], sizes = [1, 128], strides = [1, 1]} : vector<8x128xf32> to vector<1x128xf32>
    %c7 = arith.constant 7 : index
    %c0_206 = arith.constant 0 : index
    %515 = vector.load %arg11[%c7, %c0_206] : memref<8x128xf32, #tpu.memory_space<vmem>>, vector<1x128xf32>
    tpu.vector_store %arg11[%c7, %c0_206], %514 {strides = array<i32>} : memref<8x128xf32, #tpu.memory_space<vmem>>, vector<1x128xf32>,
    %c0_207 = arith.constant 0 : index
    %c0_208 = arith.constant 0 : index
    %516 = vector.load %arg11[%c0_207, %c0_208] : memref<8x128xf32, #tpu.memory_space<vmem>>, vector<8x128xf32>
    %517 = arith.truncf %516 : vector<8x128xf32> to vector<8x128xbf16>
    %c0_209 = arith.constant 0 : index
    %c0_210 = arith.constant 0 : index
    %518 = vector.load %arg7[%c0_209, %c0_210] : memref<128x128xbf16, #tpu.memory_space<vmem>>, vector<128x128xbf16>
    %cst_211 = arith.constant dense<0.000000e+00> : vector<8x128xf32>
    %519 = tpu.matmul %517, %518, %cst_211 {dimension_numbers = #tpu.dot_dimension_numbers<[1], [0], [0], [1], [0, 0, 1, 1], [], []>} : vector<8x128xbf16>, vector<128x128xbf16>, vector<8x128xf32> -> vector<8x128xf32>
    %c0_212 = arith.constant 0 : index
    %c0_213 = arith.constant 0 : index
    %520 = vector.load %arg8[%c0_212, %c0_213] : memref<1x128xf32, #tpu.memory_space<vmem>>, vector<1x128xf32>
    %521 = vector.broadcast %520 : vector<1x128xf32> to vector<8x128xf32>
    %522 = arith.addf %519, %521 : vector<8x128xf32>
    %c0_214 = arith.constant 0 : index
    %c0_215 = arith.constant 0 : index
    %523 = vector.load %arg9[%c0_214, %c0_215] : memref<8x128xf32, #tpu.memory_space<vmem>>, vector<8x128xf32>
    tpu.vector_store %arg9[%c0_214, %c0_215], %522 {strides = array<i32>} : memref<8x128xf32, #tpu.memory_space<vmem>>, vector<8x128xf32>,
    return
  }
}

</mosaic_0001>

<llo_original>
// kernel: neurochain_agi_forward.1
$region0: #{neurochain_agi_forward.1}
  #allocation0 [shape = 'u32[]', space=smem, size = 0x4, offset = 0x4, fixed_abs, tag = 'smem constant byte address 0x4 - core index']
  #allocation1 [shape = 'u32[144,128]{1,0:T(1,128)}', space=vmem, size = 0x12000, scoped, tag = 'internal scratch']
  #allocation2 [shape = 'f32[64,512]{1,0:T(8,128)}', space=vmem, size = 0x20000, scoped, tag = 'scratch operand']
  #allocation3 [shape = 'f32[8,128]{1,0:T(8,128)}', space=vmem, size = 0x1000, scoped, tag = 'scratch operand']
  %s0 = inlined_call_operand.vmem [shape: f32[8,8,128], index: 0, kind: input, shape index: {}]
  %s1 = inlined_call_operand.vmem [shape: bf16[128,512], index: 1, kind: input, shape index: {}]
  %s2 = inlined_call_operand.vmem [shape: bf16[128,512], index: 2, kind: input, shape index: {}]
  %s3 = inlined_call_operand.vmem [shape: f32[1,512], index: 3, kind: input, shape index: {}]
  %s4 = inlined_call_operand.vmem [shape: bf16[128,512], index: 4, kind: input, shape index: {}]
  %s5 = inlined_call_operand.vmem [shape: bf16[128,512], index: 5, kind: input, shape index: {}]
  %s6 = inlined_call_operand.vmem [shape: f32[1,512], index: 6, kind: input, shape index: {}]
  %s7 = inlined_call_operand.vmem [shape: bf16[128,128], index: 7, kind: input, shape index: {}]
  %s8 = inlined_call_operand.vmem [shape: f32[1,128], index: 8, kind: input, shape index: {}]
  %s9 = inlined_call_operand.hbm [shape: f32[8,128], index: 9, kind: output, shape index: {}]
  %s10 = sld [smem:[#allocation0]]
  $region46: #{neurochain_agi_forward.1} parent=0
    _
  %s12 = ssub.s32 1, %s10
  %s13 = scalar_select 0, %s12, %s10
  $region1: #{neurochain_agi_forward.1} parent=0
    #allocation4 [shape = 'u8[4096]{0}', space=vmem, size = 0x1000, scoped, tag = 'output window, operand 0, single buffered']
    #allocation5 [shape = 's32[1]{0}', space=sflag, size = 0x4, scoped, tag = 'scoped memory for neurochain_agi_forward.1']
    %14 = vsyncpa [#allocation5], 0
    // Predicated region
    $region2: #{neurochain_agi_forward.1} parent=1 // pred_check
      _
    $region3: #{neurochain_agi_forward.1} parent=1 // pred_check_branch
      %16 = sbr.rel (0) target = $region5
    $region4: #{neurochain_agi_forward.1} parent=1 // pred_region
      _
    $region5: #{neurochain_agi_forward.1} parent=1 // pred_fallthru
      _
    // Predicated region
    $region6: #{neurochain_agi_forward.1} parent=1 // pred_check
      _
    $region7: #{neurochain_agi_forward.1} parent=1 // pred_check_branch
      %18 = sbr.rel (0) target = $region9
    $region8: #{neurochain_agi_forward.1} parent=1 // pred_region
      _
    $region9: #{neurochain_agi_forward.1} parent=1 // pred_fallthru
      _
    // Predicated region
    $region10: #{neurochain_agi_forward.1} parent=1 // pred_check
      _
    $region11: #{neurochain_agi_forward.1} parent=1 // pred_check_branch
      %20 = sbr.rel (0) target = $region13
    $region12: #{neurochain_agi_forward.1} parent=1 // pred_region
      _
    $region13: #{neurochain_agi_forward.1} parent=1 // pred_fallthru
      _
    // Predicated region
    $region14: #{neurochain_agi_forward.1} parent=1 // pred_check
      _
    $region15: #{neurochain_agi_forward.1} parent=1 // pred_check_branch
      %22 = sbr.rel (0) target = $region17
    $region16: #{neurochain_agi_forward.1} parent=1 // pred_region
      _
    $region17: #{neurochain_agi_forward.1} parent=1 // pred_fallthru
      _
    // Predicated region
    $region18: #{neurochain_agi_forward.1} parent=1 // pred_check
      _
    $region19: #{neurochain_agi_forward.1} parent=1 // pred_check_branch
      %24 = sbr.rel (0) target = $region21
    $region20: #{neurochain_agi_forward.1} parent=1 // pred_region
      _
    $region21: #{neurochain_agi_forward.1} parent=1 // pred_fallthru
      _
    // Predicated region
    $region22: #{neurochain_agi_forward.1} parent=1 // pred_check
      _
    $region23: #{neurochain_agi_forward.1} parent=1 // pred_check_branch
      %26 = sbr.rel (0) target = $region25
    $region24: #{neurochain_agi_forward.1} parent=1 // pred_region
      _
    $region25: #{neurochain_agi_forward.1} parent=1 // pred_fallthru
      _
    // Predicated region
    $region26: #{neurochain_agi_forward.1} parent=1 // pred_check
      _
    $region27: #{neurochain_agi_forward.1} parent=1 // pred_check_branch
      %28 = sbr.rel (0) target = $region29
    $region28: #{neurochain_agi_forward.1} parent=1 // pred_region
      _
    $region29: #{neurochain_agi_forward.1} parent=1 // pred_fallthru
      _
    // Predicated region
    $region30: #{neurochain_agi_forward.1} parent=1 // pred_check
      _
    $region31: #{neurochain_agi_forward.1} parent=1 // pred_check_branch
      %30 = sbr.rel (0) target = $region33
    $region32: #{neurochain_agi_forward.1} parent=1 // pred_region
      _
    $region33: #{neurochain_agi_forward.1} parent=1 // pred_fallthru
      _
    // Predicated region
    $region34: #{neurochain_agi_forward.1} parent=1 // pred_check
      _
    $region35: #{neurochain_agi_forward.1} parent=1 // pred_check_branch
      %32 = sbr.rel (0) target = $region37
    $region36: #{neurochain_agi_forward.1} parent=1 // pred_region
      _
    $region37: #{neurochain_agi_forward.1} parent=1 // pred_fallthru
      _
    %v34 = vld [vmem:[%s0] sm:$0xff]
    %v35 = vld [vmem:[%s0 + $0x8] sm:$0xff]
    %v36 = vld [vmem:[%s0 + $0x10] sm:$0xff]
    %v37 = vld [vmem:[%s0 + $0x18] sm:$0xff]
    %v38 = vld [vmem:[%s0 + $0x20] sm:$0xff]
    %v39 = vld [vmem:[%s0 + $0x28] sm:$0xff]
    %v40 = vld [vmem:[%s0 + $0x30] sm:$0xff]
    %v41 = vld [vmem:[%s0 + $0x38] sm:$0xff]
    %v42 = vpack.c.bf16 %v35, %v34
    %v43 = vpack.c.bf16 %v37, %v36
    %v44 = vpack.c.bf16 %v39, %v38
    %v45 = vpack.c.bf16 %v41, %v40
    %v46 = vld [vmem:[%s1] sm:$0xff]
    %v47 = vld [vmem:[%s1 + $0x8] sm:$0xff]
    %v48 = vld [vmem:[%s1 + $0x10] sm:$0xff]
    %v49 = vld [vmem:[%s1 + $0x18] sm:$0xff]
    %v50 = vld [vmem:[%s1 + $0x20] sm:$0xff]
    %v51 = vld [vmem:[%s1 + $0x28] sm:$0xff]
    %v52 = vld [vmem:[%s1 + $0x30] sm:$0xff]
    %v53 = vld [vmem:[%s1 + $0x38] sm:$0xff]
    %v54 = vld [vmem:[%s1 + $0x40] sm:$0xff]
    %v55 = vld [vmem:[%s1 + $0x48] sm:$0xff]
    %v56 = vld [vmem:[%s1 + $0x50] sm:$0xff]
    %v57 = vld [vmem:[%s1 + $0x58] sm:$0xff]
    %v58 = vld [vmem:[%s1 + $0x60] sm:$0xff]
    %v59 = vld [vmem:[%s1 + $0x68] sm:$0xff]
    %v60 = vld [vmem:[%s1 + $0x70] sm:$0xff]
    %v61 = vld [vmem:[%s1 + $0x78] sm:$0xff]
    %v62 = vld [vmem:[%s1 + $0x80] sm:$0xff]
    %v63 = vld [vmem:[%s1 + $0x88] sm:$0xff]
    %v64 = vld [vmem:[%s1 + $0x90] sm:$0xff]
    %v65 = vld [vmem:[%s1 + $0x98] sm:$0xff]
    %v66 = vld [vmem:[%s1 + $0xa0] sm:$0xff]
    %v67 = vld [vmem:[%s1 + $0xa8] sm:$0xff]
    %v68 = vld [vmem:[%s1 + $0xb0] sm:$0xff]
    %v69 = vld [vmem:[%s1 + $0xb8] sm:$0xff]
    %v70 = vld [vmem:[%s1 + $0xc0] sm:$0xff]
    %v71 = vld [vmem:[%s1 + $0xc8] sm:$0xff]
    %v72 = vld [vmem:[%s1 + $0xd0] sm:$0xff]
    %v73 = vld [vmem:[%s1 + $0xd8] sm:$0xff]
    %v74 = vld [vmem:[%s1 + $0xe0] sm:$0xff]
    %v75 = vld [vmem:[%s1 + $0xe8] sm:$0xff]
    %v76 = vld [vmem:[%s1 + $0xf0] sm:$0xff]
    %v77 = vld [vmem:[%s1 + $0xf8] sm:$0xff]
    %v78 = vld [vmem:[%s3] sm:$0xf]
    %v80 = vlaneseq
    %v81 = vshrl.u32 %v80, 7
    %v82 = vsub.s32 0, %v81
    %v83 = vrot.slane %v78, %v82
    %v84 = vlaneseq
    %v85 = vshrl.u32 %v84, 7
    %v86 = vsub.s32 1, %v85
    %v87 = vrot.slane %v78, %v86
    %v88 = vlaneseq
    %v89 = vshrl.u32 %v88, 7
    %v90 = vsub.s32 2, %v89
    %v91 = vrot.slane %v78, %v90
    %v92 = vlaneseq
    %v93 = vshrl.u32 %v92, 7
    %v94 = vsub.s32 3, %v93
    %v95 = vrot.slane %v78, %v94
    %v132 = vunpack.c.l.b16 %v46
    %v133 = vunpack.c.h.b16 %v46
    %v134 = vunpack.c.l.b16 %v47
    %v135 = vunpack.c.h.b16 %v47
    %v136 = vunpack.c.l.b16 %v48
    %v137 = vunpack.c.h.b16 %v48
    %v138 = vunpack.c.l.b16 %v49
    %v139 = vunpack.c.h.b16 %v49
    %v140 = vunpack.c.l.b16 %v50
    %v141 = vunpack.c.h.b16 %v50
    %v142 = vunpack.c.l.b16 %v51
    %v143 = vunpack.c.h.b16 %v51
    %v144 = vunpack.c.l.b16 %v52
    %v145 = vunpack.c.h.b16 %v52
    %v146 = vunpack.c.l.b16 %v53
    %v147 = vunpack.c.h.b16 %v53
    %v148 = vunpack.c.l.b16 %v54
    %v149 = vunpack.c.h.b16 %v54
    %v150 = vunpack.c.l.b16 %v55
    %v151 = vunpack.c.h.b16 %v55
    %v152 = vunpack.c.l.b16 %v56
    %v153 = vunpack.c.h.b16 %v56
    %v154 = vunpack.c.l.b16 %v57
    %v155 = vunpack.c.h.b16 %v57
    %v156 = vunpack.c.l.b16 %v58
    %v157 = vunpack.c.h.b16 %v58
    %v158 = vunpack.c.l.b16 %v59
    %v159 = vunpack.c.h.b16 %v59
    %v160 = vunpack.c.l.b16 %v60
    %v161 = vunpack.c.h.b16 %v60
    %v162 = vunpack.c.l.b16 %v61
    %v163 = vunpack.c.h.b16 %v61
    %v164 = vunpack.c.l.b16 %v62
    %v165 = vunpack.c.h.b16 %v62
    %v166 = vunpack.c.l.b16 %v63
    %v167 = vunpack.c.h.b16 %v63
    %v168 = vunpack.c.l.b16 %v64
    %v169 = vunpack.c.h.b16 %v64
    %v170 = vunpack.c.l.b16 %v65
    %v171 = vunpack.c.h.b16 %v65
    %v172 = vunpack.c.l.b16 %v66
    %v173 = vunpack.c.h.b16 %v66
    %v174 = vunpack.c.l.b16 %v67
    %v175 = vunpack.c.h.b16 %v67
    %v176 = vunpack.c.l.b16 %v68
    %v177 = vunpack.c.h.b16 %v68
    %v178 = vunpack.c.l.b16 %v69
    %v179 = vunpack.c.h.b16 %v69
    %v180 = vunpack.c.l.b16 %v70
    %v181 = vunpack.c.h.b16 %v70
    %v182 = vunpack.c.l.b16 %v71
    %v183 = vunpack.c.h.b16 %v71
    %v184 = vunpack.c.l.b16 %v72
    %v185 = vunpack.c.h.b16 %v72
    %v186 = vunpack.c.l.b16 %v73
    %v187 = vunpack.c.h.b16 %v73
    %v188 = vunpack.c.l.b16 %v74
    %v189 = vunpack.c.h.b16 %v74
    %v190 = vunpack.c.l.b16 %v75
    %v191 = vunpack.c.h.b16 %v75
    %v192 = vunpack.c.l.b16 %v76
    %v193 = vunpack.c.h.b16 %v76
    %v194 = vunpack.c.l.b16 %v77
    %v195 = vunpack.c.h.b16 %v77
    %v196 = vpack.c.b16 %v136, %v132
    %v197 = vpack.c.b16 %v137, %v133
    %v198 = vpack.c.b16 %v138, %v134
    %v199 = vpack.c.b16 %v139, %v135
    %v200 = vpack.c.b16 %v144, %v140
    %v201 = vpack.c.b16 %v145, %v141
    %v202 = vpack.c.b16 %v146, %v142
    %v203 = vpack.c.b16 %v147, %v143
    %v204 = vpack.c.b16 %v152, %v148
    %v205 = vpack.c.b16 %v153, %v149
    %v206 = vpack.c.b16 %v154, %v150
    %v207 = vpack.c.b16 %v155, %v151
    %v208 = vpack.c.b16 %v160, %v156
    %v209 = vpack.c.b16 %v161, %v157
    %v210 = vpack.c.b16 %v162, %v158
    %v211 = vpack.c.b16 %v163, %v159
    %v212 = vpack.c.b16 %v168, %v164
    %v213 = vpack.c.b16 %v169, %v165
    %v214 = vpack.c.b16 %v170, %v166
    %v215 = vpack.c.b16 %v171, %v167
    %v216 = vpack.c.b16 %v176, %v172
    %v217 = vpack.c.b16 %v177, %v173
    %v218 = vpack.c.b16 %v178, %v174
    %v219 = vpack.c.b16 %v179, %v175
    %v220 = vpack.c.b16 %v184, %v180
    %v221 = vpack.c.b16 %v185, %v181
    %v222 = vpack.c.b16 %v186, %v182
    %v223 = vpack.c.b16 %v187, %v183
    %v224 = vpack.c.b16 %v192, %v188
    %v225 = vpack.c.b16 %v193, %v189
    %v226 = vpack.c.b16 %v194, %v190
    %v227 = vpack.c.b16 %v195, %v191
    %260 = vmatprep.subr.bf16.mxu0 %v197
    %261 = vmatpush1.bf16.msra.mxu0 %v196
    %262 = vmatprep.subr.bf16.mxu0 %v201
    %263 = vmatpush1.bf16.msra.mxu0 %v200
    %264 = vmatprep.subr.bf16.mxu0 %v205
    %265 = vmatpush1.bf16.msra.mxu0 %v204
    %266 = vmatprep.subr.bf16.mxu0 %v209
    %267 = vmatpush1.bf16.msra.mxu0 %v208
    %268 = vmatprep.subr.bf16.mxu0 %v213
    %269 = vmatpush1.bf16.msra.mxu0 %v212
    %270 = vmatprep.subr.bf16.mxu0 %v217
    %271 = vmatpush1.bf16.msra.mxu0 %v216
    %272 = vmatprep.subr.bf16.mxu0 %v221
    %273 = vmatpush1.bf16.msra.mxu0 %v220
    %274 = vmatprep.subr.bf16.mxu0 %v225
    %275 = vmatpush1.bf16.msra.mxu0 %v224
    %276 = vmatprep.subr.bf16.mxu0 0
    %277 = vmatpush1.bf16.msra.mxu0 0
    %278 = vmatprep.subr.bf16.mxu0 0
    %279 = vmatpush1.bf16.msra.mxu0 0
    %280 = vmatprep.subr.bf16.mxu0 0
    %281 = vmatpush1.bf16.msra.mxu0 0
    %282 = vmatprep.subr.bf16.mxu0 0
    %283 = vmatpush1.bf16.msra.mxu0 0
    %284 = vmatprep.subr.bf16.mxu0 0
    %285 = vmatpush1.bf16.msra.mxu0 0
    %286 = vmatprep.subr.bf16.mxu0 0
    %287 = vmatpush1.bf16.msra.mxu0 0
    %288 = vmatprep.subr.bf16.mxu0 0
    %289 = vmatpush1.bf16.msra.mxu0 0
    %290 = vmatprep.subr.bf16.mxu0 0
    %291 = vmatpush1.bf16.msra.mxu0 0
    %292 = vmatprep.mubr.bf16.mxu0 0
    %293 = vmatmul.mubr.bf16.gmra.mrb[0].mxu0 %v42
    %v294 = vpop.f32.mrb[0].mxu0
    %v295 = vadd.f32 %v83, %v294
    %v296 = vpop.f32.mrb[0].mxu0
    %v297 = vadd.f32 %v87, %v296
    %v298 = vpop.f32.mrb[0].mxu0
    %v299 = vadd.f32 %v83, %v298
    %v300 = vpop.f32.mrb[0].mxu0
    %v301 = vadd.f32 %v87, %v300
    %302 = vmatprep.mubr.bf16.mxu0 0
    %303 = vmatmul.mubr.bf16.gmra.mrb[0].mxu0 %v43
    %v304 = vpop.f32.mrb[0].mxu0
    %v305 = vadd.f32 %v83, %v304
    %v306 = vpop.f32.mrb[0].mxu0
    %v307 = vadd.f32 %v87, %v306
    %v308 = vpop.f32.mrb[0].mxu0
    %v309 = vadd.f32 %v83, %v308
    %v310 = vpop.f32.mrb[0].mxu0
    %v311 = vadd.f32 %v87, %v310
    %312 = vmatprep.mubr.bf16.mxu0 0
    %313 = vmatmul.mubr.bf16.gmra.mrb[0].mxu0 %v44
    %v314 = vpop.f32.mrb[0].mxu0
    %v315 = vadd.f32 %v83, %v314
    %v316 = vpop.f32.mrb[0].mxu0
    %v317 = vadd.f32 %v87, %v316
    %v318 = vpop.f32.mrb[0].mxu0
    %v319 = vadd.f32 %v83, %v318
    %v320 = vpop.f32.mrb[0].mxu0
    %v321 = vadd.f32 %v87, %v320
    %322 = vmatprep.mubr.bf16.mxu0 0
    %323 = vmatmul.mubr.bf16.gmra.mrb[0].mxu0 %v45
    %v324 = vpop.f32.mrb[0].mxu0
    %v325 = vadd.f32 %v83, %v324
    %v326 = vpop.f32.mrb[0].mxu0
    %v327 = vadd.f32 %v87, %v326
    %v328 = vpop.f32.mrb[0].mxu0
    %v329 = vadd.f32 %v83, %v328
    %v330 = vpop.f32.mrb[0].mxu0
    %v331 = vadd.f32 %v87, %v330
    %332 = vdwg.mxu0
    %333 = vmatprep.subr.bf16.mxu0 %v199
    %334 = vmatpush1.bf16.msra.mxu0 %v198
    %335 = vmatprep.subr.bf16.mxu0 %v203
    %336 = vmatpush1.bf16.msra.mxu0 %v202
    %337 = vmatprep.subr.bf16.mxu0 %v207
    %338 = vmatpush1.bf16.msra.mxu0 %v206
    %339 = vmatprep.subr.bf16.mxu0 %v211
    %340 = vmatpush1.bf16.msra.mxu0 %v210
    %341 = vmatprep.subr.bf16.mxu0 %v215
    %342 = vmatpush1.bf16.msra.mxu0 %v214
    %343 = vmatprep.subr.bf16.mxu0 %v219
    %344 = vmatpush1.bf16.msra.mxu0 %v218
    %345 = vmatprep.subr.bf16.mxu0 %v223
    %346 = vmatpush1.bf16.msra.mxu0 %v222
    %347 = vmatprep.subr.bf16.mxu0 %v227
    %348 = vmatpush1.bf16.msra.mxu0 %v226
    %349 = vmatprep.subr.bf16.mxu0 0
    %350 = vmatpush1.bf16.msra.mxu0 0
    %351 = vmatprep.subr.bf16.mxu0 0
    %352 = vmatpush1.bf16.msra.mxu0 0
    %353 = vmatprep.subr.bf16.mxu0 0
    %354 = vmatpush1.bf16.msra.mxu0 0
    %355 = vmatprep.subr.bf16.mxu0 0
    %356 = vmatpush1.bf16.msra.mxu0 0
    %357 = vmatprep.subr.bf16.mxu0 0
    %358 = vmatpush1.bf16.msra.mxu0 0
    %359 = vmatprep.subr.bf16.mxu0 0
    %360 = vmatpush1.bf16.msra.mxu0 0
    %361 = vmatprep.subr.bf16.mxu0 0
    %362 = vmatpush1.bf16.msra.mxu0 0
    %363 = vmatprep.subr.bf16.mxu0 0
    %364 = vmatpush1.bf16.msra.mxu0 0
    %365 = vmatprep.mubr.bf16.mxu0 0
    %366 = vmatmul.mubr.bf16.gmra.mrb[0].mxu0 %v42
    %v367 = vpop.f32.mrb[0].mxu0
    %v368 = vadd.f32 %v91, %v367
    %v369 = vpop.f32.mrb[0].mxu0
    %v370 = vadd.f32 %v95, %v369
    %v371 = vpop.f32.mrb[0].mxu0
    %v372 = vadd.f32 %v91, %v371
    %v373 = vpop.f32.mrb[0].mxu0
    %v374 = vadd.f32 %v95, %v373
    %375 = vmatprep.mubr.bf16.mxu0 0
    %376 = vmatmul.mubr.bf16.gmra.mrb[0].mxu0 %v43
    %v377 = vpop.f32.mrb[0].mxu0
    %v378 = vadd.f32 %v91, %v377
    %v379 = vpop.f32.mrb[0].mxu0
    %v380 = vadd.f32 %v95, %v379
    %v381 = vpop.f32.mrb[0].mxu0
    %v382 = vadd.f32 %v91, %v381
    %v383 = vpop.f32.mrb[0].mxu0
    %v384 = vadd.f32 %v95, %v383
    %385 = vmatprep.mubr.bf16.mxu0 0
    %386 = vmatmul.mubr.bf16.gmra.mrb[0].mxu0 %v44
    %v387 = vpop.f32.mrb[0].mxu0
    %v388 = vadd.f32 %v91, %v387
    %v389 = vpop.f32.mrb[0].mxu0
    %v390 = vadd.f32 %v95, %v389
    %v391 = vpop.f32.mrb[0].mxu0
    %v392 = vadd.f32 %v91, %v391
    %v393 = vpop.f32.mrb[0].mxu0
    %v394 = vadd.f32 %v95, %v393
    %395 = vmatprep.mubr.bf16.mxu0 0
    %396 = vmatmul.mubr.bf16.gmra.mrb[0].mxu0 %v45
    %v397 = vpop.f32.mrb[0].mxu0
    %v398 = vadd.f32 %v91, %v397
    %v399 = vpop.f32.mrb[0].mxu0
    %v400 = vadd.f32 %v95, %v399
    %v401 = vpop.f32.mrb[0].mxu0
    %v402 = vadd.f32 %v91, %v401
    %v403 = vpop.f32.mrb[0].mxu0
    %v404 = vadd.f32 %v95, %v403
    %405 = vdwg.mxu0
    %406 = vst [vmem:[#allocation2] sm:$0xff] %v295
    %407 = vst [vmem:[#allocation2 + $0x8] sm:$0xff] %v297
    %408 = vst [vmem:[#allocation2 + $0x10] sm:$0xff] %v368
    %409 = vst [vmem:[#allocation2 + $0x18] sm:$0xff] %v370
    %410 = vst [vmem:[#allocation2 + $0x20] sm:$0xff] %v299
    %411 = vst [vmem:[#allocation2 + $0x28] sm:$0xff] %v301
    %412 = vst [vmem:[#allocation2 + $0x30] sm:$0xff] %v372
    %413 = vst [vmem:[#allocation2 + $0x38] sm:$0xff] %v374
    %414 = vst [vmem:[#allocation2 + $0x40] sm:$0xff] %v305
    %415 = vst [vmem:[#allocation2 + $0x48] sm:$0xff] %v307
    %416 = vst [vmem:[#allocation2 + $0x50] sm:$0xff] %v378
    %417 = vst [vmem:[#allocation2 + $0x58] sm:$0xff] %v380
    %418 = vst [vmem:[#allocation2 + $0x60] sm:$0xff] %v309
    %419 = vst [vmem:[#allocation2 + $0x68] sm:$0xff] %v311
    %420 = vst [vmem:[#allocation2 + $0x70] sm:$0xff] %v382
    %421 = vst [vmem:[#allocation2 + $0x78] sm:$0xff] %v384
    %422 = vst [vmem:[#allocation2 + $0x80] sm:$0xff] %v315
    %423 = vst [vmem:[#allocation2 + $0x88] sm:$0xff] %v317
    %424 = vst [vmem:[#allocation2 + $0x90] sm:$0xff] %v388
    %425 = vst [vmem:[#allocation2 + $0x98] sm:$0xff] %v390
    %426 = vst [vmem:[#allocation2 + $0xa0] sm:$0xff] %v319
    %427 = vst [vmem:[#allocation2 + $0xa8] sm:$0xff] %v321
    %428 = vst [vmem:[#allocation2 + $0xb0] sm:$0xff] %v392
    %429 = vst [vmem:[#allocation2 + $0xb8] sm:$0xff] %v394
    %430 = vst [vmem:[#allocation2 + $0xc0] sm:$0xff] %v325
    %431 = vst [vmem:[#allocation2 + $0xc8] sm:$0xff] %v327
    %432 = vst [vmem:[#allocation2 + $0xd0] sm:$0xff] %v398
    %433 = vst [vmem:[#allocation2 + $0xd8] sm:$0xff] %v400
    %434 = vst [vmem:[#allocation2 + $0xe0] sm:$0xff] %v329
    %435 = vst [vmem:[#allocation2 + $0xe8] sm:$0xff] %v331
    %436 = vst [vmem:[#allocation2 + $0xf0] sm:$0xff] %v402
    %437 = vst [vmem:[#allocation2 + $0xf8] sm:$0xff] %v404
    %v438 = vld [vmem:[%s6] sm:$0xf]
    %v440 = vlaneseq
    %v441 = vshrl.u32 %v440, 7
    %v442 = vsub.s32 0, %v441
    %v443 = vrot.slane %v438, %v442
    %v444 = vlaneseq
    %v445 = vshrl.u32 %v444, 7
    %v446 = vsub.s32 1, %v445
    %v447 = vrot.slane %v438, %v446
    %v448 = vlaneseq
    %v449 = vshrl.u32 %v448, 7
    %v450 = vsub.s32 2, %v449
    %v451 = vrot.slane %v438, %v450
    %v452 = vlaneseq
    %v453 = vshrl.u32 %v452, 7
    %v454 = vsub.s32 3, %v453
    %v455 = vrot.slane %v438, %v454
    %v460 = vld [vmem:[#allocation2] sm:$0xff]
    %v461 = vld [vmem:[#allocation2 + $0x8] sm:$0xff]
    %v462 = vld [vmem:[#allocation2 + $0x10] sm:$0xff]
    %v463 = vld [vmem:[#allocation2 + $0x18] sm:$0xff]
    %v464 = vtanh.pop %v460
    %v465 = vtanh.pop %v461
    %v466 = vtanh.pop %v462
    %v467 = vtanh.pop %v463
    %v468 = vmul.f32 %v464, 0.5
    %v469 = vadd.f32 %v468, 0.5
    %v470 = vmul.f32 %v465, 0.5
    %v471 = vadd.f32 %v470, 0.5
    %v472 = vmul.f32 %v467, 0.5
    %v473 = vadd.f32 %v472, 0.5
    %v474 = vmul.f32 %v471, 0.0
    %v475 = vmul.f32 %v469, %v466
    %v476 = vadd.f32 %v474, %v475
    %v477 = vtanh.pop %v476
    %v478 = vmul.f32 %v473, %v477
    %s479 = smul.u32 1, 4
    %s480 = smul.addr %s479, 8
    %s481 = scalar_lea.vmem [#allocation2], %s480
    %v482 = vld [vmem:[%s481] sm:$0xff]
    %v483 = vld [vmem:[%s481 + $0x8] sm:$0xff]
    %v484 = vld [vmem:[%s481 + $0x10] sm:$0xff]
    %v485 = vld [vmem:[%s481 + $0x18] sm:$0xff]
    %v486 = vpack.c.bf16 %v478, %v478
    %v487 = vld [vmem:[%s2] sm:$0xff]
    %v488 = vld [vmem:[%s2 + $0x8] sm:$0xff]
    %v489 = vld [vmem:[%s2 + $0x10] sm:$0xff]
    %v490 = vld [vmem:[%s2 + $0x18] sm:$0xff]
    %v491 = vld [vmem:[%s2 + $0x20] sm:$0xff]
    %v492 = vld [vmem:[%s2 + $0x28] sm:$0xff]
    %v493 = vld [vmem:[%s2 + $0x30] sm:$0xff]
    %v494 = vld [vmem:[%s2 + $0x38] sm:$0xff]
    %v495 = vld [vmem:[%s2 + $0x40] sm:$0xff]
    %v496 = vld [vmem:[%s2 + $0x48] sm:$0xff]
    %v497 = vld [vmem:[%s2 + $0x50] sm:$0xff]
    %v498 = vld [vmem:[%s2 + $0x58] sm:$0xff]
    %v499 = vld [vmem:[%s2 + $0x60] sm:$0xff]
    %v500 = vld [vmem:[%s2 + $0x68] sm:$0xff]
    %v501 = vld [vmem:[%s2 + $0x70] sm:$0xff]
    %v502 = vld [vmem:[%s2 + $0x78] sm:$0xff]
    %v503 = vld [vmem:[%s2 + $0x80] sm:$0xff]
    %v504 = vld [vmem:[%s2 + $0x88] sm:$0xff]
    %v505 = vld [vmem:[%s2 + $0x90] sm:$0xff]
    %v506 = vld [vmem:[%s2 + $0x98] sm:$0xff]
    %v507 = vld [vmem:[%s2 + $0xa0] sm:$0xff]
    %v508 = vld [vmem:[%s2 + $0xa8] sm:$0xff]
    %v509 = vld [vmem:[%s2 + $0xb0] sm:$0xff]
    %v510 = vld [vmem:[%s2 + $0xb8] sm:$0xff]
    %v511 = vld [vmem:[%s2 + $0xc0] sm:$0xff]
    %v512 = vld [vmem:[%s2 + $0xc8] sm:$0xff]
    %v513 = vld [vmem:[%s2 + $0xd0] sm:$0xff]
    %v514 = vld [vmem:[%s2 + $0xd8] sm:$0xff]
    %v515 = vld [vmem:[%s2 + $0xe0] sm:$0xff]
    %v516 = vld [vmem:[%s2 + $0xe8] sm:$0xff]
    %v517 = vld [vmem:[%s2 + $0xf0] sm:$0xff]
    %v518 = vld [vmem:[%s2 + $0xf8] sm:$0xff]
    %v551 = vunpack.c.l.b16 %v487
    %v552 = vunpack.c.h.b16 %v487
    %v553 = vunpack.c.l.b16 %v488
    %v554 = vunpack.c.h.b16 %v488
    %v555 = vunpack.c.l.b16 %v489
    %v556 = vunpack.c.h.b16 %v489
    %v557 = vunpack.c.l.b16 %v490
    %v558 = vunpack.c.h.b16 %v490
    %v559 = vunpack.c.l.b16 %v491
    %v560 = vunpack.c.h.b16 %v491
    %v561 = vunpack.c.l.b16 %v492
    %v562 = vunpack.c.h.b16 %v492
    %v563 = vunpack.c.l.b16 %v493
    %v564 = vunpack.c.h.b16 %v493
    %v565 = vunpack.c.l.b16 %v494
    %v566 = vunpack.c.h.b16 %v494
    %v567 = vunpack.c.l.b16 %v495
    %v568 = vunpack.c.h.b16 %v495
    %v569 = vunpack.c.l.b16 %v496
    %v570 = vunpack.c.h.b16 %v496
    %v571 = vunpack.c.l.b16 %v497
    %v572 = vunpack.c.h.b16 %v497
    %v573 = vunpack.c.l.b16 %v498
    %v574 = vunpack.c.h.b16 %v498
    %v575 = vunpack.c.l.b16 %v499
    %v576 = vunpack.c.h.b16 %v499
    %v577 = vunpack.c.l.b16 %v500
    %v578 = vunpack.c.h.b16 %v500
    %v579 = vunpack.c.l.b16 %v501
    %v580 = vunpack.c.h.b16 %v501
    %v581 = vunpack.c.l.b16 %v502
    %v582 = vunpack.c.h.b16 %v502
    %v583 = vunpack.c.l.b16 %v503
    %v584 = vunpack.c.h.b16 %v503
    %v585 = vunpack.c.l.b16 %v504
    %v586 = vunpack.c.h.b16 %v504
    %v587 = vunpack.c.l.b16 %v505
    %v588 = vunpack.c.h.b16 %v505
    %v589 = vunpack.c.l.b16 %v506
    %v590 = vunpack.c.h.b16 %v506
    %v591 = vunpack.c.l.b16 %v507
    %v592 = vunpack.c.h.b16 %v507
    %v593 = vunpack.c.l.b16 %v508
    %v594 = vunpack.c.h.b16 %v508
    %v595 = vunpack.c.l.b16 %v509
    %v596 = vunpack.c.h.b16 %v509
    %v597 = vunpack.c.l.b16 %v510
    %v598 = vunpack.c.h.b16 %v510
    %v599 = vunpack.c.l.b16 %v511
    %v600 = vunpack.c.h.b16 %v511
    %v601 = vunpack.c.l.b16 %v512
    %v602 = vunpack.c.h.b16 %v512
    %v603 = vunpack.c.l.b16 %v513
    %v604 = vunpack.c.h.b16 %v513
    %v605 = vunpack.c.l.b16 %v514
    %v606 = vunpack.c.h.b16 %v514
    %v607 = vunpack.c.l.b16 %v515
    %v608 = vunpack.c.h.b16 %v515
    %v609 = vunpack.c.l.b16 %v516
    %v610 = vunpack.c.h.b16 %v516
    %v611 = vunpack.c.l.b16 %v517
    %v612 = vunpack.c.h.b16 %v517
    %v613 = vunpack.c.l.b16 %v518
    %v614 = vunpack.c.h.b16 %v518
    %v615 = vpack.c.b16 %v555, %v551
    %v616 = vpack.c.b16 %v556, %v552
    %v617 = vpack.c.b16 %v557, %v553
    %v618 = vpack.c.b16 %v558, %v554
    %v619 = vpack.c.b16 %v563, %v559
    %v620 = vpack.c.b16 %v564, %v560
    %v621 = vpack.c.b16 %v565, %v561
    %v622 = vpack.c.b16 %v566, %v562
    %v623 = vpack.c.b16 %v571, %v567
    %v624 = vpack.c.b16 %v572, %v568
    %v625 = vpack.c.b16 %v573, %v569
    %v626 = vpack.c.b16 %v574, %v570
    %v627 = vpack.c.b16 %v579, %v575
    %v628 = vpack.c.b16 %v580, %v576
    %v629 = vpack.c.b16 %v581, %v577
    %v630 = vpack.c.b16 %v582, %v578
    %v631 = vpack.c.b16 %v587, %v583
    %v632 = vpack.c.b16 %v588, %v584
    %v633 = vpack.c.b16 %v589, %v585
    %v634 = vpack.c.b16 %v590, %v586
    %v635 = vpack.c.b16 %v595, %v591
    %v636 = vpack.c.b16 %v596, %v592
    %v637 = vpack.c.b16 %v597, %v593
    %v638 = vpack.c.b16 %v598, %v594
    %v639 = vpack.c.b16 %v603, %v599
    %v640 = vpack.c.b16 %v604, %v600
    %v641 = vpack.c.b16 %v605, %v601
    %v642 = vpack.c.b16 %v606, %v602
    %v643 = vpack.c.b16 %v611, %v607
    %v644 = vpack.c.b16 %v612, %v608
    %v645 = vpack.c.b16 %v613, %v609
    %v646 = vpack.c.b16 %v614, %v610
    %679 = vmatprep.subr.bf16.mxu0 %v616
    %680 = vmatpush1.bf16.msra.mxu0 %v615
    %681 = vmatprep.subr.bf16.mxu0 %v620
    %682 = vmatpush1.bf16.msra.mxu0 %v619
    %683 = vmatprep.subr.bf16.mxu0 %v624
    %684 = vmatpush1.bf16.msra.mxu0 %v623
    %685 = vmatprep.subr.bf16.mxu0 %v628
    %686 = vmatpush1.bf16.msra.mxu0 %v627
    %687 = vmatprep.subr.bf16.mxu0 %v632
    %688 = vmatpush1.bf16.msra.mxu0 %v631
    %689 = vmatprep.subr.bf16.mxu0 %v636
    %690 = vmatpush1.bf16.msra.mxu0 %v635
    %691 = vmatprep.subr.bf16.mxu0 %v640
    %692 = vmatpush1.bf16.msra.mxu0 %v639
    %693 = vmatprep.subr.bf16.mxu0 %v644
    %694 = vmatpush1.bf16.msra.mxu0 %v643
    %695 = vmatprep.subr.bf16.mxu0 0
    %696 = vmatpush1.bf16.msra.mxu0 0
    %697 = vmatprep.subr.bf16.mxu0 0
    %698 = vmatpush1.bf16.msra.mxu0 0
    %699 = vmatprep.subr.bf16.mxu0 0
    %700 = vmatpush1.bf16.msra.mxu0 0
    %701 = vmatprep.subr.bf16.mxu0 0
    %702 = vmatpush1.bf16.msra.mxu0 0
    %703 = vmatprep.subr.bf16.mxu0 0
    %704 = vmatpush1.bf16.msra.mxu0 0
    %705 = vmatprep.subr.bf16.mxu0 0
    %706 = vmatpush1.bf16.msra.mxu0 0
    %707 = vmatprep.subr.bf16.mxu0 0
    %708 = vmatpush1.bf16.msra.mxu0 0
    %709 = vmatprep.subr.bf16.mxu0 0
    %710 = vmatpush1.bf16.msra.mxu0 0
    %711 = vmatprep.mubr.bf16.mxu0 0
    %712 = vmatmul.mubr.bf16.gmra.mrb[0].mxu0 %v486
    %v713 = vpop.f32.mrb[0].mxu0
    %v714 = vadd.f32 0.0, %v713
    %v715 = vpop.f32.mrb[0].mxu0
    %v716 = vadd.f32 0.0, %v715
    %v717 = vpop.f32.mrb[0].mxu0
    %v718 = vpop.f32.mrb[0].mxu0
    %719 = vdwg.mxu0
    %720 = vmatprep.subr.bf16.mxu0 %v618
    %721 = vmatpush1.bf16.msra.mxu0 %v617
    %722 = vmatprep.subr.bf16.mxu0 %v622
    %723 = vmatpush1.bf16.msra.mxu0 %v621
    %724 = vmatprep.subr.bf16.mxu0 %v626
    %725 = vmatpush1.bf16.msra.mxu0 %v625
    %726 = vmatprep.subr.bf16.mxu0 %v630
    %727 = vmatpush1.bf16.msra.mxu0 %v629
    %728 = vmatprep.subr.bf16.mxu0 %v634
    %729 = vmatpush1.bf16.msra.mxu0 %v633
    %730 = vmatprep.subr.bf16.mxu0 %v638
    %731 = vmatpush1.bf16.msra.mxu0 %v637
    %732 = vmatprep.subr.bf16.mxu0 %v642
    %733 = vmatpush1.bf16.msra.mxu0 %v641
    %734 = vmatprep.subr.bf16.mxu0 %v646
    %735 = vmatpush1.bf16.msra.mxu0 %v645
    %736 = vmatprep.subr.bf16.mxu0 0
    %737 = vmatpush1.bf16.msra.mxu0 0
    %738 = vmatprep.subr.bf16.mxu0 0
    %739 = vmatpush1.bf16.msra.mxu0 0
    %740 = vmatprep.subr.bf16.mxu0 0
    %741 = vmatpush1.bf16.msra.mxu0 0
    %742 = vmatprep.subr.bf16.mxu0 0
    %743 = vmatpush1.bf16.msra.mxu0 0
    %744 = vmatprep.subr.bf16.mxu0 0
    %745 = vmatpush1.bf16.msra.mxu0 0
    %746 = vmatprep.subr.bf16.mxu0 0
    %747 = vmatpush1.bf16.msra.mxu0 0
    %748 = vmatprep.subr.bf16.mxu0 0
    %749 = vmatpush1.bf16.msra.mxu0 0
    %750 = vmatprep.subr.bf16.mxu0 0
    %751 = vmatpush1.bf16.msra.mxu0 0
    %752 = vmatprep.mubr.bf16.mxu0 0
    %753 = vmatmul.mubr.bf16.gmra.mrb[0].mxu0 %v486
    %v754 = vpop.f32.mrb[0].mxu0
    %v755 = vadd.f32 0.0, %v754
    %v756 = vpop.f32.mrb[0].mxu0
    %v757 = vadd.f32 0.0, %v756
    %v758 = vpop.f32.mrb[0].mxu0
    %v759 = vpop.f32.mrb[0].mxu0
    %760 = vdwg.mxu0
    %v761 = vadd.f32 %v482, %v714
    %v762 = vadd.f32 %v483, %v716
    %v763 = vadd.f32 %v484, %v755
    %v764 = vadd.f32 %v485, %v757
    %v765 = vtanh.pop %v761
    %v766 = vtanh.pop %v762
    %v767 = vtanh.pop %v763
    %v768 = vtanh.pop %v764
    %v769 = vmul.f32 %v765, 0.5
    %v770 = vadd.f32 %v769, 0.5
    %v771 = vmul.f32 %v766, 0.5
    %v772 = vadd.f32 %v771, 0.5
    %v773 = vmul.f32 %v768, 0.5
    %v774 = vadd.f32 %v773, 0.5
    %v775 = vmul.f32 %v772, %v476
    %v776 = vmul.f32 %v770, %v767
    %v777 = vadd.f32 %v775, %v776
    %v778 = vtanh.pop %v777
    %v779 = vmul.f32 %v774, %v778
    %v780 = vld [vmem:[%s4] sm:$0xff]
    %v781 = vld [vmem:[%s4 + $0x8] sm:$0xff]
    %v782 = vld [vmem:[%s4 + $0x10] sm:$0xff]
    %v783 = vld [vmem:[%s4 + $0x18] sm:$0xff]
    %v784 = vld [vmem:[%s4 + $0x20] sm:$0xff]
    %v785 = vld [vmem:[%s4 + $0x28] sm:$0xff]
    %v786 = vld [vmem:[%s4 + $0x30] sm:$0xff]
    %v787 = vld [vmem:[%s4 + $0x38] sm:$0xff]
    %v788 = vld [vmem:[%s4 + $0x40] sm:$0xff]
    %v789 = vld [vmem:[%s4 + $0x48] sm:$0xff]
    %v790 = vld [vmem:[%s4 + $0x50] sm:$0xff]
    %v791 = vld [vmem:[%s4 + $0x58] sm:$0xff]
    %v792 = vld [vmem:[%s4 + $0x60] sm:$0xff]
    %v793 = vld [vmem:[%s4 + $0x68] sm:$0xff]
    %v794 = vld [vmem:[%s4 + $0x70] sm:$0xff]
    %v795 = vld [vmem:[%s4 + $0x78] sm:$0xff]
    %v796 = vld [vmem:[%s4 + $0x80] sm:$0xff]
    %v797 = vld [vmem:[%s4 + $0x88] sm:$0xff]
    %v798 = vld [vmem:[%s4 + $0x90] sm:$0xff]
    %v799 = vld [vmem:[%s4 + $0x98] sm:$0xff]
    %v800 = vld [vmem:[%s4 + $0xa0] sm:$0xff]
    %v801 = vld [vmem:[%s4 + $0xa8] sm:$0xff]
    %v802 = vld [vmem:[%s4 + $0xb0] sm:$0xff]
    %v803 = vld [vmem:[%s4 + $0xb8] sm:$0xff]
    %v804 = vld [vmem:[%s4 + $0xc0] sm:$0xff]
    %v805 = vld [vmem:[%s4 + $0xc8] sm:$0xff]
    %v806 = vld [vmem:[%s4 + $0xd0] sm:$0xff]
    %v807 = vld [vmem:[%s4 + $0xd8] sm:$0xff]
    %v808 = vld [vmem:[%s4 + $0xe0] sm:$0xff]
    %v809 = vld [vmem:[%s4 + $0xe8] sm:$0xff]
    %v810 = vld [vmem:[%s4 + $0xf0] sm:$0xff]
    %v811 = vld [vmem:[%s4 + $0xf8] sm:$0xff]
    %v844 = vunpack.c.l.b16 %v780
    %v845 = vunpack.c.h.b16 %v780
    %v846 = vunpack.c.l.b16 %v781
    %v847 = vunpack.c.h.b16 %v781
    %v848 = vunpack.c.l.b16 %v782
    %v849 = vunpack.c.h.b16 %v782
    %v850 = vunpack.c.l.b16 %v783
    %v851 = vunpack.c.h.b16 %v783
    %v852 = vunpack.c.l.b16 %v784
    %v853 = vunpack.c.h.b16 %v784
    %v854 = vunpack.c.l.b16 %v785
    %v855 = vunpack.c.h.b16 %v785
    %v856 = vunpack.c.l.b16 %v786
    %v857 = vunpack.c.h.b16 %v786
    %v858 = vunpack.c.l.b16 %v787
    %v859 = vunpack.c.h.b16 %v787
    %v860 = vunpack.c.l.b16 %v788
    %v861 = vunpack.c.h.b16 %v788
    %v862 = vunpack.c.l.b16 %v789
    %v863 = vunpack.c.h.b16 %v789
    %v864 = vunpack.c.l.b16 %v790
    %v865 = vunpack.c.h.b16 %v790
    %v866 = vunpack.c.l.b16 %v791
    %v867 = vunpack.c.h.b16 %v791
    %v868 = vunpack.c.l.b16 %v792
    %v869 = vunpack.c.h.b16 %v792
    %v870 = vunpack.c.l.b16 %v793
    %v871 = vunpack.c.h.b16 %v793
    %v872 = vunpack.c.l.b16 %v794
    %v873 = vunpack.c.h.b16 %v794
    %v874 = vunpack.c.l.b16 %v795
    %v875 = vunpack.c.h.b16 %v795
    %v876 = vunpack.c.l.b16 %v796
    %v877 = vunpack.c.h.b16 %v796
    %v878 = vunpack.c.l.b16 %v797
    %v879 = vunpack.c.h.b16 %v797
    %v880 = vunpack.c.l.b16 %v798
    %v881 = vunpack.c.h.b16 %v798
    %v882 = vunpack.c.l.b16 %v799
    %v883 = vunpack.c.h.b16 %v799
    %v884 = vunpack.c.l.b16 %v800
    %v885 = vunpack.c.h.b16 %v800
    %v886 = vunpack.c.l.b16 %v801
    %v887 = vunpack.c.h.b16 %v801
    %v888 = vunpack.c.l.b16 %v802
    %v889 = vunpack.c.h.b16 %v802
    %v890 = vunpack.c.l.b16 %v803
    %v891 = vunpack.c.h.b16 %v803
    %v892 = vunpack.c.l.b16 %v804
    %v893 = vunpack.c.h.b16 %v804
    %v894 = vunpack.c.l.b16 %v805
    %v895 = vunpack.c.h.b16 %v805
    %v896 = vunpack.c.l.b16 %v806
    %v897 = vunpack.c.h.b16 %v806
    %v898 = vunpack.c.l.b16 %v807
    %v899 = vunpack.c.h.b16 %v807
    %v900 = vunpack.c.l.b16 %v808
    %v901 = vunpack.c.h.b16 %v808
    %v902 = vunpack.c.l.b16 %v809
    %v903 = vunpack.c.h.b16 %v809
    %v904 = vunpack.c.l.b16 %v810
    %v905 = vunpack.c.h.b16 %v810
    %v906 = vunpack.c.l.b16 %v811
    %v907 = vunpack.c.h.b16 %v811
    %v908 = vpack.c.b16 %v848, %v844
    %v909 = vpack.c.b16 %v849, %v845
    %v910 = vpack.c.b16 %v850, %v846
    %v911 = vpack.c.b16 %v851, %v847
    %v912 = vpack.c.b16 %v856, %v852
    %v913 = vpack.c.b16 %v857, %v853
    %v914 = vpack.c.b16 %v858, %v854
    %v915 = vpack.c.b16 %v859, %v855
    %v916 = vpack.c.b16 %v864, %v860
    %v917 = vpack.c.b16 %v865, %v861
    %v918 = vpack.c.b16 %v866, %v862
    %v919 = vpack.c.b16 %v867, %v863
    %v920 = vpack.c.b16 %v872, %v868
    %v921 = vpack.c.b16 %v873, %v869
    %v922 = vpack.c.b16 %v874, %v870
    %v923 = vpack.c.b16 %v875, %v871
    %v924 = vpack.c.b16 %v880, %v876
    %v925 = vpack.c.b16 %v881, %v877
    %v926 = vpack.c.b16 %v882, %v878
    %v927 = vpack.c.b16 %v883, %v879
    %v928 = vpack.c.b16 %v888, %v884
    %v929 = vpack.c.b16 %v889, %v885
    %v930 = vpack.c.b16 %v890, %v886
    %v931 = vpack.c.b16 %v891, %v887
    %v932 = vpack.c.b16 %v896, %v892
    %v933 = vpack.c.b16 %v897, %v893
    %v934 = vpack.c.b16 %v898, %v894
    %v935 = vpack.c.b16 %v899, %v895
    %v936 = vpack.c.b16 %v904, %v900
    %v937 = vpack.c.b16 %v905, %v901
    %v938 = vpack.c.b16 %v906, %v902
    %v939 = vpack.c.b16 %v907, %v903
    %972 = vmatprep.subr.bf16.mxu0 %v909
    %973 = vmatpush1.bf16.msra.mxu0 %v908
    %974 = vmatprep.subr.bf16.mxu0 %v913
    %975 = vmatpush1.bf16.msra.mxu0 %v912
    %976 = vmatprep.subr.bf16.mxu0 %v917
    %977 = vmatpush1.bf16.msra.mxu0 %v916
    %978 = vmatprep.subr.bf16.mxu0 %v921
    %979 = vmatpush1.bf16.msra.mxu0 %v920
    %980 = vmatprep.subr.bf16.mxu0 %v925
    %981 = vmatpush1.bf16.msra.mxu0 %v924
    %982 = vmatprep.subr.bf16.mxu0 %v929
    %983 = vmatpush1.bf16.msra.mxu0 %v928
    %984 = vmatprep.subr.bf16.mxu0 %v933
    %985 = vmatpush1.bf16.msra.mxu0 %v932
    %986 = vmatprep.subr.bf16.mxu0 %v937
    %987 = vmatpush1.bf16.msra.mxu0 %v936
    %988 = vmatprep.subr.bf16.mxu0 0
    %989 = vmatpush1.bf16.msra.mxu0 0
    %990 = vmatprep.subr.bf16.mxu0 0
    %991 = vmatpush1.bf16.msra.mxu0 0
    %992 = vmatprep.subr.bf16.mxu0 0
    %993 = vmatpush1.bf16.msra.mxu0 0
    %994 = vmatprep.subr.bf16.mxu0 0
    %995 = vmatpush1.bf16.msra.mxu0 0
    %996 = vmatprep.subr.bf16.mxu0 0
    %997 = vmatpush1.bf16.msra.mxu0 0
    %998 = vmatprep.subr.bf16.mxu0 0
    %999 = vmatpush1.bf16.msra.mxu0 0
    %1000 = vmatprep.subr.bf16.mxu0 0
    %1001 = vmatpush1.bf16.msra.mxu0 0
    %1002 = vmatprep.subr.bf16.mxu0 0
    %1003 = vmatpush1.bf16.msra.mxu0 0
    %1004 = vmatprep.mubr.bf16.mxu0 0
    %1005 = vmatmul.mubr.bf16.gmra.mrb[0].mxu0 %v486
    %v1006 = vpop.f32.mrb[0].mxu0
    %v1007 = vadd.f32 0.0, %v1006
    %v1008 = vpop.f32.mrb[0].mxu0
    %v1009 = vadd.f32 0.0, %v1008
    %v1010 = vpop.f32.mrb[0].mxu0
    %v1011 = vpop.f32.mrb[0].mxu0
    %1012 = vdwg.mxu0
    %1013 = vmatprep.subr.bf16.mxu0 %v911
    %1014 = vmatpush1.bf16.msra.mxu0 %v910
    %1015 = vmatprep.subr.bf16.mxu0 %v915
    %1016 = vmatpush1.bf16.msra.mxu0 %v914
    %1017 = vmatprep.subr.bf16.mxu0 %v919
    %1018 = vmatpush1.bf16.msra.mxu0 %v918
    %1019 = vmatprep.subr.bf16.mxu0 %v923
    %1020 = vmatpush1.bf16.msra.mxu0 %v922
    %1021 = vmatprep.subr.bf16.mxu0 %v927
    %1022 = vmatpush1.bf16.msra.mxu0 %v926
    %1023 = vmatprep.subr.bf16.mxu0 %v931
    %1024 = vmatpush1.bf16.msra.mxu0 %v930
    %1025 = vmatprep.subr.bf16.mxu0 %v935
    %1026 = vmatpush1.bf16.msra.mxu0 %v934
    %1027 = vmatprep.subr.bf16.mxu0 %v939
    %1028 = vmatpush1.bf16.msra.mxu0 %v938
    %1029 = vmatprep.subr.bf16.mxu0 0
    %1030 = vmatpush1.bf16.msra.mxu0 0
    %1031 = vmatprep.subr.bf16.mxu0 0
    %1032 = vmatpush1.bf16.msra.mxu0 0
    %1033 = vmatprep.subr.bf16.mxu0 0
    %1034 = vmatpush1.bf16.msra.mxu0 0
    %1035 = vmatprep.subr.bf16.mxu0 0
    %1036 = vmatpush1.bf16.msra.mxu0 0
    %1037 = vmatprep.subr.bf16.mxu0 0
    %1038 = vmatpush1.bf16.msra.mxu0 0
    %1039 = vmatprep.subr.bf16.mxu0 0
    %1040 = vmatpush1.bf16.msra.mxu0 0
    %1041 = vmatprep.subr.bf16.mxu0 0
    %1042 = vmatpush1.bf16.msra.mxu0 0
    %1043 = vmatprep.subr.bf16.mxu0 0
    %1044 = vmatpush1.bf16.msra.mxu0 0
    %1045 = vmatprep.mubr.bf16.mxu0 0
    %1046 = vmatmul.mubr.bf16.gmra.mrb[0].mxu0 %v486
    %v1047 = vpop.f32.mrb[0].mxu0
    %v1048 = vadd.f32 0.0, %v1047
    %v1049 = vpop.f32.mrb[0].mxu0
    %v1050 = vadd.f32 0.0, %v1049
    %v1051 = vpop.f32.mrb[0].mxu0
    %v1052 = vpop.f32.mrb[0].mxu0
    %1053 = vdwg.mxu0
    %v1054 = vadd.f32 %v443, %v1007
    %v1055 = vadd.f32 %v447, %v1009
    %v1056 = vadd.f32 %v451, %v1048
    %v1057 = vadd.f32 %v455, %v1050
    %v1058 = vld [vmem:[%s5] sm:$0xff]
    %v1059 = vld [vmem:[%s5 + $0x8] sm:$0xff]
    %v1060 = vld [vmem:[%s5 + $0x10] sm:$0xff]
    %v1061 = vld [vmem:[%s5 + $0x18] sm:$0xff]
    %v1062 = vld [vmem:[%s5 + $0x20] sm:$0xff]
    %v1063 = vld [vmem:[%s5 + $0x28] sm:$0xff]
    %v1064 = vld [vmem:[%s5 + $0x30] sm:$0xff]
    %v1065 = vld [vmem:[%s5 + $0x38] sm:$0xff]
    %v1066 = vld [vmem:[%s5 + $0x40] sm:$0xff]
    %v1067 = vld [vmem:[%s5 + $0x48] sm:$0xff]
    %v1068 = vld [vmem:[%s5 + $0x50] sm:$0xff]
    %v1069 = vld [vmem:[%s5 + $0x58] sm:$0xff]
    %v1070 = vld [vmem:[%s5 + $0x60] sm:$0xff]
    %v1071 = vld [vmem:[%s5 + $0x68] sm:$0xff]
    %v1072 = vld [vmem:[%s5 + $0x70] sm:$0xff]
    %v1073 = vld [vmem:[%s5 + $0x78] sm:$0xff]
    %v1074 = vld [vmem:[%s5 + $0x80] sm:$0xff]
    %v1075 = vld [vmem:[%s5 + $0x88] sm:$0xff]
    %v1076 = vld [vmem:[%s5 + $0x90] sm:$0xff]
    %v1077 = vld [vmem:[%s5 + $0x98] sm:$0xff]
    %v1078 = vld [vmem:[%s5 + $0xa0] sm:$0xff]
    %v1079 = vld [vmem:[%s5 + $0xa8] sm:$0xff]
    %v1080 = vld [vmem:[%s5 + $0xb0] sm:$0xff]
    %v1081 = vld [vmem:[%s5 + $0xb8] sm:$0xff]
    %v1082 = vld [vmem:[%s5 + $0xc0] sm:$0xff]
    %v1083 = vld [vmem:[%s5 + $0xc8] sm:$0xff]
    %v1084 = vld [vmem:[%s5 + $0xd0] sm:$0xff]
    %v1085 = vld [vmem:[%s5 + $0xd8] sm:$0xff]
    %v1086 = vld [vmem:[%s5 + $0xe0] sm:$0xff]
    %v1087 = vld [vmem:[%s5 + $0xe8] sm:$0xff]
    %v1088 = vld [vmem:[%s5 + $0xf0] sm:$0xff]
    %v1089 = vld [vmem:[%s5 + $0xf8] sm:$0xff]
    %v1122 = vunpack.c.l.b16 %v1058
    %v1123 = vunpack.c.h.b16 %v1058
    %v1124 = vunpack.c.l.b16 %v1059
    %v1125 = vunpack.c.h.b16 %v1059
    %v1126 = vunpack.c.l.b16 %v1060
    %v1127 = vunpack.c.h.b16 %v1060
    %v1128 = vunpack.c.l.b16 %v1061
    %v1129 = vunpack.c.h.b16 %v1061
    %v1130 = vunpack.c.l.b16 %v1062
    %v1131 = vunpack.c.h.b16 %v1062
    %v1132 = vunpack.c.l.b16 %v1063
    %v1133 = vunpack.c.h.b16 %v1063
    %v1134 = vunpack.c.l.b16 %v1064
    %v1135 = vunpack.c.h.b16 %v1064
    %v1136 = vunpack.c.l.b16 %v1065
    %v1137 = vunpack.c.h.b16 %v1065
    %v1138 = vunpack.c.l.b16 %v1066
    %v1139 = vunpack.c.h.b16 %v1066
    %v1140 = vunpack.c.l.b16 %v1067
    %v1141 = vunpack.c.h.b16 %v1067
    %v1142 = vunpack.c.l.b16 %v1068
    %v1143 = vunpack.c.h.b16 %v1068
    %v1144 = vunpack.c.l.b16 %v1069
    %v1145 = vunpack.c.h.b16 %v1069
    %v1146 = vunpack.c.l.b16 %v1070
    %v1147 = vunpack.c.h.b16 %v1070
    %v1148 = vunpack.c.l.b16 %v1071
    %v1149 = vunpack.c.h.b16 %v1071
    %v1150 = vunpack.c.l.b16 %v1072
    %v1151 = vunpack.c.h.b16 %v1072
    %v1152 = vunpack.c.l.b16 %v1073
    %v1153 = vunpack.c.h.b16 %v1073
    %v1154 = vunpack.c.l.b16 %v1074
    %v1155 = vunpack.c.h.b16 %v1074
    %v1156 = vunpack.c.l.b16 %v1075
    %v1157 = vunpack.c.h.b16 %v1075
    %v1158 = vunpack.c.l.b16 %v1076
    %v1159 = vunpack.c.h.b16 %v1076
    %v1160 = vunpack.c.l.b16 %v1077
    %v1161 = vunpack.c.h.b16 %v1077
    %v1162 = vunpack.c.l.b16 %v1078
    %v1163 = vunpack.c.h.b16 %v1078
    %v1164 = vunpack.c.l.b16 %v1079
    %v1165 = vunpack.c.h.b16 %v1079
    %v1166 = vunpack.c.l.b16 %v1080
    %v1167 = vunpack.c.h.b16 %v1080
    %v1168 = vunpack.c.l.b16 %v1081
    %v1169 = vunpack.c.h.b16 %v1081
    %v1170 = vunpack.c.l.b16 %v1082
    %v1171 = vunpack.c.h.b16 %v1082
    %v1172 = vunpack.c.l.b16 %v1083
    %v1173 = vunpack.c.h.b16 %v1083
    %v1174 = vunpack.c.l.b16 %v1084
    %v1175 = vunpack.c.h.b16 %v1084
    %v1176 = vunpack.c.l.b16 %v1085
    %v1177 = vunpack.c.h.b16 %v1085
    %v1178 = vunpack.c.l.b16 %v1086
    %v1179 = vunpack.c.h.b16 %v1086
    %v1180 = vunpack.c.l.b16 %v1087
    %v1181 = vunpack.c.h.b16 %v1087
    %v1182 = vunpack.c.l.b16 %v1088
    %v1183 = vunpack.c.h.b16 %v1088
    %v1184 = vunpack.c.l.b16 %v1089
    %v1185 = vunpack.c.h.b16 %v1089
    %v1186 = vpack.c.b16 %v1126, %v1122
    %v1187 = vpack.c.b16 %v1127, %v1123
    %v1188 = vpack.c.b16 %v1128, %v1124
    %v1189 = vpack.c.b16 %v1129, %v1125
    %v1190 = vpack.c.b16 %v1134, %v1130
    %v1191 = vpack.c.b16 %v1135, %v1131
    %v1192 = vpack.c.b16 %v1136, %v1132
    %v1193 = vpack.c.b16 %v1137, %v1133
    %v1194 = vpack.c.b16 %v1142, %v1138
    %v1195 = vpack.c.b16 %v1143, %v1139
    %v1196 = vpack.c.b16 %v1144, %v1140
    %v1197 = vpack.c.b16 %v1145, %v1141
    %v1198 = vpack.c.b16 %v1150, %v1146
    %v1199 = vpack.c.b16 %v1151, %v1147
    %v1200 = vpack.c.b16 %v1152, %v1148
    %v1201 = vpack.c.b16 %v1153, %v1149
    %v1202 = vpack.c.b16 %v1158, %v1154
    %v1203 = vpack.c.b16 %v1159, %v1155
    %v1204 = vpack.c.b16 %v1160, %v1156
    %v1205 = vpack.c.b16 %v1161, %v1157
    %v1206 = vpack.c.b16 %v1166, %v1162
    %v1207 = vpack.c.b16 %v1167, %v1163
    %v1208 = vpack.c.b16 %v1168, %v1164
    %v1209 = vpack.c.b16 %v1169, %v1165
    %v1210 = vpack.c.b16 %v1174, %v1170
    %v1211 = vpack.c.b16 %v1175, %v1171
    %v1212 = vpack.c.b16 %v1176, %v1172
    %v1213 = vpack.c.b16 %v1177, %v1173
    %v1214 = vpack.c.b16 %v1182, %v1178
    %v1215 = vpack.c.b16 %v1183, %v1179
    %v1216 = vpack.c.b16 %v1184, %v1180
    %v1217 = vpack.c.b16 %v1185, %v1181
    %1250 = vmatprep.subr.bf16.mxu0 %v1187
    %1251 = vmatpush1.bf16.msra.mxu0 %v1186
    %1252 = vmatprep.subr.bf16.mxu0 %v1191
    %1253 = vmatpush1.bf16.msra.mxu0 %v1190
    %1254 = vmatprep.subr.bf16.mxu0 %v1195
    %1255 = vmatpush1.bf16.msra.mxu0 %v1194
    %1256 = vmatprep.subr.bf16.mxu0 %v1199
    %1257 = vmatpush1.bf16.msra.mxu0 %v1198
    %1258 = vmatprep.subr.bf16.mxu0 %v1203
    %1259 = vmatpush1.bf16.msra.mxu0 %v1202
    %1260 = vmatprep.subr.bf16.mxu0 %v1207
    %1261 = vmatpush1.bf16.msra.mxu0 %v1206
    %1262 = vmatprep.subr.bf16.mxu0 %v1211
    %1263 = vmatpush1.bf16.msra.mxu0 %v1210
    %1264 = vmatprep.subr.bf16.mxu0 %v1215
    %1265 = vmatpush1.bf16.msra.mxu0 %v1214
    %1266 = vmatprep.subr.bf16.mxu0 0
    %1267 = vmatpush1.bf16.msra.mxu0 0
    %1268 = vmatprep.subr.bf16.mxu0 0
    %1269 = vmatpush1.bf16.msra.mxu0 0
    %1270 = vmatprep.subr.bf16.mxu0 0
    %1271 = vmatpush1.bf16.msra.mxu0 0
    %1272 = vmatprep.subr.bf16.mxu0 0
    %1273 = vmatpush1.bf16.msra.mxu0 0
    %1274 = vmatprep.subr.bf16.mxu0 0
    %1275 = vmatpush1.bf16.msra.mxu0 0
    %1276 = vmatprep.subr.bf16.mxu0 0
    %1277 = vmatpush1.bf16.msra.mxu0 0
    %1278 = vmatprep.subr.bf16.mxu0 0
    %1279 = vmatpush1.bf16.msra.mxu0 0
    %1280 = vmatprep.subr.bf16.mxu0 0
    %1281 = vmatpush1.bf16.msra.mxu0 0
    %1282 = vmatprep.mubr.bf16.mxu0 0
    %1283 = vmatmul.mubr.bf16.gmra.mrb[0].mxu0 0
    %v1284 = vpop.f32.mrb[0].mxu0
    %v1285 = vadd.f32 0.0, %v1284
    %v1286 = vpop.f32.mrb[0].mxu0
    %v1287 = vadd.f32 0.0, %v1286
    %v1288 = vpop.f32.mrb[0].mxu0
    %v1289 = vpop.f32.mrb[0].mxu0
    %1290 = vdwg.mxu0
    %1291 = vmatprep.subr.bf16.mxu0 %v1189
    %1292 = vmatpush1.bf16.msra.mxu0 %v1188
    %1293 = vmatprep.subr.bf16.mxu0 %v1193
    %1294 = vmatpush1.bf16.msra.mxu0 %v1192
    %1295 = vmatprep.subr.bf16.mxu0 %v1197
    %1296 = vmatpush1.bf16.msra.mxu0 %v1196
    %1297 = vmatprep.subr.bf16.mxu0 %v1201
    %1298 = vmatpush1.bf16.msra.mxu0 %v1200
    %1299 = vmatprep.subr.bf16.mxu0 %v1205
    %1300 = vmatpush1.bf16.msra.mxu0 %v1204
    %1301 = vmatprep.subr.bf16.mxu0 %v1209
    %1302 = vmatpush1.bf16.msra.mxu0 %v1208
    %1303 = vmatprep.subr.bf16.mxu0 %v1213
    %1304 = vmatpush1.bf16.msra.mxu0 %v1212
    %1305 = vmatprep.subr.bf16.mxu0 %v1217
    %1306 = vmatpush1.bf16.msra.mxu0 %v1216
    %1307 = vmatprep.subr.bf16.mxu0 0
    %1308 = vmatpush1.bf16.msra.mxu0 0
    %1309 = vmatprep.subr.bf16.mxu0 0
    %1310 = vmatpush1.bf16.msra.mxu0 0
    %1311 = vmatprep.subr.bf16.mxu0 0
    %1312 = vmatpush1.bf16.msra.mxu0 0
    %1313 = vmatprep.subr.bf16.mxu0 0
    %1314 = vmatpush1.bf16.msra.mxu0 0
    %1315 = vmatprep.subr.bf16.mxu0 0
    %1316 = vmatpush1.bf16.msra.mxu0 0
    %1317 = vmatprep.subr.bf16.mxu0 0
    %1318 = vmatpush1.bf16.msra.mxu0 0
    %1319 = vmatprep.subr.bf16.mxu0 0
    %1320 = vmatpush1.bf16.msra.mxu0 0
    %1321 = vmatprep.subr.bf16.mxu0 0
    %1322 = vmatpush1.bf16.msra.mxu0 0
    %1323 = vmatprep.mubr.bf16.mxu0 0
    %1324 = vmatmul.mubr.bf16.gmra.mrb[0].mxu0 0
    %v1325 = vpop.f32.mrb[0].mxu0
    %v1326 = vadd.f32 0.0, %v1325
    %v1327 = vpop.f32.mrb[0].mxu0
    %v1328 = vadd.f32 0.0, %v1327
    %v1329 = vpop.f32.mrb[0].mxu0
    %v1330 = vpop.f32.mrb[0].mxu0
    %1331 = vdwg.mxu0
    %v1332 = vadd.f32 %v1054, %v1285
    %v1333 = vadd.f32 %v1055, %v1287
    %v1334 = vadd.f32 %v1056, %v1326
    %v1335 = vadd.f32 %v1057, %v1328
    %v1336 = vtanh.pop %v1332
    %v1337 = vtanh.pop %v1333
    %v1338 = vtanh.pop %v1334
    %v1339 = vtanh.pop %v1335
    %v1340 = vmul.f32 %v1336, 0.5
    %v1341 = vadd.f32 %v1340, 0.5
    %v1342 = vmul.f32 %v1337, 0.5
    %v1343 = vadd.f32 %v1342, 0.5
    %v1344 = vmul.f32 %v1339, 0.5
    %v1345 = vadd.f32 %v1344, 0.5
    %v1346 = vmul.f32 %v1343, 0.0
    %v1347 = vmul.f32 %v1341, %v1338
    %v1348 = vadd.f32 %v1346, %v1347
    %v1349 = vtanh.pop %v1348
    %v1350 = vmul.f32 %v1345, %v1349
    %1351 = vst [vmem:[#allocation3 - $0x7] sm:$0x80] %v1350
    %s1352 = smul.u32 2, 4
    %s1353 = smul.addr %s1352, 8
    %s1354 = scalar_lea.vmem [#allocation2], %s1353
    %v1355 = vld [vmem:[%s1354] sm:$0xff]
    %v1356 = vld [vmem:[%s1354 + $0x8] sm:$0xff]
    %v1357 = vld [vmem:[%s1354 + $0x10] sm:$0xff]
    %v1358 = vld [vmem:[%s1354 + $0x18] sm:$0xff]
    %v1359 = vpack.c.bf16 %v779, %v779
    %v1360 = vld [vmem:[%s2] sm:$0xff]
    %v1361 = vld [vmem:[%s2 + $0x8] sm:$0xff]
    %v1362 = vld [vmem:[%s2 + $0x10] sm:$0xff]
    %v1363 = vld [vmem:[%s2 + $0x18] sm:$0xff]
    %v1364 = vld [vmem:[%s2 + $0x20] sm:$0xff]
    %v1365 = vld [vmem:[%s2 + $0x28] sm:$0xff]
    %v1366 = vld [vmem:[%s2 + $0x30] sm:$0xff]
    %v1367 = vld [vmem:[%s2 + $0x38] sm:$0xff]
    %v1368 = vld [vmem:[%s2 + $0x40] sm:$0xff]
    %v1369 = vld [vmem:[%s2 + $0x48] sm:$0xff]
    %v1370 = vld [vmem:[%s2 + $0x50] sm:$0xff]
    %v1371 = vld [vmem:[%s2 + $0x58] sm:$0xff]
    %v1372 = vld [vmem:[%s2 + $0x60] sm:$0xff]
    %v1373 = vld [vmem:[%s2 + $0x68] sm:$0xff]
    %v1374 = vld [vmem:[%s2 + $0x70] sm:$0xff]
    %v1375 = vld [vmem:[%s2 + $0x78] sm:$0xff]
    %v1376 = vld [vmem:[%s2 + $0x80] sm:$0xff]
    %v1377 = vld [vmem:[%s2 + $0x88] sm:$0xff]
    %v1378 = vld [vmem:[%s2 + $0x90] sm:$0xff]
    %v1379 = vld [vmem:[%s2 + $0x98] sm:$0xff]
    %v1380 = vld [vmem:[%s2 + $0xa0] sm:$0xff]
    %v1381 = vld [vmem:[%s2 + $0xa8] sm:$0xff]
    %v1382 = vld [vmem:[%s2 + $0xb0] sm:$0xff]
    %v1383 = vld [vmem:[%s2 + $0xb8] sm:$0xff]
    %v1384 = vld [vmem:[%s2 + $0xc0] sm:$0xff]
    %v1385 = vld [vmem:[%s2 + $0xc8] sm:$0xff]
    %v1386 = vld [vmem:[%s2 + $0xd0] sm:$0xff]
    %v1387 = vld [vmem:[%s2 + $0xd8] sm:$0xff]
    %v1388 = vld [vmem:[%s2 + $0xe0] sm:$0xff]
    %v1389 = vld [vmem:[%s2 + $0xe8] sm:$0xff]
    %v1390 = vld [vmem:[%s2 + $0xf0] sm:$0xff]
    %v1391 = vld [vmem:[%s2 + $0xf8] sm:$0xff]
    %v1424 = vunpack.c.l.b16 %v1360
    %v1425 = vunpack.c.h.b16 %v1360
    %v1426 = vunpack.c.l.b16 %v1361
    %v1427 = vunpack.c.h.b16 %v1361
    %v1428 = vunpack.c.l.b16 %v1362
    %v1429 = vunpack.c.h.b16 %v1362
    %v1430 = vunpack.c.l.b16 %v1363
    %v1431 = vunpack.c.h.b16 %v1363
    %v1432 = vunpack.c.l.b16 %v1364
    %v1433 = vunpack.c.h.b16 %v1364
    %v1434 = vunpack.c.l.b16 %v1365
    %v1435 = vunpack.c.h.b16 %v1365
    %v1436 = vunpack.c.l.b16 %v1366
    %v1437 = vunpack.c.h.b16 %v1366
    %v1438 = vunpack.c.l.b16 %v1367
    %v1439 = vunpack.c.h.b16 %v1367
    %v1440 = vunpack.c.l.b16 %v1368
    %v1441 = vunpack.c.h.b16 %v1368
    %v1442 = vunpack.c.l.b16 %v1369
    %v1443 = vunpack.c.h.b16 %v1369
    %v1444 = vunpack.c.l.b16 %v1370
    %v1445 = vunpack.c.h.b16 %v1370
    %v1446 = vunpack.c.l.b16 %v1371
    %v1447 = vunpack.c.h.b16 %v1371
    %v1448 = vunpack.c.l.b16 %v1372
    %v1449 = vunpack.c.h.b16 %v1372
    %v1450 = vunpack.c.l.b16 %v1373
    %v1451 = vunpack.c.h.b16 %v1373
    %v1452 = vunpack.c.l.b16 %v1374
    %v1453 = vunpack.c.h.b16 %v1374
    %v1454 = vunpack.c.l.b16 %v1375
    %v1455 = vunpack.c.h.b16 %v1375
    %v1456 = vunpack.c.l.b16 %v1376
    %v1457 = vunpack.c.h.b16 %v1376
    %v1458 = vunpack.c.l.b16 %v1377
    %v1459 = vunpack.c.h.b16 %v1377
    %v1460 = vunpack.c.l.b16 %v1378
    %v1461 = vunpack.c.h.b16 %v1378
    %v1462 = vunpack.c.l.b16 %v1379
    %v1463 = vunpack.c.h.b16 %v1379
    %v1464 = vunpack.c.l.b16 %v1380
    %v1465 = vunpack.c.h.b16 %v1380
    %v1466 = vunpack.c.l.b16 %v1381
    %v1467 = vunpack.c.h.b16 %v1381
    %v1468 = vunpack.c.l.b16 %v1382
    %v1469 = vunpack.c.h.b16 %v1382
    %v1470 = vunpack.c.l.b16 %v1383
    %v1471 = vunpack.c.h.b16 %v1383
    %v1472 = vunpack.c.l.b16 %v1384
    %v1473 = vunpack.c.h.b16 %v1384
    %v1474 = vunpack.c.l.b16 %v1385
    %v1475 = vunpack.c.h.b16 %v1385
    %v1476 = vunpack.c.l.b16 %v1386
    %v1477 = vunpack.c.h.b16 %v1386
    %v1478 = vunpack.c.l.b16 %v1387
    %v1479 = vunpack.c.h.b16 %v1387
    %v1480 = vunpack.c.l.b16 %v1388
    %v1481 = vunpack.c.h.b16 %v1388
    %v1482 = vunpack.c.l.b16 %v1389
    %v1483 = vunpack.c.h.b16 %v1389
    %v1484 = vunpack.c.l.b16 %v1390
    %v1485 = vunpack.c.h.b16 %v1390
    %v1486 = vunpack.c.l.b16 %v1391
    %v1487 = vunpack.c.h.b16 %v1391
    %v1488 = vpack.c.b16 %v1428, %v1424
    %v1489 = vpack.c.b16 %v1429, %v1425
    %v1490 = vpack.c.b16 %v1430, %v1426
    %v1491 = vpack.c.b16 %v1431, %v1427
    %v1492 = vpack.c.b16 %v1436, %v1432
    %v1493 = vpack.c.b16 %v1437, %v1433
    %v1494 = vpack.c.b16 %v1438, %v1434
    %v1495 = vpack.c.b16 %v1439, %v1435
    %v1496 = vpack.c.b16 %v1444, %v1440
    %v1497 = vpack.c.b16 %v1445, %v1441
    %v1498 = vpack.c.b16 %v1446, %v1442
    %v1499 = vpack.c.b16 %v1447, %v1443
    %v1500 = vpack.c.b16 %v1452, %v1448
    %v1501 = vpack.c.b16 %v1453, %v1449
    %v1502 = vpack.c.b16 %v1454, %v1450
    %v1503 = vpack.c.b16 %v1455, %v1451
    %v1504 = vpack.c.b16 %v1460, %v1456
    %v1505 = vpack.c.b16 %v1461, %v1457
    %v1506 = vpack.c.b16 %v1462, %v1458
    %v1507 = vpack.c.b16 %v1463, %v1459
    %v1508 = vpack.c.b16 %v1468, %v1464
    %v1509 = vpack.c.b16 %v1469, %v1465
    %v1510 = vpack.c.b16 %v1470, %v1466
    %v1511 = vpack.c.b16 %v1471, %v1467
    %v1512 = vpack.c.b16 %v1476, %v1472
    %v1513 = vpack.c.b16 %v1477, %v1473
    %v1514 = vpack.c.b16 %v1478, %v1474
    %v1515 = vpack.c.b16 %v1479, %v1475
    %v1516 = vpack.c.b16 %v1484, %v1480
    %v1517 = vpack.c.b16 %v1485, %v1481
    %v1518 = vpack.c.b16 %v1486, %v1482
    %v1519 = vpack.c.b16 %v1487, %v1483
    %1552 = vmatprep.subr.bf16.mxu0 %v1489
    %1553 = vmatpush1.bf16.msra.mxu0 %v1488
    %1554 = vmatprep.subr.bf16.mxu0 %v1493
    %1555 = vmatpush1.bf16.msra.mxu0 %v1492
    %1556 = vmatprep.subr.bf16.mxu0 %v1497
    %1557 = vmatpush1.bf16.msra.mxu0 %v1496
    %1558 = vmatprep.subr.bf16.mxu0 %v1501
    %1559 = vmatpush1.bf16.msra.mxu0 %v1500
    %1560 = vmatprep.subr.bf16.mxu0 %v1505
    %1561 = vmatpush1.bf16.msra.mxu0 %v1504
    %1562 = vmatprep.subr.bf16.mxu0 %v1509
    %1563 = vmatpush1.bf16.msra.mxu0 %v1508
    %1564 = vmatprep.subr.bf16.mxu0 %v1513
    %1565 = vmatpush1.bf16.msra.mxu0 %v1512
    %1566 = vmatprep.subr.bf16.mxu0 %v1517
    %1567 = vmatpush1.bf16.msra.mxu0 %v1516
    %1568 = vmatprep.subr.bf16.mxu0 0
    %1569 = vmatpush1.bf16.msra.mxu0 0
    %1570 = vmatprep.subr.bf16.mxu0 0
    %1571 = vmatpush1.bf16.msra.mxu0 0
    %1572 = vmatprep.subr.bf16.mxu0 0
    %1573 = vmatpush1.bf16.msra.mxu0 0
    %1574 = vmatprep.subr.bf16.mxu0 0
    %1575 = vmatpush1.bf16.msra.mxu0 0
    %1576 = vmatprep.subr.bf16.mxu0 0
    %1577 = vmatpush1.bf16.msra.mxu0 0
    %1578 = vmatprep.subr.bf16.mxu0 0
    %1579 = vmatpush1.bf16.msra.mxu0 0
    %1580 = vmatprep.subr.bf16.mxu0 0
    %1581 = vmatpush1.bf16.msra.mxu0 0
    %1582 = vmatprep.subr.bf16.mxu0 0
    %1583 = vmatpush1.bf16.msra.mxu0 0
    %1584 = vmatprep.mubr.bf16.mxu0 0
    %1585 = vmatmul.mubr.bf16.gmra.mrb[0].mxu0 %v1359
    %v1586 = vpop.f32.mrb[0].mxu0
    %v1587 = vadd.f32 0.0, %v1586
    %v1588 = vpop.f32.mrb[0].mxu0
    %v1589 = vadd.f32 0.0, %v1588
    %v1590 = vpop.f32.mrb[0].mxu0
    %v1591 = vpop.f32.mrb[0].mxu0
    %1592 = vdwg.mxu0
    %1593 = vmatprep.subr.bf16.mxu0 %v1491
    %1594 = vmatpush1.bf16.msra.mxu0 %v1490
    %1595 = vmatprep.subr.bf16.mxu0 %v1495
    %1596 = vmatpush1.bf16.msra.mxu0 %v1494
    %1597 = vmatprep.subr.bf16.mxu0 %v1499
    %1598 = vmatpush1.bf16.msra.mxu0 %v1498
    %1599 = vmatprep.subr.bf16.mxu0 %v1503
    %1600 = vmatpush1.bf16.msra.mxu0 %v1502
    %1601 = vmatprep.subr.bf16.mxu0 %v1507
    %1602 = vmatpush1.bf16.msra.mxu0 %v1506
    %1603 = vmatprep.subr.bf16.mxu0 %v1511
    %1604 = vmatpush1.bf16.msra.mxu0 %v1510
    %1605 = vmatprep.subr.bf16.mxu0 %v1515
    %1606 = vmatpush1.bf16.msra.mxu0 %v1514
    %1607 = vmatprep.subr.bf16.mxu0 %v1519
    %1608 = vmatpush1.bf16.msra.mxu0 %v1518
    %1609 = vmatprep.subr.bf16.mxu0 0
    %1610 = vmatpush1.bf16.msra.mxu0 0
    %1611 = vmatprep.subr.bf16.mxu0 0
    %1612 = vmatpush1.bf16.msra.mxu0 0
    %1613 = vmatprep.subr.bf16.mxu0 0
    %1614 = vmatpush1.bf16.msra.mxu0 0
    %1615 = vmatprep.subr.bf16.mxu0 0
    %1616 = vmatpush1.bf16.msra.mxu0 0
    %1617 = vmatprep.subr.bf16.mxu0 0
    %1618 = vmatpush1.bf16.msra.mxu0 0
    %1619 = vmatprep.subr.bf16.mxu0 0
    %1620 = vmatpush1.bf16.msra.mxu0 0
    %1621 = vmatprep.subr.bf16.mxu0 0
    %1622 = vmatpush1.bf16.msra.mxu0 0
    %1623 = vmatprep.subr.bf16.mxu0 0
    %1624 = vmatpush1.bf16.msra.mxu0 0
    %1625 = vmatprep.mubr.bf16.mxu0 0
    %1626 = vmatmul.mubr.bf16.gmra.mrb[0].mxu0 %v1359
    %v1627 = vpop.f32.mrb[0].mxu0
    %v1628 = vadd.f32 0.0, %v1627
    %v1629 = vpop.f32.mrb[0].mxu0
    %v1630 = vadd.f32 0.0, %v1629
    %v1631 = vpop.f32.mrb[0].mxu0
    %v1632 = vpop.f32.mrb[0].mxu0
    %1633 = vdwg.mxu0
    %v1634 = vadd.f32 %v1355, %v1587
    %v1635 = vadd.f32 %v1356, %v1589
    %v1636 = vadd.f32 %v1357, %v1628
    %v1637 = vadd.f32 %v1358, %v1630
    %v1638 = vtanh.pop %v1634
    %v1639 = vtanh.pop %v1635
    %v1640 = vtanh.pop %v1636
    %v1641 = vtanh.pop %v1637
    %v1642 = vmul.f32 %v1638, 0.5
    %v1643 = vadd.f32 %v1642, 0.5
    %v1644 = vmul.f32 %v1639, 0.5
    %v1645 = vadd.f32 %v1644, 0.5
    %v1646 = vmul.f32 %v1641, 0.5
    %v1647 = vadd.f32 %v1646, 0.5
    %v1648 = vmul.f32 %v1645, %v777
    %v1649 = vmul.f32 %v1643, %v1640
    %v1650 = vadd.f32 %v1648, %v1649
    %v1651 = vtanh.pop %v1650
    %v1652 = vmul.f32 %v1647, %v1651
    %v1653 = vld [vmem:[%s4] sm:$0xff]
    %v1654 = vld [vmem:[%s4 + $0x8] sm:$0xff]
    %v1655 = vld [vmem:[%s4 + $0x10] sm:$0xff]
    %v1656 = vld [vmem:[%s4 + $0x18] sm:$0xff]
    %v1657 = vld [vmem:[%s4 + $0x20] sm:$0xff]
    %v1658 = vld [vmem:[%s4 + $0x28] sm:$0xff]
    %v1659 = vld [vmem:[%s4 + $0x30] sm:$0xff]
    %v1660 = vld [vmem:[%s4 + $0x38] sm:$0xff]
    %v1661 = vld [vmem:[%s4 + $0x40] sm:$0xff]
    %v1662 = vld [vmem:[%s4 + $0x48] sm:$0xff]
    %v1663 = vld [vmem:[%s4 + $0x50] sm:$0xff]
    %v1664 = vld [vmem:[%s4 + $0x58] sm:$0xff]
    %v1665 = vld [vmem:[%s4 + $0x60] sm:$0xff]
    %v1666 = vld [vmem:[%s4 + $0x68] sm:$0xff]
    %v1667 = vld [vmem:[%s4 + $0x70] sm:$0xff]
    %v1668 = vld [vmem:[%s4 + $0x78] sm:$0xff]
    %v1669 = vld [vmem:[%s4 + $0x80] sm:$0xff]
    %v1670 = vld [vmem:[%s4 + $0x88] sm:$0xff]
    %v1671 = vld [vmem:[%s4 + $0x90] sm:$0xff]
    %v1672 = vld [vmem:[%s4 + $0x98] sm:$0xff]
    %v1673 = vld [vmem:[%s4 + $0xa0] sm:$0xff]
    %v1674 = vld [vmem:[%s4 + $0xa8] sm:$0xff]
    %v1675 = vld [vmem:[%s4 + $0xb0] sm:$0xff]
    %v1676 = vld [vmem:[%s4 + $0xb8] sm:$0xff]
    %v1677 = vld [vmem:[%s4 + $0xc0] sm:$0xff]
    %v1678 = vld [vmem:[%s4 + $0xc8] sm:$0xff]
    %v1679 = vld [vmem:[%s4 + $0xd0] sm:$0xff]
    %v1680 = vld [vmem:[%s4 + $0xd8] sm:$0xff]
    %v1681 = vld [vmem:[%s4 + $0xe0] sm:$0xff]
    %v1682 = vld [vmem:[%s4 + $0xe8] sm:$0xff]
    %v1683 = vld [vmem:[%s4 + $0xf0] sm:$0xff]
    %v1684 = vld [vmem:[%s4 + $0xf8] sm:$0xff]
    %v1717 = vunpack.c.l.b16 %v1653
    %v1718 = vunpack.c.h.b16 %v1653
    %v1719 = vunpack.c.l.b16 %v1654
    %v1720 = vunpack.c.h.b16 %v1654
    %v1721 = vunpack.c.l.b16 %v1655
    %v1722 = vunpack.c.h.b16 %v1655
    %v1723 = vunpack.c.l.b16 %v1656
    %v1724 = vunpack.c.h.b16 %v1656
    %v1725 = vunpack.c.l.b16 %v1657
    %v1726 = vunpack.c.h.b16 %v1657
    %v1727 = vunpack.c.l.b16 %v1658
    %v1728 = vunpack.c.h.b16 %v1658
    %v1729 = vunpack.c.l.b16 %v1659
    %v1730 = vunpack.c.h.b16 %v1659
    %v1731 = vunpack.c.l.b16 %v1660
    %v1732 = vunpack.c.h.b16 %v1660
    %v1733 = vunpack.c.l.b16 %v1661
    %v1734 = vunpack.c.h.b16 %v1661
    %v1735 = vunpack.c.l.b16 %v1662
    %v1736 = vunpack.c.h.b16 %v1662
    %v1737 = vunpack.c.l.b16 %v1663
    %v1738 = vunpack.c.h.b16 %v1663
    %v1739 = vunpack.c.l.b16 %v1664
    %v1740 = vunpack.c.h.b16 %v1664
    %v1741 = vunpack.c.l.b16 %v1665
    %v1742 = vunpack.c.h.b16 %v1665
    %v1743 = vunpack.c.l.b16 %v1666
    %v1744 = vunpack.c.h.b16 %v1666
    %v1745 = vunpack.c.l.b16 %v1667
    %v1746 = vunpack.c.h.b16 %v1667
    %v1747 = vunpack.c.l.b16 %v1668
    %v1748 = vunpack.c.h.b16 %v1668
    %v1749 = vunpack.c.l.b16 %v1669
    %v1750 = vunpack.c.h.b16 %v1669
    %v1751 = vunpack.c.l.b16 %v1670
    %v1752 = vunpack.c.h.b16 %v1670
    %v1753 = vunpack.c.l.b16 %v1671
    %v1754 = vunpack.c.h.b16 %v1671
    %v1755 = vunpack.c.l.b16 %v1672
    %v1756 = vunpack.c.h.b16 %v1672
    %v1757 = vunpack.c.l.b16 %v1673
    %v1758 = vunpack.c.h.b16 %v1673
    %v1759 = vunpack.c.l.b16 %v1674
    %v1760 = vunpack.c.h.b16 %v1674
    %v1761 = vunpack.c.l.b16 %v1675
    %v1762 = vunpack.c.h.b16 %v1675
    %v1763 = vunpack.c.l.b16 %v1676
    %v1764 = vunpack.c.h.b16 %v1676
    %v1765 = vunpack.c.l.b16 %v1677
    %v1766 = vunpack.c.h.b16 %v1677
    %v1767 = vunpack.c.l.b16 %v1678
    %v1768 = vunpack.c.h.b16 %v1678
    %v1769 = vunpack.c.l.b16 %v1679
    %v1770 = vunpack.c.h.b16 %v1679
    %v1771 = vunpack.c.l.b16 %v1680
    %v1772 = vunpack.c.h.b16 %v1680
    %v1773 = vunpack.c.l.b16 %v1681
    %v1774 = vunpack.c.h.b16 %v1681
    %v1775 = vunpack.c.l.b16 %v1682
    %v1776 = vunpack.c.h.b16 %v1682
    %v1777 = vunpack.c.l.b16 %v1683
    %v1778 = vunpack.c.h.b16 %v1683
    %v1779 = vunpack.c.l.b16 %v1684
    %v1780 = vunpack.c.h.b16 %v1684
    %v1781 = vpack.c.b16 %v1721, %v1717
    %v1782 = vpack.c.b16 %v1722, %v1718
    %v1783 = vpack.c.b16 %v1723, %v1719
    %v1784 = vpack.c.b16 %v1724, %v1720
    %v1785 = vpack.c.b16 %v1729, %v1725
    %v1786 = vpack.c.b16 %v1730, %v1726
    %v1787 = vpack.c.b16 %v1731, %v1727
    %v1788 = vpack.c.b16 %v1732, %v1728
    %v1789 = vpack.c.b16 %v1737, %v1733
    %v1790 = vpack.c.b16 %v1738, %v1734
    %v1791 = vpack.c.b16 %v1739, %v1735
    %v1792 = vpack.c.b16 %v1740, %v1736
    %v1793 = vpack.c.b16 %v1745, %v1741
    %v1794 = vpack.c.b16 %v1746, %v1742
    %v1795 = vpack.c.b16 %v1747, %v1743
    %v1796 = vpack.c.b16 %v1748, %v1744
    %v1797 = vpack.c.b16 %v1753, %v1749
    %v1798 = vpack.c.b16 %v1754, %v1750
    %v1799 = vpack.c.b16 %v1755, %v1751
    %v1800 = vpack.c.b16 %v1756, %v1752
    %v1801 = vpack.c.b16 %v1761, %v1757
    %v1802 = vpack.c.b16 %v1762, %v1758
    %v1803 = vpack.c.b16 %v1763, %v1759
    %v1804 = vpack.c.b16 %v1764, %v1760
    %v1805 = vpack.c.b16 %v1769, %v1765
    %v1806 = vpack.c.b16 %v1770, %v1766
    %v1807 = vpack.c.b16 %v1771, %v1767
    %v1808 = vpack.c.b16 %v1772, %v1768
    %v1809 = vpack.c.b16 %v1777, %v1773
    %v1810 = vpack.c.b16 %v1778, %v1774
    %v1811 = vpack.c.b16 %v1779, %v1775
    %v1812 = vpack.c.b16 %v1780, %v1776
    %1845 = vmatprep.subr.bf16.mxu0 %v1782
    %1846 = vmatpush1.bf16.msra.mxu0 %v1781
    %1847 = vmatprep.subr.bf16.mxu0 %v1786
    %1848 = vmatpush1.bf16.msra.mxu0 %v1785
    %1849 = vmatprep.subr.bf16.mxu0 %v1790
    %1850 = vmatpush1.bf16.msra.mxu0 %v1789
    %1851 = vmatprep.subr.bf16.mxu0 %v1794
    %1852 = vmatpush1.bf16.msra.mxu0 %v1793
    %1853 = vmatprep.subr.bf16.mxu0 %v1798
    %1854 = vmatpush1.bf16.msra.mxu0 %v1797
    %1855 = vmatprep.subr.bf16.mxu0 %v1802
    %1856 = vmatpush1.bf16.msra.mxu0 %v1801
    %1857 = vmatprep.subr.bf16.mxu0 %v1806
    %1858 = vmatpush1.bf16.msra.mxu0 %v1805
    %1859 = vmatprep.subr.bf16.mxu0 %v1810
    %1860 = vmatpush1.bf16.msra.mxu0 %v1809
    %1861 = vmatprep.subr.bf16.mxu0 0
    %1862 = vmatpush1.bf16.msra.mxu0 0
    %1863 = vmatprep.subr.bf16.mxu0 0
    %1864 = vmatpush1.bf16.msra.mxu0 0
    %1865 = vmatprep.subr.bf16.mxu0 0
    %1866 = vmatpush1.bf16.msra.mxu0 0
    %1867 = vmatprep.subr.bf16.mxu0 0
    %1868 = vmatpush1.bf16.msra.mxu0 0
    %1869 = vmatprep.subr.bf16.mxu0 0
    %1870 = vmatpush1.bf16.msra.mxu0 0
    %1871 = vmatprep.subr.bf16.mxu0 0
    %1872 = vmatpush1.bf16.msra.mxu0 0
    %1873 = vmatprep.subr.bf16.mxu0 0
    %1874 = vmatpush1.bf16.msra.mxu0 0
    %1875 = vmatprep.subr.bf16.mxu0 0
    %1876 = vmatpush1.bf16.msra.mxu0 0
    %1877 = vmatprep.mubr.bf16.mxu0 0
    %1878 = vmatmul.mubr.bf16.gmra.mrb[0].mxu0 %v1359
    %v1879 = vpop.f32.mrb[0].mxu0
    %v1880 = vadd.f32 0.0, %v1879
    %v1881 = vpop.f32.mrb[0].mxu0
    %v1882 = vadd.f32 0.0, %v1881
    %v1883 = vpop.f32.mrb[0].mxu0
    %v1884 = vpop.f32.mrb[0].mxu0
    %1885 = vdwg.mxu0
    %1886 = vmatprep.subr.bf16.mxu0 %v1784
    %1887 = vmatpush1.bf16.msra.mxu0 %v1783
    %1888 = vmatprep.subr.bf16.mxu0 %v1788
    %1889 = vmatpush1.bf16.msra.mxu0 %v1787
    %1890 = vmatprep.subr.bf16.mxu0 %v1792
    %1891 = vmatpush1.bf16.msra.mxu0 %v1791
    %1892 = vmatprep.subr.bf16.mxu0 %v1796
    %1893 = vmatpush1.bf16.msra.mxu0 %v1795
    %1894 = vmatprep.subr.bf16.mxu0 %v1800
    %1895 = vmatpush1.bf16.msra.mxu0 %v1799
    %1896 = vmatprep.subr.bf16.mxu0 %v1804
    %1897 = vmatpush1.bf16.msra.mxu0 %v1803
    %1898 = vmatprep.subr.bf16.mxu0 %v1808
    %1899 = vmatpush1.bf16.msra.mxu0 %v1807
    %1900 = vmatprep.subr.bf16.mxu0 %v1812
    %1901 = vmatpush1.bf16.msra.mxu0 %v1811
    %1902 = vmatprep.subr.bf16.mxu0 0
    %1903 = vmatpush1.bf16.msra.mxu0 0
    %1904 = vmatprep.subr.bf16.mxu0 0
    %1905 = vmatpush1.bf16.msra.mxu0 0
    %1906 = vmatprep.subr.bf16.mxu0 0
    %1907 = vmatpush1.bf16.msra.mxu0 0
    %1908 = vmatprep.subr.bf16.mxu0 0
    %1909 = vmatpush1.bf16.msra.mxu0 0
    %1910 = vmatprep.subr.bf16.mxu0 0
    %1911 = vmatpush1.bf16.msra.mxu0 0
    %1912 = vmatprep.subr.bf16.mxu0 0
    %1913 = vmatpush1.bf16.msra.mxu0 0
    %1914 = vmatprep.subr.bf16.mxu0 0
    %1915 = vmatpush1.bf16.msra.mxu0 0
    %1916 = vmatprep.subr.bf16.mxu0 0
    %1917 = vmatpush1.bf16.msra.mxu0 0
    %1918 = vmatprep.mubr.bf16.mxu0 0
    %1919 = vmatmul.mubr.bf16.gmra.mrb[0].mxu0 %v1359
    %v1920 = vpop.f32.mrb[0].mxu0
    %v1921 = vadd.f32 0.0, %v1920
    %v1922 = vpop.f32.mrb[0].mxu0
    %v1923 = vadd.f32 0.0, %v1922
    %v1924 = vpop.f32.mrb[0].mxu0
    %v1925 = vpop.f32.mrb[0].mxu0
    %1926 = vdwg.mxu0
    %v1927 = vadd.f32 %v443, %v1880
    %v1928 = vadd.f32 %v447, %v1882
    %v1929 = vadd.f32 %v451, %v1921
    %v1930 = vadd.f32 %v455, %v1923
    %v1931 = vpack.c.bf16 %v1350, %v1350
    %v1932 = vld [vmem:[%s5] sm:$0xff]
    %v1933 = vld [vmem:[%s5 + $0x8] sm:$0xff]
    %v1934 = vld [vmem:[%s5 + $0x10] sm:$0xff]
    %v1935 = vld [vmem:[%s5 + $0x18] sm:$0xff]
    %v1936 = vld [vmem:[%s5 + $0x20] sm:$0xff]
    %v1937 = vld [vmem:[%s5 + $0x28] sm:$0xff]
    %v1938 = vld [vmem:[%s5 + $0x30] sm:$0xff]
    %v1939 = vld [vmem:[%s5 + $0x38] sm:$0xff]
    %v1940 = vld [vmem:[%s5 + $0x40] sm:$0xff]
    %v1941 = vld [vmem:[%s5 + $0x48] sm:$0xff]
    %v1942 = vld [vmem:[%s5 + $0x50] sm:$0xff]
    %v1943 = vld [vmem:[%s5 + $0x58] sm:$0xff]
    %v1944 = vld [vmem:[%s5 + $0x60] sm:$0xff]
    %v1945 = vld [vmem:[%s5 + $0x68] sm:$0xff]
    %v1946 = vld [vmem:[%s5 + $0x70] sm:$0xff]
    %v1947 = vld [vmem:[%s5 + $0x78] sm:$0xff]
    %v1948 = vld [vmem:[%s5 + $0x80] sm:$0xff]
    %v1949 = vld [vmem:[%s5 + $0x88] sm:$0xff]
    %v1950 = vld [vmem:[%s5 + $0x90] sm:$0xff]
    %v1951 = vld [vmem:[%s5 + $0x98] sm:$0xff]
    %v1952 = vld [vmem:[%s5 + $0xa0] sm:$0xff]
    %v1953 = vld [vmem:[%s5 + $0xa8] sm:$0xff]
    %v1954 = vld [vmem:[%s5 + $0xb0] sm:$0xff]
    %v1955 = vld [vmem:[%s5 + $0xb8] sm:$0xff]
    %v1956 = vld [vmem:[%s5 + $0xc0] sm:$0xff]
    %v1957 = vld [vmem:[%s5 + $0xc8] sm:$0xff]
    %v1958 = vld [vmem:[%s5 + $0xd0] sm:$0xff]
    %v1959 = vld [vmem:[%s5 + $0xd8] sm:$0xff]
    %v1960 = vld [vmem:[%s5 + $0xe0] sm:$0xff]
    %v1961 = vld [vmem:[%s5 + $0xe8] sm:$0xff]
    %v1962 = vld [vmem:[%s5 + $0xf0] sm:$0xff]
    %v1963 = vld [vmem:[%s5 + $0xf8] sm:$0xff]
    %v1996 = vunpack.c.l.b16 %v1932
    %v1997 = vunpack.c.h.b16 %v1932
    %v1998 = vunpack.c.l.b16 %v1933
    %v1999 = vunpack.c.h.b16 %v1933
    %v2000 = vunpack.c.l.b16 %v1934
    %v2001 = vunpack.c.h.b16 %v1934
    %v2002 = vunpack.c.l.b16 %v1935
    %v2003 = vunpack.c.h.b16 %v1935
    %v2004 = vunpack.c.l.b16 %v1936
    %v2005 = vunpack.c.h.b16 %v1936
    %v2006 = vunpack.c.l.b16 %v1937
    %v2007 = vunpack.c.h.b16 %v1937
    %v2008 = vunpack.c.l.b16 %v1938
    %v2009 = vunpack.c.h.b16 %v1938
    %v2010 = vunpack.c.l.b16 %v1939
    %v2011 = vunpack.c.h.b16 %v1939
    %v2012 = vunpack.c.l.b16 %v1940
    %v2013 = vunpack.c.h.b16 %v1940
    %v2014 = vunpack.c.l.b16 %v1941
    %v2015 = vunpack.c.h.b16 %v1941
    %v2016 = vunpack.c.l.b16 %v1942
    %v2017 = vunpack.c.h.b16 %v1942
    %v2018 = vunpack.c.l.b16 %v1943
    %v2019 = vunpack.c.h.b16 %v1943
    %v2020 = vunpack.c.l.b16 %v1944
    %v2021 = vunpack.c.h.b16 %v1944
    %v2022 = vunpack.c.l.b16 %v1945
    %v2023 = vunpack.c.h.b16 %v1945
    %v2024 = vunpack.c.l.b16 %v1946
    %v2025 = vunpack.c.h.b16 %v1946
    %v2026 = vunpack.c.l.b16 %v1947
    %v2027 = vunpack.c.h.b16 %v1947
    %v2028 = vunpack.c.l.b16 %v1948
    %v2029 = vunpack.c.h.b16 %v1948
    %v2030 = vunpack.c.l.b16 %v1949
    %v2031 = vunpack.c.h.b16 %v1949
    %v2032 = vunpack.c.l.b16 %v1950
    %v2033 = vunpack.c.h.b16 %v1950
    %v2034 = vunpack.c.l.b16 %v1951
    %v2035 = vunpack.c.h.b16 %v1951
    %v2036 = vunpack.c.l.b16 %v1952
    %v2037 = vunpack.c.h.b16 %v1952
    %v2038 = vunpack.c.l.b16 %v1953
    %v2039 = vunpack.c.h.b16 %v1953
    %v2040 = vunpack.c.l.b16 %v1954
    %v2041 = vunpack.c.h.b16 %v1954
    %v2042 = vunpack.c.l.b16 %v1955
    %v2043 = vunpack.c.h.b16 %v1955
    %v2044 = vunpack.c.l.b16 %v1956
    %v2045 = vunpack.c.h.b16 %v1956
    %v2046 = vunpack.c.l.b16 %v1957
    %v2047 = vunpack.c.h.b16 %v1957
    %v2048 = vunpack.c.l.b16 %v1958
    %v2049 = vunpack.c.h.b16 %v1958
    %v2050 = vunpack.c.l.b16 %v1959
    %v2051 = vunpack.c.h.b16 %v1959
    %v2052 = vunpack.c.l.b16 %v1960
    %v2053 = vunpack.c.h.b16 %v1960
    %v2054 = vunpack.c.l.b16 %v1961
    %v2055 = vunpack.c.h.b16 %v1961
    %v2056 = vunpack.c.l.b16 %v1962
    %v2057 = vunpack.c.h.b16 %v1962
    %v2058 = vunpack.c.l.b16 %v1963
    %v2059 = vunpack.c.h.b16 %v1963
    %v2060 = vpack.c.b16 %v2000, %v1996
    %v2061 = vpack.c.b16 %v2001, %v1997
    %v2062 = vpack.c.b16 %v2002, %v1998
    %v2063 = vpack.c.b16 %v2003, %v1999
    %v2064 = vpack.c.b16 %v2008, %v2004
    %v2065 = vpack.c.b16 %v2009, %v2005
    %v2066 = vpack.c.b16 %v2010, %v2006
    %v2067 = vpack.c.b16 %v2011, %v2007
    %v2068 = vpack.c.b16 %v2016, %v2012
    %v2069 = vpack.c.b16 %v2017, %v2013
    %v2070 = vpack.c.b16 %v2018, %v2014
    %v2071 = vpack.c.b16 %v2019, %v2015
    %v2072 = vpack.c.b16 %v2024, %v2020
    %v2073 = vpack.c.b16 %v2025, %v2021
    %v2074 = vpack.c.b16 %v2026, %v2022
    %v2075 = vpack.c.b16 %v2027, %v2023
    %v2076 = vpack.c.b16 %v2032, %v2028
    %v2077 = vpack.c.b16 %v2033, %v2029
    %v2078 = vpack.c.b16 %v2034, %v2030
    %v2079 = vpack.c.b16 %v2035, %v2031
    %v2080 = vpack.c.b16 %v2040, %v2036
    %v2081 = vpack.c.b16 %v2041, %v2037
    %v2082 = vpack.c.b16 %v2042, %v2038
    %v2083 = vpack.c.b16 %v2043, %v2039
    %v2084 = vpack.c.b16 %v2048, %v2044
    %v2085 = vpack.c.b16 %v2049, %v2045
    %v2086 = vpack.c.b16 %v2050, %v2046
    %v2087 = vpack.c.b16 %v2051, %v2047
    %v2088 = vpack.c.b16 %v2056, %v2052
    %v2089 = vpack.c.b16 %v2057, %v2053
    %v2090 = vpack.c.b16 %v2058, %v2054
    %v2091 = vpack.c.b16 %v2059, %v2055
    %2124 = vmatprep.subr.bf16.mxu0 %v2061
    %2125 = vmatpush1.bf16.msra.mxu0 %v2060
    %2126 = vmatprep.subr.bf16.mxu0 %v2065
    %2127 = vmatpush1.bf16.msra.mxu0 %v2064
    %2128 = vmatprep.subr.bf16.mxu0 %v2069
    %2129 = vmatpush1.bf16.msra.mxu0 %v2068
    %2130 = vmatprep.subr.bf16.mxu0 %v2073
    %2131 = vmatpush1.bf16.msra.mxu0 %v2072
    %2132 = vmatprep.subr.bf16.mxu0 %v2077
    %2133 = vmatpush1.bf16.msra.mxu0 %v2076
    %2134 = vmatprep.subr.bf16.mxu0 %v2081
    %2135 = vmatpush1.bf16.msra.mxu0 %v2080
    %2136 = vmatprep.subr.bf16.mxu0 %v2085
    %2137 = vmatpush1.bf16.msra.mxu0 %v2084
    %2138 = vmatprep.subr.bf16.mxu0 %v2089
    %2139 = vmatpush1.bf16.msra.mxu0 %v2088
    %2140 = vmatprep.subr.bf16.mxu0 0
    %2141 = vmatpush1.bf16.msra.mxu0 0
    %2142 = vmatprep.subr.bf16.mxu0 0
    %2143 = vmatpush1.bf16.msra.mxu0 0
    %2144 = vmatprep.subr.bf16.mxu0 0
    %2145 = vmatpush1.bf16.msra.mxu0 0
    %2146 = vmatprep.subr.bf16.mxu0 0
    %2147 = vmatpush1.bf16.msra.mxu0 0
    %2148 = vmatprep.subr.bf16.mxu0 0
    %2149 = vmatpush1.bf16.msra.mxu0 0
    %2150 = vmatprep.subr.bf16.mxu0 0
    %2151 = vmatpush1.bf16.msra.mxu0 0
    %2152 = vmatprep.subr.bf16.mxu0 0
    %2153 = vmatpush1.bf16.msra.mxu0 0
    %2154 = vmatprep.subr.bf16.mxu0 0
    %2155 = vmatpush1.bf16.msra.mxu0 0
    %2156 = vmatprep.mubr.bf16.mxu0 0
    %2157 = vmatmul.mubr.bf16.gmra.mrb[0].mxu0 %v1931
    %v2158 = vpop.f32.mrb[0].mxu0
    %v2159 = vadd.f32 0.0, %v2158
    %v2160 = vpop.f32.mrb[0].mxu0
    %v2161 = vadd.f32 0.0, %v2160
    %v2162 = vpop.f32.mrb[0].mxu0
    %v2163 = vpop.f32.mrb[0].mxu0
    %2164 = vdwg.mxu0
    %2165 = vmatprep.subr.bf16.mxu0 %v2063
    %2166 = vmatpush1.bf16.msra.mxu0 %v2062
    %2167 = vmatprep.subr.bf16.mxu0 %v2067
    %2168 = vmatpush1.bf16.msra.mxu0 %v2066
    %2169 = vmatprep.subr.bf16.mxu0 %v2071
    %2170 = vmatpush1.bf16.msra.mxu0 %v2070
    %2171 = vmatprep.subr.bf16.mxu0 %v2075
    %2172 = vmatpush1.bf16.msra.mxu0 %v2074
    %2173 = vmatprep.subr.bf16.mxu0 %v2079
    %2174 = vmatpush1.bf16.msra.mxu0 %v2078
    %2175 = vmatprep.subr.bf16.mxu0 %v2083
    %2176 = vmatpush1.bf16.msra.mxu0 %v2082
    %2177 = vmatprep.subr.bf16.mxu0 %v2087
    %2178 = vmatpush1.bf16.msra.mxu0 %v2086
    %2179 = vmatprep.subr.bf16.mxu0 %v2091
    %2180 = vmatpush1.bf16.msra.mxu0 %v2090
    %2181 = vmatprep.subr.bf16.mxu0 0
    %2182 = vmatpush1.bf16.msra.mxu0 0
    %2183 = vmatprep.subr.bf16.mxu0 0
    %2184 = vmatpush1.bf16.msra.mxu0 0
    %2185 = vmatprep.subr.bf16.mxu0 0
    %2186 = vmatpush1.bf16.msra.mxu0 0
    %2187 = vmatprep.subr.bf16.mxu0 0
    %2188 = vmatpush1.bf16.msra.mxu0 0
    %2189 = vmatprep.subr.bf16.mxu0 0
    %2190 = vmatpush1.bf16.msra.mxu0 0
    %2191 = vmatprep.subr.bf16.mxu0 0
    %2192 = vmatpush1.bf16.msra.mxu0 0
    %2193 = vmatprep.subr.bf16.mxu0 0
    %2194 = vmatpush1.bf16.msra.mxu0 0
    %2195 = vmatprep.subr.bf16.mxu0 0
    %2196 = vmatpush1.bf16.msra.mxu0 0
    %2197 = vmatprep.mubr.bf16.mxu0 0
    %2198 = vmatmul.mubr.bf16.gmra.mrb[0].mxu0 %v1931
    %v2199 = vpop.f32.mrb[0].mxu0
    %v2200 = vadd.f32 0.0, %v2199
    %v2201 = vpop.f32.mrb[0].mxu0
    %v2202 = vadd.f32 0.0, %v2201
    %v2203 = vpop.f32.mrb[0].mxu0
    %v2204 = vpop.f32.mrb[0].mxu0
    %2205 = vdwg.mxu0
    %v2206 = vadd.f32 %v1927, %v2159
    %v2207 = vadd.f32 %v1928, %v2161
    %v2208 = vadd.f32 %v1929, %v2200
    %v2209 = vadd.f32 %v1930, %v2202
    %v2210 = vtanh.pop %v2206
    %v2211 = vtanh.pop %v2207
    %v2212 = vtanh.pop %v2208
    %v2213 = vtanh.pop %v2209
    %v2214 = vmul.f32 %v2210, 0.5
    %v2215 = vadd.f32 %v2214, 0.5
    %v2216 = vmul.f32 %v2211, 0.5
    %v2217 = vadd.f32 %v2216, 0.5
    %v2218 = vmul.f32 %v2213, 0.5
    %v2219 = vadd.f32 %v2218, 0.5
    %v2220 = vmul.f32 %v2217, %v1348
    %v2221 = vmul.f32 %v2215, %v2212
    %v2222 = vadd.f32 %v2220, %v2221
    %v2223 = vtanh.pop %v2222
    %v2224 = vmul.f32 %v2219, %v2223
    %2225 = vst [vmem:[#allocation3 - $0x6] sm:$0x80] %v2224
    %s2226 = smul.u32 3, 4
    %s2227 = smul.addr %s2226, 8
    %s2228 = scalar_lea.vmem [#allocation2], %s2227
    %v2229 = vld [vmem:[%s2228] sm:$0xff]
    %v2230 = vld [vmem:[%s2228 + $0x8] sm:$0xff]
    %v2231 = vld [vmem:[%s2228 + $0x10] sm:$0xff]
    %v2232 = vld [vmem:[%s2228 + $0x18] sm:$0xff]
    %v2233 = vpack.c.bf16 %v1652, %v1652
    %v2234 = vld [vmem:[%s2] sm:$0xff]
    %v2235 = vld [vmem:[%s2 + $0x8] sm:$0xff]
    %v2236 = vld [vmem:[%s2 + $0x10] sm:$0xff]
    %v2237 = vld [vmem:[%s2 + $0x18] sm:$0xff]
    %v2238 = vld [vmem:[%s2 + $0x20] sm:$0xff]
    %v2239 = vld [vmem:[%s2 + $0x28] sm:$0xff]
    %v2240 = vld [vmem:[%s2 + $0x30] sm:$0xff]
    %v2241 = vld [vmem:[%s2 + $0x38] sm:$0xff]
    %v2242 = vld [vmem:[%s2 + $0x40] sm:$0xff]
    %v2243 = vld [vmem:[%s2 + $0x48] sm:$0xff]
    %v2244 = vld [vmem:[%s2 + $0x50] sm:$0xff]
    %v2245 = vld [vmem:[%s2 + $0x58] sm:$0xff]
    %v2246 = vld [vmem:[%s2 + $0x60] sm:$0xff]
    %v2247 = vld [vmem:[%s2 + $0x68] sm:$0xff]
    %v2248 = vld [vmem:[%s2 + $0x70] sm:$0xff]
    %v2249 = vld [vmem:[%s2 + $0x78] sm:$0xff]
    %v2250 = vld [vmem:[%s2 + $0x80] sm:$0xff]
    %v2251 = vld [vmem:[%s2 + $0x88] sm:$0xff]
    %v2252 = vld [vmem:[%s2 + $0x90] sm:$0xff]
    %v2253 = vld [vmem:[%s2 + $0x98] sm:$0xff]
    %v2254 = vld [vmem:[%s2 + $0xa0] sm:$0xff]
    %v2255 = vld [vmem:[%s2 + $0xa8] sm:$0xff]
    %v2256 = vld [vmem:[%s2 + $0xb0] sm:$0xff]
    %v2257 = vld [vmem:[%s2 + $0xb8] sm:$0xff]
    %v2258 = vld [vmem:[%s2 + $0xc0] sm:$0xff]
    %v2259 = vld [vmem:[%s2 + $0xc8] sm:$0xff]
    %v2260 = vld [vmem:[%s2 + $0xd0] sm:$0xff]
    %v2261 = vld [vmem:[%s2 + $0xd8] sm:$0xff]
    %v2262 = vld [vmem:[%s2 + $0xe0] sm:$0xff]
    %v2263 = vld [vmem:[%s2 + $0xe8] sm:$0xff]
    %v2264 = vld [vmem:[%s2 + $0xf0] sm:$0xff]
    %v2265 = vld [vmem:[%s2 + $0xf8] sm:$0xff]
    %v2298 = vunpack.c.l.b16 %v2234
    %v2299 = vunpack.c.h.b16 %v2234
    %v2300 = vunpack.c.l.b16 %v2235
    %v2301 = vunpack.c.h.b16 %v2235
    %v2302 = vunpack.c.l.b16 %v2236
    %v2303 = vunpack.c.h.b16 %v2236
    %v2304 = vunpack.c.l.b16 %v2237
    %v2305 = vunpack.c.h.b16 %v2237
    %v2306 = vunpack.c.l.b16 %v2238
    %v2307 = vunpack.c.h.b16 %v2238
    %v2308 = vunpack.c.l.b16 %v2239
    %v2309 = vunpack.c.h.b16 %v2239
    %v2310 = vunpack.c.l.b16 %v2240
    %v2311 = vunpack.c.h.b16 %v2240
    %v2312 = vunpack.c.l.b16 %v2241
    %v2313 = vunpack.c.h.b16 %v2241
    %v2314 = vunpack.c.l.b16 %v2242
    %v2315 = vunpack.c.h.b16 %v2242
    %v2316 = vunpack.c.l.b16 %v2243
    %v2317 = vunpack.c.h.b16 %v2243
    %v2318 = vunpack.c.l.b16 %v2244
    %v2319 = vunpack.c.h.b16 %v2244
    %v2320 = vunpack.c.l.b16 %v2245
    %v2321 = vunpack.c.h.b16 %v2245
    %v2322 = vunpack.c.l.b16 %v2246
    %v2323 = vunpack.c.h.b16 %v2246
    %v2324 = vunpack.c.l.b16 %v2247
    %v2325 = vunpack.c.h.b16 %v2247
    %v2326 = vunpack.c.l.b16 %v2248
    %v2327 = vunpack.c.h.b16 %v2248
    %v2328 = vunpack.c.l.b16 %v2249
    %v2329 = vunpack.c.h.b16 %v2249
    %v2330 = vunpack.c.l.b16 %v2250
    %v2331 = vunpack.c.h.b16 %v2250
    %v2332 = vunpack.c.l.b16 %v2251
    %v2333 = vunpack.c.h.b16 %v2251
    %v2334 = vunpack.c.l.b16 %v2252
    %v2335 = vunpack.c.h.b16 %v2252
    %v2336 = vunpack.c.l.b16 %v2253
    %v2337 = vunpack.c.h.b16 %v2253
    %v2338 = vunpack.c.l.b16 %v2254
    %v2339 = vunpack.c.h.b16 %v2254
    %v2340 = vunpack.c.l.b16 %v2255
    %v2341 = vunpack.c.h.b16 %v2255
    %v2342 = vunpack.c.l.b16 %v2256
    %v2343 = vunpack.c.h.b16 %v2256
    %v2344 = vunpack.c.l.b16 %v2257
    %v2345 = vunpack.c.h.b16 %v2257
    %v2346 = vunpack.c.l.b16 %v2258
    %v2347 = vunpack.c.h.b16 %v2258
    %v2348 = vunpack.c.l.b16 %v2259
    %v2349 = vunpack.c.h.b16 %v2259
    %v2350 = vunpack.c.l.b16 %v2260
    %v2351 = vunpack.c.h.b16 %v2260
    %v2352 = vunpack.c.l.b16 %v2261
    %v2353 = vunpack.c.h.b16 %v2261
    %v2354 = vunpack.c.l.b16 %v2262
    %v2355 = vunpack.c.h.b16 %v2262
    %v2356 = vunpack.c.l.b16 %v2263
    %v2357 = vunpack.c.h.b16 %v2263
    %v2358 = vunpack.c.l.b16 %v2264
    %v2359 = vunpack.c.h.b16 %v2264
    %v2360 = vunpack.c.l.b16 %v2265
    %v2361 = vunpack.c.h.b16 %v2265
    %v2362 = vpack.c.b16 %v2302, %v2298
    %v2363 = vpack.c.b16 %v2303, %v2299
    %v2364 = vpack.c.b16 %v2304, %v2300
    %v2365 = vpack.c.b16 %v2305, %v2301
    %v2366 = vpack.c.b16 %v2310, %v2306
    %v2367 = vpack.c.b16 %v2311, %v2307
    %v2368 = vpack.c.b16 %v2312, %v2308
    %v2369 = vpack.c.b16 %v2313, %v2309
    %v2370 = vpack.c.b16 %v2318, %v2314
    %v2371 = vpack.c.b16 %v2319, %v2315
    %v2372 = vpack.c.b16 %v2320, %v2316
    %v2373 = vpack.c.b16 %v2321, %v2317
    %v2374 = vpack.c.b16 %v2326, %v2322
    %v2375 = vpack.c.b16 %v2327, %v2323
    %v2376 = vpack.c.b16 %v2328, %v2324
    %v2377 = vpack.c.b16 %v2329, %v2325
    %v2378 = vpack.c.b16 %v2334, %v2330
    %v2379 = vpack.c.b16 %v2335, %v2331
    %v2380 = vpack.c.b16 %v2336, %v2332
    %v2381 = vpack.c.b16 %v2337, %v2333
    %v2382 = vpack.c.b16 %v2342, %v2338
    %v2383 = vpack.c.b16 %v2343, %v2339
    %v2384 = vpack.c.b16 %v2344, %v2340
    %v2385 = vpack.c.b16 %v2345, %v2341
    %v2386 = vpack.c.b16 %v2350, %v2346
    %v2387 = vpack.c.b16 %v2351, %v2347
    %v2388 = vpack.c.b16 %v2352, %v2348
    %v2389 = vpack.c.b16 %v2353, %v2349
    %v2390 = vpack.c.b16 %v2358, %v2354
    %v2391 = vpack.c.b16 %v2359, %v2355
    %v2392 = vpack.c.b16 %v2360, %v2356
    %v2393 = vpack.c.b16 %v2361, %v2357
    %2426 = vmatprep.subr.bf16.mxu0 %v2363
    %2427 = vmatpush1.bf16.msra.mxu0 %v2362
    %2428 = vmatprep.subr.bf16.mxu0 %v2367
    %2429 = vmatpush1.bf16.msra.mxu0 %v2366
    %2430 = vmatprep.subr.bf16.mxu0 %v2371
    %2431 = vmatpush1.bf16.msra.mxu0 %v2370
    %2432 = vmatprep.subr.bf16.mxu0 %v2375
    %2433 = vmatpush1.bf16.msra.mxu0 %v2374
    %2434 = vmatprep.subr.bf16.mxu0 %v2379
    %2435 = vmatpush1.bf16.msra.mxu0 %v2378
    %2436 = vmatprep.subr.bf16.mxu0 %v2383
    %2437 = vmatpush1.bf16.msra.mxu0 %v2382
    %2438 = vmatprep.subr.bf16.mxu0 %v2387
    %2439 = vmatpush1.bf16.msra.mxu0 %v2386
    %2440 = vmatprep.subr.bf16.mxu0 %v2391
    %2441 = vmatpush1.bf16.msra.mxu0 %v2390
    %2442 = vmatprep.subr.bf16.mxu0 0
    %2443 = vmatpush1.bf16.msra.mxu0 0
    %2444 = vmatprep.subr.bf16.mxu0 0
    %2445 = vmatpush1.bf16.msra.mxu0 0
    %2446 = vmatprep.subr.bf16.mxu0 0
    %2447 = vmatpush1.bf16.msra.mxu0 0
    %2448 = vmatprep.subr.bf16.mxu0 0
    %2449 = vmatpush1.bf16.msra.mxu0 0
    %2450 = vmatprep.subr.bf16.mxu0 0
    %2451 = vmatpush1.bf16.msra.mxu0 0
    %2452 = vmatprep.subr.bf16.mxu0 0
    %2453 = vmatpush1.bf16.msra.mxu0 0
    %2454 = vmatprep.subr.bf16.mxu0 0
    %2455 = vmatpush1.bf16.msra.mxu0 0
    %2456 = vmatprep.subr.bf16.mxu0 0
    %2457 = vmatpush1.bf16.msra.mxu0 0
    %2458 = vmatprep.mubr.bf16.mxu0 0
    %2459 = vmatmul.mubr.bf16.gmra.mrb[0].mxu0 %v2233
    %v2460 = vpop.f32.mrb[0].mxu0
    %v2461 = vadd.f32 0.0, %v2460
    %v2462 = vpop.f32.mrb[0].mxu0
    %v2463 = vadd.f32 0.0, %v2462
    %v2464 = vpop.f32.mrb[0].mxu0
    %v2465 = vpop.f32.mrb[0].mxu0
    %2466 = vdwg.mxu0
    %2467 = vmatprep.subr.bf16.mxu0 %v2365
    %2468 = vmatpush1.bf16.msra.mxu0 %v2364
    %2469 = vmatprep.subr.bf16.mxu0 %v2369
    %2470 = vmatpush1.bf16.msra.mxu0 %v2368
    %2471 = vmatprep.subr.bf16.mxu0 %v2373
    %2472 = vmatpush1.bf16.msra.mxu0 %v2372
    %2473 = vmatprep.subr.bf16.mxu0 %v2377
    %2474 = vmatpush1.bf16.msra.mxu0 %v2376
    %2475 = vmatprep.subr.bf16.mxu0 %v2381
    %2476 = vmatpush1.bf16.msra.mxu0 %v2380
    %2477 = vmatprep.subr.bf16.mxu0 %v2385
    %2478 = vmatpush1.bf16.msra.mxu0 %v2384
    %2479 = vmatprep.subr.bf16.mxu0 %v2389
    %2480 = vmatpush1.bf16.msra.mxu0 %v2388
    %2481 = vmatprep.subr.bf16.mxu0 %v2393
    %2482 = vmatpush1.bf16.msra.mxu0 %v2392
    %2483 = vmatprep.subr.bf16.mxu0 0
    %2484 = vmatpush1.bf16.msra.mxu0 0
    %2485 = vmatprep.subr.bf16.mxu0 0
    %2486 = vmatpush1.bf16.msra.mxu0 0
    %2487 = vmatprep.subr.bf16.mxu0 0
    %2488 = vmatpush1.bf16.msra.mxu0 0
    %2489 = vmatprep.subr.bf16.mxu0 0
    %2490 = vmatpush1.bf16.msra.mxu0 0
    %2491 = vmatprep.subr.bf16.mxu0 0
    %2492 = vmatpush1.bf16.msra.mxu0 0
    %2493 = vmatprep.subr.bf16.mxu0 0
    %2494 = vmatpush1.bf16.msra.mxu0 0
    %2495 = vmatprep.subr.bf16.mxu0 0
    %2496 = vmatpush1.bf16.msra.mxu0 0
    %2497 = vmatprep.subr.bf16.mxu0 0
    %2498 = vmatpush1.bf16.msra.mxu0 0
    %2499 = vmatprep.mubr.bf16.mxu0 0
    %2500 = vmatmul.mubr.bf16.gmra.mrb[0].mxu0 %v2233
    %v2501 = vpop.f32.mrb[0].mxu0
    %v2502 = vadd.f32 0.0, %v2501
    %v2503 = vpop.f32.mrb[0].mxu0
    %v2504 = vadd.f32 0.0, %v2503
    %v2505 = vpop.f32.mrb[0].mxu0
    %v2506 = vpop.f32.mrb[0].mxu0
    %2507 = vdwg.mxu0
    %v2508 = vadd.f32 %v2229, %v2461
    %v2509 = vadd.f32 %v2230, %v2463
    %v2510 = vadd.f32 %v2231, %v2502
    %v2511 = vadd.f32 %v2232, %v2504
    %v2512 = vtanh.pop %v2508
    %v2513 = vtanh.pop %v2509
    %v2514 = vtanh.pop %v2510
    %v2515 = vtanh.pop %v2511
    %v2516 = vmul.f32 %v2512, 0.5
    %v2517 = vadd.f32 %v2516, 0.5
    %v2518 = vmul.f32 %v2513, 0.5
    %v2519 = vadd.f32 %v2518, 0.5
    %v2520 = vmul.f32 %v2515, 0.5
    %v2521 = vadd.f32 %v2520, 0.5
    %v2522 = vmul.f32 %v2519, %v1650
    %v2523 = vmul.f32 %v2517, %v2514
    %v2524 = vadd.f32 %v2522, %v2523
    %v2525 = vtanh.pop %v2524
    %v2526 = vmul.f32 %v2521, %v2525
    %v2527 = vld [vmem:[%s4] sm:$0xff]
    %v2528 = vld [vmem:[%s4 + $0x8] sm:$0xff]
    %v2529 = vld [vmem:[%s4 + $0x10] sm:$0xff]
    %v2530 = vld [vmem:[%s4 + $0x18] sm:$0xff]
    %v2531 = vld [vmem:[%s4 + $0x20] sm:$0xff]
    %v2532 = vld [vmem:[%s4 + $0x28] sm:$0xff]
    %v2533 = vld [vmem:[%s4 + $0x30] sm:$0xff]
    %v2534 = vld [vmem:[%s4 + $0x38] sm:$0xff]
    %v2535 = vld [vmem:[%s4 + $0x40] sm:$0xff]
    %v2536 = vld [vmem:[%s4 + $0x48] sm:$0xff]
    %v2537 = vld [vmem:[%s4 + $0x50] sm:$0xff]
    %v2538 = vld [vmem:[%s4 + $0x58] sm:$0xff]
    %v2539 = vld [vmem:[%s4 + $0x60] sm:$0xff]
    %v2540 = vld [vmem:[%s4 + $0x68] sm:$0xff]
    %v2541 = vld [vmem:[%s4 + $0x70] sm:$0xff]
    %v2542 = vld [vmem:[%s4 + $0x78] sm:$0xff]
    %v2543 = vld [vmem:[%s4 + $0x80] sm:$0xff]
    %v2544 = vld [vmem:[%s4 + $0x88] sm:$0xff]
    %v2545 = vld [vmem:[%s4 + $0x90] sm:$0xff]
    %v2546 = vld [vmem:[%s4 + $0x98] sm:$0xff]
    %v2547 = vld [vmem:[%s4 + $0xa0] sm:$0xff]
    %v2548 = vld [vmem:[%s4 + $0xa8] sm:$0xff]
    %v2549 = vld [vmem:[%s4 + $0xb0] sm:$0xff]
    %v2550 = vld [vmem:[%s4 + $0xb8] sm:$0xff]
    %v2551 = vld [vmem:[%s4 + $0xc0] sm:$0xff]
    %v2552 = vld [vmem:[%s4 + $0xc8] sm:$0xff]
    %v2553 = vld [vmem:[%s4 + $0xd0] sm:$0xff]
    %v2554 = vld [vmem:[%s4 + $0xd8] sm:$0xff]
    %v2555 = vld [vmem:[%s4 + $0xe0] sm:$0xff]
    %v2556 = vld [vmem:[%s4 + $0xe8] sm:$0xff]
    %v2557 = vld [vmem:[%s4 + $0xf0] sm:$0xff]
    %v2558 = vld [vmem:[%s4 + $0xf8] sm:$0xff]
    %v2591 = vunpack.c.l.b16 %v2527
    %v2592 = vunpack.c.h.b16 %v2527
    %v2593 = vunpack.c.l.b16 %v2528
    %v2594 = vunpack.c.h.b16 %v2528
    %v2595 = vunpack.c.l.b16 %v2529
    %v2596 = vunpack.c.h.b16 %v2529
    %v2597 = vunpack.c.l.b16 %v2530
    %v2598 = vunpack.c.h.b16 %v2530
    %v2599 = vunpack.c.l.b16 %v2531
    %v2600 = vunpack.c.h.b16 %v2531
    %v2601 = vunpack.c.l.b16 %v2532
    %v2602 = vunpack.c.h.b16 %v2532
    %v2603 = vunpack.c.l.b16 %v2533
    %v2604 = vunpack.c.h.b16 %v2533
    %v2605 = vunpack.c.l.b16 %v2534
    %v2606 = vunpack.c.h.b16 %v2534
    %v2607 = vunpack.c.l.b16 %v2535
    %v2608 = vunpack.c.h.b16 %v2535
    %v2609 = vunpack.c.l.b16 %v2536
    %v2610 = vunpack.c.h.b16 %v2536
    %v2611 = vunpack.c.l.b16 %v2537
    %v2612 = vunpack.c.h.b16 %v2537
    %v2613 = vunpack.c.l.b16 %v2538
    %v2614 = vunpack.c.h.b16 %v2538
    %v2615 = vunpack.c.l.b16 %v2539
    %v2616 = vunpack.c.h.b16 %v2539
    %v2617 = vunpack.c.l.b16 %v2540
    %v2618 = vunpack.c.h.b16 %v2540
    %v2619 = vunpack.c.l.b16 %v2541
    %v2620 = vunpack.c.h.b16 %v2541
    %v2621 = vunpack.c.l.b16 %v2542
    %v2622 = vunpack.c.h.b16 %v2542
    %v2623 = vunpack.c.l.b16 %v2543
    %v2624 = vunpack.c.h.b16 %v2543
    %v2625 = vunpack.c.l.b16 %v2544
    %v2626 = vunpack.c.h.b16 %v2544
    %v2627 = vunpack.c.l.b16 %v2545
    %v2628 = vunpack.c.h.b16 %v2545
    %v2629 = vunpack.c.l.b16 %v2546
    %v2630 = vunpack.c.h.b16 %v2546
    %v2631 = vunpack.c.l.b16 %v2547
    %v2632 = vunpack.c.h.b16 %v2547
    %v2633 = vunpack.c.l.b16 %v2548
    %v2634 = vunpack.c.h.b16 %v2548
    %v2635 = vunpack.c.l.b16 %v2549
    %v2636 = vunpack.c.h.b16 %v2549
    %v2637 = vunpack.c.l.b16 %v2550
    %v2638 = vunpack.c.h.b16 %v2550
    %v2639 = vunpack.c.l.b16 %v2551
    %v2640 = vunpack.c.h.b16 %v2551
    %v2641 = vunpack.c.l.b16 %v2552
    %v2642 = vunpack.c.h.b16 %v2552
    %v2643 = vunpack.c.l.b16 %v2553
    %v2644 = vunpack.c.h.b16 %v2553
    %v2645 = vunpack.c.l.b16 %v2554
    %v2646 = vunpack.c.h.b16 %v2554
    %v2647 = vunpack.c.l.b16 %v2555
    %v2648 = vunpack.c.h.b16 %v2555
    %v2649 = vunpack.c.l.b16 %v2556
    %v2650 = vunpack.c.h.b16 %v2556
    %v2651 = vunpack.c.l.b16 %v2557
    %v2652 = vunpack.c.h.b16 %v2557
    %v2653 = vunpack.c.l.b16 %v2558
    %v2654 = vunpack.c.h.b16 %v2558
    %v2655 = vpack.c.b16 %v2595, %v2591
    %v2656 = vpack.c.b16 %v2596, %v2592
    %v2657 = vpack.c.b16 %v2597, %v2593
    %v2658 = vpack.c.b16 %v2598, %v2594
    %v2659 = vpack.c.b16 %v2603, %v2599
    %v2660 = vpack.c.b16 %v2604, %v2600
    %v2661 = vpack.c.b16 %v2605, %v2601
    %v2662 = vpack.c.b16 %v2606, %v2602
    %v2663 = vpack.c.b16 %v2611, %v2607
    %v2664 = vpack.c.b16 %v2612, %v2608
    %v2665 = vpack.c.b16 %v2613, %v2609
    %v2666 = vpack.c.b16 %v2614, %v2610
    %v2667 = vpack.c.b16 %v2619, %v2615
    %v2668 = vpack.c.b16 %v2620, %v2616
    %v2669 = vpack.c.b16 %v2621, %v2617
    %v2670 = vpack.c.b16 %v2622, %v2618
    %v2671 = vpack.c.b16 %v2627, %v2623
    %v2672 = vpack.c.b16 %v2628, %v2624
    %v2673 = vpack.c.b16 %v2629, %v2625
    %v2674 = vpack.c.b16 %v2630, %v2626
    %v2675 = vpack.c.b16 %v2635, %v2631
    %v2676 = vpack.c.b16 %v2636, %v2632
    %v2677 = vpack.c.b16 %v2637, %v2633
    %v2678 = vpack.c.b16 %v2638, %v2634
    %v2679 = vpack.c.b16 %v2643, %v2639
    %v2680 = vpack.c.b16 %v2644, %v2640
    %v2681 = vpack.c.b16 %v2645, %v2641
    %v2682 = vpack.c.b16 %v2646, %v2642
    %v2683 = vpack.c.b16 %v2651, %v2647
    %v2684 = vpack.c.b16 %v2652, %v2648
    %v2685 = vpack.c.b16 %v2653, %v2649
    %v2686 = vpack.c.b16 %v2654, %v2650
    %2719 = vmatprep.subr.bf16.mxu0 %v2656
    %2720 = vmatpush1.bf16.msra.mxu0 %v2655
    %2721 = vmatprep.subr.bf16.mxu0 %v2660
    %2722 = vmatpush1.bf16.msra.mxu0 %v2659
    %2723 = vmatprep.subr.bf16.mxu0 %v2664
    %2724 = vmatpush1.bf16.msra.mxu0 %v2663
    %2725 = vmatprep.subr.bf16.mxu0 %v2668
    %2726 = vmatpush1.bf16.msra.mxu0 %v2667
    %2727 = vmatprep.subr.bf16.mxu0 %v2672
    %2728 = vmatpush1.bf16.msra.mxu0 %v2671
    %2729 = vmatprep.subr.bf16.mxu0 %v2676
    %2730 = vmatpush1.bf16.msra.mxu0 %v2675
    %2731 = vmatprep.subr.bf16.mxu0 %v2680
    %2732 = vmatpush1.bf16.msra.mxu0 %v2679
    %2733 = vmatprep.subr.bf16.mxu0 %v2684
    %2734 = vmatpush1.bf16.msra.mxu0 %v2683
    %2735 = vmatprep.subr.bf16.mxu0 0
    %2736 = vmatpush1.bf16.msra.mxu0 0
    %2737 = vmatprep.subr.bf16.mxu0 0
    %2738 = vmatpush1.bf16.msra.mxu0 0
    %2739 = vmatprep.subr.bf16.mxu0 0
    %2740 = vmatpush1.bf16.msra.mxu0 0
    %2741 = vmatprep.subr.bf16.mxu0 0
    %2742 = vmatpush1.bf16.msra.mxu0 0
    %2743 = vmatprep.subr.bf16.mxu0 0
    %2744 = vmatpush1.bf16.msra.mxu0 0
    %2745 = vmatprep.subr.bf16.mxu0 0
    %2746 = vmatpush1.bf16.msra.mxu0 0
    %2747 = vmatprep.subr.bf16.mxu0 0
    %2748 = vmatpush1.bf16.msra.mxu0 0
    %2749 = vmatprep.subr.bf16.mxu0 0
    %2750 = vmatpush1.bf16.msra.mxu0 0
    %2751 = vmatprep.mubr.bf16.mxu0 0
    %2752 = vmatmul.mubr.bf16.gmra.mrb[0].mxu0 %v2233
    %v2753 = vpop.f32.mrb[0].mxu0
    %v2754 = vadd.f32 0.0, %v2753
    %v2755 = vpop.f32.mrb[0].mxu0
    %v2756 = vadd.f32 0.0, %v2755
    %v2757 = vpop.f32.mrb[0].mxu0
    %v2758 = vpop.f32.mrb[0].mxu0
    %2759 = vdwg.mxu0
    %2760 = vmatprep.subr.bf16.mxu0 %v2658
    %2761 = vmatpush1.bf16.msra.mxu0 %v2657
    %2762 = vmatprep.subr.bf16.mxu0 %v2662
    %2763 = vmatpush1.bf16.msra.mxu0 %v2661
    %2764 = vmatprep.subr.bf16.mxu0 %v2666
    %2765 = vmatpush1.bf16.msra.mxu0 %v2665
    %2766 = vmatprep.subr.bf16.mxu0 %v2670
    %2767 = vmatpush1.bf16.msra.mxu0 %v2669
    %2768 = vmatprep.subr.bf16.mxu0 %v2674
    %2769 = vmatpush1.bf16.msra.mxu0 %v2673
    %2770 = vmatprep.subr.bf16.mxu0 %v2678
    %2771 = vmatpush1.bf16.msra.mxu0 %v2677
    %2772 = vmatprep.subr.bf16.mxu0 %v2682
    %2773 = vmatpush1.bf16.msra.mxu0 %v2681
    %2774 = vmatprep.subr.bf16.mxu0 %v2686
    %2775 = vmatpush1.bf16.msra.mxu0 %v2685
    %2776 = vmatprep.subr.bf16.mxu0 0
    %2777 = vmatpush1.bf16.msra.mxu0 0
    %2778 = vmatprep.subr.bf16.mxu0 0
    %2779 = vmatpush1.bf16.msra.mxu0 0
    %2780 = vmatprep.subr.bf16.mxu0 0
    %2781 = vmatpush1.bf16.msra.mxu0 0
    %2782 = vmatprep.subr.bf16.mxu0 0
    %2783 = vmatpush1.bf16.msra.mxu0 0
    %2784 = vmatprep.subr.bf16.mxu0 0
    %2785 = vmatpush1.bf16.msra.mxu0 0
    %2786 = vmatprep.subr.bf16.mxu0 0
    %2787 = vmatpush1.bf16.msra.mxu0 0
    %2788 = vmatprep.subr.bf16.mxu0 0
    %2789 = vmatpush1.bf16.msra.mxu0 0
    %2790 = vmatprep.subr.bf16.mxu0 0
    %2791 = vmatpush1.bf16.msra.mxu0 0
    %2792 = vmatprep.mubr.bf16.mxu0 0
    %2793 = vmatmul.mubr.bf16.gmra.mrb[0].mxu0 %v2233
    %v2794 = vpop.f32.mrb[0].mxu0
    %v2795 = vadd.f32 0.0, %v2794
    %v2796 = vpop.f32.mrb[0].mxu0
    %v2797 = vadd.f32 0.0, %v2796
    %v2798 = vpop.f32.mrb[0].mxu0
    %v2799 = vpop.f32.mrb[0].mxu0
    %2800 = vdwg.mxu0
    %v2801 = vadd.f32 %v443, %v2754
    %v2802 = vadd.f32 %v447, %v2756
    %v2803 = vadd.f32 %v451, %v2795
    %v2804 = vadd.f32 %v455, %v2797
    %v2805 = vpack.c.bf16 %v2224, %v2224
    %v2806 = vld [vmem:[%s5] sm:$0xff]
    %v2807 = vld [vmem:[%s5 + $0x8] sm:$0xff]
    %v2808 = vld [vmem:[%s5 + $0x10] sm:$0xff]
    %v2809 = vld [vmem:[%s5 + $0x18] sm:$0xff]
    %v2810 = vld [vmem:[%s5 + $0x20] sm:$0xff]
    %v2811 = vld [vmem:[%s5 + $0x28] sm:$0xff]
    %v2812 = vld [vmem:[%s5 + $0x30] sm:$0xff]
    %v2813 = vld [vmem:[%s5 + $0x38] sm:$0xff]
    %v2814 = vld [vmem:[%s5 + $0x40] sm:$0xff]
    %v2815 = vld [vmem:[%s5 + $0x48] sm:$0xff]
    %v2816 = vld [vmem:[%s5 + $0x50] sm:$0xff]
    %v2817 = vld [vmem:[%s5 + $0x58] sm:$0xff]
    %v2818 = vld [vmem:[%s5 + $0x60] sm:$0xff]
    %v2819 = vld [vmem:[%s5 + $0x68] sm:$0xff]
    %v2820 = vld [vmem:[%s5 + $0x70] sm:$0xff]
    %v2821 = vld [vmem:[%s5 + $0x78] sm:$0xff]
    %v2822 = vld [vmem:[%s5 + $0x80] sm:$0xff]
    %v2823 = vld [vmem:[%s5 + $0x88] sm:$0xff]
    %v2824 = vld [vmem:[%s5 + $0x90] sm:$0xff]
    %v2825 = vld [vmem:[%s5 + $0x98] sm:$0xff]
    %v2826 = vld [vmem:[%s5 + $0xa0] sm:$0xff]
    %v2827 = vld [vmem:[%s5 + $0xa8] sm:$0xff]
    %v2828 = vld [vmem:[%s5 + $0xb0] sm:$0xff]
    %v2829 = vld [vmem:[%s5 + $0xb8] sm:$0xff]
    %v2830 = vld [vmem:[%s5 + $0xc0] sm:$0xff]
    %v2831 = vld [vmem:[%s5 + $0xc8] sm:$0xff]
    %v2832 = vld [vmem:[%s5 + $0xd0] sm:$0xff]
    %v2833 = vld [vmem:[%s5 + $0xd8] sm:$0xff]
    %v2834 = vld [vmem:[%s5 + $0xe0] sm:$0xff]
    %v2835 = vld [vmem:[%s5 + $0xe8] sm:$0xff]
    %v2836 = vld [vmem:[%s5 + $0xf0] sm:$0xff]
    %v2837 = vld [vmem:[%s5 + $0xf8] sm:$0xff]
    %v2870 = vunpack.c.l.b16 %v2806
    %v2871 = vunpack.c.h.b16 %v2806
    %v2872 = vunpack.c.l.b16 %v2807
    %v2873 = vunpack.c.h.b16 %v2807
    %v2874 = vunpack.c.l.b16 %v2808
    %v2875 = vunpack.c.h.b16 %v2808
    %v2876 = vunpack.c.l.b16 %v2809
    %v2877 = vunpack.c.h.b16 %v2809
    %v2878 = vunpack.c.l.b16 %v2810
    %v2879 = vunpack.c.h.b16 %v2810
    %v2880 = vunpack.c.l.b16 %v2811
    %v2881 = vunpack.c.h.b16 %v2811
    %v2882 = vunpack.c.l.b16 %v2812
    %v2883 = vunpack.c.h.b16 %v2812
    %v2884 = vunpack.c.l.b16 %v2813
    %v2885 = vunpack.c.h.b16 %v2813
    %v2886 = vunpack.c.l.b16 %v2814
    %v2887 = vunpack.c.h.b16 %v2814
    %v2888 = vunpack.c.l.b16 %v2815
    %v2889 = vunpack.c.h.b16 %v2815
    %v2890 = vunpack.c.l.b16 %v2816
    %v2891 = vunpack.c.h.b16 %v2816
    %v2892 = vunpack.c.l.b16 %v2817
    %v2893 = vunpack.c.h.b16 %v2817
    %v2894 = vunpack.c.l.b16 %v2818
    %v2895 = vunpack.c.h.b16 %v2818
    %v2896 = vunpack.c.l.b16 %v2819
    %v2897 = vunpack.c.h.b16 %v2819
    %v2898 = vunpack.c.l.b16 %v2820
    %v2899 = vunpack.c.h.b16 %v2820
    %v2900 = vunpack.c.l.b16 %v2821
    %v2901 = vunpack.c.h.b16 %v2821
    %v2902 = vunpack.c.l.b16 %v2822
    %v2903 = vunpack.c.h.b16 %v2822
    %v2904 = vunpack.c.l.b16 %v2823
    %v2905 = vunpack.c.h.b16 %v2823
    %v2906 = vunpack.c.l.b16 %v2824
    %v2907 = vunpack.c.h.b16 %v2824
    %v2908 = vunpack.c.l.b16 %v2825
    %v2909 = vunpack.c.h.b16 %v2825
    %v2910 = vunpack.c.l.b16 %v2826
    %v2911 = vunpack.c.h.b16 %v2826
    %v2912 = vunpack.c.l.b16 %v2827
    %v2913 = vunpack.c.h.b16 %v2827
    %v2914 = vunpack.c.l.b16 %v2828
    %v2915 = vunpack.c.h.b16 %v2828
    %v2916 = vunpack.c.l.b16 %v2829
    %v2917 = vunpack.c.h.b16 %v2829
    %v2918 = vunpack.c.l.b16 %v2830
    %v2919 = vunpack.c.h.b16 %v2830
    %v2920 = vunpack.c.l.b16 %v2831
    %v2921 = vunpack.c.h.b16 %v2831
    %v2922 = vunpack.c.l.b16 %v2832
    %v2923 = vunpack.c.h.b16 %v2832
    %v2924 = vunpack.c.l.b16 %v2833
    %v2925 = vunpack.c.h.b16 %v2833
    %v2926 = vunpack.c.l.b16 %v2834
    %v2927 = vunpack.c.h.b16 %v2834
    %v2928 = vunpack.c.l.b16 %v2835
    %v2929 = vunpack.c.h.b16 %v2835
    %v2930 = vunpack.c.l.b16 %v2836
    %v2931 = vunpack.c.h.b16 %v2836
    %v2932 = vunpack.c.l.b16 %v2837
    %v2933 = vunpack.c.h.b16 %v2837
    %v2934 = vpack.c.b16 %v2874, %v2870
    %v2935 = vpack.c.b16 %v2875, %v2871
    %v2936 = vpack.c.b16 %v2876, %v2872
    %v2937 = vpack.c.b16 %v2877, %v2873
    %v2938 = vpack.c.b16 %v2882, %v2878
    %v2939 = vpack.c.b16 %v2883, %v2879
    %v2940 = vpack.c.b16 %v2884, %v2880
    %v2941 = vpack.c.b16 %v2885, %v2881
    %v2942 = vpack.c.b16 %v2890, %v2886
    %v2943 = vpack.c.b16 %v2891, %v2887
    %v2944 = vpack.c.b16 %v2892, %v2888
    %v2945 = vpack.c.b16 %v2893, %v2889
    %v2946 = vpack.c.b16 %v2898, %v2894
    %v2947 = vpack.c.b16 %v2899, %v2895
    %v2948 = vpack.c.b16 %v2900, %v2896
    %v2949 = vpack.c.b16 %v2901, %v2897
    %v2950 = vpack.c.b16 %v2906, %v2902
    %v2951 = vpack.c.b16 %v2907, %v2903
    %v2952 = vpack.c.b16 %v2908, %v2904
    %v2953 = vpack.c.b16 %v2909, %v2905
    %v2954 = vpack.c.b16 %v2914, %v2910
    %v2955 = vpack.c.b16 %v2915, %v2911
    %v2956 = vpack.c.b16 %v2916, %v2912
    %v2957 = vpack.c.b16 %v2917, %v2913
    %v2958 = vpack.c.b16 %v2922, %v2918
    %v2959 = vpack.c.b16 %v2923, %v2919
    %v2960 = vpack.c.b16 %v2924, %v2920
    %v2961 = vpack.c.b16 %v2925, %v2921
    %v2962 = vpack.c.b16 %v2930, %v2926
    %v2963 = vpack.c.b16 %v2931, %v2927
    %v2964 = vpack.c.b16 %v2932, %v2928
    %v2965 = vpack.c.b16 %v2933, %v2929
    %2998 = vmatprep.subr.bf16.mxu0 %v2935
    %2999 = vmatpush1.bf16.msra.mxu0 %v2934
    %3000 = vmatprep.subr.bf16.mxu0 %v2939
    %3001 = vmatpush1.bf16.msra.mxu0 %v2938
    %3002 = vmatprep.subr.bf16.mxu0 %v2943
    %3003 = vmatpush1.bf16.msra.mxu0 %v2942
    %3004 = vmatprep.subr.bf16.mxu0 %v2947
    %3005 = vmatpush1.bf16.msra.mxu0 %v2946
    %3006 = vmatprep.subr.bf16.mxu0 %v2951
    %3007 = vmatpush1.bf16.msra.mxu0 %v2950
    %3008 = vmatprep.subr.bf16.mxu0 %v2955
    %3009 = vmatpush1.bf16.msra.mxu0 %v2954
    %3010 = vmatprep.subr.bf16.mxu0 %v2959
    %3011 = vmatpush1.bf16.msra.mxu0 %v2958
    %3012 = vmatprep.subr.bf16.mxu0 %v2963
    %3013 = vmatpush1.bf16.msra.mxu0 %v2962
    %3014 = vmatprep.subr.bf16.mxu0 0
    %3015 = vmatpush1.bf16.msra.mxu0 0
    %3016 = vmatprep.subr.bf16.mxu0 0
    %3017 = vmatpush1.bf16.msra.mxu0 0
    %3018 = vmatprep.subr.bf16.mxu0 0
    %3019 = vmatpush1.bf16.msra.mxu0 0
    %3020 = vmatprep.subr.bf16.mxu0 0
    %3021 = vmatpush1.bf16.msra.mxu0 0
    %3022 = vmatprep.subr.bf16.mxu0 0
    %3023 = vmatpush1.bf16.msra.mxu0 0
    %3024 = vmatprep.subr.bf16.mxu0 0
    %3025 = vmatpush1.bf16.msra.mxu0 0
    %3026 = vmatprep.subr.bf16.mxu0 0
    %3027 = vmatpush1.bf16.msra.mxu0 0
    %3028 = vmatprep.subr.bf16.mxu0 0
    %3029 = vmatpush1.bf16.msra.mxu0 0
    %3030 = vmatprep.mubr.bf16.mxu0 0
    %3031 = vmatmul.mubr.bf16.gmra.mrb[0].mxu0 %v2805
    %v3032 = vpop.f32.mrb[0].mxu0
    %v3033 = vadd.f32 0.0, %v3032
    %v3034 = vpop.f32.mrb[0].mxu0
    %v3035 = vadd.f32 0.0, %v3034
    %v3036 = vpop.f32.mrb[0].mxu0
    %v3037 = vpop.f32.mrb[0].mxu0
    %3038 = vdwg.mxu0
    %3039 = vmatprep.subr.bf16.mxu0 %v2937
    %3040 = vmatpush1.bf16.msra.mxu0 %v2936
    %3041 = vmatprep.subr.bf16.mxu0 %v2941
    %3042 = vmatpush1.bf16.msra.mxu0 %v2940
    %3043 = vmatprep.subr.bf16.mxu0 %v2945
    %3044 = vmatpush1.bf16.msra.mxu0 %v2944
    %3045 = vmatprep.subr.bf16.mxu0 %v2949
    %3046 = vmatpush1.bf16.msra.mxu0 %v2948
    %3047 = vmatprep.subr.bf16.mxu0 %v2953
    %3048 = vmatpush1.bf16.msra.mxu0 %v2952
    %3049 = vmatprep.subr.bf16.mxu0 %v2957
    %3050 = vmatpush1.bf16.msra.mxu0 %v2956
    %3051 = vmatprep.subr.bf16.mxu0 %v2961
    %3052 = vmatpush1.bf16.msra.mxu0 %v2960
    %3053 = vmatprep.subr.bf16.mxu0 %v2965
    %3054 = vmatpush1.bf16.msra.mxu0 %v2964
    %3055 = vmatprep.subr.bf16.mxu0 0
    %3056 = vmatpush1.bf16.msra.mxu0 0
    %3057 = vmatprep.subr.bf16.mxu0 0
    %3058 = vmatpush1.bf16.msra.mxu0 0
    %3059 = vmatprep.subr.bf16.mxu0 0
    %3060 = vmatpush1.bf16.msra.mxu0 0
    %3061 = vmatprep.subr.bf16.mxu0 0
    %3062 = vmatpush1.bf16.msra.mxu0 0
    %3063 = vmatprep.subr.bf16.mxu0 0
    %3064 = vmatpush1.bf16.msra.mxu0 0
    %3065 = vmatprep.subr.bf16.mxu0 0
    %3066 = vmatpush1.bf16.msra.mxu0 0
    %3067 = vmatprep.subr.bf16.mxu0 0
    %3068 = vmatpush1.bf16.msra.mxu0 0
    %3069 = vmatprep.subr.bf16.mxu0 0
    %3070 = vmatpush1.bf16.msra.mxu0 0
    %3071 = vmatprep.mubr.bf16.mxu0 0
    %3072 = vmatmul.mubr.bf16.gmra.mrb[0].mxu0 %v2805
    %v3073 = vpop.f32.mrb[0].mxu0
    %v3074 = vadd.f32 0.0, %v3073
    %v3075 = vpop.f32.mrb[0].mxu0
    %v3076 = vadd.f32 0.0, %v3075
    %v3077 = vpop.f32.mrb[0].mxu0
    %v3078 = vpop.f32.mrb[0].mxu0
    %3079 = vdwg.mxu0
    %v3080 = vadd.f32 %v2801, %v3033
    %v3081 = vadd.f32 %v2802, %v3035
    %v3082 = vadd.f32 %v2803, %v3074
    %v3083 = vadd.f32 %v2804, %v3076
    %v3084 = vtanh.pop %v3080
    %v3085 = vtanh.pop %v3081
    %v3086 = vtanh.pop %v3082
    %v3087 = vtanh.pop %v3083
    %v3088 = vmul.f32 %v3084, 0.5
    %v3089 = vadd.f32 %v3088, 0.5
    %v3090 = vmul.f32 %v3085, 0.5
    %v3091 = vadd.f32 %v3090, 0.5
    %v3092 = vmul.f32 %v3087, 0.5
    %v3093 = vadd.f32 %v3092, 0.5
    %v3094 = vmul.f32 %v3091, %v2222
    %v3095 = vmul.f32 %v3089, %v3086
    %v3096 = vadd.f32 %v3094, %v3095
    %v3097 = vtanh.pop %v3096
    %v3098 = vmul.f32 %v3093, %v3097
    %3099 = vst [vmem:[#allocation3 - $0x5] sm:$0x80] %v3098
    %s3100 = smul.u32 4, 4
    %s3101 = smul.addr %s3100, 8
    %s3102 = scalar_lea.vmem [#allocation2], %s3101
    %v3103 = vld [vmem:[%s3102] sm:$0xff]
    %v3104 = vld [vmem:[%s3102 + $0x8] sm:$0xff]
    %v3105 = vld [vmem:[%s3102 + $0x10] sm:$0xff]
    %v3106 = vld [vmem:[%s3102 + $0x18] sm:$0xff]
    %v3107 = vpack.c.bf16 %v2526, %v2526
    %v3108 = vld [vmem:[%s2] sm:$0xff]
    %v3109 = vld [vmem:[%s2 + $0x8] sm:$0xff]
    %v3110 = vld [vmem:[%s2 + $0x10] sm:$0xff]
    %v3111 = vld [vmem:[%s2 + $0x18] sm:$0xff]
    %v3112 = vld [vmem:[%s2 + $0x20] sm:$0xff]
    %v3113 = vld [vmem:[%s2 + $0x28] sm:$0xff]
    %v3114 = vld [vmem:[%s2 + $0x30] sm:$0xff]
    %v3115 = vld [vmem:[%s2 + $0x38] sm:$0xff]
    %v3116 = vld [vmem:[%s2 + $0x40] sm:$0xff]
    %v3117 = vld [vmem:[%s2 + $0x48] sm:$0xff]
    %v3118 = vld [vmem:[%s2 + $0x50] sm:$0xff]
    %v3119 = vld [vmem:[%s2 + $0x58] sm:$0xff]
    %v3120 = vld [vmem:[%s2 + $0x60] sm:$0xff]
    %v3121 = vld [vmem:[%s2 + $0x68] sm:$0xff]
    %v3122 = vld [vmem:[%s2 + $0x70] sm:$0xff]
    %v3123 = vld [vmem:[%s2 + $0x78] sm:$0xff]
    %v3124 = vld [vmem:[%s2 + $0x80] sm:$0xff]
    %v3125 = vld [vmem:[%s2 + $0x88] sm:$0xff]
    %v3126 = vld [vmem:[%s2 + $0x90] sm:$0xff]
    %v3127 = vld [vmem:[%s2 + $0x98] sm:$0xff]
    %v3128 = vld [vmem:[%s2 + $0xa0] sm:$0xff]
    %v3129 = vld [vmem:[%s2 + $0xa8] sm:$0xff]
    %v3130 = vld [vmem:[%s2 + $0xb0] sm:$0xff]
    %v3131 = vld [vmem:[%s2 + $0xb8] sm:$0xff]
    %v3132 = vld [vmem:[%s2 + $0xc0] sm:$0xff]
    %v3133 = vld [vmem:[%s2 + $0xc8] sm:$0xff]
    %v3134 = vld [vmem:[%s2 + $0xd0] sm:$0xff]
    %v3135 = vld [vmem:[%s2 + $0xd8] sm:$0xff]
    %v3136 = vld [vmem:[%s2 + $0xe0] sm:$0xff]
    %v3137 = vld [vmem:[%s2 + $0xe8] sm:$0xff]
    %v3138 = vld [vmem:[%s2 + $0xf0] sm:$0xff]
    %v3139 = vld [vmem:[%s2 + $0xf8] sm:$0xff]
    %v3172 = vunpack.c.l.b16 %v3108
    %v3173 = vunpack.c.h.b16 %v3108
    %v3174 = vunpack.c.l.b16 %v3109
    %v3175 = vunpack.c.h.b16 %v3109
    %v3176 = vunpack.c.l.b16 %v3110
    %v3177 = vunpack.c.h.b16 %v3110
    %v3178 = vunpack.c.l.b16 %v3111
    %v3179 = vunpack.c.h.b16 %v3111
    %v3180 = vunpack.c.l.b16 %v3112
    %v3181 = vunpack.c.h.b16 %v3112
    %v3182 = vunpack.c.l.b16 %v3113
    %v3183 = vunpack.c.h.b16 %v3113
    %v3184 = vunpack.c.l.b16 %v3114
    %v3185 = vunpack.c.h.b16 %v3114
    %v3186 = vunpack.c.l.b16 %v3115
    %v3187 = vunpack.c.h.b16 %v3115
    %v3188 = vunpack.c.l.b16 %v3116
    %v3189 = vunpack.c.h.b16 %v3116
    %v3190 = vunpack.c.l.b16 %v3117
    %v3191 = vunpack.c.h.b16 %v3117
    %v3192 = vunpack.c.l.b16 %v3118
    %v3193 = vunpack.c.h.b16 %v3118
    %v3194 = vunpack.c.l.b16 %v3119
    %v3195 = vunpack.c.h.b16 %v3119
    %v3196 = vunpack.c.l.b16 %v3120
    %v3197 = vunpack.c.h.b16 %v3120
    %v3198 = vunpack.c.l.b16 %v3121
    %v3199 = vunpack.c.h.b16 %v3121
    %v3200 = vunpack.c.l.b16 %v3122
    %v3201 = vunpack.c.h.b16 %v3122
    %v3202 = vunpack.c.l.b16 %v3123
    %v3203 = vunpack.c.h.b16 %v3123
    %v3204 = vunpack.c.l.b16 %v3124
    %v3205 = vunpack.c.h.b16 %v3124
    %v3206 = vunpack.c.l.b16 %v3125
    %v3207 = vunpack.c.h.b16 %v3125
    %v3208 = vunpack.c.l.b16 %v3126
    %v3209 = vunpack.c.h.b16 %v3126
    %v3210 = vunpack.c.l.b16 %v3127
    %v3211 = vunpack.c.h.b16 %v3127
    %v3212 = vunpack.c.l.b16 %v3128
    %v3213 = vunpack.c.h.b16 %v3128
    %v3214 = vunpack.c.l.b16 %v3129
    %v3215 = vunpack.c.h.b16 %v3129
    %v3216 = vunpack.c.l.b16 %v3130
    %v3217 = vunpack.c.h.b16 %v3130
    %v3218 = vunpack.c.l.b16 %v3131
    %v3219 = vunpack.c.h.b16 %v3131
    %v3220 = vunpack.c.l.b16 %v3132
    %v3221 = vunpack.c.h.b16 %v3132
    %v3222 = vunpack.c.l.b16 %v3133
    %v3223 = vunpack.c.h.b16 %v3133
    %v3224 = vunpack.c.l.b16 %v3134
    %v3225 = vunpack.c.h.b16 %v3134
    %v3226 = vunpack.c.l.b16 %v3135
    %v3227 = vunpack.c.h.b16 %v3135
    %v3228 = vunpack.c.l.b16 %v3136
    %v3229 = vunpack.c.h.b16 %v3136
    %v3230 = vunpack.c.l.b16 %v3137
    %v3231 = vunpack.c.h.b16 %v3137
    %v3232 = vunpack.c.l.b16 %v3138
    %v3233 = vunpack.c.h.b16 %v3138
    %v3234 = vunpack.c.l.b16 %v3139
    %v3235 = vunpack.c.h.b16 %v3139
    %v3236 = vpack.c.b16 %v3176, %v3172
    %v3237 = vpack.c.b16 %v3177, %v3173
    %v3238 = vpack.c.b16 %v3178, %v3174
    %v3239 = vpack.c.b16 %v3179, %v3175
    %v3240 = vpack.c.b16 %v3184, %v3180
    %v3241 = vpack.c.b16 %v3185, %v3181
    %v3242 = vpack.c.b16 %v3186, %v3182
    %v3243 = vpack.c.b16 %v3187, %v3183
    %v3244 = vpack.c.b16 %v3192, %v3188
    %v3245 = vpack.c.b16 %v3193, %v3189
    %v3246 = vpack.c.b16 %v3194, %v3190
    %v3247 = vpack.c.b16 %v3195, %v3191
    %v3248 = vpack.c.b16 %v3200, %v3196
    %v3249 = vpack.c.b16 %v3201, %v3197
    %v3250 = vpack.c.b16 %v3202, %v3198
    %v3251 = vpack.c.b16 %v3203, %v3199
    %v3252 = vpack.c.b16 %v3208, %v3204
    %v3253 = vpack.c.b16 %v3209, %v3205
    %v3254 = vpack.c.b16 %v3210, %v3206
    %v3255 = vpack.c.b16 %v3211, %v3207
    %v3256 = vpack.c.b16 %v3216, %v3212
    %v3257 = vpack.c.b16 %v3217, %v3213
    %v3258 = vpack.c.b16 %v3218, %v3214
    %v3259 = vpack.c.b16 %v3219, %v3215
    %v3260 = vpack.c.b16 %v3224, %v3220
    %v3261 = vpack.c.b16 %v3225, %v3221
    %v3262 = vpack.c.b16 %v3226, %v3222
    %v3263 = vpack.c.b16 %v3227, %v3223
    %v3264 = vpack.c.b16 %v3232, %v3228
    %v3265 = vpack.c.b16 %v3233, %v3229
    %v3266 = vpack.c.b16 %v3234, %v3230
    %v3267 = vpack.c.b16 %v3235, %v3231
    %3300 = vmatprep.subr.bf16.mxu0 %v3237
    %3301 = vmatpush1.bf16.msra.mxu0 %v3236
    %3302 = vmatprep.subr.bf16.mxu0 %v3241
    %3303 = vmatpush1.bf16.msra.mxu0 %v3240
    %3304 = vmatprep.subr.bf16.mxu0 %v3245
    %3305 = vmatpush1.bf16.msra.mxu0 %v3244
    %3306 = vmatprep.subr.bf16.mxu0 %v3249
    %3307 = vmatpush1.bf16.msra.mxu0 %v3248
    %3308 = vmatprep.subr.bf16.mxu0 %v3253
    %3309 = vmatpush1.bf16.msra.mxu0 %v3252
    %3310 = vmatprep.subr.bf16.mxu0 %v3257
    %3311 = vmatpush1.bf16.msra.mxu0 %v3256
    %3312 = vmatprep.subr.bf16.mxu0 %v3261
    %3313 = vmatpush1.bf16.msra.mxu0 %v3260
    %3314 = vmatprep.subr.bf16.mxu0 %v3265
    %3315 = vmatpush1.bf16.msra.mxu0 %v3264
    %3316 = vmatprep.subr.bf16.mxu0 0
    %3317 = vmatpush1.bf16.msra.mxu0 0
    %3318 = vmatprep.subr.bf16.mxu0 0
    %3319 = vmatpush1.bf16.msra.mxu0 0
    %3320 = vmatprep.subr.bf16.mxu0 0
    %3321 = vmatpush1.bf16.msra.mxu0 0
    %3322 = vmatprep.subr.bf16.mxu0 0
    %3323 = vmatpush1.bf16.msra.mxu0 0
    %3324 = vmatprep.subr.bf16.mxu0 0
    %3325 = vmatpush1.bf16.msra.mxu0 0
    %3326 = vmatprep.subr.bf16.mxu0 0
    %3327 = vmatpush1.bf16.msra.mxu0 0
    %3328 = vmatprep.subr.bf16.mxu0 0
    %3329 = vmatpush1.bf16.msra.mxu0 0
    %3330 = vmatprep.subr.bf16.mxu0 0
    %3331 = vmatpush1.bf16.msra.mxu0 0
    %3332 = vmatprep.mubr.bf16.mxu0 0
    %3333 = vmatmul.mubr.bf16.gmra.mrb[0].mxu0 %v3107
    %v3334 = vpop.f32.mrb[0].mxu0
    %v3335 = vadd.f32 0.0, %v3334
    %v3336 = vpop.f32.mrb[0].mxu0
    %v3337 = vadd.f32 0.0, %v3336
    %v3338 = vpop.f32.mrb[0].mxu0
    %v3339 = vpop.f32.mrb[0].mxu0
    %3340 = vdwg.mxu0
    %3341 = vmatprep.subr.bf16.mxu0 %v3239
    %3342 = vmatpush1.bf16.msra.mxu0 %v3238
    %3343 = vmatprep.subr.bf16.mxu0 %v3243
    %3344 = vmatpush1.bf16.msra.mxu0 %v3242
    %3345 = vmatprep.subr.bf16.mxu0 %v3247
    %3346 = vmatpush1.bf16.msra.mxu0 %v3246
    %3347 = vmatprep.subr.bf16.mxu0 %v3251
    %3348 = vmatpush1.bf16.msra.mxu0 %v3250
    %3349 = vmatprep.subr.bf16.mxu0 %v3255
    %3350 = vmatpush1.bf16.msra.mxu0 %v3254
    %3351 = vmatprep.subr.bf16.mxu0 %v3259
    %3352 = vmatpush1.bf16.msra.mxu0 %v3258
    %3353 = vmatprep.subr.bf16.mxu0 %v3263
    %3354 = vmatpush1.bf16.msra.mxu0 %v3262
    %3355 = vmatprep.subr.bf16.mxu0 %v3267
    %3356 = vmatpush1.bf16.msra.mxu0 %v3266
    %3357 = vmatprep.subr.bf16.mxu0 0
    %3358 = vmatpush1.bf16.msra.mxu0 0
    %3359 = vmatprep.subr.bf16.mxu0 0
    %3360 = vmatpush1.bf16.msra.mxu0 0
    %3361 = vmatprep.subr.bf16.mxu0 0
    %3362 = vmatpush1.bf16.msra.mxu0 0
    %3363 = vmatprep.subr.bf16.mxu0 0
    %3364 = vmatpush1.bf16.msra.mxu0 0
    %3365 = vmatprep.subr.bf16.mxu0 0
    %3366 = vmatpush1.bf16.msra.mxu0 0
    %3367 = vmatprep.subr.bf16.mxu0 0
    %3368 = vmatpush1.bf16.msra.mxu0 0
    %3369 = vmatprep.subr.bf16.mxu0 0
    %3370 = vmatpush1.bf16.msra.mxu0 0
    %3371 = vmatprep.subr.bf16.mxu0 0
    %3372 = vmatpush1.bf16.msra.mxu0 0
    %3373 = vmatprep.mubr.bf16.mxu0 0
    %3374 = vmatmul.mubr.bf16.gmra.mrb[0].mxu0 %v3107
    %v3375 = vpop.f32.mrb[0].mxu0
    %v3376 = vadd.f32 0.0, %v3375
    %v3377 = vpop.f32.mrb[0].mxu0
    %v3378 = vadd.f32 0.0, %v3377
    %v3379 = vpop.f32.mrb[0].mxu0
    %v3380 = vpop.f32.mrb[0].mxu0
    %3381 = vdwg.mxu0
    %v3382 = vadd.f32 %v3103, %v3335
    %v3383 = vadd.f32 %v3104, %v3337
    %v3384 = vadd.f32 %v3105, %v3376
    %v3385 = vadd.f32 %v3106, %v3378
    %v3386 = vtanh.pop %v3382
    %v3387 = vtanh.pop %v3383
    %v3388 = vtanh.pop %v3384
    %v3389 = vtanh.pop %v3385
    %v3390 = vmul.f32 %v3386, 0.5
    %v3391 = vadd.f32 %v3390, 0.5
    %v3392 = vmul.f32 %v3387, 0.5
    %v3393 = vadd.f32 %v3392, 0.5
    %v3394 = vmul.f32 %v3389, 0.5
    %v3395 = vadd.f32 %v3394, 0.5
    %v3396 = vmul.f32 %v3393, %v2524
    %v3397 = vmul.f32 %v3391, %v3388
    %v3398 = vadd.f32 %v3396, %v3397
    %v3399 = vtanh.pop %v3398
    %v3400 = vmul.f32 %v3395, %v3399
    %v3401 = vld [vmem:[%s4] sm:$0xff]
    %v3402 = vld [vmem:[%s4 + $0x8] sm:$0xff]
    %v3403 = vld [vmem:[%s4 + $0x10] sm:$0xff]
    %v3404 = vld [vmem:[%s4 + $0x18] sm:$0xff]
    %v3405 = vld [vmem:[%s4 + $0x20] sm:$0xff]
    %v3406 = vld [vmem:[%s4 + $0x28] sm:$0xff]
    %v3407 = vld [vmem:[%s4 + $0x30] sm:$0xff]
    %v3408 = vld [vmem:[%s4 + $0x38] sm:$0xff]
    %v3409 = vld [vmem:[%s4 + $0x40] sm:$0xff]
    %v3410 = vld [vmem:[%s4 + $0x48] sm:$0xff]
    %v3411 = vld [vmem:[%s4 + $0x50] sm:$0xff]
    %v3412 = vld [vmem:[%s4 + $0x58] sm:$0xff]
    %v3413 = vld [vmem:[%s4 + $0x60] sm:$0xff]
    %v3414 = vld [vmem:[%s4 + $0x68] sm:$0xff]
    %v3415 = vld [vmem:[%s4 + $0x70] sm:$0xff]
    %v3416 = vld [vmem:[%s4 + $0x78] sm:$0xff]
    %v3417 = vld [vmem:[%s4 + $0x80] sm:$0xff]
    %v3418 = vld [vmem:[%s4 + $0x88] sm:$0xff]
    %v3419 = vld [vmem:[%s4 + $0x90] sm:$0xff]
    %v3420 = vld [vmem:[%s4 + $0x98] sm:$0xff]
    %v3421 = vld [vmem:[%s4 + $0xa0] sm:$0xff]
    %v3422 = vld [vmem:[%s4 + $0xa8] sm:$0xff]
    %v3423 = vld [vmem:[%s4 + $0xb0] sm:$0xff]
    %v3424 = vld [vmem:[%s4 + $0xb8] sm:$0xff]
    %v3425 = vld [vmem:[%s4 + $0xc0] sm:$0xff]
    %v3426 = vld [vmem:[%s4 + $0xc8] sm:$0xff]
    %v3427 = vld [vmem:[%s4 + $0xd0] sm:$0xff]
    %v3428 = vld [vmem:[%s4 + $0xd8] sm:$0xff]
    %v3429 = vld [vmem:[%s4 + $0xe0] sm:$0xff]
    %v3430 = vld [vmem:[%s4 + $0xe8] sm:$0xff]
    %v3431 = vld [vmem:[%s4 + $0xf0] sm:$0xff]
    %v3432 = vld [vmem:[%s4 + $0xf8] sm:$0xff]
    %v3465 = vunpack.c.l.b16 %v3401
    %v3466 = vunpack.c.h.b16 %v3401
    %v3467 = vunpack.c.l.b16 %v3402
    %v3468 = vunpack.c.h.b16 %v3402
    %v3469 = vunpack.c.l.b16 %v3403
    %v3470 = vunpack.c.h.b16 %v3403
    %v3471 = vunpack.c.l.b16 %v3404
    %v3472 = vunpack.c.h.b16 %v3404
    %v3473 = vunpack.c.l.b16 %v3405
    %v3474 = vunpack.c.h.b16 %v3405
    %v3475 = vunpack.c.l.b16 %v3406
    %v3476 = vunpack.c.h.b16 %v3406
    %v3477 = vunpack.c.l.b16 %v3407
    %v3478 = vunpack.c.h.b16 %v3407
    %v3479 = vunpack.c.l.b16 %v3408
    %v3480 = vunpack.c.h.b16 %v3408
    %v3481 = vunpack.c.l.b16 %v3409
    %v3482 = vunpack.c.h.b16 %v3409
    %v3483 = vunpack.c.l.b16 %v3410
    %v3484 = vunpack.c.h.b16 %v3410
    %v3485 = vunpack.c.l.b16 %v3411
    %v3486 = vunpack.c.h.b16 %v3411
    %v3487 = vunpack.c.l.b16 %v3412
    %v3488 = vunpack.c.h.b16 %v3412
    %v3489 = vunpack.c.l.b16 %v3413
    %v3490 = vunpack.c.h.b16 %v3413
    %v3491 = vunpack.c.l.b16 %v3414
    %v3492 = vunpack.c.h.b16 %v3414
    %v3493 = vunpack.c.l.b16 %v3415
    %v3494 = vunpack.c.h.b16 %v3415
    %v3495 = vunpack.c.l.b16 %v3416
    %v3496 = vunpack.c.h.b16 %v3416
    %v3497 = vunpack.c.l.b16 %v3417
    %v3498 = vunpack.c.h.b16 %v3417
    %v3499 = vunpack.c.l.b16 %v3418
    %v3500 = vunpack.c.h.b16 %v3418
    %v3501 = vunpack.c.l.b16 %v3419
    %v3502 = vunpack.c.h.b16 %v3419
    %v3503 = vunpack.c.l.b16 %v3420
    %v3504 = vunpack.c.h.b16 %v3420
    %v3505 = vunpack.c.l.b16 %v3421
    %v3506 = vunpack.c.h.b16 %v3421
    %v3507 = vunpack.c.l.b16 %v3422
    %v3508 = vunpack.c.h.b16 %v3422
    %v3509 = vunpack.c.l.b16 %v3423
    %v3510 = vunpack.c.h.b16 %v3423
    %v3511 = vunpack.c.l.b16 %v3424
    %v3512 = vunpack.c.h.b16 %v3424
    %v3513 = vunpack.c.l.b16 %v3425
    %v3514 = vunpack.c.h.b16 %v3425
    %v3515 = vunpack.c.l.b16 %v3426
    %v3516 = vunpack.c.h.b16 %v3426
    %v3517 = vunpack.c.l.b16 %v3427
    %v3518 = vunpack.c.h.b16 %v3427
    %v3519 = vunpack.c.l.b16 %v3428
    %v3520 = vunpack.c.h.b16 %v3428
    %v3521 = vunpack.c.l.b16 %v3429
    %v3522 = vunpack.c.h.b16 %v3429
    %v3523 = vunpack.c.l.b16 %v3430
    %v3524 = vunpack.c.h.b16 %v3430
    %v3525 = vunpack.c.l.b16 %v3431
    %v3526 = vunpack.c.h.b16 %v3431
    %v3527 = vunpack.c.l.b16 %v3432
    %v3528 = vunpack.c.h.b16 %v3432
    %v3529 = vpack.c.b16 %v3469, %v3465
    %v3530 = vpack.c.b16 %v3470, %v3466
    %v3531 = vpack.c.b16 %v3471, %v3467
    %v3532 = vpack.c.b16 %v3472, %v3468
    %v3533 = vpack.c.b16 %v3477, %v3473
    %v3534 = vpack.c.b16 %v3478, %v3474
    %v3535 = vpack.c.b16 %v3479, %v3475
    %v3536 = vpack.c.b16 %v3480, %v3476
    %v3537 = vpack.c.b16 %v3485, %v3481
    %v3538 = vpack.c.b16 %v3486, %v3482
    %v3539 = vpack.c.b16 %v3487, %v3483
    %v3540 = vpack.c.b16 %v3488, %v3484
    %v3541 = vpack.c.b16 %v3493, %v3489
    %v3542 = vpack.c.b16 %v3494, %v3490
    %v3543 = vpack.c.b16 %v3495, %v3491
    %v3544 = vpack.c.b16 %v3496, %v3492
    %v3545 = vpack.c.b16 %v3501, %v3497
    %v3546 = vpack.c.b16 %v3502, %v3498
    %v3547 = vpack.c.b16 %v3503, %v3499
    %v3548 = vpack.c.b16 %v3504, %v3500
    %v3549 = vpack.c.b16 %v3509, %v3505
    %v3550 = vpack.c.b16 %v3510, %v3506
    %v3551 = vpack.c.b16 %v3511, %v3507
    %v3552 = vpack.c.b16 %v3512, %v3508
    %v3553 = vpack.c.b16 %v3517, %v3513
    %v3554 = vpack.c.b16 %v3518, %v3514
    %v3555 = vpack.c.b16 %v3519, %v3515
    %v3556 = vpack.c.b16 %v3520, %v3516
    %v3557 = vpack.c.b16 %v3525, %v3521
    %v3558 = vpack.c.b16 %v3526, %v3522
    %v3559 = vpack.c.b16 %v3527, %v3523
    %v3560 = vpack.c.b16 %v3528, %v3524
    %3593 = vmatprep.subr.bf16.mxu0 %v3530
    %3594 = vmatpush1.bf16.msra.mxu0 %v3529
    %3595 = vmatprep.subr.bf16.mxu0 %v3534
    %3596 = vmatpush1.bf16.msra.mxu0 %v3533
    %3597 = vmatprep.subr.bf16.mxu0 %v3538
    %3598 = vmatpush1.bf16.msra.mxu0 %v3537
    %3599 = vmatprep.subr.bf16.mxu0 %v3542
    %3600 = vmatpush1.bf16.msra.mxu0 %v3541
    %3601 = vmatprep.subr.bf16.mxu0 %v3546
    %3602 = vmatpush1.bf16.msra.mxu0 %v3545
    %3603 = vmatprep.subr.bf16.mxu0 %v3550
    %3604 = vmatpush1.bf16.msra.mxu0 %v3549
    %3605 = vmatprep.subr.bf16.mxu0 %v3554
    %3606 = vmatpush1.bf16.msra.mxu0 %v3553
    %3607 = vmatprep.subr.bf16.mxu0 %v3558
    %3608 = vmatpush1.bf16.msra.mxu0 %v3557
    %3609 = vmatprep.subr.bf16.mxu0 0
    %3610 = vmatpush1.bf16.msra.mxu0 0
    %3611 = vmatprep.subr.bf16.mxu0 0
    %3612 = vmatpush1.bf16.msra.mxu0 0
    %3613 = vmatprep.subr.bf16.mxu0 0
    %3614 = vmatpush1.bf16.msra.mxu0 0
    %3615 = vmatprep.subr.bf16.mxu0 0
    %3616 = vmatpush1.bf16.msra.mxu0 0
    %3617 = vmatprep.subr.bf16.mxu0 0
    %3618 = vmatpush1.bf16.msra.mxu0 0
    %3619 = vmatprep.subr.bf16.mxu0 0
    %3620 = vmatpush1.bf16.msra.mxu0 0
    %3621 = vmatprep.subr.bf16.mxu0 0
    %3622 = vmatpush1.bf16.msra.mxu0 0
    %3623 = vmatprep.subr.bf16.mxu0 0
    %3624 = vmatpush1.bf16.msra.mxu0 0
    %3625 = vmatprep.mubr.bf16.mxu0 0
    %3626 = vmatmul.mubr.bf16.gmra.mrb[0].mxu0 %v3107
    %v3627 = vpop.f32.mrb[0].mxu0
    %v3628 = vadd.f32 0.0, %v3627
    %v3629 = vpop.f32.mrb[0].mxu0
    %v3630 = vadd.f32 0.0, %v3629
    %v3631 = vpop.f32.mrb[0].mxu0
    %v3632 = vpop.f32.mrb[0].mxu0
    %3633 = vdwg.mxu0
    %3634 = vmatprep.subr.bf16.mxu0 %v3532
    %3635 = vmatpush1.bf16.msra.mxu0 %v3531
    %3636 = vmatprep.subr.bf16.mxu0 %v3536
    %3637 = vmatpush1.bf16.msra.mxu0 %v3535
    %3638 = vmatprep.subr.bf16.mxu0 %v3540
    %3639 = vmatpush1.bf16.msra.mxu0 %v3539
    %3640 = vmatprep.subr.bf16.mxu0 %v3544
    %3641 = vmatpush1.bf16.msra.mxu0 %v3543
    %3642 = vmatprep.subr.bf16.mxu0 %v3548
    %3643 = vmatpush1.bf16.msra.mxu0 %v3547
    %3644 = vmatprep.subr.bf16.mxu0 %v3552
    %3645 = vmatpush1.bf16.msra.mxu0 %v3551
    %3646 = vmatprep.subr.bf16.mxu0 %v3556
    %3647 = vmatpush1.bf16.msra.mxu0 %v3555
    %3648 = vmatprep.subr.bf16.mxu0 %v3560
    %3649 = vmatpush1.bf16.msra.mxu0 %v3559
    %3650 = vmatprep.subr.bf16.mxu0 0
    %3651 = vmatpush1.bf16.msra.mxu0 0
    %3652 = vmatprep.subr.bf16.mxu0 0
    %3653 = vmatpush1.bf16.msra.mxu0 0
    %3654 = vmatprep.subr.bf16.mxu0 0
    %3655 = vmatpush1.bf16.msra.mxu0 0
    %3656 = vmatprep.subr.bf16.mxu0 0
    %3657 = vmatpush1.bf16.msra.mxu0 0
    %3658 = vmatprep.subr.bf16.mxu0 0
    %3659 = vmatpush1.bf16.msra.mxu0 0
    %3660 = vmatprep.subr.bf16.mxu0 0
    %3661 = vmatpush1.bf16.msra.mxu0 0
    %3662 = vmatprep.subr.bf16.mxu0 0
    %3663 = vmatpush1.bf16.msra.mxu0 0
    %3664 = vmatprep.subr.bf16.mxu0 0
    %3665 = vmatpush1.bf16.msra.mxu0 0
    %3666 = vmatprep.mubr.bf16.mxu0 0
    %3667 = vmatmul.mubr.bf16.gmra.mrb[0].mxu0 %v3107
    %v3668 = vpop.f32.mrb[0].mxu0
    %v3669 = vadd.f32 0.0, %v3668
    %v3670 = vpop.f32.mrb[0].mxu0
    %v3671 = vadd.f32 0.0, %v3670
    %v3672 = vpop.f32.mrb[0].mxu0
    %v3673 = vpop.f32.mrb[0].mxu0
    %3674 = vdwg.mxu0
    %v3675 = vadd.f32 %v443, %v3628
    %v3676 = vadd.f32 %v447, %v3630
    %v3677 = vadd.f32 %v451, %v3669
    %v3678 = vadd.f32 %v455, %v3671
    %v3679 = vpack.c.bf16 %v3098, %v3098
    %v3680 = vld [vmem:[%s5] sm:$0xff]
    %v3681 = vld [vmem:[%s5 + $0x8] sm:$0xff]
    %v3682 = vld [vmem:[%s5 + $0x10] sm:$0xff]
    %v3683 = vld [vmem:[%s5 + $0x18] sm:$0xff]
    %v3684 = vld [vmem:[%s5 + $0x20] sm:$0xff]
    %v3685 = vld [vmem:[%s5 + $0x28] sm:$0xff]
    %v3686 = vld [vmem:[%s5 + $0x30] sm:$0xff]
    %v3687 = vld [vmem:[%s5 + $0x38] sm:$0xff]
    %v3688 = vld [vmem:[%s5 + $0x40] sm:$0xff]
    %v3689 = vld [vmem:[%s5 + $0x48] sm:$0xff]
    %v3690 = vld [vmem:[%s5 + $0x50] sm:$0xff]
    %v3691 = vld [vmem:[%s5 + $0x58] sm:$0xff]
    %v3692 = vld [vmem:[%s5 + $0x60] sm:$0xff]
    %v3693 = vld [vmem:[%s5 + $0x68] sm:$0xff]
    %v3694 = vld [vmem:[%s5 + $0x70] sm:$0xff]
    %v3695 = vld [vmem:[%s5 + $0x78] sm:$0xff]
    %v3696 = vld [vmem:[%s5 + $0x80] sm:$0xff]
    %v3697 = vld [vmem:[%s5 + $0x88] sm:$0xff]
    %v3698 = vld [vmem:[%s5 + $0x90] sm:$0xff]
    %v3699 = vld [vmem:[%s5 + $0x98] sm:$0xff]
    %v3700 = vld [vmem:[%s5 + $0xa0] sm:$0xff]
    %v3701 = vld [vmem:[%s5 + $0xa8] sm:$0xff]
    %v3702 = vld [vmem:[%s5 + $0xb0] sm:$0xff]
    %v3703 = vld [vmem:[%s5 + $0xb8] sm:$0xff]
    %v3704 = vld [vmem:[%s5 + $0xc0] sm:$0xff]
    %v3705 = vld [vmem:[%s5 + $0xc8] sm:$0xff]
    %v3706 = vld [vmem:[%s5 + $0xd0] sm:$0xff]
    %v3707 = vld [vmem:[%s5 + $0xd8] sm:$0xff]
    %v3708 = vld [vmem:[%s5 + $0xe0] sm:$0xff]
    %v3709 = vld [vmem:[%s5 + $0xe8] sm:$0xff]
    %v3710 = vld [vmem:[%s5 + $0xf0] sm:$0xff]
    %v3711 = vld [vmem:[%s5 + $0xf8] sm:$0xff]
    %v3744 = vunpack.c.l.b16 %v3680
    %v3745 = vunpack.c.h.b16 %v3680
    %v3746 = vunpack.c.l.b16 %v3681
    %v3747 = vunpack.c.h.b16 %v3681
    %v3748 = vunpack.c.l.b16 %v3682
    %v3749 = vunpack.c.h.b16 %v3682
    %v3750 = vunpack.c.l.b16 %v3683
    %v3751 = vunpack.c.h.b16 %v3683
    %v3752 = vunpack.c.l.b16 %v3684
    %v3753 = vunpack.c.h.b16 %v3684
    %v3754 = vunpack.c.l.b16 %v3685
    %v3755 = vunpack.c.h.b16 %v3685
    %v3756 = vunpack.c.l.b16 %v3686
    %v3757 = vunpack.c.h.b16 %v3686
    %v3758 = vunpack.c.l.b16 %v3687
    %v3759 = vunpack.c.h.b16 %v3687
    %v3760 = vunpack.c.l.b16 %v3688
    %v3761 = vunpack.c.h.b16 %v3688
    %v3762 = vunpack.c.l.b16 %v3689
    %v3763 = vunpack.c.h.b16 %v3689
    %v3764 = vunpack.c.l.b16 %v3690
    %v3765 = vunpack.c.h.b16 %v3690
    %v3766 = vunpack.c.l.b16 %v3691
    %v3767 = vunpack.c.h.b16 %v3691
    %v3768 = vunpack.c.l.b16 %v3692
    %v3769 = vunpack.c.h.b16 %v3692
    %v3770 = vunpack.c.l.b16 %v3693
    %v3771 = vunpack.c.h.b16 %v3693
    %v3772 = vunpack.c.l.b16 %v3694
    %v3773 = vunpack.c.h.b16 %v3694
    %v3774 = vunpack.c.l.b16 %v3695
    %v3775 = vunpack.c.h.b16 %v3695
    %v3776 = vunpack.c.l.b16 %v3696
    %v3777 = vunpack.c.h.b16 %v3696
    %v3778 = vunpack.c.l.b16 %v3697
    %v3779 = vunpack.c.h.b16 %v3697
    %v3780 = vunpack.c.l.b16 %v3698
    %v3781 = vunpack.c.h.b16 %v3698
    %v3782 = vunpack.c.l.b16 %v3699
    %v3783 = vunpack.c.h.b16 %v3699
    %v3784 = vunpack.c.l.b16 %v3700
    %v3785 = vunpack.c.h.b16 %v3700
    %v3786 = vunpack.c.l.b16 %v3701
    %v3787 = vunpack.c.h.b16 %v3701
    %v3788 = vunpack.c.l.b16 %v3702
    %v3789 = vunpack.c.h.b16 %v3702
    %v3790 = vunpack.c.l.b16 %v3703
    %v3791 = vunpack.c.h.b16 %v3703
    %v3792 = vunpack.c.l.b16 %v3704
    %v3793 = vunpack.c.h.b16 %v3704
    %v3794 = vunpack.c.l.b16 %v3705
    %v3795 = vunpack.c.h.b16 %v3705
    %v3796 = vunpack.c.l.b16 %v3706
    %v3797 = vunpack.c.h.b16 %v3706
    %v3798 = vunpack.c.l.b16 %v3707
    %v3799 = vunpack.c.h.b16 %v3707
    %v3800 = vunpack.c.l.b16 %v3708
    %v3801 = vunpack.c.h.b16 %v3708
    %v3802 = vunpack.c.l.b16 %v3709
    %v3803 = vunpack.c.h.b16 %v3709
    %v3804 = vunpack.c.l.b16 %v3710
    %v3805 = vunpack.c.h.b16 %v3710
    %v3806 = vunpack.c.l.b16 %v3711
    %v3807 = vunpack.c.h.b16 %v3711
    %v3808 = vpack.c.b16 %v3748, %v3744
    %v3809 = vpack.c.b16 %v3749, %v3745
    %v3810 = vpack.c.b16 %v3750, %v3746
    %v3811 = vpack.c.b16 %v3751, %v3747
    %v3812 = vpack.c.b16 %v3756, %v3752
    %v3813 = vpack.c.b16 %v3757, %v3753
    %v3814 = vpack.c.b16 %v3758, %v3754
    %v3815 = vpack.c.b16 %v3759, %v3755
    %v3816 = vpack.c.b16 %v3764, %v3760
    %v3817 = vpack.c.b16 %v3765, %v3761
    %v3818 = vpack.c.b16 %v3766, %v3762
    %v3819 = vpack.c.b16 %v3767, %v3763
    %v3820 = vpack.c.b16 %v3772, %v3768
    %v3821 = vpack.c.b16 %v3773, %v3769
    %v3822 = vpack.c.b16 %v3774, %v3770
    %v3823 = vpack.c.b16 %v3775, %v3771
    %v3824 = vpack.c.b16 %v3780, %v3776
    %v3825 = vpack.c.b16 %v3781, %v3777
    %v3826 = vpack.c.b16 %v3782, %v3778
    %v3827 = vpack.c.b16 %v3783, %v3779
    %v3828 = vpack.c.b16 %v3788, %v3784
    %v3829 = vpack.c.b16 %v3789, %v3785
    %v3830 = vpack.c.b16 %v3790, %v3786
    %v3831 = vpack.c.b16 %v3791, %v3787
    %v3832 = vpack.c.b16 %v3796, %v3792
    %v3833 = vpack.c.b16 %v3797, %v3793
    %v3834 = vpack.c.b16 %v3798, %v3794
    %v3835 = vpack.c.b16 %v3799, %v3795
    %v3836 = vpack.c.b16 %v3804, %v3800
    %v3837 = vpack.c.b16 %v3805, %v3801
    %v3838 = vpack.c.b16 %v3806, %v3802
    %v3839 = vpack.c.b16 %v3807, %v3803
    %3872 = vmatprep.subr.bf16.mxu0 %v3809
    %3873 = vmatpush1.bf16.msra.mxu0 %v3808
    %3874 = vmatprep.subr.bf16.mxu0 %v3813
    %3875 = vmatpush1.bf16.msra.mxu0 %v3812
    %3876 = vmatprep.subr.bf16.mxu0 %v3817
    %3877 = vmatpush1.bf16.msra.mxu0 %v3816
    %3878 = vmatprep.subr.bf16.mxu0 %v3821
    %3879 = vmatpush1.bf16.msra.mxu0 %v3820
    %3880 = vmatprep.subr.bf16.mxu0 %v3825
    %3881 = vmatpush1.bf16.msra.mxu0 %v3824
    %3882 = vmatprep.subr.bf16.mxu0 %v3829
    %3883 = vmatpush1.bf16.msra.mxu0 %v3828
    %3884 = vmatprep.subr.bf16.mxu0 %v3833
    %3885 = vmatpush1.bf16.msra.mxu0 %v3832
    %3886 = vmatprep.subr.bf16.mxu0 %v3837
    %3887 = vmatpush1.bf16.msra.mxu0 %v3836
    %3888 = vmatprep.subr.bf16.mxu0 0
    %3889 = vmatpush1.bf16.msra.mxu0 0
    %3890 = vmatprep.subr.bf16.mxu0 0
    %3891 = vmatpush1.bf16.msra.mxu0 0
    %3892 = vmatprep.subr.bf16.mxu0 0
    %3893 = vmatpush1.bf16.msra.mxu0 0
    %3894 = vmatprep.subr.bf16.mxu0 0
    %3895 = vmatpush1.bf16.msra.mxu0 0
    %3896 = vmatprep.subr.bf16.mxu0 0
    %3897 = vmatpush1.bf16.msra.mxu0 0
    %3898 = vmatprep.subr.bf16.mxu0 0
    %3899 = vmatpush1.bf16.msra.mxu0 0
    %3900 = vmatprep.subr.bf16.mxu0 0
    %3901 = vmatpush1.bf16.msra.mxu0 0
    %3902 = vmatprep.subr.bf16.mxu0 0
    %3903 = vmatpush1.bf16.msra.mxu0 0
    %3904 = vmatprep.mubr.bf16.mxu0 0
    %3905 = vmatmul.mubr.bf16.gmra.mrb[0].mxu0 %v3679
    %v3906 = vpop.f32.mrb[0].mxu0
    %v3907 = vadd.f32 0.0, %v3906
    %v3908 = vpop.f32.mrb[0].mxu0
    %v3909 = vadd.f32 0.0, %v3908
    %v3910 = vpop.f32.mrb[0].mxu0
    %v3911 = vpop.f32.mrb[0].mxu0
    %3912 = vdwg.mxu0
    %3913 = vmatprep.subr.bf16.mxu0 %v3811
    %3914 = vmatpush1.bf16.msra.mxu0 %v3810
    %3915 = vmatprep.subr.bf16.mxu0 %v3815
    %3916 = vmatpush1.bf16.msra.mxu0 %v3814
    %3917 = vmatprep.subr.bf16.mxu0 %v3819
    %3918 = vmatpush1.bf16.msra.mxu0 %v3818
    %3919 = vmatprep.subr.bf16.mxu0 %v3823
    %3920 = vmatpush1.bf16.msra.mxu0 %v3822
    %3921 = vmatprep.subr.bf16.mxu0 %v3827
    %3922 = vmatpush1.bf16.msra.mxu0 %v3826
    %3923 = vmatprep.subr.bf16.mxu0 %v3831
    %3924 = vmatpush1.bf16.msra.mxu0 %v3830
    %3925 = vmatprep.subr.bf16.mxu0 %v3835
    %3926 = vmatpush1.bf16.msra.mxu0 %v3834
    %3927 = vmatprep.subr.bf16.mxu0 %v3839
    %3928 = vmatpush1.bf16.msra.mxu0 %v3838
    %3929 = vmatprep.subr.bf16.mxu0 0
    %3930 = vmatpush1.bf16.msra.mxu0 0
    %3931 = vmatprep.subr.bf16.mxu0 0
    %3932 = vmatpush1.bf16.msra.mxu0 0
    %3933 = vmatprep.subr.bf16.mxu0 0
    %3934 = vmatpush1.bf16.msra.mxu0 0
    %3935 = vmatprep.subr.bf16.mxu0 0
    %3936 = vmatpush1.bf16.msra.mxu0 0
    %3937 = vmatprep.subr.bf16.mxu0 0
    %3938 = vmatpush1.bf16.msra.mxu0 0
    %3939 = vmatprep.subr.bf16.mxu0 0
    %3940 = vmatpush1.bf16.msra.mxu0 0
    %3941 = vmatprep.subr.bf16.mxu0 0
    %3942 = vmatpush1.bf16.msra.mxu0 0
    %3943 = vmatprep.subr.bf16.mxu0 0
    %3944 = vmatpush1.bf16.msra.mxu0 0
    %3945 = vmatprep.mubr.bf16.mxu0 0
    %3946 = vmatmul.mubr.bf16.gmra.mrb[0].mxu0 %v3679
    %v3947 = vpop.f32.mrb[0].mxu0
    %v3948 = vadd.f32 0.0, %v3947
    %v3949 = vpop.f32.mrb[0].mxu0
    %v3950 = vadd.f32 0.0, %v3949
    %v3951 = vpop.f32.mrb[0].mxu0
    %v3952 = vpop.f32.mrb[0].mxu0
    %3953 = vdwg.mxu0
    %v3954 = vadd.f32 %v3675, %v3907
    %v3955 = vadd.f32 %v3676, %v3909
    %v3956 = vadd.f32 %v3677, %v3948
    %v3957 = vadd.f32 %v3678, %v3950
    %v3958 = vtanh.pop %v3954
    %v3959 = vtanh.pop %v3955
    %v3960 = vtanh.pop %v3956
    %v3961 = vtanh.pop %v3957
    %v3962 = vmul.f32 %v3958, 0.5
    %v3963 = vadd.f32 %v3962, 0.5
    %v3964 = vmul.f32 %v3959, 0.5
    %v3965 = vadd.f32 %v3964, 0.5
    %v3966 = vmul.f32 %v3961, 0.5
    %v3967 = vadd.f32 %v3966, 0.5
    %v3968 = vmul.f32 %v3965, %v3096
    %v3969 = vmul.f32 %v3963, %v3960
    %v3970 = vadd.f32 %v3968, %v3969
    %v3971 = vtanh.pop %v3970
    %v3972 = vmul.f32 %v3967, %v3971
    %3973 = vst [vmem:[#allocation3 - $0x4] sm:$0x80] %v3972
    %s3974 = smul.u32 5, 4
    %s3975 = smul.addr %s3974, 8
    %s3976 = scalar_lea.vmem [#allocation2], %s3975
    %v3977 = vld [vmem:[%s3976] sm:$0xff]
    %v3978 = vld [vmem:[%s3976 + $0x8] sm:$0xff]
    %v3979 = vld [vmem:[%s3976 + $0x10] sm:$0xff]
    %v3980 = vld [vmem:[%s3976 + $0x18] sm:$0xff]
    %v3981 = vpack.c.bf16 %v3400, %v3400
    %v3982 = vld [vmem:[%s2] sm:$0xff]
    %v3983 = vld [vmem:[%s2 + $0x8] sm:$0xff]
    %v3984 = vld [vmem:[%s2 + $0x10] sm:$0xff]
    %v3985 = vld [vmem:[%s2 + $0x18] sm:$0xff]
    %v3986 = vld [vmem:[%s2 + $0x20] sm:$0xff]
    %v3987 = vld [vmem:[%s2 + $0x28] sm:$0xff]
    %v3988 = vld [vmem:[%s2 + $0x30] sm:$0xff]
    %v3989 = vld [vmem:[%s2 + $0x38] sm:$0xff]
    %v3990 = vld [vmem:[%s2 + $0x40] sm:$0xff]
    %v3991 = vld [vmem:[%s2 + $0x48] sm:$0xff]
    %v3992 = vld [vmem:[%s2 + $0x50] sm:$0xff]
    %v3993 = vld [vmem:[%s2 + $0x58] sm:$0xff]
    %v3994 = vld [vmem:[%s2 + $0x60] sm:$0xff]
    %v3995 = vld [vmem:[%s2 + $0x68] sm:$0xff]
    %v3996 = vld [vmem:[%s2 + $0x70] sm:$0xff]
    %v3997 = vld [vmem:[%s2 + $0x78] sm:$0xff]
    %v3998 = vld [vmem:[%s2 + $0x80] sm:$0xff]
    %v3999 = vld [vmem:[%s2 + $0x88] sm:$0xff]
    %v4000 = vld [vmem:[%s2 + $0x90] sm:$0xff]
    %v4001 = vld [vmem:[%s2 + $0x98] sm:$0xff]
    %v4002 = vld [vmem:[%s2 + $0xa0] sm:$0xff]
    %v4003 = vld [vmem:[%s2 + $0xa8] sm:$0xff]
    %v4004 = vld [vmem:[%s2 + $0xb0] sm:$0xff]
    %v4005 = vld [vmem:[%s2 + $0xb8] sm:$0xff]
    %v4006 = vld [vmem:[%s2 + $0xc0] sm:$0xff]
    %v4007 = vld [vmem:[%s2 + $0xc8] sm:$0xff]
    %v4008 = vld [vmem:[%s2 + $0xd0] sm:$0xff]
    %v4009 = vld [vmem:[%s2 + $0xd8] sm:$0xff]
    %v4010 = vld [vmem:[%s2 + $0xe0] sm:$0xff]
    %v4011 = vld [vmem:[%s2 + $0xe8] sm:$0xff]
    %v4012 = vld [vmem:[%s2 + $0xf0] sm:$0xff]
    %v4013 = vld [vmem:[%s2 + $0xf8] sm:$0xff]
    %v4046 = vunpack.c.l.b16 %v3982
    %v4047 = vunpack.c.h.b16 %v3982
    %v4048 = vunpack.c.l.b16 %v3983
    %v4049 = vunpack.c.h.b16 %v3983
    %v4050 = vunpack.c.l.b16 %v3984
    %v4051 = vunpack.c.h.b16 %v3984
    %v4052 = vunpack.c.l.b16 %v3985
    %v4053 = vunpack.c.h.b16 %v3985
    %v4054 = vunpack.c.l.b16 %v3986
    %v4055 = vunpack.c.h.b16 %v3986
    %v4056 = vunpack.c.l.b16 %v3987
    %v4057 = vunpack.c.h.b16 %v3987
    %v4058 = vunpack.c.l.b16 %v3988
    %v4059 = vunpack.c.h.b16 %v3988
    %v4060 = vunpack.c.l.b16 %v3989
    %v4061 = vunpack.c.h.b16 %v3989
    %v4062 = vunpack.c.l.b16 %v3990
    %v4063 = vunpack.c.h.b16 %v3990
    %v4064 = vunpack.c.l.b16 %v3991
    %v4065 = vunpack.c.h.b16 %v3991
    %v4066 = vunpack.c.l.b16 %v3992
    %v4067 = vunpack.c.h.b16 %v3992
    %v4068 = vunpack.c.l.b16 %v3993
    %v4069 = vunpack.c.h.b16 %v3993
    %v4070 = vunpack.c.l.b16 %v3994
    %v4071 = vunpack.c.h.b16 %v3994
    %v4072 = vunpack.c.l.b16 %v3995
    %v4073 = vunpack.c.h.b16 %v3995
    %v4074 = vunpack.c.l.b16 %v3996
    %v4075 = vunpack.c.h.b16 %v3996
    %v4076 = vunpack.c.l.b16 %v3997
    %v4077 = vunpack.c.h.b16 %v3997
    %v4078 = vunpack.c.l.b16 %v3998
    %v4079 = vunpack.c.h.b16 %v3998
    %v4080 = vunpack.c.l.b16 %v3999
    %v4081 = vunpack.c.h.b16 %v3999
    %v4082 = vunpack.c.l.b16 %v4000
    %v4083 = vunpack.c.h.b16 %v4000
    %v4084 = vunpack.c.l.b16 %v4001
    %v4085 = vunpack.c.h.b16 %v4001
    %v4086 = vunpack.c.l.b16 %v4002
    %v4087 = vunpack.c.h.b16 %v4002
    %v4088 = vunpack.c.l.b16 %v4003
    %v4089 = vunpack.c.h.b16 %v4003
    %v4090 = vunpack.c.l.b16 %v4004
    %v4091 = vunpack.c.h.b16 %v4004
    %v4092 = vunpack.c.l.b16 %v4005
    %v4093 = vunpack.c.h.b16 %v4005
    %v4094 = vunpack.c.l.b16 %v4006
    %v4095 = vunpack.c.h.b16 %v4006
    %v4096 = vunpack.c.l.b16 %v4007
    %v4097 = vunpack.c.h.b16 %v4007
    %v4098 = vunpack.c.l.b16 %v4008
    %v4099 = vunpack.c.h.b16 %v4008
    %v4100 = vunpack.c.l.b16 %v4009
    %v4101 = vunpack.c.h.b16 %v4009
    %v4102 = vunpack.c.l.b16 %v4010
    %v4103 = vunpack.c.h.b16 %v4010
    %v4104 = vunpack.c.l.b16 %v4011
    %v4105 = vunpack.c.h.b16 %v4011
    %v4106 = vunpack.c.l.b16 %v4012
    %v4107 = vunpack.c.h.b16 %v4012
    %v4108 = vunpack.c.l.b16 %v4013
    %v4109 = vunpack.c.h.b16 %v4013
    %v4110 = vpack.c.b16 %v4050, %v4046
    %v4111 = vpack.c.b16 %v4051, %v4047
    %v4112 = vpack.c.b16 %v4052, %v4048
    %v4113 = vpack.c.b16 %v4053, %v4049
    %v4114 = vpack.c.b16 %v4058, %v4054
    %v4115 = vpack.c.b16 %v4059, %v4055
    %v4116 = vpack.c.b16 %v4060, %v4056
    %v4117 = vpack.c.b16 %v4061, %v4057
    %v4118 = vpack.c.b16 %v4066, %v4062
    %v4119 = vpack.c.b16 %v4067, %v4063
    %v4120 = vpack.c.b16 %v4068, %v4064
    %v4121 = vpack.c.b16 %v4069, %v4065
    %v4122 = vpack.c.b16 %v4074, %v4070
    %v4123 = vpack.c.b16 %v4075, %v4071
    %v4124 = vpack.c.b16 %v4076, %v4072
    %v4125 = vpack.c.b16 %v4077, %v4073
    %v4126 = vpack.c.b16 %v4082, %v4078
    %v4127 = vpack.c.b16 %v4083, %v4079
    %v4128 = vpack.c.b16 %v4084, %v4080
    %v4129 = vpack.c.b16 %v4085, %v4081
    %v4130 = vpack.c.b16 %v4090, %v4086
    %v4131 = vpack.c.b16 %v4091, %v4087
    %v4132 = vpack.c.b16 %v4092, %v4088
    %v4133 = vpack.c.b16 %v4093, %v4089
    %v4134 = vpack.c.b16 %v4098, %v4094
    %v4135 = vpack.c.b16 %v4099, %v4095
    %v4136 = vpack.c.b16 %v4100, %v4096
    %v4137 = vpack.c.b16 %v4101, %v4097
    %v4138 = vpack.c.b16 %v4106, %v4102
    %v4139 = vpack.c.b16 %v4107, %v4103
    %v4140 = vpack.c.b16 %v4108, %v4104
    %v4141 = vpack.c.b16 %v4109, %v4105
    %4174 = vmatprep.subr.bf16.mxu0 %v4111
    %4175 = vmatpush1.bf16.msra.mxu0 %v4110
    %4176 = vmatprep.subr.bf16.mxu0 %v4115
    %4177 = vmatpush1.bf16.msra.mxu0 %v4114
    %4178 = vmatprep.subr.bf16.mxu0 %v4119
    %4179 = vmatpush1.bf16.msra.mxu0 %v4118
    %4180 = vmatprep.subr.bf16.mxu0 %v4123
    %4181 = vmatpush1.bf16.msra.mxu0 %v4122
    %4182 = vmatprep.subr.bf16.mxu0 %v4127
    %4183 = vmatpush1.bf16.msra.mxu0 %v4126
    %4184 = vmatprep.subr.bf16.mxu0 %v4131
    %4185 = vmatpush1.bf16.msra.mxu0 %v4130
    %4186 = vmatprep.subr.bf16.mxu0 %v4135
    %4187 = vmatpush1.bf16.msra.mxu0 %v4134
    %4188 = vmatprep.subr.bf16.mxu0 %v4139
    %4189 = vmatpush1.bf16.msra.mxu0 %v4138
    %4190 = vmatprep.subr.bf16.mxu0 0
    %4191 = vmatpush1.bf16.msra.mxu0 0
    %4192 = vmatprep.subr.bf16.mxu0 0
    %4193 = vmatpush1.bf16.msra.mxu0 0
    %4194 = vmatprep.subr.bf16.mxu0 0
    %4195 = vmatpush1.bf16.msra.mxu0 0
    %4196 = vmatprep.subr.bf16.mxu0 0
    %4197 = vmatpush1.bf16.msra.mxu0 0
    %4198 = vmatprep.subr.bf16.mxu0 0
    %4199 = vmatpush1.bf16.msra.mxu0 0
    %4200 = vmatprep.subr.bf16.mxu0 0
    %4201 = vmatpush1.bf16.msra.mxu0 0
    %4202 = vmatprep.subr.bf16.mxu0 0
    %4203 = vmatpush1.bf16.msra.mxu0 0
    %4204 = vmatprep.subr.bf16.mxu0 0
    %4205 = vmatpush1.bf16.msra.mxu0 0
    %4206 = vmatprep.mubr.bf16.mxu0 0
    %4207 = vmatmul.mubr.bf16.gmra.mrb[0].mxu0 %v3981
    %v4208 = vpop.f32.mrb[0].mxu0
    %v4209 = vadd.f32 0.0, %v4208
    %v4210 = vpop.f32.mrb[0].mxu0
    %v4211 = vadd.f32 0.0, %v4210
    %v4212 = vpop.f32.mrb[0].mxu0
    %v4213 = vpop.f32.mrb[0].mxu0
    %4214 = vdwg.mxu0
    %4215 = vmatprep.subr.bf16.mxu0 %v4113
    %4216 = vmatpush1.bf16.msra.mxu0 %v4112
    %4217 = vmatprep.subr.bf16.mxu0 %v4117
    %4218 = vmatpush1.bf16.msra.mxu0 %v4116
    %4219 = vmatprep.subr.bf16.mxu0 %v4121
    %4220 = vmatpush1.bf16.msra.mxu0 %v4120
    %4221 = vmatprep.subr.bf16.mxu0 %v4125
    %4222 = vmatpush1.bf16.msra.mxu0 %v4124
    %4223 = vmatprep.subr.bf16.mxu0 %v4129
    %4224 = vmatpush1.bf16.msra.mxu0 %v4128
    %4225 = vmatprep.subr.bf16.mxu0 %v4133
    %4226 = vmatpush1.bf16.msra.mxu0 %v4132
    %4227 = vmatprep.subr.bf16.mxu0 %v4137
    %4228 = vmatpush1.bf16.msra.mxu0 %v4136
    %4229 = vmatprep.subr.bf16.mxu0 %v4141
    %4230 = vmatpush1.bf16.msra.mxu0 %v4140
    %4231 = vmatprep.subr.bf16.mxu0 0
    %4232 = vmatpush1.bf16.msra.mxu0 0
    %4233 = vmatprep.subr.bf16.mxu0 0
    %4234 = vmatpush1.bf16.msra.mxu0 0
    %4235 = vmatprep.subr.bf16.mxu0 0
    %4236 = vmatpush1.bf16.msra.mxu0 0
    %4237 = vmatprep.subr.bf16.mxu0 0
    %4238 = vmatpush1.bf16.msra.mxu0 0
    %4239 = vmatprep.subr.bf16.mxu0 0
    %4240 = vmatpush1.bf16.msra.mxu0 0
    %4241 = vmatprep.subr.bf16.mxu0 0
    %4242 = vmatpush1.bf16.msra.mxu0 0
    %4243 = vmatprep.subr.bf16.mxu0 0
    %4244 = vmatpush1.bf16.msra.mxu0 0
    %4245 = vmatprep.subr.bf16.mxu0 0
    %4246 = vmatpush1.bf16.msra.mxu0 0
    %4247 = vmatprep.mubr.bf16.mxu0 0
    %4248 = vmatmul.mubr.bf16.gmra.mrb[0].mxu0 %v3981
    %v4249 = vpop.f32.mrb[0].mxu0
    %v4250 = vadd.f32 0.0, %v4249
    %v4251 = vpop.f32.mrb[0].mxu0
    %v4252 = vadd.f32 0.0, %v4251
    %v4253 = vpop.f32.mrb[0].mxu0
    %v4254 = vpop.f32.mrb[0].mxu0
    %4255 = vdwg.mxu0
    %v4256 = vadd.f32 %v3977, %v4209
    %v4257 = vadd.f32 %v3978, %v4211
    %v4258 = vadd.f32 %v3979, %v4250
    %v4259 = vadd.f32 %v3980, %v4252
    %v4260 = vtanh.pop %v4256
    %v4261 = vtanh.pop %v4257
    %v4262 = vtanh.pop %v4258
    %v4263 = vtanh.pop %v4259
    %v4264 = vmul.f32 %v4260, 0.5
    %v4265 = vadd.f32 %v4264, 0.5
    %v4266 = vmul.f32 %v4261, 0.5
    %v4267 = vadd.f32 %v4266, 0.5
    %v4268 = vmul.f32 %v4263, 0.5
    %v4269 = vadd.f32 %v4268, 0.5
    %v4270 = vmul.f32 %v4267, %v3398
    %v4271 = vmul.f32 %v4265, %v4262
    %v4272 = vadd.f32 %v4270, %v4271
    %v4273 = vtanh.pop %v4272
    %v4274 = vmul.f32 %v4269, %v4273
    %v4275 = vld [vmem:[%s4] sm:$0xff]
    %v4276 = vld [vmem:[%s4 + $0x8] sm:$0xff]
    %v4277 = vld [vmem:[%s4 + $0x10] sm:$0xff]
    %v4278 = vld [vmem:[%s4 + $0x18] sm:$0xff]
    %v4279 = vld [vmem:[%s4 + $0x20] sm:$0xff]
    %v4280 = vld [vmem:[%s4 + $0x28] sm:$0xff]
    %v4281 = vld [vmem:[%s4 + $0x30] sm:$0xff]
    %v4282 = vld [vmem:[%s4 + $0x38] sm:$0xff]
    %v4283 = vld [vmem:[%s4 + $0x40] sm:$0xff]
    %v4284 = vld [vmem:[%s4 + $0x48] sm:$0xff]
    %v4285 = vld [vmem:[%s4 + $0x50] sm:$0xff]
    %v4286 = vld [vmem:[%s4 + $0x58] sm:$0xff]
    %v4287 = vld [vmem:[%s4 + $0x60] sm:$0xff]
    %v4288 = vld [vmem:[%s4 + $0x68] sm:$0xff]
    %v4289 = vld [vmem:[%s4 + $0x70] sm:$0xff]
    %v4290 = vld [vmem:[%s4 + $0x78] sm:$0xff]
    %v4291 = vld [vmem:[%s4 + $0x80] sm:$0xff]
    %v4292 = vld [vmem:[%s4 + $0x88] sm:$0xff]
    %v4293 = vld [vmem:[%s4 + $0x90] sm:$0xff]
    %v4294 = vld [vmem:[%s4 + $0x98] sm:$0xff]
    %v4295 = vld [vmem:[%s4 + $0xa0] sm:$0xff]
    %v4296 = vld [vmem:[%s4 + $0xa8] sm:$0xff]
    %v4297 = vld [vmem:[%s4 + $0xb0] sm:$0xff]
    %v4298 = vld [vmem:[%s4 + $0xb8] sm:$0xff]
    %v4299 = vld [vmem:[%s4 + $0xc0] sm:$0xff]
    %v4300 = vld [vmem:[%s4 + $0xc8] sm:$0xff]
    %v4301 = vld [vmem:[%s4 + $0xd0] sm:$0xff]
    %v4302 = vld [vmem:[%s4 + $0xd8] sm:$0xff]
    %v4303 = vld [vmem:[%s4 + $0xe0] sm:$0xff]
    %v4304 = vld [vmem:[%s4 + $0xe8] sm:$0xff]
    %v4305 = vld [vmem:[%s4 + $0xf0] sm:$0xff]
    %v4306 = vld [vmem:[%s4 + $0xf8] sm:$0xff]
    %v4339 = vunpack.c.l.b16 %v4275
    %v4340 = vunpack.c.h.b16 %v4275
    %v4341 = vunpack.c.l.b16 %v4276
    %v4342 = vunpack.c.h.b16 %v4276
    %v4343 = vunpack.c.l.b16 %v4277
    %v4344 = vunpack.c.h.b16 %v4277
    %v4345 = vunpack.c.l.b16 %v4278
    %v4346 = vunpack.c.h.b16 %v4278
    %v4347 = vunpack.c.l.b16 %v4279
    %v4348 = vunpack.c.h.b16 %v4279
    %v4349 = vunpack.c.l.b16 %v4280
    %v4350 = vunpack.c.h.b16 %v4280
    %v4351 = vunpack.c.l.b16 %v4281
    %v4352 = vunpack.c.h.b16 %v4281
    %v4353 = vunpack.c.l.b16 %v4282
    %v4354 = vunpack.c.h.b16 %v4282
    %v4355 = vunpack.c.l.b16 %v4283
    %v4356 = vunpack.c.h.b16 %v4283
    %v4357 = vunpack.c.l.b16 %v4284
    %v4358 = vunpack.c.h.b16 %v4284
    %v4359 = vunpack.c.l.b16 %v4285
    %v4360 = vunpack.c.h.b16 %v4285
    %v4361 = vunpack.c.l.b16 %v4286
    %v4362 = vunpack.c.h.b16 %v4286
    %v4363 = vunpack.c.l.b16 %v4287
    %v4364 = vunpack.c.h.b16 %v4287
    %v4365 = vunpack.c.l.b16 %v4288
    %v4366 = vunpack.c.h.b16 %v4288
    %v4367 = vunpack.c.l.b16 %v4289
    %v4368 = vunpack.c.h.b16 %v4289
    %v4369 = vunpack.c.l.b16 %v4290
    %v4370 = vunpack.c.h.b16 %v4290
    %v4371 = vunpack.c.l.b16 %v4291
    %v4372 = vunpack.c.h.b16 %v4291
    %v4373 = vunpack.c.l.b16 %v4292
    %v4374 = vunpack.c.h.b16 %v4292
    %v4375 = vunpack.c.l.b16 %v4293
    %v4376 = vunpack.c.h.b16 %v4293
    %v4377 = vunpack.c.l.b16 %v4294
    %v4378 = vunpack.c.h.b16 %v4294
    %v4379 = vunpack.c.l.b16 %v4295
    %v4380 = vunpack.c.h.b16 %v4295
    %v4381 = vunpack.c.l.b16 %v4296
    %v4382 = vunpack.c.h.b16 %v4296
    %v4383 = vunpack.c.l.b16 %v4297
    %v4384 = vunpack.c.h.b16 %v4297
    %v4385 = vunpack.c.l.b16 %v4298
    %v4386 = vunpack.c.h.b16 %v4298
    %v4387 = vunpack.c.l.b16 %v4299
    %v4388 = vunpack.c.h.b16 %v4299
    %v4389 = vunpack.c.l.b16 %v4300
    %v4390 = vunpack.c.h.b16 %v4300
    %v4391 = vunpack.c.l.b16 %v4301
    %v4392 = vunpack.c.h.b16 %v4301
    %v4393 = vunpack.c.l.b16 %v4302
    %v4394 = vunpack.c.h.b16 %v4302
    %v4395 = vunpack.c.l.b16 %v4303
    %v4396 = vunpack.c.h.b16 %v4303
    %v4397 = vunpack.c.l.b16 %v4304
    %v4398 = vunpack.c.h.b16 %v4304
    %v4399 = vunpack.c.l.b16 %v4305
    %v4400 = vunpack.c.h.b16 %v4305
    %v4401 = vunpack.c.l.b16 %v4306
    %v4402 = vunpack.c.h.b16 %v4306
    %v4403 = vpack.c.b16 %v4343, %v4339
    %v4404 = vpack.c.b16 %v4344, %v4340
    %v4405 = vpack.c.b16 %v4345, %v4341
    %v4406 = vpack.c.b16 %v4346, %v4342
    %v4407 = vpack.c.b16 %v4351, %v4347
    %v4408 = vpack.c.b16 %v4352, %v4348
    %v4409 = vpack.c.b16 %v4353, %v4349
    %v4410 = vpack.c.b16 %v4354, %v4350
    %v4411 = vpack.c.b16 %v4359, %v4355
    %v4412 = vpack.c.b16 %v4360, %v4356
    %v4413 = vpack.c.b16 %v4361, %v4357
    %v4414 = vpack.c.b16 %v4362, %v4358
    %v4415 = vpack.c.b16 %v4367, %v4363
    %v4416 = vpack.c.b16 %v4368, %v4364
    %v4417 = vpack.c.b16 %v4369, %v4365
    %v4418 = vpack.c.b16 %v4370, %v4366
    %v4419 = vpack.c.b16 %v4375, %v4371
    %v4420 = vpack.c.b16 %v4376, %v4372
    %v4421 = vpack.c.b16 %v4377, %v4373
    %v4422 = vpack.c.b16 %v4378, %v4374
    %v4423 = vpack.c.b16 %v4383, %v4379
    %v4424 = vpack.c.b16 %v4384, %v4380
    %v4425 = vpack.c.b16 %v4385, %v4381
    %v4426 = vpack.c.b16 %v4386, %v4382
    %v4427 = vpack.c.b16 %v4391, %v4387
    %v4428 = vpack.c.b16 %v4392, %v4388
    %v4429 = vpack.c.b16 %v4393, %v4389
    %v4430 = vpack.c.b16 %v4394, %v4390
    %v4431 = vpack.c.b16 %v4399, %v4395
    %v4432 = vpack.c.b16 %v4400, %v4396
    %v4433 = vpack.c.b16 %v4401, %v4397
    %v4434 = vpack.c.b16 %v4402, %v4398
    %4467 = vmatprep.subr.bf16.mxu0 %v4404
    %4468 = vmatpush1.bf16.msra.mxu0 %v4403
    %4469 = vmatprep.subr.bf16.mxu0 %v4408
    %4470 = vmatpush1.bf16.msra.mxu0 %v4407
    %4471 = vmatprep.subr.bf16.mxu0 %v4412
    %4472 = vmatpush1.bf16.msra.mxu0 %v4411
    %4473 = vmatprep.subr.bf16.mxu0 %v4416
    %4474 = vmatpush1.bf16.msra.mxu0 %v4415
    %4475 = vmatprep.subr.bf16.mxu0 %v4420
    %4476 = vmatpush1.bf16.msra.mxu0 %v4419
    %4477 = vmatprep.subr.bf16.mxu0 %v4424
    %4478 = vmatpush1.bf16.msra.mxu0 %v4423
    %4479 = vmatprep.subr.bf16.mxu0 %v4428
    %4480 = vmatpush1.bf16.msra.mxu0 %v4427
    %4481 = vmatprep.subr.bf16.mxu0 %v4432
    %4482 = vmatpush1.bf16.msra.mxu0 %v4431
    %4483 = vmatprep.subr.bf16.mxu0 0
    %4484 = vmatpush1.bf16.msra.mxu0 0
    %4485 = vmatprep.subr.bf16.mxu0 0
    %4486 = vmatpush1.bf16.msra.mxu0 0
    %4487 = vmatprep.subr.bf16.mxu0 0
    %4488 = vmatpush1.bf16.msra.mxu0 0
    %4489 = vmatprep.subr.bf16.mxu0 0
    %4490 = vmatpush1.bf16.msra.mxu0 0
    %4491 = vmatprep.subr.bf16.mxu0 0
    %4492 = vmatpush1.bf16.msra.mxu0 0
    %4493 = vmatprep.subr.bf16.mxu0 0
    %4494 = vmatpush1.bf16.msra.mxu0 0
    %4495 = vmatprep.subr.bf16.mxu0 0
    %4496 = vmatpush1.bf16.msra.mxu0 0
    %4497 = vmatprep.subr.bf16.mxu0 0
    %4498 = vmatpush1.bf16.msra.mxu0 0
    %4499 = vmatprep.mubr.bf16.mxu0 0
    %4500 = vmatmul.mubr.bf16.gmra.mrb[0].mxu0 %v3981
    %v4501 = vpop.f32.mrb[0].mxu0
    %v4502 = vadd.f32 0.0, %v4501
    %v4503 = vpop.f32.mrb[0].mxu0
    %v4504 = vadd.f32 0.0, %v4503
    %v4505 = vpop.f32.mrb[0].mxu0
    %v4506 = vpop.f32.mrb[0].mxu0
    %4507 = vdwg.mxu0
    %4508 = vmatprep.subr.bf16.mxu0 %v4406
    %4509 = vmatpush1.bf16.msra.mxu0 %v4405
    %4510 = vmatprep.subr.bf16.mxu0 %v4410
    %4511 = vmatpush1.bf16.msra.mxu0 %v4409
    %4512 = vmatprep.subr.bf16.mxu0 %v4414
    %4513 = vmatpush1.bf16.msra.mxu0 %v4413
    %4514 = vmatprep.subr.bf16.mxu0 %v4418
    %4515 = vmatpush1.bf16.msra.mxu0 %v4417
    %4516 = vmatprep.subr.bf16.mxu0 %v4422
    %4517 = vmatpush1.bf16.msra.mxu0 %v4421
    %4518 = vmatprep.subr.bf16.mxu0 %v4426
    %4519 = vmatpush1.bf16.msra.mxu0 %v4425
    %4520 = vmatprep.subr.bf16.mxu0 %v4430
    %4521 = vmatpush1.bf16.msra.mxu0 %v4429
    %4522 = vmatprep.subr.bf16.mxu0 %v4434
    %4523 = vmatpush1.bf16.msra.mxu0 %v4433
    %4524 = vmatprep.subr.bf16.mxu0 0
    %4525 = vmatpush1.bf16.msra.mxu0 0
    %4526 = vmatprep.subr.bf16.mxu0 0
    %4527 = vmatpush1.bf16.msra.mxu0 0
    %4528 = vmatprep.subr.bf16.mxu0 0
    %4529 = vmatpush1.bf16.msra.mxu0 0
    %4530 = vmatprep.subr.bf16.mxu0 0
    %4531 = vmatpush1.bf16.msra.mxu0 0
    %4532 = vmatprep.subr.bf16.mxu0 0
    %4533 = vmatpush1.bf16.msra.mxu0 0
    %4534 = vmatprep.subr.bf16.mxu0 0
    %4535 = vmatpush1.bf16.msra.mxu0 0
    %4536 = vmatprep.subr.bf16.mxu0 0
    %4537 = vmatpush1.bf16.msra.mxu0 0
    %4538 = vmatprep.subr.bf16.mxu0 0
    %4539 = vmatpush1.bf16.msra.mxu0 0
    %4540 = vmatprep.mubr.bf16.mxu0 0
    %4541 = vmatmul.mubr.bf16.gmra.mrb[0].mxu0 %v3981
    %v4542 = vpop.f32.mrb[0].mxu0
    %v4543 = vadd.f32 0.0, %v4542
    %v4544 = vpop.f32.mrb[0].mxu0
    %v4545 = vadd.f32 0.0, %v4544
    %v4546 = vpop.f32.mrb[0].mxu0
    %v4547 = vpop.f32.mrb[0].mxu0
    %4548 = vdwg.mxu0
    %v4549 = vadd.f32 %v443, %v4502
    %v4550 = vadd.f32 %v447, %v4504
    %v4551 = vadd.f32 %v451, %v4543
    %v4552 = vadd.f32 %v455, %v4545
    %v4553 = vpack.c.bf16 %v3972, %v3972
    %v4554 = vld [vmem:[%s5] sm:$0xff]
    %v4555 = vld [vmem:[%s5 + $0x8] sm:$0xff]
    %v4556 = vld [vmem:[%s5 + $0x10] sm:$0xff]
    %v4557 = vld [vmem:[%s5 + $0x18] sm:$0xff]
    %v4558 = vld [vmem:[%s5 + $0x20] sm:$0xff]
    %v4559 = vld [vmem:[%s5 + $0x28] sm:$0xff]
    %v4560 = vld [vmem:[%s5 + $0x30] sm:$0xff]
    %v4561 = vld [vmem:[%s5 + $0x38] sm:$0xff]
    %v4562 = vld [vmem:[%s5 + $0x40] sm:$0xff]
    %v4563 = vld [vmem:[%s5 + $0x48] sm:$0xff]
    %v4564 = vld [vmem:[%s5 + $0x50] sm:$0xff]
    %v4565 = vld [vmem:[%s5 + $0x58] sm:$0xff]
    %v4566 = vld [vmem:[%s5 + $0x60] sm:$0xff]
    %v4567 = vld [vmem:[%s5 + $0x68] sm:$0xff]
    %v4568 = vld [vmem:[%s5 + $0x70] sm:$0xff]
    %v4569 = vld [vmem:[%s5 + $0x78] sm:$0xff]
    %v4570 = vld [vmem:[%s5 + $0x80] sm:$0xff]
    %v4571 = vld [vmem:[%s5 + $0x88] sm:$0xff]
    %v4572 = vld [vmem:[%s5 + $0x90] sm:$0xff]
    %v4573 = vld [vmem:[%s5 + $0x98] sm:$0xff]
    %v4574 = vld [vmem:[%s5 + $0xa0] sm:$0xff]
    %v4575 = vld [vmem:[%s5 + $0xa8] sm:$0xff]
    %v4576 = vld [vmem:[%s5 + $0xb0] sm:$0xff]
    %v4577 = vld [vmem:[%s5 + $0xb8] sm:$0xff]
    %v4578 = vld [vmem:[%s5 + $0xc0] sm:$0xff]
    %v4579 = vld [vmem:[%s5 + $0xc8] sm:$0xff]
    %v4580 = vld [vmem:[%s5 + $0xd0] sm:$0xff]
    %v4581 = vld [vmem:[%s5 + $0xd8] sm:$0xff]
    %v4582 = vld [vmem:[%s5 + $0xe0] sm:$0xff]
    %v4583 = vld [vmem:[%s5 + $0xe8] sm:$0xff]
    %v4584 = vld [vmem:[%s5 + $0xf0] sm:$0xff]
    %v4585 = vld [vmem:[%s5 + $0xf8] sm:$0xff]
    %v4618 = vunpack.c.l.b16 %v4554
    %v4619 = vunpack.c.h.b16 %v4554
    %v4620 = vunpack.c.l.b16 %v4555
    %v4621 = vunpack.c.h.b16 %v4555
    %v4622 = vunpack.c.l.b16 %v4556
    %v4623 = vunpack.c.h.b16 %v4556
    %v4624 = vunpack.c.l.b16 %v4557
    %v4625 = vunpack.c.h.b16 %v4557
    %v4626 = vunpack.c.l.b16 %v4558
    %v4627 = vunpack.c.h.b16 %v4558
    %v4628 = vunpack.c.l.b16 %v4559
    %v4629 = vunpack.c.h.b16 %v4559
    %v4630 = vunpack.c.l.b16 %v4560
    %v4631 = vunpack.c.h.b16 %v4560
    %v4632 = vunpack.c.l.b16 %v4561
    %v4633 = vunpack.c.h.b16 %v4561
    %v4634 = vunpack.c.l.b16 %v4562
    %v4635 = vunpack.c.h.b16 %v4562
    %v4636 = vunpack.c.l.b16 %v4563
    %v4637 = vunpack.c.h.b16 %v4563
    %v4638 = vunpack.c.l.b16 %v4564
    %v4639 = vunpack.c.h.b16 %v4564
    %v4640 = vunpack.c.l.b16 %v4565
    %v4641 = vunpack.c.h.b16 %v4565
    %v4642 = vunpack.c.l.b16 %v4566
    %v4643 = vunpack.c.h.b16 %v4566
    %v4644 = vunpack.c.l.b16 %v4567
    %v4645 = vunpack.c.h.b16 %v4567
    %v4646 = vunpack.c.l.b16 %v4568
    %v4647 = vunpack.c.h.b16 %v4568
    %v4648 = vunpack.c.l.b16 %v4569
    %v4649 = vunpack.c.h.b16 %v4569
    %v4650 = vunpack.c.l.b16 %v4570
    %v4651 = vunpack.c.h.b16 %v4570
    %v4652 = vunpack.c.l.b16 %v4571
    %v4653 = vunpack.c.h.b16 %v4571
    %v4654 = vunpack.c.l.b16 %v4572
    %v4655 = vunpack.c.h.b16 %v4572
    %v4656 = vunpack.c.l.b16 %v4573
    %v4657 = vunpack.c.h.b16 %v4573
    %v4658 = vunpack.c.l.b16 %v4574
    %v4659 = vunpack.c.h.b16 %v4574
    %v4660 = vunpack.c.l.b16 %v4575
    %v4661 = vunpack.c.h.b16 %v4575
    %v4662 = vunpack.c.l.b16 %v4576
    %v4663 = vunpack.c.h.b16 %v4576
    %v4664 = vunpack.c.l.b16 %v4577
    %v4665 = vunpack.c.h.b16 %v4577
    %v4666 = vunpack.c.l.b16 %v4578
    %v4667 = vunpack.c.h.b16 %v4578
    %v4668 = vunpack.c.l.b16 %v4579
    %v4669 = vunpack.c.h.b16 %v4579
    %v4670 = vunpack.c.l.b16 %v4580
    %v4671 = vunpack.c.h.b16 %v4580
    %v4672 = vunpack.c.l.b16 %v4581
    %v4673 = vunpack.c.h.b16 %v4581
    %v4674 = vunpack.c.l.b16 %v4582
    %v4675 = vunpack.c.h.b16 %v4582
    %v4676 = vunpack.c.l.b16 %v4583
    %v4677 = vunpack.c.h.b16 %v4583
    %v4678 = vunpack.c.l.b16 %v4584
    %v4679 = vunpack.c.h.b16 %v4584
    %v4680 = vunpack.c.l.b16 %v4585
    %v4681 = vunpack.c.h.b16 %v4585
    %v4682 = vpack.c.b16 %v4622, %v4618
    %v4683 = vpack.c.b16 %v4623, %v4619
    %v4684 = vpack.c.b16 %v4624, %v4620
    %v4685 = vpack.c.b16 %v4625, %v4621
    %v4686 = vpack.c.b16 %v4630, %v4626
    %v4687 = vpack.c.b16 %v4631, %v4627
    %v4688 = vpack.c.b16 %v4632, %v4628
    %v4689 = vpack.c.b16 %v4633, %v4629
    %v4690 = vpack.c.b16 %v4638, %v4634
    %v4691 = vpack.c.b16 %v4639, %v4635
    %v4692 = vpack.c.b16 %v4640, %v4636
    %v4693 = vpack.c.b16 %v4641, %v4637
    %v4694 = vpack.c.b16 %v4646, %v4642
    %v4695 = vpack.c.b16 %v4647, %v4643
    %v4696 = vpack.c.b16 %v4648, %v4644
    %v4697 = vpack.c.b16 %v4649, %v4645
    %v4698 = vpack.c.b16 %v4654, %v4650
    %v4699 = vpack.c.b16 %v4655, %v4651
    %v4700 = vpack.c.b16 %v4656, %v4652
    %v4701 = vpack.c.b16 %v4657, %v4653
    %v4702 = vpack.c.b16 %v4662, %v4658
    %v4703 = vpack.c.b16 %v4663, %v4659
    %v4704 = vpack.c.b16 %v4664, %v4660
    %v4705 = vpack.c.b16 %v4665, %v4661
    %v4706 = vpack.c.b16 %v4670, %v4666
    %v4707 = vpack.c.b16 %v4671, %v4667
    %v4708 = vpack.c.b16 %v4672, %v4668
    %v4709 = vpack.c.b16 %v4673, %v4669
    %v4710 = vpack.c.b16 %v4678, %v4674
    %v4711 = vpack.c.b16 %v4679, %v4675
    %v4712 = vpack.c.b16 %v4680, %v4676
    %v4713 = vpack.c.b16 %v4681, %v4677
    %4746 = vmatprep.subr.bf16.mxu0 %v4683
    %4747 = vmatpush1.bf16.msra.mxu0 %v4682
    %4748 = vmatprep.subr.bf16.mxu0 %v4687
    %4749 = vmatpush1.bf16.msra.mxu0 %v4686
    %4750 = vmatprep.subr.bf16.mxu0 %v4691
    %4751 = vmatpush1.bf16.msra.mxu0 %v4690
    %4752 = vmatprep.subr.bf16.mxu0 %v4695
    %4753 = vmatpush1.bf16.msra.mxu0 %v4694
    %4754 = vmatprep.subr.bf16.mxu0 %v4699
    %4755 = vmatpush1.bf16.msra.mxu0 %v4698
    %4756 = vmatprep.subr.bf16.mxu0 %v4703
    %4757 = vmatpush1.bf16.msra.mxu0 %v4702
    %4758 = vmatprep.subr.bf16.mxu0 %v4707
    %4759 = vmatpush1.bf16.msra.mxu0 %v4706
    %4760 = vmatprep.subr.bf16.mxu0 %v4711
    %4761 = vmatpush1.bf16.msra.mxu0 %v4710
    %4762 = vmatprep.subr.bf16.mxu0 0
    %4763 = vmatpush1.bf16.msra.mxu0 0
    %4764 = vmatprep.subr.bf16.mxu0 0
    %4765 = vmatpush1.bf16.msra.mxu0 0
    %4766 = vmatprep.subr.bf16.mxu0 0
    %4767 = vmatpush1.bf16.msra.mxu0 0
    %4768 = vmatprep.subr.bf16.mxu0 0
    %4769 = vmatpush1.bf16.msra.mxu0 0
    %4770 = vmatprep.subr.bf16.mxu0 0
    %4771 = vmatpush1.bf16.msra.mxu0 0
    %4772 = vmatprep.subr.bf16.mxu0 0
    %4773 = vmatpush1.bf16.msra.mxu0 0
    %4774 = vmatprep.subr.bf16.mxu0 0
    %4775 = vmatpush1.bf16.msra.mxu0 0
    %4776 = vmatprep.subr.bf16.mxu0 0
    %4777 = vmatpush1.bf16.msra.mxu0 0
    %4778 = vmatprep.mubr.bf16.mxu0 0
    %4779 = vmatmul.mubr.bf16.gmra.mrb[0].mxu0 %v4553
    %v4780 = vpop.f32.mrb[0].mxu0
    %v4781 = vadd.f32 0.0, %v4780
    %v4782 = vpop.f32.mrb[0].mxu0
    %v4783 = vadd.f32 0.0, %v4782
    %v4784 = vpop.f32.mrb[0].mxu0
    %v4785 = vpop.f32.mrb[0].mxu0
    %4786 = vdwg.mxu0
    %4787 = vmatprep.subr.bf16.mxu0 %v4685
    %4788 = vmatpush1.bf16.msra.mxu0 %v4684
    %4789 = vmatprep.subr.bf16.mxu0 %v4689
    %4790 = vmatpush1.bf16.msra.mxu0 %v4688
    %4791 = vmatprep.subr.bf16.mxu0 %v4693
    %4792 = vmatpush1.bf16.msra.mxu0 %v4692
    %4793 = vmatprep.subr.bf16.mxu0 %v4697
    %4794 = vmatpush1.bf16.msra.mxu0 %v4696
    %4795 = vmatprep.subr.bf16.mxu0 %v4701
    %4796 = vmatpush1.bf16.msra.mxu0 %v4700
    %4797 = vmatprep.subr.bf16.mxu0 %v4705
    %4798 = vmatpush1.bf16.msra.mxu0 %v4704
    %4799 = vmatprep.subr.bf16.mxu0 %v4709
    %4800 = vmatpush1.bf16.msra.mxu0 %v4708
    %4801 = vmatprep.subr.bf16.mxu0 %v4713
    %4802 = vmatpush1.bf16.msra.mxu0 %v4712
    %4803 = vmatprep.subr.bf16.mxu0 0
    %4804 = vmatpush1.bf16.msra.mxu0 0
    %4805 = vmatprep.subr.bf16.mxu0 0
    %4806 = vmatpush1.bf16.msra.mxu0 0
    %4807 = vmatprep.subr.bf16.mxu0 0
    %4808 = vmatpush1.bf16.msra.mxu0 0
    %4809 = vmatprep.subr.bf16.mxu0 0
    %4810 = vmatpush1.bf16.msra.mxu0 0
    %4811 = vmatprep.subr.bf16.mxu0 0
    %4812 = vmatpush1.bf16.msra.mxu0 0
    %4813 = vmatprep.subr.bf16.mxu0 0
    %4814 = vmatpush1.bf16.msra.mxu0 0
    %4815 = vmatprep.subr.bf16.mxu0 0
    %4816 = vmatpush1.bf16.msra.mxu0 0
    %4817 = vmatprep.subr.bf16.mxu0 0
    %4818 = vmatpush1.bf16.msra.mxu0 0
    %4819 = vmatprep.mubr.bf16.mxu0 0
    %4820 = vmatmul.mubr.bf16.gmra.mrb[0].mxu0 %v4553
    %v4821 = vpop.f32.mrb[0].mxu0
    %v4822 = vadd.f32 0.0, %v4821
    %v4823 = vpop.f32.mrb[0].mxu0
    %v4824 = vadd.f32 0.0, %v4823
    %v4825 = vpop.f32.mrb[0].mxu0
    %v4826 = vpop.f32.mrb[0].mxu0
    %4827 = vdwg.mxu0
    %v4828 = vadd.f32 %v4549, %v4781
    %v4829 = vadd.f32 %v4550, %v4783
    %v4830 = vadd.f32 %v4551, %v4822
    %v4831 = vadd.f32 %v4552, %v4824
    %v4832 = vtanh.pop %v4828
    %v4833 = vtanh.pop %v4829
    %v4834 = vtanh.pop %v4830
    %v4835 = vtanh.pop %v4831
    %v4836 = vmul.f32 %v4832, 0.5
    %v4837 = vadd.f32 %v4836, 0.5
    %v4838 = vmul.f32 %v4833, 0.5
    %v4839 = vadd.f32 %v4838, 0.5
    %v4840 = vmul.f32 %v4835, 0.5
    %v4841 = vadd.f32 %v4840, 0.5
    %v4842 = vmul.f32 %v4839, %v3970
    %v4843 = vmul.f32 %v4837, %v4834
    %v4844 = vadd.f32 %v4842, %v4843
    %v4845 = vtanh.pop %v4844
    %v4846 = vmul.f32 %v4841, %v4845
    %4847 = vst [vmem:[#allocation3 - $0x3] sm:$0x80] %v4846
    %s4848 = smul.u32 6, 4
    %s4849 = smul.addr %s4848, 8
    %s4850 = scalar_lea.vmem [#allocation2], %s4849
    %v4851 = vld [vmem:[%s4850] sm:$0xff]
    %v4852 = vld [vmem:[%s4850 + $0x8] sm:$0xff]
    %v4853 = vld [vmem:[%s4850 + $0x10] sm:$0xff]
    %v4854 = vld [vmem:[%s4850 + $0x18] sm:$0xff]
    %v4855 = vpack.c.bf16 %v4274, %v4274
    %v4856 = vld [vmem:[%s2] sm:$0xff]
    %v4857 = vld [vmem:[%s2 + $0x8] sm:$0xff]
    %v4858 = vld [vmem:[%s2 + $0x10] sm:$0xff]
    %v4859 = vld [vmem:[%s2 + $0x18] sm:$0xff]
    %v4860 = vld [vmem:[%s2 + $0x20] sm:$0xff]
    %v4861 = vld [vmem:[%s2 + $0x28] sm:$0xff]
    %v4862 = vld [vmem:[%s2 + $0x30] sm:$0xff]
    %v4863 = vld [vmem:[%s2 + $0x38] sm:$0xff]
    %v4864 = vld [vmem:[%s2 + $0x40] sm:$0xff]
    %v4865 = vld [vmem:[%s2 + $0x48] sm:$0xff]
    %v4866 = vld [vmem:[%s2 + $0x50] sm:$0xff]
    %v4867 = vld [vmem:[%s2 + $0x58] sm:$0xff]
    %v4868 = vld [vmem:[%s2 + $0x60] sm:$0xff]
    %v4869 = vld [vmem:[%s2 + $0x68] sm:$0xff]
    %v4870 = vld [vmem:[%s2 + $0x70] sm:$0xff]
    %v4871 = vld [vmem:[%s2 + $0x78] sm:$0xff]
    %v4872 = vld [vmem:[%s2 + $0x80] sm:$0xff]
    %v4873 = vld [vmem:[%s2 + $0x88] sm:$0xff]
    %v4874 = vld [vmem:[%s2 + $0x90] sm:$0xff]
    %v4875 = vld [vmem:[%s2 + $0x98] sm:$0xff]
    %v4876 = vld [vmem:[%s2 + $0xa0] sm:$0xff]
    %v4877 = vld [vmem:[%s2 + $0xa8] sm:$0xff]
    %v4878 = vld [vmem:[%s2 + $0xb0] sm:$0xff]
    %v4879 = vld [vmem:[%s2 + $0xb8] sm:$0xff]
    %v4880 = vld [vmem:[%s2 + $0xc0] sm:$0xff]
    %v4881 = vld [vmem:[%s2 + $0xc8] sm:$0xff]
    %v4882 = vld [vmem:[%s2 + $0xd0] sm:$0xff]
    %v4883 = vld [vmem:[%s2 + $0xd8] sm:$0xff]
    %v4884 = vld [vmem:[%s2 + $0xe0] sm:$0xff]
    %v4885 = vld [vmem:[%s2 + $0xe8] sm:$0xff]
    %v4886 = vld [vmem:[%s2 + $0xf0] sm:$0xff]
    %v4887 = vld [vmem:[%s2 + $0xf8] sm:$0xff]
    %v4920 = vunpack.c.l.b16 %v4856
    %v4921 = vunpack.c.h.b16 %v4856
    %v4922 = vunpack.c.l.b16 %v4857
    %v4923 = vunpack.c.h.b16 %v4857
    %v4924 = vunpack.c.l.b16 %v4858
    %v4925 = vunpack.c.h.b16 %v4858
    %v4926 = vunpack.c.l.b16 %v4859
    %v4927 = vunpack.c.h.b16 %v4859
    %v4928 = vunpack.c.l.b16 %v4860
    %v4929 = vunpack.c.h.b16 %v4860
    %v4930 = vunpack.c.l.b16 %v4861
    %v4931 = vunpack.c.h.b16 %v4861
    %v4932 = vunpack.c.l.b16 %v4862
    %v4933 = vunpack.c.h.b16 %v4862
    %v4934 = vunpack.c.l.b16 %v4863
    %v4935 = vunpack.c.h.b16 %v4863
    %v4936 = vunpack.c.l.b16 %v4864
    %v4937 = vunpack.c.h.b16 %v4864
    %v4938 = vunpack.c.l.b16 %v4865
    %v4939 = vunpack.c.h.b16 %v4865
    %v4940 = vunpack.c.l.b16 %v4866
    %v4941 = vunpack.c.h.b16 %v4866
    %v4942 = vunpack.c.l.b16 %v4867
    %v4943 = vunpack.c.h.b16 %v4867
    %v4944 = vunpack.c.l.b16 %v4868
    %v4945 = vunpack.c.h.b16 %v4868
    %v4946 = vunpack.c.l.b16 %v4869
    %v4947 = vunpack.c.h.b16 %v4869
    %v4948 = vunpack.c.l.b16 %v4870
    %v4949 = vunpack.c.h.b16 %v4870
    %v4950 = vunpack.c.l.b16 %v4871
    %v4951 = vunpack.c.h.b16 %v4871
    %v4952 = vunpack.c.l.b16 %v4872
    %v4953 = vunpack.c.h.b16 %v4872
    %v4954 = vunpack.c.l.b16 %v4873
    %v4955 = vunpack.c.h.b16 %v4873
    %v4956 = vunpack.c.l.b16 %v4874
    %v4957 = vunpack.c.h.b16 %v4874
    %v4958 = vunpack.c.l.b16 %v4875
    %v4959 = vunpack.c.h.b16 %v4875
    %v4960 = vunpack.c.l.b16 %v4876
    %v4961 = vunpack.c.h.b16 %v4876
    %v4962 = vunpack.c.l.b16 %v4877
    %v4963 = vunpack.c.h.b16 %v4877
    %v4964 = vunpack.c.l.b16 %v4878
    %v4965 = vunpack.c.h.b16 %v4878
    %v4966 = vunpack.c.l.b16 %v4879
    %v4967 = vunpack.c.h.b16 %v4879
    %v4968 = vunpack.c.l.b16 %v4880
    %v4969 = vunpack.c.h.b16 %v4880
    %v4970 = vunpack.c.l.b16 %v4881
    %v4971 = vunpack.c.h.b16 %v4881
    %v4972 = vunpack.c.l.b16 %v4882
    %v4973 = vunpack.c.h.b16 %v4882
    %v4974 = vunpack.c.l.b16 %v4883
    %v4975 = vunpack.c.h.b16 %v4883
    %v4976 = vunpack.c.l.b16 %v4884
    %v4977 = vunpack.c.h.b16 %v4884
    %v4978 = vunpack.c.l.b16 %v4885
    %v4979 = vunpack.c.h.b16 %v4885
    %v4980 = vunpack.c.l.b16 %v4886
    %v4981 = vunpack.c.h.b16 %v4886
    %v4982 = vunpack.c.l.b16 %v4887
    %v4983 = vunpack.c.h.b16 %v4887
    %v4984 = vpack.c.b16 %v4924, %v4920
    %v4985 = vpack.c.b16 %v4925, %v4921
    %v4986 = vpack.c.b16 %v4926, %v4922
    %v4987 = vpack.c.b16 %v4927, %v4923
    %v4988 = vpack.c.b16 %v4932, %v4928
    %v4989 = vpack.c.b16 %v4933, %v4929
    %v4990 = vpack.c.b16 %v4934, %v4930
    %v4991 = vpack.c.b16 %v4935, %v4931
    %v4992 = vpack.c.b16 %v4940, %v4936
    %v4993 = vpack.c.b16 %v4941, %v4937
    %v4994 = vpack.c.b16 %v4942, %v4938
    %v4995 = vpack.c.b16 %v4943, %v4939
    %v4996 = vpack.c.b16 %v4948, %v4944
    %v4997 = vpack.c.b16 %v4949, %v4945
    %v4998 = vpack.c.b16 %v4950, %v4946
    %v4999 = vpack.c.b16 %v4951, %v4947
    %v5000 = vpack.c.b16 %v4956, %v4952
    %v5001 = vpack.c.b16 %v4957, %v4953
    %v5002 = vpack.c.b16 %v4958, %v4954
    %v5003 = vpack.c.b16 %v4959, %v4955
    %v5004 = vpack.c.b16 %v4964, %v4960
    %v5005 = vpack.c.b16 %v4965, %v4961
    %v5006 = vpack.c.b16 %v4966, %v4962
    %v5007 = vpack.c.b16 %v4967, %v4963
    %v5008 = vpack.c.b16 %v4972, %v4968
    %v5009 = vpack.c.b16 %v4973, %v4969
    %v5010 = vpack.c.b16 %v4974, %v4970
    %v5011 = vpack.c.b16 %v4975, %v4971
    %v5012 = vpack.c.b16 %v4980, %v4976
    %v5013 = vpack.c.b16 %v4981, %v4977
    %v5014 = vpack.c.b16 %v4982, %v4978
    %v5015 = vpack.c.b16 %v4983, %v4979
    %5048 = vmatprep.subr.bf16.mxu0 %v4985
    %5049 = vmatpush1.bf16.msra.mxu0 %v4984
    %5050 = vmatprep.subr.bf16.mxu0 %v4989
    %5051 = vmatpush1.bf16.msra.mxu0 %v4988
    %5052 = vmatprep.subr.bf16.mxu0 %v4993
    %5053 = vmatpush1.bf16.msra.mxu0 %v4992
    %5054 = vmatprep.subr.bf16.mxu0 %v4997
    %5055 = vmatpush1.bf16.msra.mxu0 %v4996
    %5056 = vmatprep.subr.bf16.mxu0 %v5001
    %5057 = vmatpush1.bf16.msra.mxu0 %v5000
    %5058 = vmatprep.subr.bf16.mxu0 %v5005
    %5059 = vmatpush1.bf16.msra.mxu0 %v5004
    %5060 = vmatprep.subr.bf16.mxu0 %v5009
    %5061 = vmatpush1.bf16.msra.mxu0 %v5008
    %5062 = vmatprep.subr.bf16.mxu0 %v5013
    %5063 = vmatpush1.bf16.msra.mxu0 %v5012
    %5064 = vmatprep.subr.bf16.mxu0 0
    %5065 = vmatpush1.bf16.msra.mxu0 0
    %5066 = vmatprep.subr.bf16.mxu0 0
    %5067 = vmatpush1.bf16.msra.mxu0 0
    %5068 = vmatprep.subr.bf16.mxu0 0
    %5069 = vmatpush1.bf16.msra.mxu0 0
    %5070 = vmatprep.subr.bf16.mxu0 0
    %5071 = vmatpush1.bf16.msra.mxu0 0
    %5072 = vmatprep.subr.bf16.mxu0 0
    %5073 = vmatpush1.bf16.msra.mxu0 0
    %5074 = vmatprep.subr.bf16.mxu0 0
    %5075 = vmatpush1.bf16.msra.mxu0 0
    %5076 = vmatprep.subr.bf16.mxu0 0
    %5077 = vmatpush1.bf16.msra.mxu0 0
    %5078 = vmatprep.subr.bf16.mxu0 0
    %5079 = vmatpush1.bf16.msra.mxu0 0
    %5080 = vmatprep.mubr.bf16.mxu0 0
    %5081 = vmatmul.mubr.bf16.gmra.mrb[0].mxu0 %v4855
    %v5082 = vpop.f32.mrb[0].mxu0
    %v5083 = vadd.f32 0.0, %v5082
    %v5084 = vpop.f32.mrb[0].mxu0
    %v5085 = vadd.f32 0.0, %v5084
    %v5086 = vpop.f32.mrb[0].mxu0
    %v5087 = vpop.f32.mrb[0].mxu0
    %5088 = vdwg.mxu0
    %5089 = vmatprep.subr.bf16.mxu0 %v4987
    %5090 = vmatpush1.bf16.msra.mxu0 %v4986
    %5091 = vmatprep.subr.bf16.mxu0 %v4991
    %5092 = vmatpush1.bf16.msra.mxu0 %v4990
    %5093 = vmatprep.subr.bf16.mxu0 %v4995
    %5094 = vmatpush1.bf16.msra.mxu0 %v4994
    %5095 = vmatprep.subr.bf16.mxu0 %v4999
    %5096 = vmatpush1.bf16.msra.mxu0 %v4998
    %5097 = vmatprep.subr.bf16.mxu0 %v5003
    %5098 = vmatpush1.bf16.msra.mxu0 %v5002
    %5099 = vmatprep.subr.bf16.mxu0 %v5007
    %5100 = vmatpush1.bf16.msra.mxu0 %v5006
    %5101 = vmatprep.subr.bf16.mxu0 %v5011
    %5102 = vmatpush1.bf16.msra.mxu0 %v5010
    %5103 = vmatprep.subr.bf16.mxu0 %v5015
    %5104 = vmatpush1.bf16.msra.mxu0 %v5014
    %5105 = vmatprep.subr.bf16.mxu0 0
    %5106 = vmatpush1.bf16.msra.mxu0 0
    %5107 = vmatprep.subr.bf16.mxu0 0
    %5108 = vmatpush1.bf16.msra.mxu0 0
    %5109 = vmatprep.subr.bf16.mxu0 0
    %5110 = vmatpush1.bf16.msra.mxu0 0
    %5111 = vmatprep.subr.bf16.mxu0 0
    %5112 = vmatpush1.bf16.msra.mxu0 0
    %5113 = vmatprep.subr.bf16.mxu0 0
    %5114 = vmatpush1.bf16.msra.mxu0 0
    %5115 = vmatprep.subr.bf16.mxu0 0
    %5116 = vmatpush1.bf16.msra.mxu0 0
    %5117 = vmatprep.subr.bf16.mxu0 0
    %5118 = vmatpush1.bf16.msra.mxu0 0
    %5119 = vmatprep.subr.bf16.mxu0 0
    %5120 = vmatpush1.bf16.msra.mxu0 0
    %5121 = vmatprep.mubr.bf16.mxu0 0
    %5122 = vmatmul.mubr.bf16.gmra.mrb[0].mxu0 %v4855
    %v5123 = vpop.f32.mrb[0].mxu0
    %v5124 = vadd.f32 0.0, %v5123
    %v5125 = vpop.f32.mrb[0].mxu0
    %v5126 = vadd.f32 0.0, %v5125
    %v5127 = vpop.f32.mrb[0].mxu0
    %v5128 = vpop.f32.mrb[0].mxu0
    %5129 = vdwg.mxu0
    %v5130 = vadd.f32 %v4851, %v5083
    %v5131 = vadd.f32 %v4852, %v5085
    %v5132 = vadd.f32 %v4853, %v5124
    %v5133 = vadd.f32 %v4854, %v5126
    %v5134 = vtanh.pop %v5130
    %v5135 = vtanh.pop %v5131
    %v5136 = vtanh.pop %v5132
    %v5137 = vtanh.pop %v5133
    %v5138 = vmul.f32 %v5134, 0.5
    %v5139 = vadd.f32 %v5138, 0.5
    %v5140 = vmul.f32 %v5135, 0.5
    %v5141 = vadd.f32 %v5140, 0.5
    %v5142 = vmul.f32 %v5137, 0.5
    %v5143 = vadd.f32 %v5142, 0.5
    %v5144 = vmul.f32 %v5141, %v4272
    %v5145 = vmul.f32 %v5139, %v5136
    %v5146 = vadd.f32 %v5144, %v5145
    %v5147 = vtanh.pop %v5146
    %v5148 = vmul.f32 %v5143, %v5147
    %v5149 = vld [vmem:[%s4] sm:$0xff]
    %v5150 = vld [vmem:[%s4 + $0x8] sm:$0xff]
    %v5151 = vld [vmem:[%s4 + $0x10] sm:$0xff]
    %v5152 = vld [vmem:[%s4 + $0x18] sm:$0xff]
    %v5153 = vld [vmem:[%s4 + $0x20] sm:$0xff]
    %v5154 = vld [vmem:[%s4 + $0x28] sm:$0xff]
    %v5155 = vld [vmem:[%s4 + $0x30] sm:$0xff]
    %v5156 = vld [vmem:[%s4 + $0x38] sm:$0xff]
    %v5157 = vld [vmem:[%s4 + $0x40] sm:$0xff]
    %v5158 = vld [vmem:[%s4 + $0x48] sm:$0xff]
    %v5159 = vld [vmem:[%s4 + $0x50] sm:$0xff]
    %v5160 = vld [vmem:[%s4 + $0x58] sm:$0xff]
    %v5161 = vld [vmem:[%s4 + $0x60] sm:$0xff]
    %v5162 = vld [vmem:[%s4 + $0x68] sm:$0xff]
    %v5163 = vld [vmem:[%s4 + $0x70] sm:$0xff]
    %v5164 = vld [vmem:[%s4 + $0x78] sm:$0xff]
    %v5165 = vld [vmem:[%s4 + $0x80] sm:$0xff]
    %v5166 = vld [vmem:[%s4 + $0x88] sm:$0xff]
    %v5167 = vld [vmem:[%s4 + $0x90] sm:$0xff]
    %v5168 = vld [vmem:[%s4 + $0x98] sm:$0xff]
    %v5169 = vld [vmem:[%s4 + $0xa0] sm:$0xff]
    %v5170 = vld [vmem:[%s4 + $0xa8] sm:$0xff]
    %v5171 = vld [vmem:[%s4 + $0xb0] sm:$0xff]
    %v5172 = vld [vmem:[%s4 + $0xb8] sm:$0xff]
    %v5173 = vld [vmem:[%s4 + $0xc0] sm:$0xff]
    %v5174 = vld [vmem:[%s4 + $0xc8] sm:$0xff]
    %v5175 = vld [vmem:[%s4 + $0xd0] sm:$0xff]
    %v5176 = vld [vmem:[%s4 + $0xd8] sm:$0xff]
    %v5177 = vld [vmem:[%s4 + $0xe0] sm:$0xff]
    %v5178 = vld [vmem:[%s4 + $0xe8] sm:$0xff]
    %v5179 = vld [vmem:[%s4 + $0xf0] sm:$0xff]
    %v5180 = vld [vmem:[%s4 + $0xf8] sm:$0xff]
    %v5213 = vunpack.c.l.b16 %v5149
    %v5214 = vunpack.c.h.b16 %v5149
    %v5215 = vunpack.c.l.b16 %v5150
    %v5216 = vunpack.c.h.b16 %v5150
    %v5217 = vunpack.c.l.b16 %v5151
    %v5218 = vunpack.c.h.b16 %v5151
    %v5219 = vunpack.c.l.b16 %v5152
    %v5220 = vunpack.c.h.b16 %v5152
    %v5221 = vunpack.c.l.b16 %v5153
    %v5222 = vunpack.c.h.b16 %v5153
    %v5223 = vunpack.c.l.b16 %v5154
    %v5224 = vunpack.c.h.b16 %v5154
    %v5225 = vunpack.c.l.b16 %v5155
    %v5226 = vunpack.c.h.b16 %v5155
    %v5227 = vunpack.c.l.b16 %v5156
    %v5228 = vunpack.c.h.b16 %v5156
    %v5229 = vunpack.c.l.b16 %v5157
    %v5230 = vunpack.c.h.b16 %v5157
    %v5231 = vunpack.c.l.b16 %v5158
    %v5232 = vunpack.c.h.b16 %v5158
    %v5233 = vunpack.c.l.b16 %v5159
    %v5234 = vunpack.c.h.b16 %v5159
    %v5235 = vunpack.c.l.b16 %v5160
    %v5236 = vunpack.c.h.b16 %v5160
    %v5237 = vunpack.c.l.b16 %v5161
    %v5238 = vunpack.c.h.b16 %v5161
    %v5239 = vunpack.c.l.b16 %v5162
    %v5240 = vunpack.c.h.b16 %v5162
    %v5241 = vunpack.c.l.b16 %v5163
    %v5242 = vunpack.c.h.b16 %v5163
    %v5243 = vunpack.c.l.b16 %v5164
    %v5244 = vunpack.c.h.b16 %v5164
    %v5245 = vunpack.c.l.b16 %v5165
    %v5246 = vunpack.c.h.b16 %v5165
    %v5247 = vunpack.c.l.b16 %v5166
    %v5248 = vunpack.c.h.b16 %v5166
    %v5249 = vunpack.c.l.b16 %v5167
    %v5250 = vunpack.c.h.b16 %v5167
    %v5251 = vunpack.c.l.b16 %v5168
    %v5252 = vunpack.c.h.b16 %v5168
    %v5253 = vunpack.c.l.b16 %v5169
    %v5254 = vunpack.c.h.b16 %v5169
    %v5255 = vunpack.c.l.b16 %v5170
    %v5256 = vunpack.c.h.b16 %v5170
    %v5257 = vunpack.c.l.b16 %v5171
    %v5258 = vunpack.c.h.b16 %v5171
    %v5259 = vunpack.c.l.b16 %v5172
    %v5260 = vunpack.c.h.b16 %v5172
    %v5261 = vunpack.c.l.b16 %v5173
    %v5262 = vunpack.c.h.b16 %v5173
    %v5263 = vunpack.c.l.b16 %v5174
    %v5264 = vunpack.c.h.b16 %v5174
    %v5265 = vunpack.c.l.b16 %v5175
    %v5266 = vunpack.c.h.b16 %v5175
    %v5267 = vunpack.c.l.b16 %v5176
    %v5268 = vunpack.c.h.b16 %v5176
    %v5269 = vunpack.c.l.b16 %v5177
    %v5270 = vunpack.c.h.b16 %v5177
    %v5271 = vunpack.c.l.b16 %v5178
    %v5272 = vunpack.c.h.b16 %v5178
    %v5273 = vunpack.c.l.b16 %v5179
    %v5274 = vunpack.c.h.b16 %v5179
    %v5275 = vunpack.c.l.b16 %v5180
    %v5276 = vunpack.c.h.b16 %v5180
    %v5277 = vpack.c.b16 %v5217, %v5213
    %v5278 = vpack.c.b16 %v5218, %v5214
    %v5279 = vpack.c.b16 %v5219, %v5215
    %v5280 = vpack.c.b16 %v5220, %v5216
    %v5281 = vpack.c.b16 %v5225, %v5221
    %v5282 = vpack.c.b16 %v5226, %v5222
    %v5283 = vpack.c.b16 %v5227, %v5223
    %v5284 = vpack.c.b16 %v5228, %v5224
    %v5285 = vpack.c.b16 %v5233, %v5229
    %v5286 = vpack.c.b16 %v5234, %v5230
    %v5287 = vpack.c.b16 %v5235, %v5231
    %v5288 = vpack.c.b16 %v5236, %v5232
    %v5289 = vpack.c.b16 %v5241, %v5237
    %v5290 = vpack.c.b16 %v5242, %v5238
    %v5291 = vpack.c.b16 %v5243, %v5239
    %v5292 = vpack.c.b16 %v5244, %v5240
    %v5293 = vpack.c.b16 %v5249, %v5245
    %v5294 = vpack.c.b16 %v5250, %v5246
    %v5295 = vpack.c.b16 %v5251, %v5247
    %v5296 = vpack.c.b16 %v5252, %v5248
    %v5297 = vpack.c.b16 %v5257, %v5253
    %v5298 = vpack.c.b16 %v5258, %v5254
    %v5299 = vpack.c.b16 %v5259, %v5255
    %v5300 = vpack.c.b16 %v5260, %v5256
    %v5301 = vpack.c.b16 %v5265, %v5261
    %v5302 = vpack.c.b16 %v5266, %v5262
    %v5303 = vpack.c.b16 %v5267, %v5263
    %v5304 = vpack.c.b16 %v5268, %v5264
    %v5305 = vpack.c.b16 %v5273, %v5269
    %v5306 = vpack.c.b16 %v5274, %v5270
    %v5307 = vpack.c.b16 %v5275, %v5271
    %v5308 = vpack.c.b16 %v5276, %v5272
    %5341 = vmatprep.subr.bf16.mxu0 %v5278
    %5342 = vmatpush1.bf16.msra.mxu0 %v5277
    %5343 = vmatprep.subr.bf16.mxu0 %v5282
    %5344 = vmatpush1.bf16.msra.mxu0 %v5281
    %5345 = vmatprep.subr.bf16.mxu0 %v5286
    %5346 = vmatpush1.bf16.msra.mxu0 %v5285
    %5347 = vmatprep.subr.bf16.mxu0 %v5290
    %5348 = vmatpush1.bf16.msra.mxu0 %v5289
    %5349 = vmatprep.subr.bf16.mxu0 %v5294
    %5350 = vmatpush1.bf16.msra.mxu0 %v5293
    %5351 = vmatprep.subr.bf16.mxu0 %v5298
    %5352 = vmatpush1.bf16.msra.mxu0 %v5297
    %5353 = vmatprep.subr.bf16.mxu0 %v5302
    %5354 = vmatpush1.bf16.msra.mxu0 %v5301
    %5355 = vmatprep.subr.bf16.mxu0 %v5306
    %5356 = vmatpush1.bf16.msra.mxu0 %v5305
    %5357 = vmatprep.subr.bf16.mxu0 0
    %5358 = vmatpush1.bf16.msra.mxu0 0
    %5359 = vmatprep.subr.bf16.mxu0 0
    %5360 = vmatpush1.bf16.msra.mxu0 0
    %5361 = vmatprep.subr.bf16.mxu0 0
    %5362 = vmatpush1.bf16.msra.mxu0 0
    %5363 = vmatprep.subr.bf16.mxu0 0
    %5364 = vmatpush1.bf16.msra.mxu0 0
    %5365 = vmatprep.subr.bf16.mxu0 0
    %5366 = vmatpush1.bf16.msra.mxu0 0
    %5367 = vmatprep.subr.bf16.mxu0 0
    %5368 = vmatpush1.bf16.msra.mxu0 0
    %5369 = vmatprep.subr.bf16.mxu0 0
    %5370 = vmatpush1.bf16.msra.mxu0 0
    %5371 = vmatprep.subr.bf16.mxu0 0
    %5372 = vmatpush1.bf16.msra.mxu0 0
    %5373 = vmatprep.mubr.bf16.mxu0 0
    %5374 = vmatmul.mubr.bf16.gmra.mrb[0].mxu0 %v4855
    %v5375 = vpop.f32.mrb[0].mxu0
    %v5376 = vadd.f32 0.0, %v5375
    %v5377 = vpop.f32.mrb[0].mxu0
    %v5378 = vadd.f32 0.0, %v5377
    %v5379 = vpop.f32.mrb[0].mxu0
    %v5380 = vpop.f32.mrb[0].mxu0
    %5381 = vdwg.mxu0
    %5382 = vmatprep.subr.bf16.mxu0 %v5280
    %5383 = vmatpush1.bf16.msra.mxu0 %v5279
    %5384 = vmatprep.subr.bf16.mxu0 %v5284
    %5385 = vmatpush1.bf16.msra.mxu0 %v5283
    %5386 = vmatprep.subr.bf16.mxu0 %v5288
    %5387 = vmatpush1.bf16.msra.mxu0 %v5287
    %5388 = vmatprep.subr.bf16.mxu0 %v5292
    %5389 = vmatpush1.bf16.msra.mxu0 %v5291
    %5390 = vmatprep.subr.bf16.mxu0 %v5296
    %5391 = vmatpush1.bf16.msra.mxu0 %v5295
    %5392 = vmatprep.subr.bf16.mxu0 %v5300
    %5393 = vmatpush1.bf16.msra.mxu0 %v5299
    %5394 = vmatprep.subr.bf16.mxu0 %v5304
    %5395 = vmatpush1.bf16.msra.mxu0 %v5303
    %5396 = vmatprep.subr.bf16.mxu0 %v5308
    %5397 = vmatpush1.bf16.msra.mxu0 %v5307
    %5398 = vmatprep.subr.bf16.mxu0 0
    %5399 = vmatpush1.bf16.msra.mxu0 0
    %5400 = vmatprep.subr.bf16.mxu0 0
    %5401 = vmatpush1.bf16.msra.mxu0 0
    %5402 = vmatprep.subr.bf16.mxu0 0
    %5403 = vmatpush1.bf16.msra.mxu0 0
    %5404 = vmatprep.subr.bf16.mxu0 0
    %5405 = vmatpush1.bf16.msra.mxu0 0
    %5406 = vmatprep.subr.bf16.mxu0 0
    %5407 = vmatpush1.bf16.msra.mxu0 0
    %5408 = vmatprep.subr.bf16.mxu0 0
    %5409 = vmatpush1.bf16.msra.mxu0 0
    %5410 = vmatprep.subr.bf16.mxu0 0
    %5411 = vmatpush1.bf16.msra.mxu0 0
    %5412 = vmatprep.subr.bf16.mxu0 0
    %5413 = vmatpush1.bf16.msra.mxu0 0
    %5414 = vmatprep.mubr.bf16.mxu0 0
    %5415 = vmatmul.mubr.bf16.gmra.mrb[0].mxu0 %v4855
    %v5416 = vpop.f32.mrb[0].mxu0
    %v5417 = vadd.f32 0.0, %v5416
    %v5418 = vpop.f32.mrb[0].mxu0
    %v5419 = vadd.f32 0.0, %v5418
    %v5420 = vpop.f32.mrb[0].mxu0
    %v5421 = vpop.f32.mrb[0].mxu0
    %5422 = vdwg.mxu0
    %v5423 = vadd.f32 %v443, %v5376
    %v5424 = vadd.f32 %v447, %v5378
    %v5425 = vadd.f32 %v451, %v5417
    %v5426 = vadd.f32 %v455, %v5419
    %v5427 = vpack.c.bf16 %v4846, %v4846
    %v5428 = vld [vmem:[%s5] sm:$0xff]
    %v5429 = vld [vmem:[%s5 + $0x8] sm:$0xff]
    %v5430 = vld [vmem:[%s5 + $0x10] sm:$0xff]
    %v5431 = vld [vmem:[%s5 + $0x18] sm:$0xff]
    %v5432 = vld [vmem:[%s5 + $0x20] sm:$0xff]
    %v5433 = vld [vmem:[%s5 + $0x28] sm:$0xff]
    %v5434 = vld [vmem:[%s5 + $0x30] sm:$0xff]
    %v5435 = vld [vmem:[%s5 + $0x38] sm:$0xff]
    %v5436 = vld [vmem:[%s5 + $0x40] sm:$0xff]
    %v5437 = vld [vmem:[%s5 + $0x48] sm:$0xff]
    %v5438 = vld [vmem:[%s5 + $0x50] sm:$0xff]
    %v5439 = vld [vmem:[%s5 + $0x58] sm:$0xff]
    %v5440 = vld [vmem:[%s5 + $0x60] sm:$0xff]
    %v5441 = vld [vmem:[%s5 + $0x68] sm:$0xff]
    %v5442 = vld [vmem:[%s5 + $0x70] sm:$0xff]
    %v5443 = vld [vmem:[%s5 + $0x78] sm:$0xff]
    %v5444 = vld [vmem:[%s5 + $0x80] sm:$0xff]
    %v5445 = vld [vmem:[%s5 + $0x88] sm:$0xff]
    %v5446 = vld [vmem:[%s5 + $0x90] sm:$0xff]
    %v5447 = vld [vmem:[%s5 + $0x98] sm:$0xff]
    %v5448 = vld [vmem:[%s5 + $0xa0] sm:$0xff]
    %v5449 = vld [vmem:[%s5 + $0xa8] sm:$0xff]
    %v5450 = vld [vmem:[%s5 + $0xb0] sm:$0xff]
    %v5451 = vld [vmem:[%s5 + $0xb8] sm:$0xff]
    %v5452 = vld [vmem:[%s5 + $0xc0] sm:$0xff]
    %v5453 = vld [vmem:[%s5 + $0xc8] sm:$0xff]
    %v5454 = vld [vmem:[%s5 + $0xd0] sm:$0xff]
    %v5455 = vld [vmem:[%s5 + $0xd8] sm:$0xff]
    %v5456 = vld [vmem:[%s5 + $0xe0] sm:$0xff]
    %v5457 = vld [vmem:[%s5 + $0xe8] sm:$0xff]
    %v5458 = vld [vmem:[%s5 + $0xf0] sm:$0xff]
    %v5459 = vld [vmem:[%s5 + $0xf8] sm:$0xff]
    %v5492 = vunpack.c.l.b16 %v5428
    %v5493 = vunpack.c.h.b16 %v5428
    %v5494 = vunpack.c.l.b16 %v5429
    %v5495 = vunpack.c.h.b16 %v5429
    %v5496 = vunpack.c.l.b16 %v5430
    %v5497 = vunpack.c.h.b16 %v5430
    %v5498 = vunpack.c.l.b16 %v5431
    %v5499 = vunpack.c.h.b16 %v5431
    %v5500 = vunpack.c.l.b16 %v5432
    %v5501 = vunpack.c.h.b16 %v5432
    %v5502 = vunpack.c.l.b16 %v5433
    %v5503 = vunpack.c.h.b16 %v5433
    %v5504 = vunpack.c.l.b16 %v5434
    %v5505 = vunpack.c.h.b16 %v5434
    %v5506 = vunpack.c.l.b16 %v5435
    %v5507 = vunpack.c.h.b16 %v5435
    %v5508 = vunpack.c.l.b16 %v5436
    %v5509 = vunpack.c.h.b16 %v5436
    %v5510 = vunpack.c.l.b16 %v5437
    %v5511 = vunpack.c.h.b16 %v5437
    %v5512 = vunpack.c.l.b16 %v5438
    %v5513 = vunpack.c.h.b16 %v5438
    %v5514 = vunpack.c.l.b16 %v5439
    %v5515 = vunpack.c.h.b16 %v5439
    %v5516 = vunpack.c.l.b16 %v5440
    %v5517 = vunpack.c.h.b16 %v5440
    %v5518 = vunpack.c.l.b16 %v5441
    %v5519 = vunpack.c.h.b16 %v5441
    %v5520 = vunpack.c.l.b16 %v5442
    %v5521 = vunpack.c.h.b16 %v5442
    %v5522 = vunpack.c.l.b16 %v5443
    %v5523 = vunpack.c.h.b16 %v5443
    %v5524 = vunpack.c.l.b16 %v5444
    %v5525 = vunpack.c.h.b16 %v5444
    %v5526 = vunpack.c.l.b16 %v5445
    %v5527 = vunpack.c.h.b16 %v5445
    %v5528 = vunpack.c.l.b16 %v5446
    %v5529 = vunpack.c.h.b16 %v5446
    %v5530 = vunpack.c.l.b16 %v5447
    %v5531 = vunpack.c.h.b16 %v5447
    %v5532 = vunpack.c.l.b16 %v5448
    %v5533 = vunpack.c.h.b16 %v5448
    %v5534 = vunpack.c.l.b16 %v5449
    %v5535 = vunpack.c.h.b16 %v5449
    %v5536 = vunpack.c.l.b16 %v5450
    %v5537 = vunpack.c.h.b16 %v5450
    %v5538 = vunpack.c.l.b16 %v5451
    %v5539 = vunpack.c.h.b16 %v5451
    %v5540 = vunpack.c.l.b16 %v5452
    %v5541 = vunpack.c.h.b16 %v5452
    %v5542 = vunpack.c.l.b16 %v5453
    %v5543 = vunpack.c.h.b16 %v5453
    %v5544 = vunpack.c.l.b16 %v5454
    %v5545 = vunpack.c.h.b16 %v5454
    %v5546 = vunpack.c.l.b16 %v5455
    %v5547 = vunpack.c.h.b16 %v5455
    %v5548 = vunpack.c.l.b16 %v5456
    %v5549 = vunpack.c.h.b16 %v5456
    %v5550 = vunpack.c.l.b16 %v5457
    %v5551 = vunpack.c.h.b16 %v5457
    %v5552 = vunpack.c.l.b16 %v5458
    %v5553 = vunpack.c.h.b16 %v5458
    %v5554 = vunpack.c.l.b16 %v5459
    %v5555 = vunpack.c.h.b16 %v5459
    %v5556 = vpack.c.b16 %v5496, %v5492
    %v5557 = vpack.c.b16 %v5497, %v5493
    %v5558 = vpack.c.b16 %v5498, %v5494
    %v5559 = vpack.c.b16 %v5499, %v5495
    %v5560 = vpack.c.b16 %v5504, %v5500
    %v5561 = vpack.c.b16 %v5505, %v5501
    %v5562 = vpack.c.b16 %v5506, %v5502
    %v5563 = vpack.c.b16 %v5507, %v5503
    %v5564 = vpack.c.b16 %v5512, %v5508
    %v5565 = vpack.c.b16 %v5513, %v5509
    %v5566 = vpack.c.b16 %v5514, %v5510
    %v5567 = vpack.c.b16 %v5515, %v5511
    %v5568 = vpack.c.b16 %v5520, %v5516
    %v5569 = vpack.c.b16 %v5521, %v5517
    %v5570 = vpack.c.b16 %v5522, %v5518
    %v5571 = vpack.c.b16 %v5523, %v5519
    %v5572 = vpack.c.b16 %v5528, %v5524
    %v5573 = vpack.c.b16 %v5529, %v5525
    %v5574 = vpack.c.b16 %v5530, %v5526
    %v5575 = vpack.c.b16 %v5531, %v5527
    %v5576 = vpack.c.b16 %v5536, %v5532
    %v5577 = vpack.c.b16 %v5537, %v5533
    %v5578 = vpack.c.b16 %v5538, %v5534
    %v5579 = vpack.c.b16 %v5539, %v5535
    %v5580 = vpack.c.b16 %v5544, %v5540
    %v5581 = vpack.c.b16 %v5545, %v5541
    %v5582 = vpack.c.b16 %v5546, %v5542
    %v5583 = vpack.c.b16 %v5547, %v5543
    %v5584 = vpack.c.b16 %v5552, %v5548
    %v5585 = vpack.c.b16 %v5553, %v5549
    %v5586 = vpack.c.b16 %v5554, %v5550
    %v5587 = vpack.c.b16 %v5555, %v5551
    %5620 = vmatprep.subr.bf16.mxu0 %v5557
    %5621 = vmatpush1.bf16.msra.mxu0 %v5556
    %5622 = vmatprep.subr.bf16.mxu0 %v5561
    %5623 = vmatpush1.bf16.msra.mxu0 %v5560
    %5624 = vmatprep.subr.bf16.mxu0 %v5565
    %5625 = vmatpush1.bf16.msra.mxu0 %v5564
    %5626 = vmatprep.subr.bf16.mxu0 %v5569
    %5627 = vmatpush1.bf16.msra.mxu0 %v5568
    %5628 = vmatprep.subr.bf16.mxu0 %v5573
    %5629 = vmatpush1.bf16.msra.mxu0 %v5572
    %5630 = vmatprep.subr.bf16.mxu0 %v5577
    %5631 = vmatpush1.bf16.msra.mxu0 %v5576
    %5632 = vmatprep.subr.bf16.mxu0 %v5581
    %5633 = vmatpush1.bf16.msra.mxu0 %v5580
    %5634 = vmatprep.subr.bf16.mxu0 %v5585
    %5635 = vmatpush1.bf16.msra.mxu0 %v5584
    %5636 = vmatprep.subr.bf16.mxu0 0
    %5637 = vmatpush1.bf16.msra.mxu0 0
    %5638 = vmatprep.subr.bf16.mxu0 0
    %5639 = vmatpush1.bf16.msra.mxu0 0
    %5640 = vmatprep.subr.bf16.mxu0 0
    %5641 = vmatpush1.bf16.msra.mxu0 0
    %5642 = vmatprep.subr.bf16.mxu0 0
    %5643 = vmatpush1.bf16.msra.mxu0 0
    %5644 = vmatprep.subr.bf16.mxu0 0
    %5645 = vmatpush1.bf16.msra.mxu0 0
    %5646 = vmatprep.subr.bf16.mxu0 0
    %5647 = vmatpush1.bf16.msra.mxu0 0
    %5648 = vmatprep.subr.bf16.mxu0 0
    %5649 = vmatpush1.bf16.msra.mxu0 0
    %5650 = vmatprep.subr.bf16.mxu0 0
    %5651 = vmatpush1.bf16.msra.mxu0 0
    %5652 = vmatprep.mubr.bf16.mxu0 0
    %5653 = vmatmul.mubr.bf16.gmra.mrb[0].mxu0 %v5427
    %v5654 = vpop.f32.mrb[0].mxu0
    %v5655 = vadd.f32 0.0, %v5654
    %v5656 = vpop.f32.mrb[0].mxu0
    %v5657 = vadd.f32 0.0, %v5656
    %v5658 = vpop.f32.mrb[0].mxu0
    %v5659 = vpop.f32.mrb[0].mxu0
    %5660 = vdwg.mxu0
    %5661 = vmatprep.subr.bf16.mxu0 %v5559
    %5662 = vmatpush1.bf16.msra.mxu0 %v5558
    %5663 = vmatprep.subr.bf16.mxu0 %v5563
    %5664 = vmatpush1.bf16.msra.mxu0 %v5562
    %5665 = vmatprep.subr.bf16.mxu0 %v5567
    %5666 = vmatpush1.bf16.msra.mxu0 %v5566
    %5667 = vmatprep.subr.bf16.mxu0 %v5571
    %5668 = vmatpush1.bf16.msra.mxu0 %v5570
    %5669 = vmatprep.subr.bf16.mxu0 %v5575
    %5670 = vmatpush1.bf16.msra.mxu0 %v5574
    %5671 = vmatprep.subr.bf16.mxu0 %v5579
    %5672 = vmatpush1.bf16.msra.mxu0 %v5578
    %5673 = vmatprep.subr.bf16.mxu0 %v5583
    %5674 = vmatpush1.bf16.msra.mxu0 %v5582
    %5675 = vmatprep.subr.bf16.mxu0 %v5587
    %5676 = vmatpush1.bf16.msra.mxu0 %v5586
    %5677 = vmatprep.subr.bf16.mxu0 0
    %5678 = vmatpush1.bf16.msra.mxu0 0
    %5679 = vmatprep.subr.bf16.mxu0 0
    %5680 = vmatpush1.bf16.msra.mxu0 0
    %5681 = vmatprep.subr.bf16.mxu0 0
    %5682 = vmatpush1.bf16.msra.mxu0 0
    %5683 = vmatprep.subr.bf16.mxu0 0
    %5684 = vmatpush1.bf16.msra.mxu0 0
    %5685 = vmatprep.subr.bf16.mxu0 0
    %5686 = vmatpush1.bf16.msra.mxu0 0
    %5687 = vmatprep.subr.bf16.mxu0 0
    %5688 = vmatpush1.bf16.msra.mxu0 0
    %5689 = vmatprep.subr.bf16.mxu0 0
    %5690 = vmatpush1.bf16.msra.mxu0 0
    %5691 = vmatprep.subr.bf16.mxu0 0
    %5692 = vmatpush1.bf16.msra.mxu0 0
    %5693 = vmatprep.mubr.bf16.mxu0 0
    %5694 = vmatmul.mubr.bf16.gmra.mrb[0].mxu0 %v5427
    %v5695 = vpop.f32.mrb[0].mxu0
    %v5696 = vadd.f32 0.0, %v5695
    %v5697 = vpop.f32.mrb[0].mxu0
    %v5698 = vadd.f32 0.0, %v5697
    %v5699 = vpop.f32.mrb[0].mxu0
    %v5700 = vpop.f32.mrb[0].mxu0
    %5701 = vdwg.mxu0
    %v5702 = vadd.f32 %v5423, %v5655
    %v5703 = vadd.f32 %v5424, %v5657
    %v5704 = vadd.f32 %v5425, %v5696
    %v5705 = vadd.f32 %v5426, %v5698
    %v5706 = vtanh.pop %v5702
    %v5707 = vtanh.pop %v5703
    %v5708 = vtanh.pop %v5704
    %v5709 = vtanh.pop %v5705
    %v5710 = vmul.f32 %v5706, 0.5
    %v5711 = vadd.f32 %v5710, 0.5
    %v5712 = vmul.f32 %v5707, 0.5
    %v5713 = vadd.f32 %v5712, 0.5
    %v5714 = vmul.f32 %v5709, 0.5
    %v5715 = vadd.f32 %v5714, 0.5
    %v5716 = vmul.f32 %v5713, %v4844
    %v5717 = vmul.f32 %v5711, %v5708
    %v5718 = vadd.f32 %v5716, %v5717
    %v5719 = vtanh.pop %v5718
    %v5720 = vmul.f32 %v5715, %v5719
    %5721 = vst [vmem:[#allocation3 - $0x2] sm:$0x80] %v5720
    %s5722 = smul.u32 7, 4
    %s5723 = smul.addr %s5722, 8
    %s5724 = scalar_lea.vmem [#allocation2], %s5723
    %v5725 = vld [vmem:[%s5724] sm:$0xff]
    %v5726 = vld [vmem:[%s5724 + $0x8] sm:$0xff]
    %v5727 = vld [vmem:[%s5724 + $0x10] sm:$0xff]
    %v5728 = vld [vmem:[%s5724 + $0x18] sm:$0xff]
    %v5729 = vpack.c.bf16 %v5148, %v5148
    %v5730 = vld [vmem:[%s2] sm:$0xff]
    %v5731 = vld [vmem:[%s2 + $0x8] sm:$0xff]
    %v5732 = vld [vmem:[%s2 + $0x10] sm:$0xff]
    %v5733 = vld [vmem:[%s2 + $0x18] sm:$0xff]
    %v5734 = vld [vmem:[%s2 + $0x20] sm:$0xff]
    %v5735 = vld [vmem:[%s2 + $0x28] sm:$0xff]
    %v5736 = vld [vmem:[%s2 + $0x30] sm:$0xff]
    %v5737 = vld [vmem:[%s2 + $0x38] sm:$0xff]
    %v5738 = vld [vmem:[%s2 + $0x40] sm:$0xff]
    %v5739 = vld [vmem:[%s2 + $0x48] sm:$0xff]
    %v5740 = vld [vmem:[%s2 + $0x50] sm:$0xff]
    %v5741 = vld [vmem:[%s2 + $0x58] sm:$0xff]
    %v5742 = vld [vmem:[%s2 + $0x60] sm:$0xff]
    %v5743 = vld [vmem:[%s2 + $0x68] sm:$0xff]
    %v5744 = vld [vmem:[%s2 + $0x70] sm:$0xff]
    %v5745 = vld [vmem:[%s2 + $0x78] sm:$0xff]
    %v5746 = vld [vmem:[%s2 + $0x80] sm:$0xff]
    %v5747 = vld [vmem:[%s2 + $0x88] sm:$0xff]
    %v5748 = vld [vmem:[%s2 + $0x90] sm:$0xff]
    %v5749 = vld [vmem:[%s2 + $0x98] sm:$0xff]
    %v5750 = vld [vmem:[%s2 + $0xa0] sm:$0xff]
    %v5751 = vld [vmem:[%s2 + $0xa8] sm:$0xff]
    %v5752 = vld [vmem:[%s2 + $0xb0] sm:$0xff]
    %v5753 = vld [vmem:[%s2 + $0xb8] sm:$0xff]
    %v5754 = vld [vmem:[%s2 + $0xc0] sm:$0xff]
    %v5755 = vld [vmem:[%s2 + $0xc8] sm:$0xff]
    %v5756 = vld [vmem:[%s2 + $0xd0] sm:$0xff]
    %v5757 = vld [vmem:[%s2 + $0xd8] sm:$0xff]
    %v5758 = vld [vmem:[%s2 + $0xe0] sm:$0xff]
    %v5759 = vld [vmem:[%s2 + $0xe8] sm:$0xff]
    %v5760 = vld [vmem:[%s2 + $0xf0] sm:$0xff]
    %v5761 = vld [vmem:[%s2 + $0xf8] sm:$0xff]
    %v5794 = vunpack.c.l.b16 %v5730
    %v5795 = vunpack.c.h.b16 %v5730
    %v5796 = vunpack.c.l.b16 %v5731
    %v5797 = vunpack.c.h.b16 %v5731
    %v5798 = vunpack.c.l.b16 %v5732
    %v5799 = vunpack.c.h.b16 %v5732
    %v5800 = vunpack.c.l.b16 %v5733
    %v5801 = vunpack.c.h.b16 %v5733
    %v5802 = vunpack.c.l.b16 %v5734
    %v5803 = vunpack.c.h.b16 %v5734
    %v5804 = vunpack.c.l.b16 %v5735
    %v5805 = vunpack.c.h.b16 %v5735
    %v5806 = vunpack.c.l.b16 %v5736
    %v5807 = vunpack.c.h.b16 %v5736
    %v5808 = vunpack.c.l.b16 %v5737
    %v5809 = vunpack.c.h.b16 %v5737
    %v5810 = vunpack.c.l.b16 %v5738
    %v5811 = vunpack.c.h.b16 %v5738
    %v5812 = vunpack.c.l.b16 %v5739
    %v5813 = vunpack.c.h.b16 %v5739
    %v5814 = vunpack.c.l.b16 %v5740
    %v5815 = vunpack.c.h.b16 %v5740
    %v5816 = vunpack.c.l.b16 %v5741
    %v5817 = vunpack.c.h.b16 %v5741
    %v5818 = vunpack.c.l.b16 %v5742
    %v5819 = vunpack.c.h.b16 %v5742
    %v5820 = vunpack.c.l.b16 %v5743
    %v5821 = vunpack.c.h.b16 %v5743
    %v5822 = vunpack.c.l.b16 %v5744
    %v5823 = vunpack.c.h.b16 %v5744
    %v5824 = vunpack.c.l.b16 %v5745
    %v5825 = vunpack.c.h.b16 %v5745
    %v5826 = vunpack.c.l.b16 %v5746
    %v5827 = vunpack.c.h.b16 %v5746
    %v5828 = vunpack.c.l.b16 %v5747
    %v5829 = vunpack.c.h.b16 %v5747
    %v5830 = vunpack.c.l.b16 %v5748
    %v5831 = vunpack.c.h.b16 %v5748
    %v5832 = vunpack.c.l.b16 %v5749
    %v5833 = vunpack.c.h.b16 %v5749
    %v5834 = vunpack.c.l.b16 %v5750
    %v5835 = vunpack.c.h.b16 %v5750
    %v5836 = vunpack.c.l.b16 %v5751
    %v5837 = vunpack.c.h.b16 %v5751
    %v5838 = vunpack.c.l.b16 %v5752
    %v5839 = vunpack.c.h.b16 %v5752
    %v5840 = vunpack.c.l.b16 %v5753
    %v5841 = vunpack.c.h.b16 %v5753
    %v5842 = vunpack.c.l.b16 %v5754
    %v5843 = vunpack.c.h.b16 %v5754
    %v5844 = vunpack.c.l.b16 %v5755
    %v5845 = vunpack.c.h.b16 %v5755
    %v5846 = vunpack.c.l.b16 %v5756
    %v5847 = vunpack.c.h.b16 %v5756
    %v5848 = vunpack.c.l.b16 %v5757
    %v5849 = vunpack.c.h.b16 %v5757
    %v5850 = vunpack.c.l.b16 %v5758
    %v5851 = vunpack.c.h.b16 %v5758
    %v5852 = vunpack.c.l.b16 %v5759
    %v5853 = vunpack.c.h.b16 %v5759
    %v5854 = vunpack.c.l.b16 %v5760
    %v5855 = vunpack.c.h.b16 %v5760
    %v5856 = vunpack.c.l.b16 %v5761
    %v5857 = vunpack.c.h.b16 %v5761
    %v5858 = vpack.c.b16 %v5798, %v5794
    %v5859 = vpack.c.b16 %v5799, %v5795
    %v5860 = vpack.c.b16 %v5800, %v5796
    %v5861 = vpack.c.b16 %v5801, %v5797
    %v5862 = vpack.c.b16 %v5806, %v5802
    %v5863 = vpack.c.b16 %v5807, %v5803
    %v5864 = vpack.c.b16 %v5808, %v5804
    %v5865 = vpack.c.b16 %v5809, %v5805
    %v5866 = vpack.c.b16 %v5814, %v5810
    %v5867 = vpack.c.b16 %v5815, %v5811
    %v5868 = vpack.c.b16 %v5816, %v5812
    %v5869 = vpack.c.b16 %v5817, %v5813
    %v5870 = vpack.c.b16 %v5822, %v5818
    %v5871 = vpack.c.b16 %v5823, %v5819
    %v5872 = vpack.c.b16 %v5824, %v5820
    %v5873 = vpack.c.b16 %v5825, %v5821
    %v5874 = vpack.c.b16 %v5830, %v5826
    %v5875 = vpack.c.b16 %v5831, %v5827
    %v5876 = vpack.c.b16 %v5832, %v5828
    %v5877 = vpack.c.b16 %v5833, %v5829
    %v5878 = vpack.c.b16 %v5838, %v5834
    %v5879 = vpack.c.b16 %v5839, %v5835
    %v5880 = vpack.c.b16 %v5840, %v5836
    %v5881 = vpack.c.b16 %v5841, %v5837
    %v5882 = vpack.c.b16 %v5846, %v5842
    %v5883 = vpack.c.b16 %v5847, %v5843
    %v5884 = vpack.c.b16 %v5848, %v5844
    %v5885 = vpack.c.b16 %v5849, %v5845
    %v5886 = vpack.c.b16 %v5854, %v5850
    %v5887 = vpack.c.b16 %v5855, %v5851
    %v5888 = vpack.c.b16 %v5856, %v5852
    %v5889 = vpack.c.b16 %v5857, %v5853
    %5922 = vmatprep.subr.bf16.mxu0 %v5859
    %5923 = vmatpush1.bf16.msra.mxu0 %v5858
    %5924 = vmatprep.subr.bf16.mxu0 %v5863
    %5925 = vmatpush1.bf16.msra.mxu0 %v5862
    %5926 = vmatprep.subr.bf16.mxu0 %v5867
    %5927 = vmatpush1.bf16.msra.mxu0 %v5866
    %5928 = vmatprep.subr.bf16.mxu0 %v5871
    %5929 = vmatpush1.bf16.msra.mxu0 %v5870
    %5930 = vmatprep.subr.bf16.mxu0 %v5875
    %5931 = vmatpush1.bf16.msra.mxu0 %v5874
    %5932 = vmatprep.subr.bf16.mxu0 %v5879
    %5933 = vmatpush1.bf16.msra.mxu0 %v5878
    %5934 = vmatprep.subr.bf16.mxu0 %v5883
    %5935 = vmatpush1.bf16.msra.mxu0 %v5882
    %5936 = vmatprep.subr.bf16.mxu0 %v5887
    %5937 = vmatpush1.bf16.msra.mxu0 %v5886
    %5938 = vmatprep.subr.bf16.mxu0 0
    %5939 = vmatpush1.bf16.msra.mxu0 0
    %5940 = vmatprep.subr.bf16.mxu0 0
    %5941 = vmatpush1.bf16.msra.mxu0 0
    %5942 = vmatprep.subr.bf16.mxu0 0
    %5943 = vmatpush1.bf16.msra.mxu0 0
    %5944 = vmatprep.subr.bf16.mxu0 0
    %5945 = vmatpush1.bf16.msra.mxu0 0
    %5946 = vmatprep.subr.bf16.mxu0 0
    %5947 = vmatpush1.bf16.msra.mxu0 0
    %5948 = vmatprep.subr.bf16.mxu0 0
    %5949 = vmatpush1.bf16.msra.mxu0 0
    %5950 = vmatprep.subr.bf16.mxu0 0
    %5951 = vmatpush1.bf16.msra.mxu0 0
    %5952 = vmatprep.subr.bf16.mxu0 0
    %5953 = vmatpush1.bf16.msra.mxu0 0
    %5954 = vmatprep.mubr.bf16.mxu0 0
    %5955 = vmatmul.mubr.bf16.gmra.mrb[0].mxu0 %v5729
    %v5956 = vpop.f32.mrb[0].mxu0
    %v5957 = vadd.f32 0.0, %v5956
    %v5958 = vpop.f32.mrb[0].mxu0
    %v5959 = vadd.f32 0.0, %v5958
    %v5960 = vpop.f32.mrb[0].mxu0
    %v5961 = vpop.f32.mrb[0].mxu0
    %5962 = vdwg.mxu0
    %5963 = vmatprep.subr.bf16.mxu0 %v5861
    %5964 = vmatpush1.bf16.msra.mxu0 %v5860
    %5965 = vmatprep.subr.bf16.mxu0 %v5865
    %5966 = vmatpush1.bf16.msra.mxu0 %v5864
    %5967 = vmatprep.subr.bf16.mxu0 %v5869
    %5968 = vmatpush1.bf16.msra.mxu0 %v5868
    %5969 = vmatprep.subr.bf16.mxu0 %v5873
    %5970 = vmatpush1.bf16.msra.mxu0 %v5872
    %5971 = vmatprep.subr.bf16.mxu0 %v5877
    %5972 = vmatpush1.bf16.msra.mxu0 %v5876
    %5973 = vmatprep.subr.bf16.mxu0 %v5881
    %5974 = vmatpush1.bf16.msra.mxu0 %v5880
    %5975 = vmatprep.subr.bf16.mxu0 %v5885
    %5976 = vmatpush1.bf16.msra.mxu0 %v5884
    %5977 = vmatprep.subr.bf16.mxu0 %v5889
    %5978 = vmatpush1.bf16.msra.mxu0 %v5888
    %5979 = vmatprep.subr.bf16.mxu0 0
    %5980 = vmatpush1.bf16.msra.mxu0 0
    %5981 = vmatprep.subr.bf16.mxu0 0
    %5982 = vmatpush1.bf16.msra.mxu0 0
    %5983 = vmatprep.subr.bf16.mxu0 0
    %5984 = vmatpush1.bf16.msra.mxu0 0
    %5985 = vmatprep.subr.bf16.mxu0 0
    %5986 = vmatpush1.bf16.msra.mxu0 0
    %5987 = vmatprep.subr.bf16.mxu0 0
    %5988 = vmatpush1.bf16.msra.mxu0 0
    %5989 = vmatprep.subr.bf16.mxu0 0
    %5990 = vmatpush1.bf16.msra.mxu0 0
    %5991 = vmatprep.subr.bf16.mxu0 0
    %5992 = vmatpush1.bf16.msra.mxu0 0
    %5993 = vmatprep.subr.bf16.mxu0 0
    %5994 = vmatpush1.bf16.msra.mxu0 0
    %5995 = vmatprep.mubr.bf16.mxu0 0
    %5996 = vmatmul.mubr.bf16.gmra.mrb[0].mxu0 %v5729
    %v5997 = vpop.f32.mrb[0].mxu0
    %v5998 = vadd.f32 0.0, %v5997
    %v5999 = vpop.f32.mrb[0].mxu0
    %v6000 = vadd.f32 0.0, %v5999
    %v6001 = vpop.f32.mrb[0].mxu0
    %v6002 = vpop.f32.mrb[0].mxu0
    %6003 = vdwg.mxu0
    %v6004 = vadd.f32 %v5725, %v5957
    %v6005 = vadd.f32 %v5726, %v5959
    %v6006 = vadd.f32 %v5727, %v5998
    %v6007 = vadd.f32 %v5728, %v6000
    %v6008 = vtanh.pop %v6004
    %v6009 = vtanh.pop %v6005
    %v6010 = vtanh.pop %v6006
    %v6011 = vtanh.pop %v6007
    %v6012 = vmul.f32 %v6008, 0.5
    %v6013 = vadd.f32 %v6012, 0.5
    %v6014 = vmul.f32 %v6009, 0.5
    %v6015 = vadd.f32 %v6014, 0.5
    %v6016 = vmul.f32 %v6011, 0.5
    %v6017 = vadd.f32 %v6016, 0.5
    %v6018 = vmul.f32 %v6015, %v5146
    %v6019 = vmul.f32 %v6013, %v6010
    %v6020 = vadd.f32 %v6018, %v6019
    %v6021 = vtanh.pop %v6020
    %v6022 = vmul.f32 %v6017, %v6021
    %v6023 = vld [vmem:[%s4] sm:$0xff]
    %v6024 = vld [vmem:[%s4 + $0x8] sm:$0xff]
    %v6025 = vld [vmem:[%s4 + $0x10] sm:$0xff]
    %v6026 = vld [vmem:[%s4 + $0x18] sm:$0xff]
    %v6027 = vld [vmem:[%s4 + $0x20] sm:$0xff]
    %v6028 = vld [vmem:[%s4 + $0x28] sm:$0xff]
    %v6029 = vld [vmem:[%s4 + $0x30] sm:$0xff]
    %v6030 = vld [vmem:[%s4 + $0x38] sm:$0xff]
    %v6031 = vld [vmem:[%s4 + $0x40] sm:$0xff]
    %v6032 = vld [vmem:[%s4 + $0x48] sm:$0xff]
    %v6033 = vld [vmem:[%s4 + $0x50] sm:$0xff]
    %v6034 = vld [vmem:[%s4 + $0x58] sm:$0xff]
    %v6035 = vld [vmem:[%s4 + $0x60] sm:$0xff]
    %v6036 = vld [vmem:[%s4 + $0x68] sm:$0xff]
    %v6037 = vld [vmem:[%s4 + $0x70] sm:$0xff]
    %v6038 = vld [vmem:[%s4 + $0x78] sm:$0xff]
    %v6039 = vld [vmem:[%s4 + $0x80] sm:$0xff]
    %v6040 = vld [vmem:[%s4 + $0x88] sm:$0xff]
    %v6041 = vld [vmem:[%s4 + $0x90] sm:$0xff]
    %v6042 = vld [vmem:[%s4 + $0x98] sm:$0xff]
    %v6043 = vld [vmem:[%s4 + $0xa0] sm:$0xff]
    %v6044 = vld [vmem:[%s4 + $0xa8] sm:$0xff]
    %v6045 = vld [vmem:[%s4 + $0xb0] sm:$0xff]
    %v6046 = vld [vmem:[%s4 + $0xb8] sm:$0xff]
    %v6047 = vld [vmem:[%s4 + $0xc0] sm:$0xff]
    %v6048 = vld [vmem:[%s4 + $0xc8] sm:$0xff]
    %v6049 = vld [vmem:[%s4 + $0xd0] sm:$0xff]
    %v6050 = vld [vmem:[%s4 + $0xd8] sm:$0xff]
    %v6051 = vld [vmem:[%s4 + $0xe0] sm:$0xff]
    %v6052 = vld [vmem:[%s4 + $0xe8] sm:$0xff]
    %v6053 = vld [vmem:[%s4 + $0xf0] sm:$0xff]
    %v6054 = vld [vmem:[%s4 + $0xf8] sm:$0xff]
    %v6087 = vunpack.c.l.b16 %v6023
    %v6088 = vunpack.c.h.b16 %v6023
    %v6089 = vunpack.c.l.b16 %v6024
    %v6090 = vunpack.c.h.b16 %v6024
    %v6091 = vunpack.c.l.b16 %v6025
    %v6092 = vunpack.c.h.b16 %v6025
    %v6093 = vunpack.c.l.b16 %v6026
    %v6094 = vunpack.c.h.b16 %v6026
    %v6095 = vunpack.c.l.b16 %v6027
    %v6096 = vunpack.c.h.b16 %v6027
    %v6097 = vunpack.c.l.b16 %v6028
    %v6098 = vunpack.c.h.b16 %v6028
    %v6099 = vunpack.c.l.b16 %v6029
    %v6100 = vunpack.c.h.b16 %v6029
    %v6101 = vunpack.c.l.b16 %v6030
    %v6102 = vunpack.c.h.b16 %v6030
    %v6103 = vunpack.c.l.b16 %v6031
    %v6104 = vunpack.c.h.b16 %v6031
    %v6105 = vunpack.c.l.b16 %v6032
    %v6106 = vunpack.c.h.b16 %v6032
    %v6107 = vunpack.c.l.b16 %v6033
    %v6108 = vunpack.c.h.b16 %v6033
    %v6109 = vunpack.c.l.b16 %v6034
    %v6110 = vunpack.c.h.b16 %v6034
    %v6111 = vunpack.c.l.b16 %v6035
    %v6112 = vunpack.c.h.b16 %v6035
    %v6113 = vunpack.c.l.b16 %v6036
    %v6114 = vunpack.c.h.b16 %v6036
    %v6115 = vunpack.c.l.b16 %v6037
    %v6116 = vunpack.c.h.b16 %v6037
    %v6117 = vunpack.c.l.b16 %v6038
    %v6118 = vunpack.c.h.b16 %v6038
    %v6119 = vunpack.c.l.b16 %v6039
    %v6120 = vunpack.c.h.b16 %v6039
    %v6121 = vunpack.c.l.b16 %v6040
    %v6122 = vunpack.c.h.b16 %v6040
    %v6123 = vunpack.c.l.b16 %v6041
    %v6124 = vunpack.c.h.b16 %v6041
    %v6125 = vunpack.c.l.b16 %v6042
    %v6126 = vunpack.c.h.b16 %v6042
    %v6127 = vunpack.c.l.b16 %v6043
    %v6128 = vunpack.c.h.b16 %v6043
    %v6129 = vunpack.c.l.b16 %v6044
    %v6130 = vunpack.c.h.b16 %v6044
    %v6131 = vunpack.c.l.b16 %v6045
    %v6132 = vunpack.c.h.b16 %v6045
    %v6133 = vunpack.c.l.b16 %v6046
    %v6134 = vunpack.c.h.b16 %v6046
    %v6135 = vunpack.c.l.b16 %v6047
    %v6136 = vunpack.c.h.b16 %v6047
    %v6137 = vunpack.c.l.b16 %v6048
    %v6138 = vunpack.c.h.b16 %v6048
    %v6139 = vunpack.c.l.b16 %v6049
    %v6140 = vunpack.c.h.b16 %v6049
    %v6141 = vunpack.c.l.b16 %v6050
    %v6142 = vunpack.c.h.b16 %v6050
    %v6143 = vunpack.c.l.b16 %v6051
    %v6144 = vunpack.c.h.b16 %v6051
    %v6145 = vunpack.c.l.b16 %v6052
    %v6146 = vunpack.c.h.b16 %v6052
    %v6147 = vunpack.c.l.b16 %v6053
    %v6148 = vunpack.c.h.b16 %v6053
    %v6149 = vunpack.c.l.b16 %v6054
    %v6150 = vunpack.c.h.b16 %v6054
    %v6151 = vpack.c.b16 %v6091, %v6087
    %v6152 = vpack.c.b16 %v6092, %v6088
    %v6153 = vpack.c.b16 %v6093, %v6089
    %v6154 = vpack.c.b16 %v6094, %v6090
    %v6155 = vpack.c.b16 %v6099, %v6095
    %v6156 = vpack.c.b16 %v6100, %v6096
    %v6157 = vpack.c.b16 %v6101, %v6097
    %v6158 = vpack.c.b16 %v6102, %v6098
    %v6159 = vpack.c.b16 %v6107, %v6103
    %v6160 = vpack.c.b16 %v6108, %v6104
    %v6161 = vpack.c.b16 %v6109, %v6105
    %v6162 = vpack.c.b16 %v6110, %v6106
    %v6163 = vpack.c.b16 %v6115, %v6111
    %v6164 = vpack.c.b16 %v6116, %v6112
    %v6165 = vpack.c.b16 %v6117, %v6113
    %v6166 = vpack.c.b16 %v6118, %v6114
    %v6167 = vpack.c.b16 %v6123, %v6119
    %v6168 = vpack.c.b16 %v6124, %v6120
    %v6169 = vpack.c.b16 %v6125, %v6121
    %v6170 = vpack.c.b16 %v6126, %v6122
    %v6171 = vpack.c.b16 %v6131, %v6127
    %v6172 = vpack.c.b16 %v6132, %v6128
    %v6173 = vpack.c.b16 %v6133, %v6129
    %v6174 = vpack.c.b16 %v6134, %v6130
    %v6175 = vpack.c.b16 %v6139, %v6135
    %v6176 = vpack.c.b16 %v6140, %v6136
    %v6177 = vpack.c.b16 %v6141, %v6137
    %v6178 = vpack.c.b16 %v6142, %v6138
    %v6179 = vpack.c.b16 %v6147, %v6143
    %v6180 = vpack.c.b16 %v6148, %v6144
    %v6181 = vpack.c.b16 %v6149, %v6145
    %v6182 = vpack.c.b16 %v6150, %v6146
    %6215 = vmatprep.subr.bf16.mxu0 %v6152
    %6216 = vmatpush1.bf16.msra.mxu0 %v6151
    %6217 = vmatprep.subr.bf16.mxu0 %v6156
    %6218 = vmatpush1.bf16.msra.mxu0 %v6155
    %6219 = vmatprep.subr.bf16.mxu0 %v6160
    %6220 = vmatpush1.bf16.msra.mxu0 %v6159
    %6221 = vmatprep.subr.bf16.mxu0 %v6164
    %6222 = vmatpush1.bf16.msra.mxu0 %v6163
    %6223 = vmatprep.subr.bf16.mxu0 %v6168
    %6224 = vmatpush1.bf16.msra.mxu0 %v6167
    %6225 = vmatprep.subr.bf16.mxu0 %v6172
    %6226 = vmatpush1.bf16.msra.mxu0 %v6171
    %6227 = vmatprep.subr.bf16.mxu0 %v6176
    %6228 = vmatpush1.bf16.msra.mxu0 %v6175
    %6229 = vmatprep.subr.bf16.mxu0 %v6180
    %6230 = vmatpush1.bf16.msra.mxu0 %v6179
    %6231 = vmatprep.subr.bf16.mxu0 0
    %6232 = vmatpush1.bf16.msra.mxu0 0
    %6233 = vmatprep.subr.bf16.mxu0 0
    %6234 = vmatpush1.bf16.msra.mxu0 0
    %6235 = vmatprep.subr.bf16.mxu0 0
    %6236 = vmatpush1.bf16.msra.mxu0 0
    %6237 = vmatprep.subr.bf16.mxu0 0
    %6238 = vmatpush1.bf16.msra.mxu0 0
    %6239 = vmatprep.subr.bf16.mxu0 0
    %6240 = vmatpush1.bf16.msra.mxu0 0
    %6241 = vmatprep.subr.bf16.mxu0 0
    %6242 = vmatpush1.bf16.msra.mxu0 0
    %6243 = vmatprep.subr.bf16.mxu0 0
    %6244 = vmatpush1.bf16.msra.mxu0 0
    %6245 = vmatprep.subr.bf16.mxu0 0
    %6246 = vmatpush1.bf16.msra.mxu0 0
    %6247 = vmatprep.mubr.bf16.mxu0 0
    %6248 = vmatmul.mubr.bf16.gmra.mrb[0].mxu0 %v5729
    %v6249 = vpop.f32.mrb[0].mxu0
    %v6250 = vadd.f32 0.0, %v6249
    %v6251 = vpop.f32.mrb[0].mxu0
    %v6252 = vadd.f32 0.0, %v6251
    %v6253 = vpop.f32.mrb[0].mxu0
    %v6254 = vpop.f32.mrb[0].mxu0
    %6255 = vdwg.mxu0
    %6256 = vmatprep.subr.bf16.mxu0 %v6154
    %6257 = vmatpush1.bf16.msra.mxu0 %v6153
    %6258 = vmatprep.subr.bf16.mxu0 %v6158
    %6259 = vmatpush1.bf16.msra.mxu0 %v6157
    %6260 = vmatprep.subr.bf16.mxu0 %v6162
    %6261 = vmatpush1.bf16.msra.mxu0 %v6161
    %6262 = vmatprep.subr.bf16.mxu0 %v6166
    %6263 = vmatpush1.bf16.msra.mxu0 %v6165
    %6264 = vmatprep.subr.bf16.mxu0 %v6170
    %6265 = vmatpush1.bf16.msra.mxu0 %v6169
    %6266 = vmatprep.subr.bf16.mxu0 %v6174
    %6267 = vmatpush1.bf16.msra.mxu0 %v6173
    %6268 = vmatprep.subr.bf16.mxu0 %v6178
    %6269 = vmatpush1.bf16.msra.mxu0 %v6177
    %6270 = vmatprep.subr.bf16.mxu0 %v6182
    %6271 = vmatpush1.bf16.msra.mxu0 %v6181
    %6272 = vmatprep.subr.bf16.mxu0 0
    %6273 = vmatpush1.bf16.msra.mxu0 0
    %6274 = vmatprep.subr.bf16.mxu0 0
    %6275 = vmatpush1.bf16.msra.mxu0 0
    %6276 = vmatprep.subr.bf16.mxu0 0
    %6277 = vmatpush1.bf16.msra.mxu0 0
    %6278 = vmatprep.subr.bf16.mxu0 0
    %6279 = vmatpush1.bf16.msra.mxu0 0
    %6280 = vmatprep.subr.bf16.mxu0 0
    %6281 = vmatpush1.bf16.msra.mxu0 0
    %6282 = vmatprep.subr.bf16.mxu0 0
    %6283 = vmatpush1.bf16.msra.mxu0 0
    %6284 = vmatprep.subr.bf16.mxu0 0
    %6285 = vmatpush1.bf16.msra.mxu0 0
    %6286 = vmatprep.subr.bf16.mxu0 0
    %6287 = vmatpush1.bf16.msra.mxu0 0
    %6288 = vmatprep.mubr.bf16.mxu0 0
    %6289 = vmatmul.mubr.bf16.gmra.mrb[0].mxu0 %v5729
    %v6290 = vpop.f32.mrb[0].mxu0
    %v6291 = vadd.f32 0.0, %v6290
    %v6292 = vpop.f32.mrb[0].mxu0
    %v6293 = vadd.f32 0.0, %v6292
    %v6294 = vpop.f32.mrb[0].mxu0
    %v6295 = vpop.f32.mrb[0].mxu0
    %6296 = vdwg.mxu0
    %v6297 = vadd.f32 %v443, %v6250
    %v6298 = vadd.f32 %v447, %v6252
    %v6299 = vadd.f32 %v451, %v6291
    %v6300 = vadd.f32 %v455, %v6293
    %v6301 = vpack.c.bf16 %v5720, %v5720
    %v6302 = vld [vmem:[%s5] sm:$0xff]
    %v6303 = vld [vmem:[%s5 + $0x8] sm:$0xff]
    %v6304 = vld [vmem:[%s5 + $0x10] sm:$0xff]
    %v6305 = vld [vmem:[%s5 + $0x18] sm:$0xff]
    %v6306 = vld [vmem:[%s5 + $0x20] sm:$0xff]
    %v6307 = vld [vmem:[%s5 + $0x28] sm:$0xff]
    %v6308 = vld [vmem:[%s5 + $0x30] sm:$0xff]
    %v6309 = vld [vmem:[%s5 + $0x38] sm:$0xff]
    %v6310 = vld [vmem:[%s5 + $0x40] sm:$0xff]
    %v6311 = vld [vmem:[%s5 + $0x48] sm:$0xff]
    %v6312 = vld [vmem:[%s5 + $0x50] sm:$0xff]
    %v6313 = vld [vmem:[%s5 + $0x58] sm:$0xff]
    %v6314 = vld [vmem:[%s5 + $0x60] sm:$0xff]
    %v6315 = vld [vmem:[%s5 + $0x68] sm:$0xff]
    %v6316 = vld [vmem:[%s5 + $0x70] sm:$0xff]
    %v6317 = vld [vmem:[%s5 + $0x78] sm:$0xff]
    %v6318 = vld [vmem:[%s5 + $0x80] sm:$0xff]
    %v6319 = vld [vmem:[%s5 + $0x88] sm:$0xff]
    %v6320 = vld [vmem:[%s5 + $0x90] sm:$0xff]
    %v6321 = vld [vmem:[%s5 + $0x98] sm:$0xff]
    %v6322 = vld [vmem:[%s5 + $0xa0] sm:$0xff]
    %v6323 = vld [vmem:[%s5 + $0xa8] sm:$0xff]
    %v6324 = vld [vmem:[%s5 + $0xb0] sm:$0xff]
    %v6325 = vld [vmem:[%s5 + $0xb8] sm:$0xff]
    %v6326 = vld [vmem:[%s5 + $0xc0] sm:$0xff]
    %v6327 = vld [vmem:[%s5 + $0xc8] sm:$0xff]
    %v6328 = vld [vmem:[%s5 + $0xd0] sm:$0xff]
    %v6329 = vld [vmem:[%s5 + $0xd8] sm:$0xff]
    %v6330 = vld [vmem:[%s5 + $0xe0] sm:$0xff]
    %v6331 = vld [vmem:[%s5 + $0xe8] sm:$0xff]
    %v6332 = vld [vmem:[%s5 + $0xf0] sm:$0xff]
    %v6333 = vld [vmem:[%s5 + $0xf8] sm:$0xff]
    %v6366 = vunpack.c.l.b16 %v6302
    %v6367 = vunpack.c.h.b16 %v6302
    %v6368 = vunpack.c.l.b16 %v6303
    %v6369 = vunpack.c.h.b16 %v6303
    %v6370 = vunpack.c.l.b16 %v6304
    %v6371 = vunpack.c.h.b16 %v6304
    %v6372 = vunpack.c.l.b16 %v6305
    %v6373 = vunpack.c.h.b16 %v6305
    %v6374 = vunpack.c.l.b16 %v6306
    %v6375 = vunpack.c.h.b16 %v6306
    %v6376 = vunpack.c.l.b16 %v6307
    %v6377 = vunpack.c.h.b16 %v6307
    %v6378 = vunpack.c.l.b16 %v6308
    %v6379 = vunpack.c.h.b16 %v6308
    %v6380 = vunpack.c.l.b16 %v6309
    %v6381 = vunpack.c.h.b16 %v6309
    %v6382 = vunpack.c.l.b16 %v6310
    %v6383 = vunpack.c.h.b16 %v6310
    %v6384 = vunpack.c.l.b16 %v6311
    %v6385 = vunpack.c.h.b16 %v6311
    %v6386 = vunpack.c.l.b16 %v6312
    %v6387 = vunpack.c.h.b16 %v6312
    %v6388 = vunpack.c.l.b16 %v6313
    %v6389 = vunpack.c.h.b16 %v6313
    %v6390 = vunpack.c.l.b16 %v6314
    %v6391 = vunpack.c.h.b16 %v6314
    %v6392 = vunpack.c.l.b16 %v6315
    %v6393 = vunpack.c.h.b16 %v6315
    %v6394 = vunpack.c.l.b16 %v6316
    %v6395 = vunpack.c.h.b16 %v6316
    %v6396 = vunpack.c.l.b16 %v6317
    %v6397 = vunpack.c.h.b16 %v6317
    %v6398 = vunpack.c.l.b16 %v6318
    %v6399 = vunpack.c.h.b16 %v6318
    %v6400 = vunpack.c.l.b16 %v6319
    %v6401 = vunpack.c.h.b16 %v6319
    %v6402 = vunpack.c.l.b16 %v6320
    %v6403 = vunpack.c.h.b16 %v6320
    %v6404 = vunpack.c.l.b16 %v6321
    %v6405 = vunpack.c.h.b16 %v6321
    %v6406 = vunpack.c.l.b16 %v6322
    %v6407 = vunpack.c.h.b16 %v6322
    %v6408 = vunpack.c.l.b16 %v6323
    %v6409 = vunpack.c.h.b16 %v6323
    %v6410 = vunpack.c.l.b16 %v6324
    %v6411 = vunpack.c.h.b16 %v6324
    %v6412 = vunpack.c.l.b16 %v6325
    %v6413 = vunpack.c.h.b16 %v6325
    %v6414 = vunpack.c.l.b16 %v6326
    %v6415 = vunpack.c.h.b16 %v6326
    %v6416 = vunpack.c.l.b16 %v6327
    %v6417 = vunpack.c.h.b16 %v6327
    %v6418 = vunpack.c.l.b16 %v6328
    %v6419 = vunpack.c.h.b16 %v6328
    %v6420 = vunpack.c.l.b16 %v6329
    %v6421 = vunpack.c.h.b16 %v6329
    %v6422 = vunpack.c.l.b16 %v6330
    %v6423 = vunpack.c.h.b16 %v6330
    %v6424 = vunpack.c.l.b16 %v6331
    %v6425 = vunpack.c.h.b16 %v6331
    %v6426 = vunpack.c.l.b16 %v6332
    %v6427 = vunpack.c.h.b16 %v6332
    %v6428 = vunpack.c.l.b16 %v6333
    %v6429 = vunpack.c.h.b16 %v6333
    %v6430 = vpack.c.b16 %v6370, %v6366
    %v6431 = vpack.c.b16 %v6371, %v6367
    %v6432 = vpack.c.b16 %v6372, %v6368
    %v6433 = vpack.c.b16 %v6373, %v6369
    %v6434 = vpack.c.b16 %v6378, %v6374
    %v6435 = vpack.c.b16 %v6379, %v6375
    %v6436 = vpack.c.b16 %v6380, %v6376
    %v6437 = vpack.c.b16 %v6381, %v6377
    %v6438 = vpack.c.b16 %v6386, %v6382
    %v6439 = vpack.c.b16 %v6387, %v6383
    %v6440 = vpack.c.b16 %v6388, %v6384
    %v6441 = vpack.c.b16 %v6389, %v6385
    %v6442 = vpack.c.b16 %v6394, %v6390
    %v6443 = vpack.c.b16 %v6395, %v6391
    %v6444 = vpack.c.b16 %v6396, %v6392
    %v6445 = vpack.c.b16 %v6397, %v6393
    %v6446 = vpack.c.b16 %v6402, %v6398
    %v6447 = vpack.c.b16 %v6403, %v6399
    %v6448 = vpack.c.b16 %v6404, %v6400
    %v6449 = vpack.c.b16 %v6405, %v6401
    %v6450 = vpack.c.b16 %v6410, %v6406
    %v6451 = vpack.c.b16 %v6411, %v6407
    %v6452 = vpack.c.b16 %v6412, %v6408
    %v6453 = vpack.c.b16 %v6413, %v6409
    %v6454 = vpack.c.b16 %v6418, %v6414
    %v6455 = vpack.c.b16 %v6419, %v6415
    %v6456 = vpack.c.b16 %v6420, %v6416
    %v6457 = vpack.c.b16 %v6421, %v6417
    %v6458 = vpack.c.b16 %v6426, %v6422
    %v6459 = vpack.c.b16 %v6427, %v6423
    %v6460 = vpack.c.b16 %v6428, %v6424
    %v6461 = vpack.c.b16 %v6429, %v6425
    %6494 = vmatprep.subr.bf16.mxu0 %v6431
    %6495 = vmatpush1.bf16.msra.mxu0 %v6430
    %6496 = vmatprep.subr.bf16.mxu0 %v6435
    %6497 = vmatpush1.bf16.msra.mxu0 %v6434
    %6498 = vmatprep.subr.bf16.mxu0 %v6439
    %6499 = vmatpush1.bf16.msra.mxu0 %v6438
    %6500 = vmatprep.subr.bf16.mxu0 %v6443
    %6501 = vmatpush1.bf16.msra.mxu0 %v6442
    %6502 = vmatprep.subr.bf16.mxu0 %v6447
    %6503 = vmatpush1.bf16.msra.mxu0 %v6446
    %6504 = vmatprep.subr.bf16.mxu0 %v6451
    %6505 = vmatpush1.bf16.msra.mxu0 %v6450
    %6506 = vmatprep.subr.bf16.mxu0 %v6455
    %6507 = vmatpush1.bf16.msra.mxu0 %v6454
    %6508 = vmatprep.subr.bf16.mxu0 %v6459
    %6509 = vmatpush1.bf16.msra.mxu0 %v6458
    %6510 = vmatprep.subr.bf16.mxu0 0
    %6511 = vmatpush1.bf16.msra.mxu0 0
    %6512 = vmatprep.subr.bf16.mxu0 0
    %6513 = vmatpush1.bf16.msra.mxu0 0
    %6514 = vmatprep.subr.bf16.mxu0 0
    %6515 = vmatpush1.bf16.msra.mxu0 0
    %6516 = vmatprep.subr.bf16.mxu0 0
    %6517 = vmatpush1.bf16.msra.mxu0 0
    %6518 = vmatprep.subr.bf16.mxu0 0
    %6519 = vmatpush1.bf16.msra.mxu0 0
    %6520 = vmatprep.subr.bf16.mxu0 0
    %6521 = vmatpush1.bf16.msra.mxu0 0
    %6522 = vmatprep.subr.bf16.mxu0 0
    %6523 = vmatpush1.bf16.msra.mxu0 0
    %6524 = vmatprep.subr.bf16.mxu0 0
    %6525 = vmatpush1.bf16.msra.mxu0 0
    %6526 = vmatprep.mubr.bf16.mxu0 0
    %6527 = vmatmul.mubr.bf16.gmra.mrb[0].mxu0 %v6301
    %v6528 = vpop.f32.mrb[0].mxu0
    %v6529 = vadd.f32 0.0, %v6528
    %v6530 = vpop.f32.mrb[0].mxu0
    %v6531 = vadd.f32 0.0, %v6530
    %v6532 = vpop.f32.mrb[0].mxu0
    %v6533 = vpop.f32.mrb[0].mxu0
    %6534 = vdwg.mxu0
    %6535 = vmatprep.subr.bf16.mxu0 %v6433
    %6536 = vmatpush1.bf16.msra.mxu0 %v6432
    %6537 = vmatprep.subr.bf16.mxu0 %v6437
    %6538 = vmatpush1.bf16.msra.mxu0 %v6436
    %6539 = vmatprep.subr.bf16.mxu0 %v6441
    %6540 = vmatpush1.bf16.msra.mxu0 %v6440
    %6541 = vmatprep.subr.bf16.mxu0 %v6445
    %6542 = vmatpush1.bf16.msra.mxu0 %v6444
    %6543 = vmatprep.subr.bf16.mxu0 %v6449
    %6544 = vmatpush1.bf16.msra.mxu0 %v6448
    %6545 = vmatprep.subr.bf16.mxu0 %v6453
    %6546 = vmatpush1.bf16.msra.mxu0 %v6452
    %6547 = vmatprep.subr.bf16.mxu0 %v6457
    %6548 = vmatpush1.bf16.msra.mxu0 %v6456
    %6549 = vmatprep.subr.bf16.mxu0 %v6461
    %6550 = vmatpush1.bf16.msra.mxu0 %v6460
    %6551 = vmatprep.subr.bf16.mxu0 0
    %6552 = vmatpush1.bf16.msra.mxu0 0
    %6553 = vmatprep.subr.bf16.mxu0 0
    %6554 = vmatpush1.bf16.msra.mxu0 0
    %6555 = vmatprep.subr.bf16.mxu0 0
    %6556 = vmatpush1.bf16.msra.mxu0 0
    %6557 = vmatprep.subr.bf16.mxu0 0
    %6558 = vmatpush1.bf16.msra.mxu0 0
    %6559 = vmatprep.subr.bf16.mxu0 0
    %6560 = vmatpush1.bf16.msra.mxu0 0
    %6561 = vmatprep.subr.bf16.mxu0 0
    %6562 = vmatpush1.bf16.msra.mxu0 0
    %6563 = vmatprep.subr.bf16.mxu0 0
    %6564 = vmatpush1.bf16.msra.mxu0 0
    %6565 = vmatprep.subr.bf16.mxu0 0
    %6566 = vmatpush1.bf16.msra.mxu0 0
    %6567 = vmatprep.mubr.bf16.mxu0 0
    %6568 = vmatmul.mubr.bf16.gmra.mrb[0].mxu0 %v6301
    %v6569 = vpop.f32.mrb[0].mxu0
    %v6570 = vadd.f32 0.0, %v6569
    %v6571 = vpop.f32.mrb[0].mxu0
    %v6572 = vadd.f32 0.0, %v6571
    %v6573 = vpop.f32.mrb[0].mxu0
    %v6574 = vpop.f32.mrb[0].mxu0
    %6575 = vdwg.mxu0
    %v6576 = vadd.f32 %v6297, %v6529
    %v6577 = vadd.f32 %v6298, %v6531
    %v6578 = vadd.f32 %v6299, %v6570
    %v6579 = vadd.f32 %v6300, %v6572
    %v6580 = vtanh.pop %v6576
    %v6581 = vtanh.pop %v6577
    %v6582 = vtanh.pop %v6578
    %v6583 = vtanh.pop %v6579
    %v6584 = vmul.f32 %v6580, 0.5
    %v6585 = vadd.f32 %v6584, 0.5
    %v6586 = vmul.f32 %v6581, 0.5
    %v6587 = vadd.f32 %v6586, 0.5
    %v6588 = vmul.f32 %v6583, 0.5
    %v6589 = vadd.f32 %v6588, 0.5
    %v6590 = vmul.f32 %v6587, %v5718
    %v6591 = vmul.f32 %v6585, %v6582
    %v6592 = vadd.f32 %v6590, %v6591
    %v6593 = vtanh.pop %v6592
    %v6594 = vmul.f32 %v6589, %v6593
    %6595 = vst [vmem:[#allocation3 - $0x1] sm:$0x80] %v6594
    %v6596 = vpack.c.bf16 %v6022, %v6022
    %v6597 = vld [vmem:[%s4] sm:$0xff]
    %v6598 = vld [vmem:[%s4 + $0x8] sm:$0xff]
    %v6599 = vld [vmem:[%s4 + $0x10] sm:$0xff]
    %v6600 = vld [vmem:[%s4 + $0x18] sm:$0xff]
    %v6601 = vld [vmem:[%s4 + $0x20] sm:$0xff]
    %v6602 = vld [vmem:[%s4 + $0x28] sm:$0xff]
    %v6603 = vld [vmem:[%s4 + $0x30] sm:$0xff]
    %v6604 = vld [vmem:[%s4 + $0x38] sm:$0xff]
    %v6605 = vld [vmem:[%s4 + $0x40] sm:$0xff]
    %v6606 = vld [vmem:[%s4 + $0x48] sm:$0xff]
    %v6607 = vld [vmem:[%s4 + $0x50] sm:$0xff]
    %v6608 = vld [vmem:[%s4 + $0x58] sm:$0xff]
    %v6609 = vld [vmem:[%s4 + $0x60] sm:$0xff]
    %v6610 = vld [vmem:[%s4 + $0x68] sm:$0xff]
    %v6611 = vld [vmem:[%s4 + $0x70] sm:$0xff]
    %v6612 = vld [vmem:[%s4 + $0x78] sm:$0xff]
    %v6613 = vld [vmem:[%s4 + $0x80] sm:$0xff]
    %v6614 = vld [vmem:[%s4 + $0x88] sm:$0xff]
    %v6615 = vld [vmem:[%s4 + $0x90] sm:$0xff]
    %v6616 = vld [vmem:[%s4 + $0x98] sm:$0xff]
    %v6617 = vld [vmem:[%s4 + $0xa0] sm:$0xff]
    %v6618 = vld [vmem:[%s4 + $0xa8] sm:$0xff]
    %v6619 = vld [vmem:[%s4 + $0xb0] sm:$0xff]
    %v6620 = vld [vmem:[%s4 + $0xb8] sm:$0xff]
    %v6621 = vld [vmem:[%s4 + $0xc0] sm:$0xff]
    %v6622 = vld [vmem:[%s4 + $0xc8] sm:$0xff]
    %v6623 = vld [vmem:[%s4 + $0xd0] sm:$0xff]
    %v6624 = vld [vmem:[%s4 + $0xd8] sm:$0xff]
    %v6625 = vld [vmem:[%s4 + $0xe0] sm:$0xff]
    %v6626 = vld [vmem:[%s4 + $0xe8] sm:$0xff]
    %v6627 = vld [vmem:[%s4 + $0xf0] sm:$0xff]
    %v6628 = vld [vmem:[%s4 + $0xf8] sm:$0xff]
    %v6661 = vunpack.c.l.b16 %v6597
    %v6662 = vunpack.c.h.b16 %v6597
    %v6663 = vunpack.c.l.b16 %v6598
    %v6664 = vunpack.c.h.b16 %v6598
    %v6665 = vunpack.c.l.b16 %v6599
    %v6666 = vunpack.c.h.b16 %v6599
    %v6667 = vunpack.c.l.b16 %v6600
    %v6668 = vunpack.c.h.b16 %v6600
    %v6669 = vunpack.c.l.b16 %v6601
    %v6670 = vunpack.c.h.b16 %v6601
    %v6671 = vunpack.c.l.b16 %v6602
    %v6672 = vunpack.c.h.b16 %v6602
    %v6673 = vunpack.c.l.b16 %v6603
    %v6674 = vunpack.c.h.b16 %v6603
    %v6675 = vunpack.c.l.b16 %v6604
    %v6676 = vunpack.c.h.b16 %v6604
    %v6677 = vunpack.c.l.b16 %v6605
    %v6678 = vunpack.c.h.b16 %v6605
    %v6679 = vunpack.c.l.b16 %v6606
    %v6680 = vunpack.c.h.b16 %v6606
    %v6681 = vunpack.c.l.b16 %v6607
    %v6682 = vunpack.c.h.b16 %v6607
    %v6683 = vunpack.c.l.b16 %v6608
    %v6684 = vunpack.c.h.b16 %v6608
    %v6685 = vunpack.c.l.b16 %v6609
    %v6686 = vunpack.c.h.b16 %v6609
    %v6687 = vunpack.c.l.b16 %v6610
    %v6688 = vunpack.c.h.b16 %v6610
    %v6689 = vunpack.c.l.b16 %v6611
    %v6690 = vunpack.c.h.b16 %v6611
    %v6691 = vunpack.c.l.b16 %v6612
    %v6692 = vunpack.c.h.b16 %v6612
    %v6693 = vunpack.c.l.b16 %v6613
    %v6694 = vunpack.c.h.b16 %v6613
    %v6695 = vunpack.c.l.b16 %v6614
    %v6696 = vunpack.c.h.b16 %v6614
    %v6697 = vunpack.c.l.b16 %v6615
    %v6698 = vunpack.c.h.b16 %v6615
    %v6699 = vunpack.c.l.b16 %v6616
    %v6700 = vunpack.c.h.b16 %v6616
    %v6701 = vunpack.c.l.b16 %v6617
    %v6702 = vunpack.c.h.b16 %v6617
    %v6703 = vunpack.c.l.b16 %v6618
    %v6704 = vunpack.c.h.b16 %v6618
    %v6705 = vunpack.c.l.b16 %v6619
    %v6706 = vunpack.c.h.b16 %v6619
    %v6707 = vunpack.c.l.b16 %v6620
    %v6708 = vunpack.c.h.b16 %v6620
    %v6709 = vunpack.c.l.b16 %v6621
    %v6710 = vunpack.c.h.b16 %v6621
    %v6711 = vunpack.c.l.b16 %v6622
    %v6712 = vunpack.c.h.b16 %v6622
    %v6713 = vunpack.c.l.b16 %v6623
    %v6714 = vunpack.c.h.b16 %v6623
    %v6715 = vunpack.c.l.b16 %v6624
    %v6716 = vunpack.c.h.b16 %v6624
    %v6717 = vunpack.c.l.b16 %v6625
    %v6718 = vunpack.c.h.b16 %v6625
    %v6719 = vunpack.c.l.b16 %v6626
    %v6720 = vunpack.c.h.b16 %v6626
    %v6721 = vunpack.c.l.b16 %v6627
    %v6722 = vunpack.c.h.b16 %v6627
    %v6723 = vunpack.c.l.b16 %v6628
    %v6724 = vunpack.c.h.b16 %v6628
    %v6725 = vpack.c.b16 %v6665, %v6661
    %v6726 = vpack.c.b16 %v6666, %v6662
    %v6727 = vpack.c.b16 %v6667, %v6663
    %v6728 = vpack.c.b16 %v6668, %v6664
    %v6729 = vpack.c.b16 %v6673, %v6669
    %v6730 = vpack.c.b16 %v6674, %v6670
    %v6731 = vpack.c.b16 %v6675, %v6671
    %v6732 = vpack.c.b16 %v6676, %v6672
    %v6733 = vpack.c.b16 %v6681, %v6677
    %v6734 = vpack.c.b16 %v6682, %v6678
    %v6735 = vpack.c.b16 %v6683, %v6679
    %v6736 = vpack.c.b16 %v6684, %v6680
    %v6737 = vpack.c.b16 %v6689, %v6685
    %v6738 = vpack.c.b16 %v6690, %v6686
    %v6739 = vpack.c.b16 %v6691, %v6687
    %v6740 = vpack.c.b16 %v6692, %v6688
    %v6741 = vpack.c.b16 %v6697, %v6693
    %v6742 = vpack.c.b16 %v6698, %v6694
    %v6743 = vpack.c.b16 %v6699, %v6695
    %v6744 = vpack.c.b16 %v6700, %v6696
    %v6745 = vpack.c.b16 %v6705, %v6701
    %v6746 = vpack.c.b16 %v6706, %v6702
    %v6747 = vpack.c.b16 %v6707, %v6703
    %v6748 = vpack.c.b16 %v6708, %v6704
    %v6749 = vpack.c.b16 %v6713, %v6709
    %v6750 = vpack.c.b16 %v6714, %v6710
    %v6751 = vpack.c.b16 %v6715, %v6711
    %v6752 = vpack.c.b16 %v6716, %v6712
    %v6753 = vpack.c.b16 %v6721, %v6717
    %v6754 = vpack.c.b16 %v6722, %v6718
    %v6755 = vpack.c.b16 %v6723, %v6719
    %v6756 = vpack.c.b16 %v6724, %v6720
    %6789 = vmatprep.subr.bf16.mxu0 %v6726
    %6790 = vmatpush1.bf16.msra.mxu0 %v6725
    %6791 = vmatprep.subr.bf16.mxu0 %v6730
    %6792 = vmatpush1.bf16.msra.mxu0 %v6729
    %6793 = vmatprep.subr.bf16.mxu0 %v6734
    %6794 = vmatpush1.bf16.msra.mxu0 %v6733
    %6795 = vmatprep.subr.bf16.mxu0 %v6738
    %6796 = vmatpush1.bf16.msra.mxu0 %v6737
    %6797 = vmatprep.subr.bf16.mxu0 %v6742
    %6798 = vmatpush1.bf16.msra.mxu0 %v6741
    %6799 = vmatprep.subr.bf16.mxu0 %v6746
    %6800 = vmatpush1.bf16.msra.mxu0 %v6745
    %6801 = vmatprep.subr.bf16.mxu0 %v6750
    %6802 = vmatpush1.bf16.msra.mxu0 %v6749
    %6803 = vmatprep.subr.bf16.mxu0 %v6754
    %6804 = vmatpush1.bf16.msra.mxu0 %v6753
    %6805 = vmatprep.subr.bf16.mxu0 0
    %6806 = vmatpush1.bf16.msra.mxu0 0
    %6807 = vmatprep.subr.bf16.mxu0 0
    %6808 = vmatpush1.bf16.msra.mxu0 0
    %6809 = vmatprep.subr.bf16.mxu0 0
    %6810 = vmatpush1.bf16.msra.mxu0 0
    %6811 = vmatprep.subr.bf16.mxu0 0
    %6812 = vmatpush1.bf16.msra.mxu0 0
    %6813 = vmatprep.subr.bf16.mxu0 0
    %6814 = vmatpush1.bf16.msra.mxu0 0
    %6815 = vmatprep.subr.bf16.mxu0 0
    %6816 = vmatpush1.bf16.msra.mxu0 0
    %6817 = vmatprep.subr.bf16.mxu0 0
    %6818 = vmatpush1.bf16.msra.mxu0 0
    %6819 = vmatprep.subr.bf16.mxu0 0
    %6820 = vmatpush1.bf16.msra.mxu0 0
    %6821 = vmatprep.mubr.bf16.mxu0 0
    %6822 = vmatmul.mubr.bf16.gmra.mrb[0].mxu0 %v6596
    %v6823 = vpop.f32.mrb[0].mxu0
    %v6824 = vadd.f32 0.0, %v6823
    %v6825 = vpop.f32.mrb[0].mxu0
    %v6826 = vadd.f32 0.0, %v6825
    %v6827 = vpop.f32.mrb[0].mxu0
    %v6828 = vpop.f32.mrb[0].mxu0
    %6829 = vdwg.mxu0
    %6830 = vmatprep.subr.bf16.mxu0 %v6728
    %6831 = vmatpush1.bf16.msra.mxu0 %v6727
    %6832 = vmatprep.subr.bf16.mxu0 %v6732
    %6833 = vmatpush1.bf16.msra.mxu0 %v6731
    %6834 = vmatprep.subr.bf16.mxu0 %v6736
    %6835 = vmatpush1.bf16.msra.mxu0 %v6735
    %6836 = vmatprep.subr.bf16.mxu0 %v6740
    %6837 = vmatpush1.bf16.msra.mxu0 %v6739
    %6838 = vmatprep.subr.bf16.mxu0 %v6744
    %6839 = vmatpush1.bf16.msra.mxu0 %v6743
    %6840 = vmatprep.subr.bf16.mxu0 %v6748
    %6841 = vmatpush1.bf16.msra.mxu0 %v6747
    %6842 = vmatprep.subr.bf16.mxu0 %v6752
    %6843 = vmatpush1.bf16.msra.mxu0 %v6751
    %6844 = vmatprep.subr.bf16.mxu0 %v6756
    %6845 = vmatpush1.bf16.msra.mxu0 %v6755
    %6846 = vmatprep.subr.bf16.mxu0 0
    %6847 = vmatpush1.bf16.msra.mxu0 0
    %6848 = vmatprep.subr.bf16.mxu0 0
    %6849 = vmatpush1.bf16.msra.mxu0 0
    %6850 = vmatprep.subr.bf16.mxu0 0
    %6851 = vmatpush1.bf16.msra.mxu0 0
    %6852 = vmatprep.subr.bf16.mxu0 0
    %6853 = vmatpush1.bf16.msra.mxu0 0
    %6854 = vmatprep.subr.bf16.mxu0 0
    %6855 = vmatpush1.bf16.msra.mxu0 0
    %6856 = vmatprep.subr.bf16.mxu0 0
    %6857 = vmatpush1.bf16.msra.mxu0 0
    %6858 = vmatprep.subr.bf16.mxu0 0
    %6859 = vmatpush1.bf16.msra.mxu0 0
    %6860 = vmatprep.subr.bf16.mxu0 0
    %6861 = vmatpush1.bf16.msra.mxu0 0
    %6862 = vmatprep.mubr.bf16.mxu0 0
    %6863 = vmatmul.mubr.bf16.gmra.mrb[0].mxu0 %v6596
    %v6864 = vpop.f32.mrb[0].mxu0
    %v6865 = vadd.f32 0.0, %v6864
    %v6866 = vpop.f32.mrb[0].mxu0
    %v6867 = vadd.f32 0.0, %v6866
    %v6868 = vpop.f32.mrb[0].mxu0
    %v6869 = vpop.f32.mrb[0].mxu0
    %6870 = vdwg.mxu0
    %v6871 = vadd.f32 %v443, %v6824
    %v6872 = vadd.f32 %v447, %v6826
    %v6873 = vadd.f32 %v451, %v6865
    %v6874 = vadd.f32 %v455, %v6867
    %v6875 = vpack.c.bf16 %v6594, %v6594
    %v6876 = vld [vmem:[%s5] sm:$0xff]
    %v6877 = vld [vmem:[%s5 + $0x8] sm:$0xff]
    %v6878 = vld [vmem:[%s5 + $0x10] sm:$0xff]
    %v6879 = vld [vmem:[%s5 + $0x18] sm:$0xff]
    %v6880 = vld [vmem:[%s5 + $0x20] sm:$0xff]
    %v6881 = vld [vmem:[%s5 + $0x28] sm:$0xff]
    %v6882 = vld [vmem:[%s5 + $0x30] sm:$0xff]
    %v6883 = vld [vmem:[%s5 + $0x38] sm:$0xff]
    %v6884 = vld [vmem:[%s5 + $0x40] sm:$0xff]
    %v6885 = vld [vmem:[%s5 + $0x48] sm:$0xff]
    %v6886 = vld [vmem:[%s5 + $0x50] sm:$0xff]
    %v6887 = vld [vmem:[%s5 + $0x58] sm:$0xff]
    %v6888 = vld [vmem:[%s5 + $0x60] sm:$0xff]
    %v6889 = vld [vmem:[%s5 + $0x68] sm:$0xff]
    %v6890 = vld [vmem:[%s5 + $0x70] sm:$0xff]
    %v6891 = vld [vmem:[%s5 + $0x78] sm:$0xff]
    %v6892 = vld [vmem:[%s5 + $0x80] sm:$0xff]
    %v6893 = vld [vmem:[%s5 + $0x88] sm:$0xff]
    %v6894 = vld [vmem:[%s5 + $0x90] sm:$0xff]
    %v6895 = vld [vmem:[%s5 + $0x98] sm:$0xff]
    %v6896 = vld [vmem:[%s5 + $0xa0] sm:$0xff]
    %v6897 = vld [vmem:[%s5 + $0xa8] sm:$0xff]
    %v6898 = vld [vmem:[%s5 + $0xb0] sm:$0xff]
    %v6899 = vld [vmem:[%s5 + $0xb8] sm:$0xff]
    %v6900 = vld [vmem:[%s5 + $0xc0] sm:$0xff]
    %v6901 = vld [vmem:[%s5 + $0xc8] sm:$0xff]
    %v6902 = vld [vmem:[%s5 + $0xd0] sm:$0xff]
    %v6903 = vld [vmem:[%s5 + $0xd8] sm:$0xff]
    %v6904 = vld [vmem:[%s5 + $0xe0] sm:$0xff]
    %v6905 = vld [vmem:[%s5 + $0xe8] sm:$0xff]
    %v6906 = vld [vmem:[%s5 + $0xf0] sm:$0xff]
    %v6907 = vld [vmem:[%s5 + $0xf8] sm:$0xff]
    %v6940 = vunpack.c.l.b16 %v6876
    %v6941 = vunpack.c.h.b16 %v6876
    %v6942 = vunpack.c.l.b16 %v6877
    %v6943 = vunpack.c.h.b16 %v6877
    %v6944 = vunpack.c.l.b16 %v6878
    %v6945 = vunpack.c.h.b16 %v6878
    %v6946 = vunpack.c.l.b16 %v6879
    %v6947 = vunpack.c.h.b16 %v6879
    %v6948 = vunpack.c.l.b16 %v6880
    %v6949 = vunpack.c.h.b16 %v6880
    %v6950 = vunpack.c.l.b16 %v6881
    %v6951 = vunpack.c.h.b16 %v6881
    %v6952 = vunpack.c.l.b16 %v6882
    %v6953 = vunpack.c.h.b16 %v6882
    %v6954 = vunpack.c.l.b16 %v6883
    %v6955 = vunpack.c.h.b16 %v6883
    %v6956 = vunpack.c.l.b16 %v6884
    %v6957 = vunpack.c.h.b16 %v6884
    %v6958 = vunpack.c.l.b16 %v6885
    %v6959 = vunpack.c.h.b16 %v6885
    %v6960 = vunpack.c.l.b16 %v6886
    %v6961 = vunpack.c.h.b16 %v6886
    %v6962 = vunpack.c.l.b16 %v6887
    %v6963 = vunpack.c.h.b16 %v6887
    %v6964 = vunpack.c.l.b16 %v6888
    %v6965 = vunpack.c.h.b16 %v6888
    %v6966 = vunpack.c.l.b16 %v6889
    %v6967 = vunpack.c.h.b16 %v6889
    %v6968 = vunpack.c.l.b16 %v6890
    %v6969 = vunpack.c.h.b16 %v6890
    %v6970 = vunpack.c.l.b16 %v6891
    %v6971 = vunpack.c.h.b16 %v6891
    %v6972 = vunpack.c.l.b16 %v6892
    %v6973 = vunpack.c.h.b16 %v6892
    %v6974 = vunpack.c.l.b16 %v6893
    %v6975 = vunpack.c.h.b16 %v6893
    %v6976 = vunpack.c.l.b16 %v6894
    %v6977 = vunpack.c.h.b16 %v6894
    %v6978 = vunpack.c.l.b16 %v6895
    %v6979 = vunpack.c.h.b16 %v6895
    %v6980 = vunpack.c.l.b16 %v6896
    %v6981 = vunpack.c.h.b16 %v6896
    %v6982 = vunpack.c.l.b16 %v6897
    %v6983 = vunpack.c.h.b16 %v6897
    %v6984 = vunpack.c.l.b16 %v6898
    %v6985 = vunpack.c.h.b16 %v6898
    %v6986 = vunpack.c.l.b16 %v6899
    %v6987 = vunpack.c.h.b16 %v6899
    %v6988 = vunpack.c.l.b16 %v6900
    %v6989 = vunpack.c.h.b16 %v6900
    %v6990 = vunpack.c.l.b16 %v6901
    %v6991 = vunpack.c.h.b16 %v6901
    %v6992 = vunpack.c.l.b16 %v6902
    %v6993 = vunpack.c.h.b16 %v6902
    %v6994 = vunpack.c.l.b16 %v6903
    %v6995 = vunpack.c.h.b16 %v6903
    %v6996 = vunpack.c.l.b16 %v6904
    %v6997 = vunpack.c.h.b16 %v6904
    %v6998 = vunpack.c.l.b16 %v6905
    %v6999 = vunpack.c.h.b16 %v6905
    %v7000 = vunpack.c.l.b16 %v6906
    %v7001 = vunpack.c.h.b16 %v6906
    %v7002 = vunpack.c.l.b16 %v6907
    %v7003 = vunpack.c.h.b16 %v6907
    %v7004 = vpack.c.b16 %v6944, %v6940
    %v7005 = vpack.c.b16 %v6945, %v6941
    %v7006 = vpack.c.b16 %v6946, %v6942
    %v7007 = vpack.c.b16 %v6947, %v6943
    %v7008 = vpack.c.b16 %v6952, %v6948
    %v7009 = vpack.c.b16 %v6953, %v6949
    %v7010 = vpack.c.b16 %v6954, %v6950
    %v7011 = vpack.c.b16 %v6955, %v6951
    %v7012 = vpack.c.b16 %v6960, %v6956
    %v7013 = vpack.c.b16 %v6961, %v6957
    %v7014 = vpack.c.b16 %v6962, %v6958
    %v7015 = vpack.c.b16 %v6963, %v6959
    %v7016 = vpack.c.b16 %v6968, %v6964
    %v7017 = vpack.c.b16 %v6969, %v6965
    %v7018 = vpack.c.b16 %v6970, %v6966
    %v7019 = vpack.c.b16 %v6971, %v6967
    %v7020 = vpack.c.b16 %v6976, %v6972
    %v7021 = vpack.c.b16 %v6977, %v6973
    %v7022 = vpack.c.b16 %v6978, %v6974
    %v7023 = vpack.c.b16 %v6979, %v6975
    %v7024 = vpack.c.b16 %v6984, %v6980
    %v7025 = vpack.c.b16 %v6985, %v6981
    %v7026 = vpack.c.b16 %v6986, %v6982
    %v7027 = vpack.c.b16 %v6987, %v6983
    %v7028 = vpack.c.b16 %v6992, %v6988
    %v7029 = vpack.c.b16 %v6993, %v6989
    %v7030 = vpack.c.b16 %v6994, %v6990
    %v7031 = vpack.c.b16 %v6995, %v6991
    %v7032 = vpack.c.b16 %v7000, %v6996
    %v7033 = vpack.c.b16 %v7001, %v6997
    %v7034 = vpack.c.b16 %v7002, %v6998
    %v7035 = vpack.c.b16 %v7003, %v6999
    %7068 = vmatprep.subr.bf16.mxu0 %v7005
    %7069 = vmatpush1.bf16.msra.mxu0 %v7004
    %7070 = vmatprep.subr.bf16.mxu0 %v7009
    %7071 = vmatpush1.bf16.msra.mxu0 %v7008
    %7072 = vmatprep.subr.bf16.mxu0 %v7013
    %7073 = vmatpush1.bf16.msra.mxu0 %v7012
    %7074 = vmatprep.subr.bf16.mxu0 %v7017
    %7075 = vmatpush1.bf16.msra.mxu0 %v7016
    %7076 = vmatprep.subr.bf16.mxu0 %v7021
    %7077 = vmatpush1.bf16.msra.mxu0 %v7020
    %7078 = vmatprep.subr.bf16.mxu0 %v7025
    %7079 = vmatpush1.bf16.msra.mxu0 %v7024
    %7080 = vmatprep.subr.bf16.mxu0 %v7029
    %7081 = vmatpush1.bf16.msra.mxu0 %v7028
    %7082 = vmatprep.subr.bf16.mxu0 %v7033
    %7083 = vmatpush1.bf16.msra.mxu0 %v7032
    %7084 = vmatprep.subr.bf16.mxu0 0
    %7085 = vmatpush1.bf16.msra.mxu0 0
    %7086 = vmatprep.subr.bf16.mxu0 0
    %7087 = vmatpush1.bf16.msra.mxu0 0
    %7088 = vmatprep.subr.bf16.mxu0 0
    %7089 = vmatpush1.bf16.msra.mxu0 0
    %7090 = vmatprep.subr.bf16.mxu0 0
    %7091 = vmatpush1.bf16.msra.mxu0 0
    %7092 = vmatprep.subr.bf16.mxu0 0
    %7093 = vmatpush1.bf16.msra.mxu0 0
    %7094 = vmatprep.subr.bf16.mxu0 0
    %7095 = vmatpush1.bf16.msra.mxu0 0
    %7096 = vmatprep.subr.bf16.mxu0 0
    %7097 = vmatpush1.bf16.msra.mxu0 0
    %7098 = vmatprep.subr.bf16.mxu0 0
    %7099 = vmatpush1.bf16.msra.mxu0 0
    %7100 = vmatprep.mubr.bf16.mxu0 0
    %7101 = vmatmul.mubr.bf16.gmra.mrb[0].mxu0 %v6875
    %v7102 = vpop.f32.mrb[0].mxu0
    %v7103 = vadd.f32 0.0, %v7102
    %v7104 = vpop.f32.mrb[0].mxu0
    %v7105 = vadd.f32 0.0, %v7104
    %v7106 = vpop.f32.mrb[0].mxu0
    %v7107 = vpop.f32.mrb[0].mxu0
    %7108 = vdwg.mxu0
    %7109 = vmatprep.subr.bf16.mxu0 %v7007
    %7110 = vmatpush1.bf16.msra.mxu0 %v7006
    %7111 = vmatprep.subr.bf16.mxu0 %v7011
    %7112 = vmatpush1.bf16.msra.mxu0 %v7010
    %7113 = vmatprep.subr.bf16.mxu0 %v7015
    %7114 = vmatpush1.bf16.msra.mxu0 %v7014
    %7115 = vmatprep.subr.bf16.mxu0 %v7019
    %7116 = vmatpush1.bf16.msra.mxu0 %v7018
    %7117 = vmatprep.subr.bf16.mxu0 %v7023
    %7118 = vmatpush1.bf16.msra.mxu0 %v7022
    %7119 = vmatprep.subr.bf16.mxu0 %v7027
    %7120 = vmatpush1.bf16.msra.mxu0 %v7026
    %7121 = vmatprep.subr.bf16.mxu0 %v7031
    %7122 = vmatpush1.bf16.msra.mxu0 %v7030
    %7123 = vmatprep.subr.bf16.mxu0 %v7035
    %7124 = vmatpush1.bf16.msra.mxu0 %v7034
    %7125 = vmatprep.subr.bf16.mxu0 0
    %7126 = vmatpush1.bf16.msra.mxu0 0
    %7127 = vmatprep.subr.bf16.mxu0 0
    %7128 = vmatpush1.bf16.msra.mxu0 0
    %7129 = vmatprep.subr.bf16.mxu0 0
    %7130 = vmatpush1.bf16.msra.mxu0 0
    %7131 = vmatprep.subr.bf16.mxu0 0
    %7132 = vmatpush1.bf16.msra.mxu0 0
    %7133 = vmatprep.subr.bf16.mxu0 0
    %7134 = vmatpush1.bf16.msra.mxu0 0
    %7135 = vmatprep.subr.bf16.mxu0 0
    %7136 = vmatpush1.bf16.msra.mxu0 0
    %7137 = vmatprep.subr.bf16.mxu0 0
    %7138 = vmatpush1.bf16.msra.mxu0 0
    %7139 = vmatprep.subr.bf16.mxu0 0
    %7140 = vmatpush1.bf16.msra.mxu0 0
    %7141 = vmatprep.mubr.bf16.mxu0 0
    %7142 = vmatmul.mubr.bf16.gmra.mrb[0].mxu0 %v6875
    %v7143 = vpop.f32.mrb[0].mxu0
    %v7144 = vadd.f32 0.0, %v7143
    %v7145 = vpop.f32.mrb[0].mxu0
    %v7146 = vadd.f32 0.0, %v7145
    %v7147 = vpop.f32.mrb[0].mxu0
    %v7148 = vpop.f32.mrb[0].mxu0
    %7149 = vdwg.mxu0
    %v7150 = vadd.f32 %v6871, %v7103
    %v7151 = vadd.f32 %v6872, %v7105
    %v7152 = vadd.f32 %v6873, %v7144
    %v7153 = vadd.f32 %v6874, %v7146
    %v7154 = vtanh.pop %v7150
    %v7155 = vtanh.pop %v7151
    %v7156 = vtanh.pop %v7152
    %v7157 = vtanh.pop %v7153
    %v7158 = vmul.f32 %v7154, 0.5
    %v7159 = vadd.f32 %v7158, 0.5
    %v7160 = vmul.f32 %v7155, 0.5
    %v7161 = vadd.f32 %v7160, 0.5
    %v7162 = vmul.f32 %v7157, 0.5
    %v7163 = vadd.f32 %v7162, 0.5
    %v7164 = vmul.f32 %v7161, %v6592
    %v7165 = vmul.f32 %v7159, %v7156
    %v7166 = vadd.f32 %v7164, %v7165
    %v7167 = vtanh.pop %v7166
    %v7168 = vmul.f32 %v7163, %v7167
    %7169 = vst [vmem:[#allocation3] sm:$0x80] %v7168
    %v7170 = vld [vmem:[#allocation3] sm:$0xff]
    %v7171 = vpack.c.bf16 %v7170, %v7170
    %v7172 = vld [vmem:[%s7] sm:$0xf]
    %v7173 = vld [vmem:[%s7 + $0x4] sm:$0xf]
    %v7174 = vld [vmem:[%s7 + $0x8] sm:$0xf]
    %v7175 = vld [vmem:[%s7 + $0xc] sm:$0xf]
    %v7176 = vld [vmem:[%s7 + $0x10] sm:$0xf]
    %v7177 = vld [vmem:[%s7 + $0x14] sm:$0xf]
    %v7178 = vld [vmem:[%s7 + $0x18] sm:$0xf]
    %v7179 = vld [vmem:[%s7 + $0x1c] sm:$0xf]
    %v7180 = vld [vmem:[%s7 + $0x20] sm:$0xf]
    %v7181 = vld [vmem:[%s7 + $0x24] sm:$0xf]
    %v7182 = vld [vmem:[%s7 + $0x28] sm:$0xf]
    %v7183 = vld [vmem:[%s7 + $0x2c] sm:$0xf]
    %v7184 = vld [vmem:[%s7 + $0x30] sm:$0xf]
    %v7185 = vld [vmem:[%s7 + $0x34] sm:$0xf]
    %v7186 = vld [vmem:[%s7 + $0x38] sm:$0xf]
    %v7187 = vld [vmem:[%s7 + $0x3c] sm:$0xf]
    %v7188 = vld [vmem:[%s8] sm:$0x1]
    %v7190 = vlaneseq
    %v7191 = vshrl.u32 %v7190, 7
    %v7192 = vsub.s32 0, %v7191
    %v7193 = vrot.slane %v7188, %v7192
    %v7211 = vunpack.c.l.b16 %v7172
    %v7212 = vunpack.c.l.b16 %v7173
    %v7213 = vunpack.c.l.b16 %v7174
    %v7214 = vunpack.c.l.b16 %v7175
    %v7215 = vunpack.c.l.b16 %v7176
    %v7216 = vunpack.c.l.b16 %v7177
    %v7217 = vunpack.c.l.b16 %v7178
    %v7218 = vunpack.c.l.b16 %v7179
    %v7219 = vunpack.c.l.b16 %v7180
    %v7220 = vunpack.c.l.b16 %v7181
    %v7221 = vunpack.c.l.b16 %v7182
    %v7222 = vunpack.c.l.b16 %v7183
    %v7223 = vunpack.c.l.b16 %v7184
    %v7224 = vunpack.c.l.b16 %v7185
    %v7225 = vunpack.c.l.b16 %v7186
    %v7226 = vunpack.c.l.b16 %v7187
    %v7227 = vpack.c.b16 %v7212, %v7211
    %v7228 = vpack.c.b16 %v7214, %v7213
    %v7229 = vpack.c.b16 %v7216, %v7215
    %v7230 = vpack.c.b16 %v7218, %v7217
    %v7231 = vpack.c.b16 %v7220, %v7219
    %v7232 = vpack.c.b16 %v7222, %v7221
    %v7233 = vpack.c.b16 %v7224, %v7223
    %v7234 = vpack.c.b16 %v7226, %v7225
    %7243 = vmatprep.subr.bf16.mxu0 0
    %7244 = vmatpush1.bf16.msra.mxu0 %v7227
    %7245 = vmatprep.subr.bf16.mxu0 0
    %7246 = vmatpush1.bf16.msra.mxu0 %v7228
    %7247 = vmatprep.subr.bf16.mxu0 0
    %7248 = vmatpush1.bf16.msra.mxu0 %v7229
    %7249 = vmatprep.subr.bf16.mxu0 0
    %7250 = vmatpush1.bf16.msra.mxu0 %v7230
    %7251 = vmatprep.subr.bf16.mxu0 0
    %7252 = vmatpush1.bf16.msra.mxu0 %v7231
    %7253 = vmatprep.subr.bf16.mxu0 0
    %7254 = vmatpush1.bf16.msra.mxu0 %v7232
    %7255 = vmatprep.subr.bf16.mxu0 0
    %7256 = vmatpush1.bf16.msra.mxu0 %v7233
    %7257 = vmatprep.subr.bf16.mxu0 0
    %7258 = vmatpush1.bf16.msra.mxu0 %v7234
    %7259 = vmatprep.subr.bf16.mxu0 0
    %7260 = vmatpush1.bf16.msra.mxu0 0
    %7261 = vmatprep.subr.bf16.mxu0 0
    %7262 = vmatpush1.bf16.msra.mxu0 0
    %7263 = vmatprep.subr.bf16.mxu0 0
    %7264 = vmatpush1.bf16.msra.mxu0 0
    %7265 = vmatprep.subr.bf16.mxu0 0
    %7266 = vmatpush1.bf16.msra.mxu0 0
    %7267 = vmatprep.subr.bf16.mxu0 0
    %7268 = vmatpush1.bf16.msra.mxu0 0
    %7269 = vmatprep.subr.bf16.mxu0 0
    %7270 = vmatpush1.bf16.msra.mxu0 0
    %7271 = vmatprep.subr.bf16.mxu0 0
    %7272 = vmatpush1.bf16.msra.mxu0 0
    %7273 = vmatprep.subr.bf16.mxu0 0
    %7274 = vmatpush1.bf16.msra.mxu0 0
    %7275 = vmatprep.mubr.bf16.mxu0 0
    %7276 = vmatmul.mubr.bf16.gmra.mrb[0].mxu0 %v7171
    %v7277 = vpop.f32.mrb[0].mxu0
    %v7278 = vadd.f32 %v7193, %v7277
    %v7279 = vpop.f32.mrb[0].mxu0
    %v7280 = vpop.f32.mrb[0].mxu0
    %v7281 = vpop.f32.mrb[0].mxu0
    %7282 = vdwg.mxu0
    %7283 = vst [vmem:[#allocation4] sm:$0xff] %v7278
    // Predicated region
    $region38: #{neurochain_agi_forward.1} parent=1 // pred_check
      _
    $region39: #{neurochain_agi_forward.1} parent=1 // pred_check_branch
      %7285 = sbr.rel (0) target = $region41
    $region40: #{neurochain_agi_forward.1} parent=1 // pred_region
      %s7287 = ssub.s32 128, 128
      %7288 = vsyncadd [#allocation5], %s7287
      %s7290 = sshll.u32 [#allocation4], 4
      %s7291 = int_to_ptr.vmem [resolvable:$true] %s7290
      %7293 = dma.vmem_to_hbm [thread:$0]  %s7291, 128, %s9, [#allocation5]
    $region41: #{neurochain_agi_forward.1} parent=1 // pred_fallthru
      _
    // Predicated region
    $region42: #{neurochain_agi_forward.1} parent=1 // pred_check
      _
    $region43: #{neurochain_agi_forward.1} parent=1 // pred_check_branch
      %7295 = sbr.rel (0) target = $region45
    $region44: #{neurochain_agi_forward.1} parent=1 // pred_region
      %7296 = dma.done [#allocation5], 128
    $region45: #{neurochain_agi_forward.1} parent=1 // pred_fallthru
      _
    %7297 = vsyncpa [#allocation5], 1

</llo_original>
